<compile_context>
chip_gen: v6e
topology: v6e:2x2x1
jax: 0.10.0
libtpu: 0.0.40
codegen_flags: <defaults>
</compile_context>

<pallas_src>
import functools
import math

import numpy as np
import jax
import jax.numpy as jnp
from jax.experimental import pallas as pl
from jax.experimental.pallas import tpu as pltpu


_LAYER_KEYS = ("wqkv", "bqkv", "wo", "bo", "ln1g", "ln1b",
               "w1", "b1", "w2", "b2", "ln2g", "ln2b")


def _layer_norm(x, g, b, eps=1e-5):
    mu = jnp.mean(x, axis=-1, keepdims=True)
    var = jnp.mean(jnp.square(x - mu), axis=-1, keepdims=True)
    return (x - mu) * jax.lax.rsqrt(var + eps) * g + b


# ----------------------------------------------------------------------------
# The single fused forward kernel
# ----------------------------------------------------------------------------
def _fused_forward_kernel(*refs, num_layers, num_heads, return_embedding):
    f32 = jnp.float32

    (cols5_ref, mask_ref, bias_ref, sel_ref,
     wc1_ref, bc1_ref, wc2_ref, bc2_ref,
     fw3_ref, fb_ref, pos_ref) = refs[:11]
    i = 11
    layer_refs = []
    for _ in range(num_layers):
        layer_refs.append(refs[i:i + 12])
        i += 12
    fc1w_ref, fc1b_ref, fc2w_ref, fc2b_ref = refs[i:i + 4]
    out_ref = refs[i + 4]

    fw3 = fw3_ref[...]                        # (49, 64, D)
    D = fw3.shape[2]
    dh = D // num_heads
    scale = 1.0 / math.sqrt(dh)

    # ---- conv stage: both 3x3 convs as two dense matmuls over (49*N) rows --
    h1 = jnp.dot(cols5_ref[...], wc1_ref[...],
                 preferred_element_type=f32) + bc1_ref[...]
    h1 = jnp.maximum(h1, 0.0) * mask_ref[...]            # (49N, 9*32)
    y2 = jnp.dot(h1, wc2_ref[...], preferred_element_type=f32) + bc2_ref[...]
    y2 = jnp.maximum(y2, 0.0)                            # (49N, 64), rows (p, n)
    N = y2.shape[0] // 49

    # ---- feature Linear, torch-Flatten (C,H,W) order folded into fw3 ------
    feat = jnp.dot(y2[0:N, :], fw3[0], preferred_element_type=f32)
    for p in range(1, 49):
        feat = feat + jnp.dot(y2[p * N:(p + 1) * N, :], fw3[p],
                              preferred_element_type=f32)
    feat = jnp.maximum(feat + fb_ref[...], 0.0)          # (N, D)

    # ---- positional embedding ----------------------------------------------
    x2d = feat + pos_ref[...]
    attn_bias = bias_ref[...]                            # (N, N) block-diag 0/-1e30

    # ---- transformer encoder stack (post-LN, ReLU FFN, eval-mode dropout) --
    for lr in layer_refs:
        (wqkv, bqkv, wo, bo, ln1g, ln1b,
         w1, b1, w2, b2, ln2g, ln2b) = [r[...] for r in lr]

        qkv = jnp.dot(x2d, wqkv, preferred_element_type=f32) + bqkv
        q = qkv[:, 0:D] * scale                          # pre-scale once
        k = qkv[:, D:2 * D]
        v = qkv[:, 2 * D:3 * D]

        head_outs = []
        for h in range(num_heads):
            c0 = h * dh
            qh = q[:, c0:c0 + dh]
            kh = k[:, c0:c0 + dh]
            vh = v[:, c0:c0 + dh]
            s = jnp.dot(qh, kh.T, preferred_element_type=f32) + attn_bias
            s = s - jnp.max(s, axis=-1, keepdims=True)
            e = jnp.exp(s)
            inv = pl.reciprocal(jnp.sum(e, axis=-1, keepdims=True), approx=True)
            head_outs.append(jnp.dot(e * inv, vh, preferred_element_type=f32))
        attn_cat = jnp.concatenate(head_outs, axis=1)    # (N, D)

        attn = jnp.dot(attn_cat, wo, preferred_element_type=f32) + bo
        y = _layer_norm(x2d + attn, ln1g, ln1b)
        hf = jnp.maximum(jnp.dot(y, w1, preferred_element_type=f32) + b1, 0.0)
        hf = jnp.dot(hf, w2, preferred_element_type=f32) + b2
        x2d = _layer_norm(y + hf, ln2g, ln2b)

    # ---- last token (constant selection matmul) + policy head --------------
    emb = jnp.dot(sel_ref[...], x2d, preferred_element_type=f32)   # (B, D)
    if return_embedding:
        out_ref[...] = emb.astype(out_ref.dtype)
    else:
        hh = jnp.maximum(
            jnp.dot(emb, fc1w_ref[...], preferred_element_type=f32)
            + fc1b_ref[...], 0.0)
        out_ref[...] = (jnp.dot(hh, fc2w_ref[...], preferred_element_type=f32)
                        + fc2b_ref[...]).astype(out_ref.dtype)


# ----------------------------------------------------------------------------
# Constant builders (depend only on static shapes; become jit constants)
# ----------------------------------------------------------------------------
def _conv2_tap_mask(n_imgs):
    """(49*n, 288) 0/1 mask; zero where a conv2 tap hits conv2's zero padding."""
    m = np.zeros((49, 9), np.float32)
    for ii in range(7):
        for jj in range(7):
            for ky in range(3):
                for kx in range(3):
                    yy, xx = ii + ky - 1, jj + kx - 1
                    if 0 <= yy < 7 and 0 <= xx < 7:
                        m[ii * 7 + jj, ky * 3 + kx] = 1.0
    m = np.repeat(m, 32, axis=1)                       # columns ordered (tap, c1_out)
    return jnp.asarray(np.repeat(m, n_imgs, axis=0))   # rows ordered (p, n)


def _attn_bias(batch, seq):
    n = batch * seq
    bias = np.full((n, n), -1e30, np.float32)
    for b in range(batch):
        bias[b * seq:(b + 1) * seq, b * seq:(b + 1) * seq] = 0.0
    return jnp.asarray(bias)


def _last_token_selector(batch, seq):
    sel = np.zeros((batch, batch * seq), np.float32)
    for b in range(batch):
        sel[b, b * seq + seq - 1] = 1.0
    return jnp.asarray(sel)


# ----------------------------------------------------------------------------
# Parameter init (natural shapes) and one-time kernel-layout packing
# ----------------------------------------------------------------------------
def init_params(key, action_dim, hidden_dim, num_heads, num_layers):
    def nrm(k, shape, scale=0.02):
        return scale * jax.random.normal(k, shape, jnp.float32)

    keys = iter(jax.random.split(key, 12 + 8 * num_layers))
    nxt = lambda: next(keys)

    p = {
        "conv1_w": nrm(nxt(), (3, 3, 3, 32)),            # HWIO
        "conv1_b": nrm(nxt(), (32,)),
        "conv2_w": nrm(nxt(), (3, 3, 32, 64)),
        "conv2_b": nrm(nxt(), (64,)),
        "feat_w": nrm(nxt(), (64 * 7 * 7, hidden_dim)),  # rows in torch (C,H,W) order
        "feat_b": nrm(nxt(), (hidden_dim,)),
        "pos_emb": jax.random.normal(nxt(), (1, 1, hidden_dim), jnp.float32),
        "fc1_w": nrm(nxt(), (hidden_dim, hidden_dim)),
        "fc1_b": nrm(nxt(), (hidden_dim,)),
        "fc2_w": nrm(nxt(), (hidden_dim, action_dim)),
        "fc2_b": nrm(nxt(), (action_dim,)),
        "layers": [],
    }
    for _ in range(num_layers):
        p["layers"].append({
            "wqkv": nrm(nxt(), (hidden_dim, 3 * hidden_dim)),
            "bqkv": nrm(nxt(), (3 * hidden_dim,)),
            "wo": nrm(nxt(), (hidden_dim, hidden_dim)),
            "bo": nrm(nxt(), (hidden_dim,)),
            "ln1g": jnp.ones((hidden_dim,), jnp.float32),
            "ln1b": jnp.zeros((hidden_dim,), jnp.float32),
            "w1": nrm(nxt(), (hidden_dim, 4 * hidden_dim)),
            "b1": nrm(nxt(), (4 * hidden_dim,)),
            "w2": nrm(nxt(), (4 * hidden_dim, hidden_dim)),
            "b2": nrm(nxt(), (hidden_dim,)),
            "ln2g": jnp.ones((hidden_dim,), jnp.float32),
            "ln2b": jnp.zeros((hidden_dim,), jnp.float32),
        })
    return p


def pack_params(params):
    """One-time repacking of weights into kernel-ready layouts."""
    C1, C2 = 32, 64
    c1w = np.asarray(params["conv1_w"], np.float32)
    c1b = np.asarray(params["conv1_b"], np.float32)
    c2w = np.asarray(params["conv2_w"], np.float32)
    c2b = np.asarray(params["conv2_b"], np.float32)
    featw = np.asarray(params["feat_w"], np.float32)
    D = featw.shape[1]

    # conv1 weight scattered per conv2-tap over the composite 5x5 patch.
    wc1 = np.zeros((5 * 5 * 3, 9 * C1), np.float32)
    for ky in range(3):
        for kx in range(3):
            kk = ky * 3 + kx
            for jy in range(3):
                for jx in range(3):
                    r = ((ky + jy) * 5 + (kx + jx)) * 3
                    wc1[r:r + 3, kk * C1:(kk + 1) * C1] = c1w[jy, jx]

    # feature Linear weight with the torch Flatten (c*49 + p) order folded in.
    fw3 = featw.reshape(C2, 49, D).transpose(1, 0, 2)    # fw3[p, c, :] = featw[c*49+p, :]

    kp = {
        "wc1": jnp.asarray(wc1),
        "bc1": jnp.asarray(np.tile(c1b, 9).reshape(1, 9 * C1)),
        "wc2": jnp.asarray(c2w.reshape(9 * C1, C2)),
        "bc2": jnp.asarray(c2b.reshape(1, C2)),
        "fw3": jnp.asarray(fw3),
        "fb": jnp.asarray(np.asarray(params["feat_b"], np.float32).reshape(1, D)),
        "pos": jnp.asarray(np.asarray(params["pos_emb"], np.float32).reshape(1, D)),
        "fc1_w": params["fc1_w"],
        "fc1_b": params["fc1_b"].reshape(1, -1),
        "fc2_w": params["fc2_w"],
        "fc2_b": params["fc2_b"].reshape(1, -1),
        "layers": [],
    }
    for lw in params["layers"]:
        kp["layers"].append({
            "wqkv": lw["wqkv"], "bqkv": lw["bqkv"].reshape(1, -1),
            "wo": lw["wo"], "bo": lw["bo"].reshape(1, -1),
            "ln1g": lw["ln1g"].reshape(1, -1), "ln1b": lw["ln1b"].reshape(1, -1),
            "w1": lw["w1"], "b1": lw["b1"].reshape(1, -1),
            "w2": lw["w2"], "b2": lw["b2"].reshape(1, -1),
            "ln2g": lw["ln2g"].reshape(1, -1), "ln2b": lw["ln2b"].reshape(1, -1),
        })
    return kp


# ----------------------------------------------------------------------------
# Forward pass: one pallas_call for the whole network
# ----------------------------------------------------------------------------
def transformer_policy_forward(packed, x, *, num_heads, return_embedding=False):
    B, S, H, W, C = x.shape
    assert (H, W, C) == (7, 7, 3), "feature_extractor implies 7x7x3 frames"
    N = B * S
    D = packed["fb"].shape[1]
    A = packed["fc2_b"].shape[1]
    assert D % num_heads == 0
    num_layers = len(packed["layers"])

    # 5x5 composite-receptive-field patches (zero pad 2), rows ordered (p, n),
    # columns ordered (dy, dx, cin).  This is the only per-call XLA glue and
    # touches ~118 KiB of data.
    imgs = x.reshape(N, H, W, C).astype(jnp.float32)
    xp = jnp.pad(imgs, ((0, 0), (2, 2), (2, 2), (0, 0)))
    pats = [xp[:, dy:dy + 7, dx:dx + 7, :] for dy in range(5) for dx in range(5)]
    cols5 = jnp.stack(pats, axis=3).reshape(N, 49, 75)
    cols5 = jnp.transpose(cols5, (1, 0, 2)).reshape(49 * N, 75)

    mask = _conv2_tap_mask(N)          # trace-time constants
    bias = _attn_bias(B, S)
    sel = _last_token_selector(B, S)

    args = [cols5, mask, bias, sel,
            packed["wc1"], packed["bc1"], packed["wc2"], packed["bc2"],
            packed["fw3"], packed["fb"], packed["pos"]]
    for lw in packed["layers"]:
        args.extend(lw[kk] for kk in _LAYER_KEYS)
    args.extend([packed["fc1_w"], packed["fc1_b"],
                 packed["fc2_w"], packed["fc2_b"]])

    out_cols = D if return_embedding else A

    def fullspec(shape):
        return pl.BlockSpec(shape, lambda i, _n=len(shape): (0,) * _n)

    kernel = functools.partial(
        _fused_forward_kernel, num_layers=num_layers, num_heads=num_heads,
        return_embedding=return_embedding)

    return pl.pallas_call(
        kernel,
        out_shape=jax.ShapeDtypeStruct((B, out_cols), jnp.float32),
        grid=(1,),
        in_specs=[fullspec(a.shape) for a in args],
        out_specs=fullspec((B, out_cols)),
        compiler_params=pltpu.CompilerParams(
            dimension_semantics=("arbitrary",)),
    )(*args)


if __name__ == "__main__":
    action_dim, hidden_dim, num_heads, num_layers = 6, 32, 4, 2
    B, S = 2, 4

    key = jax.random.PRNGKey(0)
    pkey, xkey = jax.random.split(key)
    params = init_params(pkey, action_dim, hidden_dim, num_heads, num_layers)
    packed = pack_params(params)                 # one-time weight repacking
    x = jax.random.normal(xkey, (B, S, 7, 7, 3), jnp.float32)

    fwd = jax.jit(functools.partial(transformer_policy_forward,
                                    num_heads=num_heads))
    logits = fwd(packed, x)
    jax.block_until_ready(logits)
    assert logits.shape == (B, action_dim)
    assert bool(jnp.all(jnp.isfinite(logits)))
    print("KERNEL_OK")
</pallas_src>

<mosaic_0001>
module attributes {stable_mosaic.version = 11 : i64} {
  func.func @_fused_forward_kernel(%arg0: i32, %arg1: memref<392x75xf32, #tpu.memory_space<vmem>>, %arg2: memref<392x288xf32, #tpu.memory_space<vmem>>, %arg3: memref<8x8xf32, #tpu.memory_space<vmem>>, %arg4: memref<2x8xf32, #tpu.memory_space<vmem>>, %arg5: memref<75x288xf32, #tpu.memory_space<vmem>>, %arg6: memref<1x288xf32, #tpu.memory_space<vmem>>, %arg7: memref<288x64xf32, #tpu.memory_space<vmem>>, %arg8: memref<1x64xf32, #tpu.memory_space<vmem>>, %arg9: memref<49x64x32xf32, #tpu.memory_space<vmem>>, %arg10: memref<1x32xf32, #tpu.memory_space<vmem>>, %arg11: memref<1x32xf32, #tpu.memory_space<vmem>>, %arg12: memref<32x96xf32, #tpu.memory_space<vmem>>, %arg13: memref<1x96xf32, #tpu.memory_space<vmem>>, %arg14: memref<32x32xf32, #tpu.memory_space<vmem>>, %arg15: memref<1x32xf32, #tpu.memory_space<vmem>>, %arg16: memref<1x32xf32, #tpu.memory_space<vmem>>, %arg17: memref<1x32xf32, #tpu.memory_space<vmem>>, %arg18: memref<32x128xf32, #tpu.memory_space<vmem>>, %arg19: memref<1x128xf32, #tpu.memory_space<vmem>>, %arg20: memref<128x32xf32, #tpu.memory_space<vmem>>, %arg21: memref<1x32xf32, #tpu.memory_space<vmem>>, %arg22: memref<1x32xf32, #tpu.memory_space<vmem>>, %arg23: memref<1x32xf32, #tpu.memory_space<vmem>>, %arg24: memref<32x96xf32, #tpu.memory_space<vmem>>, %arg25: memref<1x96xf32, #tpu.memory_space<vmem>>, %arg26: memref<32x32xf32, #tpu.memory_space<vmem>>, %arg27: memref<1x32xf32, #tpu.memory_space<vmem>>, %arg28: memref<1x32xf32, #tpu.memory_space<vmem>>, %arg29: memref<1x32xf32, #tpu.memory_space<vmem>>, %arg30: memref<32x128xf32, #tpu.memory_space<vmem>>, %arg31: memref<1x128xf32, #tpu.memory_space<vmem>>, %arg32: memref<128x32xf32, #tpu.memory_space<vmem>>, %arg33: memref<1x32xf32, #tpu.memory_space<vmem>>, %arg34: memref<1x32xf32, #tpu.memory_space<vmem>>, %arg35: memref<1x32xf32, #tpu.memory_space<vmem>>, %arg36: memref<32x32xf32, #tpu.memory_space<vmem>>, %arg37: memref<1x32xf32, #tpu.memory_space<vmem>>, %arg38: memref<32x6xf32, #tpu.memory_space<vmem>>, %arg39: memref<1x6xf32, #tpu.memory_space<vmem>>, %arg40: memref<2x6xf32, #tpu.memory_space<vmem>>) attributes {dimension_semantics = [#tpu.dimension_semantics<arbitrary>], iteration_bounds = array<i64: 1>, scalar_prefetch = 0 : i64, scratch_operands = 0 : i64, tpu.core_type = #tpu.core_type<tc>, window_params = [{pipeline_mode = #tpu.pipeline_mode<synchronous>, transform_indices = @transform_0, window_bounds = array<i64: 392, 75>}, {pipeline_mode = #tpu.pipeline_mode<synchronous>, transform_indices = @transform_1, window_bounds = array<i64: 392, 288>}, {pipeline_mode = #tpu.pipeline_mode<synchronous>, transform_indices = @transform_2, window_bounds = array<i64: 8, 8>}, {pipeline_mode = #tpu.pipeline_mode<synchronous>, transform_indices = @transform_3, window_bounds = array<i64: 2, 8>}, {pipeline_mode = #tpu.pipeline_mode<synchronous>, transform_indices = @transform_4, window_bounds = array<i64: 75, 288>}, {pipeline_mode = #tpu.pipeline_mode<synchronous>, transform_indices = @transform_5, window_bounds = array<i64: 1, 288>}, {pipeline_mode = #tpu.pipeline_mode<synchronous>, transform_indices = @transform_6, window_bounds = array<i64: 288, 64>}, {pipeline_mode = #tpu.pipeline_mode<synchronous>, transform_indices = @transform_7, window_bounds = array<i64: 1, 64>}, {pipeline_mode = #tpu.pipeline_mode<synchronous>, transform_indices = @transform_8, window_bounds = array<i64: 49, 64, 32>}, {pipeline_mode = #tpu.pipeline_mode<synchronous>, transform_indices = @transform_9, window_bounds = array<i64: 1, 32>}, {pipeline_mode = #tpu.pipeline_mode<synchronous>, transform_indices = @transform_10, window_bounds = array<i64: 1, 32>}, {pipeline_mode = #tpu.pipeline_mode<synchronous>, transform_indices = @transform_11, window_bounds = array<i64: 32, 96>}, {pipeline_mode = #tpu.pipeline_mode<synchronous>, transform_indices = @transform_12, window_bounds = array<i64: 1, 96>}, {pipeline_mode = #tpu.pipeline_mode<synchronous>, transform_indices = @transform_13, window_bounds = array<i64: 32, 32>}, {pipeline_mode = #tpu.pipeline_mode<synchronous>, transform_indices = @transform_14, window_bounds = array<i64: 1, 32>}, {pipeline_mode = #tpu.pipeline_mode<synchronous>, transform_indices = @transform_15, window_bounds = array<i64: 1, 32>}, {pipeline_mode = #tpu.pipeline_mode<synchronous>, transform_indices = @transform_16, window_bounds = array<i64: 1, 32>}, {pipeline_mode = #tpu.pipeline_mode<synchronous>, transform_indices = @transform_17, window_bounds = array<i64: 32, 128>}, {pipeline_mode = #tpu.pipeline_mode<synchronous>, transform_indices = @transform_18, window_bounds = array<i64: 1, 128>}, {pipeline_mode = #tpu.pipeline_mode<synchronous>, transform_indices = @transform_19, window_bounds = array<i64: 128, 32>}, {pipeline_mode = #tpu.pipeline_mode<synchronous>, transform_indices = @transform_20, window_bounds = array<i64: 1, 32>}, {pipeline_mode = #tpu.pipeline_mode<synchronous>, transform_indices = @transform_21, window_bounds = array<i64: 1, 32>}, {pipeline_mode = #tpu.pipeline_mode<synchronous>, transform_indices = @transform_22, window_bounds = array<i64: 1, 32>}, {pipeline_mode = #tpu.pipeline_mode<synchronous>, transform_indices = @transform_23, window_bounds = array<i64: 32, 96>}, {pipeline_mode = #tpu.pipeline_mode<synchronous>, transform_indices = @transform_24, window_bounds = array<i64: 1, 96>}, {pipeline_mode = #tpu.pipeline_mode<synchronous>, transform_indices = @transform_25, window_bounds = array<i64: 32, 32>}, {pipeline_mode = #tpu.pipeline_mode<synchronous>, transform_indices = @transform_26, window_bounds = array<i64: 1, 32>}, {pipeline_mode = #tpu.pipeline_mode<synchronous>, transform_indices = @transform_27, window_bounds = array<i64: 1, 32>}, {pipeline_mode = #tpu.pipeline_mode<synchronous>, transform_indices = @transform_28, window_bounds = array<i64: 1, 32>}, {pipeline_mode = #tpu.pipeline_mode<synchronous>, transform_indices = @transform_29, window_bounds = array<i64: 32, 128>}, {pipeline_mode = #tpu.pipeline_mode<synchronous>, transform_indices = @transform_30, window_bounds = array<i64: 1, 128>}, {pipeline_mode = #tpu.pipeline_mode<synchronous>, transform_indices = @transform_31, window_bounds = array<i64: 128, 32>}, {pipeline_mode = #tpu.pipeline_mode<synchronous>, transform_indices = @transform_32, window_bounds = array<i64: 1, 32>}, {pipeline_mode = #tpu.pipeline_mode<synchronous>, transform_indices = @transform_33, window_bounds = array<i64: 1, 32>}, {pipeline_mode = #tpu.pipeline_mode<synchronous>, transform_indices = @transform_34, window_bounds = array<i64: 1, 32>}, {pipeline_mode = #tpu.pipeline_mode<synchronous>, transform_indices = @transform_35, window_bounds = array<i64: 32, 32>}, {pipeline_mode = #tpu.pipeline_mode<synchronous>, transform_indices = @transform_36, window_bounds = array<i64: 1, 32>}, {pipeline_mode = #tpu.pipeline_mode<synchronous>, transform_indices = @transform_37, window_bounds = array<i64: 32, 6>}, {pipeline_mode = #tpu.pipeline_mode<synchronous>, transform_indices = @transform_38, window_bounds = array<i64: 1, 6>}, {pipeline_mode = #tpu.pipeline_mode<synchronous>, transform_indices = @transform_39, window_bounds = array<i64: 2, 6>}]} {
    %c0 = arith.constant 0 : index
    %c0_0 = arith.constant 0 : index
    %c0_1 = arith.constant 0 : index
    %0 = vector.load %arg9[%c0, %c0_0, %c0_1] : memref<49x64x32xf32, #tpu.memory_space<vmem>>, vector<49x64x32xf32>
    %c0_2 = arith.constant 0 : index
    %c0_3 = arith.constant 0 : index
    %1 = vector.load %arg1[%c0_2, %c0_3] : memref<392x75xf32, #tpu.memory_space<vmem>>, vector<392x75xf32>
    %c0_4 = arith.constant 0 : index
    %c0_5 = arith.constant 0 : index
    %2 = vector.load %arg5[%c0_4, %c0_5] : memref<75x288xf32, #tpu.memory_space<vmem>>, vector<75x288xf32>
    %cst = arith.constant dense<0.000000e+00> : vector<392x288xf32>
    %3 = tpu.matmul %1, %2, %cst {dimension_numbers = #tpu.dot_dimension_numbers<[1], [0], [0], [1], [0, 0, 1, 1], [], []>} : vector<392x75xf32>, vector<75x288xf32>, vector<392x288xf32> -> vector<392x288xf32>
    %c0_6 = arith.constant 0 : index
    %c0_7 = arith.constant 0 : index
    %4 = vector.load %arg6[%c0_6, %c0_7] : memref<1x288xf32, #tpu.memory_space<vmem>>, vector<1x288xf32>
    %5 = vector.broadcast %4 : vector<1x288xf32> to vector<392x288xf32>
    %6 = arith.addf %3, %5 : vector<392x288xf32>
    %cst_8 = arith.constant 0.000000e+00 : f32
    %7 = vector.broadcast %cst_8 : f32 to vector<392x288xf32>
    %8 = arith.maximumf %6, %7 : vector<392x288xf32>
    %c0_9 = arith.constant 0 : index
    %c0_10 = arith.constant 0 : index
    %9 = vector.load %arg2[%c0_9, %c0_10] : memref<392x288xf32, #tpu.memory_space<vmem>>, vector<392x288xf32>
    %10 = arith.mulf %8, %9 : vector<392x288xf32>
    %c0_11 = arith.constant 0 : index
    %c0_12 = arith.constant 0 : index
    %11 = vector.load %arg7[%c0_11, %c0_12] : memref<288x64xf32, #tpu.memory_space<vmem>>, vector<288x64xf32>
    %cst_13 = arith.constant dense<0.000000e+00> : vector<392x64xf32>
    %12 = tpu.matmul %10, %11, %cst_13 {dimension_numbers = #tpu.dot_dimension_numbers<[1], [0], [0], [1], [0, 0, 1, 1], [], []>} : vector<392x288xf32>, vector<288x64xf32>, vector<392x64xf32> -> vector<392x64xf32>
    %c0_14 = arith.constant 0 : index
    %c0_15 = arith.constant 0 : index
    %13 = vector.load %arg8[%c0_14, %c0_15] : memref<1x64xf32, #tpu.memory_space<vmem>>, vector<1x64xf32>
    %14 = vector.broadcast %13 : vector<1x64xf32> to vector<392x64xf32>
    %15 = arith.addf %12, %14 : vector<392x64xf32>
    %cst_16 = arith.constant 0.000000e+00 : f32
    %16 = vector.broadcast %cst_16 : f32 to vector<392x64xf32>
    %17 = arith.maximumf %15, %16 : vector<392x64xf32>
    %18 = vector.extract_strided_slice %17 {offsets = [0, 0], sizes = [8, 64], strides = [1, 1]} : vector<392x64xf32> to vector<8x64xf32>
    %19 = vector.extract_strided_slice %0 {offsets = [0, 0, 0], sizes = [1, 64, 32], strides = [1, 1, 1]} : vector<49x64x32xf32> to vector<1x64x32xf32>
    %20 = vector.shape_cast %19 : vector<1x64x32xf32> to vector<64x32xf32>
    %cst_17 = arith.constant dense<0.000000e+00> : vector<8x32xf32>
    %21 = tpu.matmul %18, %20, %cst_17 {dimension_numbers = #tpu.dot_dimension_numbers<[1], [0], [0], [1], [0, 0, 1, 1], [], []>} : vector<8x64xf32>, vector<64x32xf32>, vector<8x32xf32> -> vector<8x32xf32>
    %22 = vector.extract_strided_slice %17 {offsets = [8, 0], sizes = [8, 64], strides = [1, 1]} : vector<392x64xf32> to vector<8x64xf32>
    %23 = vector.extract_strided_slice %0 {offsets = [1, 0, 0], sizes = [1, 64, 32], strides = [1, 1, 1]} : vector<49x64x32xf32> to vector<1x64x32xf32>
    %24 = vector.shape_cast %23 : vector<1x64x32xf32> to vector<64x32xf32>
    %cst_18 = arith.constant dense<0.000000e+00> : vector<8x32xf32>
    %25 = tpu.matmul %22, %24, %cst_18 {dimension_numbers = #tpu.dot_dimension_numbers<[1], [0], [0], [1], [0, 0, 1, 1], [], []>} : vector<8x64xf32>, vector<64x32xf32>, vector<8x32xf32> -> vector<8x32xf32>
    %26 = arith.addf %21, %25 : vector<8x32xf32>
    %27 = vector.extract_strided_slice %17 {offsets = [16, 0], sizes = [8, 64], strides = [1, 1]} : vector<392x64xf32> to vector<8x64xf32>
    %28 = vector.extract_strided_slice %0 {offsets = [2, 0, 0], sizes = [1, 64, 32], strides = [1, 1, 1]} : vector<49x64x32xf32> to vector<1x64x32xf32>
    %29 = vector.shape_cast %28 : vector<1x64x32xf32> to vector<64x32xf32>
    %cst_19 = arith.constant dense<0.000000e+00> : vector<8x32xf32>
    %30 = tpu.matmul %27, %29, %cst_19 {dimension_numbers = #tpu.dot_dimension_numbers<[1], [0], [0], [1], [0, 0, 1, 1], [], []>} : vector<8x64xf32>, vector<64x32xf32>, vector<8x32xf32> -> vector<8x32xf32>
    %31 = arith.addf %26, %30 : vector<8x32xf32>
    %32 = vector.extract_strided_slice %17 {offsets = [24, 0], sizes = [8, 64], strides = [1, 1]} : vector<392x64xf32> to vector<8x64xf32>
    %33 = vector.extract_strided_slice %0 {offsets = [3, 0, 0], sizes = [1, 64, 32], strides = [1, 1, 1]} : vector<49x64x32xf32> to vector<1x64x32xf32>
    %34 = vector.shape_cast %33 : vector<1x64x32xf32> to vector<64x32xf32>
    %cst_20 = arith.constant dense<0.000000e+00> : vector<8x32xf32>
    %35 = tpu.matmul %32, %34, %cst_20 {dimension_numbers = #tpu.dot_dimension_numbers<[1], [0], [0], [1], [0, 0, 1, 1], [], []>} : vector<8x64xf32>, vector<64x32xf32>, vector<8x32xf32> -> vector<8x32xf32>
    %36 = arith.addf %31, %35 : vector<8x32xf32>
    %37 = vector.extract_strided_slice %17 {offsets = [32, 0], sizes = [8, 64], strides = [1, 1]} : vector<392x64xf32> to vector<8x64xf32>
    %38 = vector.extract_strided_slice %0 {offsets = [4, 0, 0], sizes = [1, 64, 32], strides = [1, 1, 1]} : vector<49x64x32xf32> to vector<1x64x32xf32>
    %39 = vector.shape_cast %38 : vector<1x64x32xf32> to vector<64x32xf32>
    %cst_21 = arith.constant dense<0.000000e+00> : vector<8x32xf32>
    %40 = tpu.matmul %37, %39, %cst_21 {dimension_numbers = #tpu.dot_dimension_numbers<[1], [0], [0], [1], [0, 0, 1, 1], [], []>} : vector<8x64xf32>, vector<64x32xf32>, vector<8x32xf32> -> vector<8x32xf32>
    %41 = arith.addf %36, %40 : vector<8x32xf32>
    %42 = vector.extract_strided_slice %17 {offsets = [40, 0], sizes = [8, 64], strides = [1, 1]} : vector<392x64xf32> to vector<8x64xf32>
    %43 = vector.extract_strided_slice %0 {offsets = [5, 0, 0], sizes = [1, 64, 32], strides = [1, 1, 1]} : vector<49x64x32xf32> to vector<1x64x32xf32>
    %44 = vector.shape_cast %43 : vector<1x64x32xf32> to vector<64x32xf32>
    %cst_22 = arith.constant dense<0.000000e+00> : vector<8x32xf32>
    %45 = tpu.matmul %42, %44, %cst_22 {dimension_numbers = #tpu.dot_dimension_numbers<[1], [0], [0], [1], [0, 0, 1, 1], [], []>} : vector<8x64xf32>, vector<64x32xf32>, vector<8x32xf32> -> vector<8x32xf32>
    %46 = arith.addf %41, %45 : vector<8x32xf32>
    %47 = vector.extract_strided_slice %17 {offsets = [48, 0], sizes = [8, 64], strides = [1, 1]} : vector<392x64xf32> to vector<8x64xf32>
    %48 = vector.extract_strided_slice %0 {offsets = [6, 0, 0], sizes = [1, 64, 32], strides = [1, 1, 1]} : vector<49x64x32xf32> to vector<1x64x32xf32>
    %49 = vector.shape_cast %48 : vector<1x64x32xf32> to vector<64x32xf32>
    %cst_23 = arith.constant dense<0.000000e+00> : vector<8x32xf32>
    %50 = tpu.matmul %47, %49, %cst_23 {dimension_numbers = #tpu.dot_dimension_numbers<[1], [0], [0], [1], [0, 0, 1, 1], [], []>} : vector<8x64xf32>, vector<64x32xf32>, vector<8x32xf32> -> vector<8x32xf32>
    %51 = arith.addf %46, %50 : vector<8x32xf32>
    %52 = vector.extract_strided_slice %17 {offsets = [56, 0], sizes = [8, 64], strides = [1, 1]} : vector<392x64xf32> to vector<8x64xf32>
    %53 = vector.extract_strided_slice %0 {offsets = [7, 0, 0], sizes = [1, 64, 32], strides = [1, 1, 1]} : vector<49x64x32xf32> to vector<1x64x32xf32>
    %54 = vector.shape_cast %53 : vector<1x64x32xf32> to vector<64x32xf32>
    %cst_24 = arith.constant dense<0.000000e+00> : vector<8x32xf32>
    %55 = tpu.matmul %52, %54, %cst_24 {dimension_numbers = #tpu.dot_dimension_numbers<[1], [0], [0], [1], [0, 0, 1, 1], [], []>} : vector<8x64xf32>, vector<64x32xf32>, vector<8x32xf32> -> vector<8x32xf32>
    %56 = arith.addf %51, %55 : vector<8x32xf32>
    %57 = vector.extract_strided_slice %17 {offsets = [64, 0], sizes = [8, 64], strides = [1, 1]} : vector<392x64xf32> to vector<8x64xf32>
    %58 = vector.extract_strided_slice %0 {offsets = [8, 0, 0], sizes = [1, 64, 32], strides = [1, 1, 1]} : vector<49x64x32xf32> to vector<1x64x32xf32>
    %59 = vector.shape_cast %58 : vector<1x64x32xf32> to vector<64x32xf32>
    %cst_25 = arith.constant dense<0.000000e+00> : vector<8x32xf32>
    %60 = tpu.matmul %57, %59, %cst_25 {dimension_numbers = #tpu.dot_dimension_numbers<[1], [0], [0], [1], [0, 0, 1, 1], [], []>} : vector<8x64xf32>, vector<64x32xf32>, vector<8x32xf32> -> vector<8x32xf32>
    %61 = arith.addf %56, %60 : vector<8x32xf32>
    %62 = vector.extract_strided_slice %17 {offsets = [72, 0], sizes = [8, 64], strides = [1, 1]} : vector<392x64xf32> to vector<8x64xf32>
    %63 = vector.extract_strided_slice %0 {offsets = [9, 0, 0], sizes = [1, 64, 32], strides = [1, 1, 1]} : vector<49x64x32xf32> to vector<1x64x32xf32>
    %64 = vector.shape_cast %63 : vector<1x64x32xf32> to vector<64x32xf32>
    %cst_26 = arith.constant dense<0.000000e+00> : vector<8x32xf32>
    %65 = tpu.matmul %62, %64, %cst_26 {dimension_numbers = #tpu.dot_dimension_numbers<[1], [0], [0], [1], [0, 0, 1, 1], [], []>} : vector<8x64xf32>, vector<64x32xf32>, vector<8x32xf32> -> vector<8x32xf32>
    %66 = arith.addf %61, %65 : vector<8x32xf32>
    %67 = vector.extract_strided_slice %17 {offsets = [80, 0], sizes = [8, 64], strides = [1, 1]} : vector<392x64xf32> to vector<8x64xf32>
    %68 = vector.extract_strided_slice %0 {offsets = [10, 0, 0], sizes = [1, 64, 32], strides = [1, 1, 1]} : vector<49x64x32xf32> to vector<1x64x32xf32>
    %69 = vector.shape_cast %68 : vector<1x64x32xf32> to vector<64x32xf32>
    %cst_27 = arith.constant dense<0.000000e+00> : vector<8x32xf32>
    %70 = tpu.matmul %67, %69, %cst_27 {dimension_numbers = #tpu.dot_dimension_numbers<[1], [0], [0], [1], [0, 0, 1, 1], [], []>} : vector<8x64xf32>, vector<64x32xf32>, vector<8x32xf32> -> vector<8x32xf32>
    %71 = arith.addf %66, %70 : vector<8x32xf32>
    %72 = vector.extract_strided_slice %17 {offsets = [88, 0], sizes = [8, 64], strides = [1, 1]} : vector<392x64xf32> to vector<8x64xf32>
    %73 = vector.extract_strided_slice %0 {offsets = [11, 0, 0], sizes = [1, 64, 32], strides = [1, 1, 1]} : vector<49x64x32xf32> to vector<1x64x32xf32>
    %74 = vector.shape_cast %73 : vector<1x64x32xf32> to vector<64x32xf32>
    %cst_28 = arith.constant dense<0.000000e+00> : vector<8x32xf32>
    %75 = tpu.matmul %72, %74, %cst_28 {dimension_numbers = #tpu.dot_dimension_numbers<[1], [0], [0], [1], [0, 0, 1, 1], [], []>} : vector<8x64xf32>, vector<64x32xf32>, vector<8x32xf32> -> vector<8x32xf32>
    %76 = arith.addf %71, %75 : vector<8x32xf32>
    %77 = vector.extract_strided_slice %17 {offsets = [96, 0], sizes = [8, 64], strides = [1, 1]} : vector<392x64xf32> to vector<8x64xf32>
    %78 = vector.extract_strided_slice %0 {offsets = [12, 0, 0], sizes = [1, 64, 32], strides = [1, 1, 1]} : vector<49x64x32xf32> to vector<1x64x32xf32>
    %79 = vector.shape_cast %78 : vector<1x64x32xf32> to vector<64x32xf32>
    %cst_29 = arith.constant dense<0.000000e+00> : vector<8x32xf32>
    %80 = tpu.matmul %77, %79, %cst_29 {dimension_numbers = #tpu.dot_dimension_numbers<[1], [0], [0], [1], [0, 0, 1, 1], [], []>} : vector<8x64xf32>, vector<64x32xf32>, vector<8x32xf32> -> vector<8x32xf32>
    %81 = arith.addf %76, %80 : vector<8x32xf32>
    %82 = vector.extract_strided_slice %17 {offsets = [104, 0], sizes = [8, 64], strides = [1, 1]} : vector<392x64xf32> to vector<8x64xf32>
    %83 = vector.extract_strided_slice %0 {offsets = [13, 0, 0], sizes = [1, 64, 32], strides = [1, 1, 1]} : vector<49x64x32xf32> to vector<1x64x32xf32>
    %84 = vector.shape_cast %83 : vector<1x64x32xf32> to vector<64x32xf32>
    %cst_30 = arith.constant dense<0.000000e+00> : vector<8x32xf32>
    %85 = tpu.matmul %82, %84, %cst_30 {dimension_numbers = #tpu.dot_dimension_numbers<[1], [0], [0], [1], [0, 0, 1, 1], [], []>} : vector<8x64xf32>, vector<64x32xf32>, vector<8x32xf32> -> vector<8x32xf32>
    %86 = arith.addf %81, %85 : vector<8x32xf32>
    %87 = vector.extract_strided_slice %17 {offsets = [112, 0], sizes = [8, 64], strides = [1, 1]} : vector<392x64xf32> to vector<8x64xf32>
    %88 = vector.extract_strided_slice %0 {offsets = [14, 0, 0], sizes = [1, 64, 32], strides = [1, 1, 1]} : vector<49x64x32xf32> to vector<1x64x32xf32>
    %89 = vector.shape_cast %88 : vector<1x64x32xf32> to vector<64x32xf32>
    %cst_31 = arith.constant dense<0.000000e+00> : vector<8x32xf32>
    %90 = tpu.matmul %87, %89, %cst_31 {dimension_numbers = #tpu.dot_dimension_numbers<[1], [0], [0], [1], [0, 0, 1, 1], [], []>} : vector<8x64xf32>, vector<64x32xf32>, vector<8x32xf32> -> vector<8x32xf32>
    %91 = arith.addf %86, %90 : vector<8x32xf32>
    %92 = vector.extract_strided_slice %17 {offsets = [120, 0], sizes = [8, 64], strides = [1, 1]} : vector<392x64xf32> to vector<8x64xf32>
    %93 = vector.extract_strided_slice %0 {offsets = [15, 0, 0], sizes = [1, 64, 32], strides = [1, 1, 1]} : vector<49x64x32xf32> to vector<1x64x32xf32>
    %94 = vector.shape_cast %93 : vector<1x64x32xf32> to vector<64x32xf32>
    %cst_32 = arith.constant dense<0.000000e+00> : vector<8x32xf32>
    %95 = tpu.matmul %92, %94, %cst_32 {dimension_numbers = #tpu.dot_dimension_numbers<[1], [0], [0], [1], [0, 0, 1, 1], [], []>} : vector<8x64xf32>, vector<64x32xf32>, vector<8x32xf32> -> vector<8x32xf32>
    %96 = arith.addf %91, %95 : vector<8x32xf32>
    %97 = vector.extract_strided_slice %17 {offsets = [128, 0], sizes = [8, 64], strides = [1, 1]} : vector<392x64xf32> to vector<8x64xf32>
    %98 = vector.extract_strided_slice %0 {offsets = [16, 0, 0], sizes = [1, 64, 32], strides = [1, 1, 1]} : vector<49x64x32xf32> to vector<1x64x32xf32>
    %99 = vector.shape_cast %98 : vector<1x64x32xf32> to vector<64x32xf32>
    %cst_33 = arith.constant dense<0.000000e+00> : vector<8x32xf32>
    %100 = tpu.matmul %97, %99, %cst_33 {dimension_numbers = #tpu.dot_dimension_numbers<[1], [0], [0], [1], [0, 0, 1, 1], [], []>} : vector<8x64xf32>, vector<64x32xf32>, vector<8x32xf32> -> vector<8x32xf32>
    %101 = arith.addf %96, %100 : vector<8x32xf32>
    %102 = vector.extract_strided_slice %17 {offsets = [136, 0], sizes = [8, 64], strides = [1, 1]} : vector<392x64xf32> to vector<8x64xf32>
    %103 = vector.extract_strided_slice %0 {offsets = [17, 0, 0], sizes = [1, 64, 32], strides = [1, 1, 1]} : vector<49x64x32xf32> to vector<1x64x32xf32>
    %104 = vector.shape_cast %103 : vector<1x64x32xf32> to vector<64x32xf32>
    %cst_34 = arith.constant dense<0.000000e+00> : vector<8x32xf32>
    %105 = tpu.matmul %102, %104, %cst_34 {dimension_numbers = #tpu.dot_dimension_numbers<[1], [0], [0], [1], [0, 0, 1, 1], [], []>} : vector<8x64xf32>, vector<64x32xf32>, vector<8x32xf32> -> vector<8x32xf32>
    %106 = arith.addf %101, %105 : vector<8x32xf32>
    %107 = vector.extract_strided_slice %17 {offsets = [144, 0], sizes = [8, 64], strides = [1, 1]} : vector<392x64xf32> to vector<8x64xf32>
    %108 = vector.extract_strided_slice %0 {offsets = [18, 0, 0], sizes = [1, 64, 32], strides = [1, 1, 1]} : vector<49x64x32xf32> to vector<1x64x32xf32>
    %109 = vector.shape_cast %108 : vector<1x64x32xf32> to vector<64x32xf32>
    %cst_35 = arith.constant dense<0.000000e+00> : vector<8x32xf32>
    %110 = tpu.matmul %107, %109, %cst_35 {dimension_numbers = #tpu.dot_dimension_numbers<[1], [0], [0], [1], [0, 0, 1, 1], [], []>} : vector<8x64xf32>, vector<64x32xf32>, vector<8x32xf32> -> vector<8x32xf32>
    %111 = arith.addf %106, %110 : vector<8x32xf32>
    %112 = vector.extract_strided_slice %17 {offsets = [152, 0], sizes = [8, 64], strides = [1, 1]} : vector<392x64xf32> to vector<8x64xf32>
    %113 = vector.extract_strided_slice %0 {offsets = [19, 0, 0], sizes = [1, 64, 32], strides = [1, 1, 1]} : vector<49x64x32xf32> to vector<1x64x32xf32>
    %114 = vector.shape_cast %113 : vector<1x64x32xf32> to vector<64x32xf32>
    %cst_36 = arith.constant dense<0.000000e+00> : vector<8x32xf32>
    %115 = tpu.matmul %112, %114, %cst_36 {dimension_numbers = #tpu.dot_dimension_numbers<[1], [0], [0], [1], [0, 0, 1, 1], [], []>} : vector<8x64xf32>, vector<64x32xf32>, vector<8x32xf32> -> vector<8x32xf32>
    %116 = arith.addf %111, %115 : vector<8x32xf32>
    %117 = vector.extract_strided_slice %17 {offsets = [160, 0], sizes = [8, 64], strides = [1, 1]} : vector<392x64xf32> to vector<8x64xf32>
    %118 = vector.extract_strided_slice %0 {offsets = [20, 0, 0], sizes = [1, 64, 32], strides = [1, 1, 1]} : vector<49x64x32xf32> to vector<1x64x32xf32>
    %119 = vector.shape_cast %118 : vector<1x64x32xf32> to vector<64x32xf32>
    %cst_37 = arith.constant dense<0.000000e+00> : vector<8x32xf32>
    %120 = tpu.matmul %117, %119, %cst_37 {dimension_numbers = #tpu.dot_dimension_numbers<[1], [0], [0], [1], [0, 0, 1, 1], [], []>} : vector<8x64xf32>, vector<64x32xf32>, vector<8x32xf32> -> vector<8x32xf32>
    %121 = arith.addf %116, %120 : vector<8x32xf32>
    %122 = vector.extract_strided_slice %17 {offsets = [168, 0], sizes = [8, 64], strides = [1, 1]} : vector<392x64xf32> to vector<8x64xf32>
    %123 = vector.extract_strided_slice %0 {offsets = [21, 0, 0], sizes = [1, 64, 32], strides = [1, 1, 1]} : vector<49x64x32xf32> to vector<1x64x32xf32>
    %124 = vector.shape_cast %123 : vector<1x64x32xf32> to vector<64x32xf32>
    %cst_38 = arith.constant dense<0.000000e+00> : vector<8x32xf32>
    %125 = tpu.matmul %122, %124, %cst_38 {dimension_numbers = #tpu.dot_dimension_numbers<[1], [0], [0], [1], [0, 0, 1, 1], [], []>} : vector<8x64xf32>, vector<64x32xf32>, vector<8x32xf32> -> vector<8x32xf32>
    %126 = arith.addf %121, %125 : vector<8x32xf32>
    %127 = vector.extract_strided_slice %17 {offsets = [176, 0], sizes = [8, 64], strides = [1, 1]} : vector<392x64xf32> to vector<8x64xf32>
    %128 = vector.extract_strided_slice %0 {offsets = [22, 0, 0], sizes = [1, 64, 32], strides = [1, 1, 1]} : vector<49x64x32xf32> to vector<1x64x32xf32>
    %129 = vector.shape_cast %128 : vector<1x64x32xf32> to vector<64x32xf32>
    %cst_39 = arith.constant dense<0.000000e+00> : vector<8x32xf32>
    %130 = tpu.matmul %127, %129, %cst_39 {dimension_numbers = #tpu.dot_dimension_numbers<[1], [0], [0], [1], [0, 0, 1, 1], [], []>} : vector<8x64xf32>, vector<64x32xf32>, vector<8x32xf32> -> vector<8x32xf32>
    %131 = arith.addf %126, %130 : vector<8x32xf32>
    %132 = vector.extract_strided_slice %17 {offsets = [184, 0], sizes = [8, 64], strides = [1, 1]} : vector<392x64xf32> to vector<8x64xf32>
    %133 = vector.extract_strided_slice %0 {offsets = [23, 0, 0], sizes = [1, 64, 32], strides = [1, 1, 1]} : vector<49x64x32xf32> to vector<1x64x32xf32>
    %134 = vector.shape_cast %133 : vector<1x64x32xf32> to vector<64x32xf32>
    %cst_40 = arith.constant dense<0.000000e+00> : vector<8x32xf32>
    %135 = tpu.matmul %132, %134, %cst_40 {dimension_numbers = #tpu.dot_dimension_numbers<[1], [0], [0], [1], [0, 0, 1, 1], [], []>} : vector<8x64xf32>, vector<64x32xf32>, vector<8x32xf32> -> vector<8x32xf32>
    %136 = arith.addf %131, %135 : vector<8x32xf32>
    %137 = vector.extract_strided_slice %17 {offsets = [192, 0], sizes = [8, 64], strides = [1, 1]} : vector<392x64xf32> to vector<8x64xf32>
    %138 = vector.extract_strided_slice %0 {offsets = [24, 0, 0], sizes = [1, 64, 32], strides = [1, 1, 1]} : vector<49x64x32xf32> to vector<1x64x32xf32>
    %139 = vector.shape_cast %138 : vector<1x64x32xf32> to vector<64x32xf32>
    %cst_41 = arith.constant dense<0.000000e+00> : vector<8x32xf32>
    %140 = tpu.matmul %137, %139, %cst_41 {dimension_numbers = #tpu.dot_dimension_numbers<[1], [0], [0], [1], [0, 0, 1, 1], [], []>} : vector<8x64xf32>, vector<64x32xf32>, vector<8x32xf32> -> vector<8x32xf32>
    %141 = arith.addf %136, %140 : vector<8x32xf32>
    %142 = vector.extract_strided_slice %17 {offsets = [200, 0], sizes = [8, 64], strides = [1, 1]} : vector<392x64xf32> to vector<8x64xf32>
    %143 = vector.extract_strided_slice %0 {offsets = [25, 0, 0], sizes = [1, 64, 32], strides = [1, 1, 1]} : vector<49x64x32xf32> to vector<1x64x32xf32>
    %144 = vector.shape_cast %143 : vector<1x64x32xf32> to vector<64x32xf32>
    %cst_42 = arith.constant dense<0.000000e+00> : vector<8x32xf32>
    %145 = tpu.matmul %142, %144, %cst_42 {dimension_numbers = #tpu.dot_dimension_numbers<[1], [0], [0], [1], [0, 0, 1, 1], [], []>} : vector<8x64xf32>, vector<64x32xf32>, vector<8x32xf32> -> vector<8x32xf32>
    %146 = arith.addf %141, %145 : vector<8x32xf32>
    %147 = vector.extract_strided_slice %17 {offsets = [208, 0], sizes = [8, 64], strides = [1, 1]} : vector<392x64xf32> to vector<8x64xf32>
    %148 = vector.extract_strided_slice %0 {offsets = [26, 0, 0], sizes = [1, 64, 32], strides = [1, 1, 1]} : vector<49x64x32xf32> to vector<1x64x32xf32>
    %149 = vector.shape_cast %148 : vector<1x64x32xf32> to vector<64x32xf32>
    %cst_43 = arith.constant dense<0.000000e+00> : vector<8x32xf32>
    %150 = tpu.matmul %147, %149, %cst_43 {dimension_numbers = #tpu.dot_dimension_numbers<[1], [0], [0], [1], [0, 0, 1, 1], [], []>} : vector<8x64xf32>, vector<64x32xf32>, vector<8x32xf32> -> vector<8x32xf32>
    %151 = arith.addf %146, %150 : vector<8x32xf32>
    %152 = vector.extract_strided_slice %17 {offsets = [216, 0], sizes = [8, 64], strides = [1, 1]} : vector<392x64xf32> to vector<8x64xf32>
    %153 = vector.extract_strided_slice %0 {offsets = [27, 0, 0], sizes = [1, 64, 32], strides = [1, 1, 1]} : vector<49x64x32xf32> to vector<1x64x32xf32>
    %154 = vector.shape_cast %153 : vector<1x64x32xf32> to vector<64x32xf32>
    %cst_44 = arith.constant dense<0.000000e+00> : vector<8x32xf32>
    %155 = tpu.matmul %152, %154, %cst_44 {dimension_numbers = #tpu.dot_dimension_numbers<[1], [0], [0], [1], [0, 0, 1, 1], [], []>} : vector<8x64xf32>, vector<64x32xf32>, vector<8x32xf32> -> vector<8x32xf32>
    %156 = arith.addf %151, %155 : vector<8x32xf32>
    %157 = vector.extract_strided_slice %17 {offsets = [224, 0], sizes = [8, 64], strides = [1, 1]} : vector<392x64xf32> to vector<8x64xf32>
    %158 = vector.extract_strided_slice %0 {offsets = [28, 0, 0], sizes = [1, 64, 32], strides = [1, 1, 1]} : vector<49x64x32xf32> to vector<1x64x32xf32>
    %159 = vector.shape_cast %158 : vector<1x64x32xf32> to vector<64x32xf32>
    %cst_45 = arith.constant dense<0.000000e+00> : vector<8x32xf32>
    %160 = tpu.matmul %157, %159, %cst_45 {dimension_numbers = #tpu.dot_dimension_numbers<[1], [0], [0], [1], [0, 0, 1, 1], [], []>} : vector<8x64xf32>, vector<64x32xf32>, vector<8x32xf32> -> vector<8x32xf32>
    %161 = arith.addf %156, %160 : vector<8x32xf32>
    %162 = vector.extract_strided_slice %17 {offsets = [232, 0], sizes = [8, 64], strides = [1, 1]} : vector<392x64xf32> to vector<8x64xf32>
    %163 = vector.extract_strided_slice %0 {offsets = [29, 0, 0], sizes = [1, 64, 32], strides = [1, 1, 1]} : vector<49x64x32xf32> to vector<1x64x32xf32>
    %164 = vector.shape_cast %163 : vector<1x64x32xf32> to vector<64x32xf32>
    %cst_46 = arith.constant dense<0.000000e+00> : vector<8x32xf32>
    %165 = tpu.matmul %162, %164, %cst_46 {dimension_numbers = #tpu.dot_dimension_numbers<[1], [0], [0], [1], [0, 0, 1, 1], [], []>} : vector<8x64xf32>, vector<64x32xf32>, vector<8x32xf32> -> vector<8x32xf32>
    %166 = arith.addf %161, %165 : vector<8x32xf32>
    %167 = vector.extract_strided_slice %17 {offsets = [240, 0], sizes = [8, 64], strides = [1, 1]} : vector<392x64xf32> to vector<8x64xf32>
    %168 = vector.extract_strided_slice %0 {offsets = [30, 0, 0], sizes = [1, 64, 32], strides = [1, 1, 1]} : vector<49x64x32xf32> to vector<1x64x32xf32>
    %169 = vector.shape_cast %168 : vector<1x64x32xf32> to vector<64x32xf32>
    %cst_47 = arith.constant dense<0.000000e+00> : vector<8x32xf32>
    %170 = tpu.matmul %167, %169, %cst_47 {dimension_numbers = #tpu.dot_dimension_numbers<[1], [0], [0], [1], [0, 0, 1, 1], [], []>} : vector<8x64xf32>, vector<64x32xf32>, vector<8x32xf32> -> vector<8x32xf32>
    %171 = arith.addf %166, %170 : vector<8x32xf32>
    %172 = vector.extract_strided_slice %17 {offsets = [248, 0], sizes = [8, 64], strides = [1, 1]} : vector<392x64xf32> to vector<8x64xf32>
    %173 = vector.extract_strided_slice %0 {offsets = [31, 0, 0], sizes = [1, 64, 32], strides = [1, 1, 1]} : vector<49x64x32xf32> to vector<1x64x32xf32>
    %174 = vector.shape_cast %173 : vector<1x64x32xf32> to vector<64x32xf32>
    %cst_48 = arith.constant dense<0.000000e+00> : vector<8x32xf32>
    %175 = tpu.matmul %172, %174, %cst_48 {dimension_numbers = #tpu.dot_dimension_numbers<[1], [0], [0], [1], [0, 0, 1, 1], [], []>} : vector<8x64xf32>, vector<64x32xf32>, vector<8x32xf32> -> vector<8x32xf32>
    %176 = arith.addf %171, %175 : vector<8x32xf32>
    %177 = vector.extract_strided_slice %17 {offsets = [256, 0], sizes = [8, 64], strides = [1, 1]} : vector<392x64xf32> to vector<8x64xf32>
    %178 = vector.extract_strided_slice %0 {offsets = [32, 0, 0], sizes = [1, 64, 32], strides = [1, 1, 1]} : vector<49x64x32xf32> to vector<1x64x32xf32>
    %179 = vector.shape_cast %178 : vector<1x64x32xf32> to vector<64x32xf32>
    %cst_49 = arith.constant dense<0.000000e+00> : vector<8x32xf32>
    %180 = tpu.matmul %177, %179, %cst_49 {dimension_numbers = #tpu.dot_dimension_numbers<[1], [0], [0], [1], [0, 0, 1, 1], [], []>} : vector<8x64xf32>, vector<64x32xf32>, vector<8x32xf32> -> vector<8x32xf32>
    %181 = arith.addf %176, %180 : vector<8x32xf32>
    %182 = vector.extract_strided_slice %17 {offsets = [264, 0], sizes = [8, 64], strides = [1, 1]} : vector<392x64xf32> to vector<8x64xf32>
    %183 = vector.extract_strided_slice %0 {offsets = [33, 0, 0], sizes = [1, 64, 32], strides = [1, 1, 1]} : vector<49x64x32xf32> to vector<1x64x32xf32>
    %184 = vector.shape_cast %183 : vector<1x64x32xf32> to vector<64x32xf32>
    %cst_50 = arith.constant dense<0.000000e+00> : vector<8x32xf32>
    %185 = tpu.matmul %182, %184, %cst_50 {dimension_numbers = #tpu.dot_dimension_numbers<[1], [0], [0], [1], [0, 0, 1, 1], [], []>} : vector<8x64xf32>, vector<64x32xf32>, vector<8x32xf32> -> vector<8x32xf32>
    %186 = arith.addf %181, %185 : vector<8x32xf32>
    %187 = vector.extract_strided_slice %17 {offsets = [272, 0], sizes = [8, 64], strides = [1, 1]} : vector<392x64xf32> to vector<8x64xf32>
    %188 = vector.extract_strided_slice %0 {offsets = [34, 0, 0], sizes = [1, 64, 32], strides = [1, 1, 1]} : vector<49x64x32xf32> to vector<1x64x32xf32>
    %189 = vector.shape_cast %188 : vector<1x64x32xf32> to vector<64x32xf32>
    %cst_51 = arith.constant dense<0.000000e+00> : vector<8x32xf32>
    %190 = tpu.matmul %187, %189, %cst_51 {dimension_numbers = #tpu.dot_dimension_numbers<[1], [0], [0], [1], [0, 0, 1, 1], [], []>} : vector<8x64xf32>, vector<64x32xf32>, vector<8x32xf32> -> vector<8x32xf32>
    %191 = arith.addf %186, %190 : vector<8x32xf32>
    %192 = vector.extract_strided_slice %17 {offsets = [280, 0], sizes = [8, 64], strides = [1, 1]} : vector<392x64xf32> to vector<8x64xf32>
    %193 = vector.extract_strided_slice %0 {offsets = [35, 0, 0], sizes = [1, 64, 32], strides = [1, 1, 1]} : vector<49x64x32xf32> to vector<1x64x32xf32>
    %194 = vector.shape_cast %193 : vector<1x64x32xf32> to vector<64x32xf32>
    %cst_52 = arith.constant dense<0.000000e+00> : vector<8x32xf32>
    %195 = tpu.matmul %192, %194, %cst_52 {dimension_numbers = #tpu.dot_dimension_numbers<[1], [0], [0], [1], [0, 0, 1, 1], [], []>} : vector<8x64xf32>, vector<64x32xf32>, vector<8x32xf32> -> vector<8x32xf32>
    %196 = arith.addf %191, %195 : vector<8x32xf32>
    %197 = vector.extract_strided_slice %17 {offsets = [288, 0], sizes = [8, 64], strides = [1, 1]} : vector<392x64xf32> to vector<8x64xf32>
    %198 = vector.extract_strided_slice %0 {offsets = [36, 0, 0], sizes = [1, 64, 32], strides = [1, 1, 1]} : vector<49x64x32xf32> to vector<1x64x32xf32>
    %199 = vector.shape_cast %198 : vector<1x64x32xf32> to vector<64x32xf32>
    %cst_53 = arith.constant dense<0.000000e+00> : vector<8x32xf32>
    %200 = tpu.matmul %197, %199, %cst_53 {dimension_numbers = #tpu.dot_dimension_numbers<[1], [0], [0], [1], [0, 0, 1, 1], [], []>} : vector<8x64xf32>, vector<64x32xf32>, vector<8x32xf32> -> vector<8x32xf32>
    %201 = arith.addf %196, %200 : vector<8x32xf32>
    %202 = vector.extract_strided_slice %17 {offsets = [296, 0], sizes = [8, 64], strides = [1, 1]} : vector<392x64xf32> to vector<8x64xf32>
    %203 = vector.extract_strided_slice %0 {offsets = [37, 0, 0], sizes = [1, 64, 32], strides = [1, 1, 1]} : vector<49x64x32xf32> to vector<1x64x32xf32>
    %204 = vector.shape_cast %203 : vector<1x64x32xf32> to vector<64x32xf32>
    %cst_54 = arith.constant dense<0.000000e+00> : vector<8x32xf32>
    %205 = tpu.matmul %202, %204, %cst_54 {dimension_numbers = #tpu.dot_dimension_numbers<[1], [0], [0], [1], [0, 0, 1, 1], [], []>} : vector<8x64xf32>, vector<64x32xf32>, vector<8x32xf32> -> vector<8x32xf32>
    %206 = arith.addf %201, %205 : vector<8x32xf32>
    %207 = vector.extract_strided_slice %17 {offsets = [304, 0], sizes = [8, 64], strides = [1, 1]} : vector<392x64xf32> to vector<8x64xf32>
    %208 = vector.extract_strided_slice %0 {offsets = [38, 0, 0], sizes = [1, 64, 32], strides = [1, 1, 1]} : vector<49x64x32xf32> to vector<1x64x32xf32>
    %209 = vector.shape_cast %208 : vector<1x64x32xf32> to vector<64x32xf32>
    %cst_55 = arith.constant dense<0.000000e+00> : vector<8x32xf32>
    %210 = tpu.matmul %207, %209, %cst_55 {dimension_numbers = #tpu.dot_dimension_numbers<[1], [0], [0], [1], [0, 0, 1, 1], [], []>} : vector<8x64xf32>, vector<64x32xf32>, vector<8x32xf32> -> vector<8x32xf32>
    %211 = arith.addf %206, %210 : vector<8x32xf32>
    %212 = vector.extract_strided_slice %17 {offsets = [312, 0], sizes = [8, 64], strides = [1, 1]} : vector<392x64xf32> to vector<8x64xf32>
    %213 = vector.extract_strided_slice %0 {offsets = [39, 0, 0], sizes = [1, 64, 32], strides = [1, 1, 1]} : vector<49x64x32xf32> to vector<1x64x32xf32>
    %214 = vector.shape_cast %213 : vector<1x64x32xf32> to vector<64x32xf32>
    %cst_56 = arith.constant dense<0.000000e+00> : vector<8x32xf32>
    %215 = tpu.matmul %212, %214, %cst_56 {dimension_numbers = #tpu.dot_dimension_numbers<[1], [0], [0], [1], [0, 0, 1, 1], [], []>} : vector<8x64xf32>, vector<64x32xf32>, vector<8x32xf32> -> vector<8x32xf32>
    %216 = arith.addf %211, %215 : vector<8x32xf32>
    %217 = vector.extract_strided_slice %17 {offsets = [320, 0], sizes = [8, 64], strides = [1, 1]} : vector<392x64xf32> to vector<8x64xf32>
    %218 = vector.extract_strided_slice %0 {offsets = [40, 0, 0], sizes = [1, 64, 32], strides = [1, 1, 1]} : vector<49x64x32xf32> to vector<1x64x32xf32>
    %219 = vector.shape_cast %218 : vector<1x64x32xf32> to vector<64x32xf32>
    %cst_57 = arith.constant dense<0.000000e+00> : vector<8x32xf32>
    %220 = tpu.matmul %217, %219, %cst_57 {dimension_numbers = #tpu.dot_dimension_numbers<[1], [0], [0], [1], [0, 0, 1, 1], [], []>} : vector<8x64xf32>, vector<64x32xf32>, vector<8x32xf32> -> vector<8x32xf32>
    %221 = arith.addf %216, %220 : vector<8x32xf32>
    %222 = vector.extract_strided_slice %17 {offsets = [328, 0], sizes = [8, 64], strides = [1, 1]} : vector<392x64xf32> to vector<8x64xf32>
    %223 = vector.extract_strided_slice %0 {offsets = [41, 0, 0], sizes = [1, 64, 32], strides = [1, 1, 1]} : vector<49x64x32xf32> to vector<1x64x32xf32>
    %224 = vector.shape_cast %223 : vector<1x64x32xf32> to vector<64x32xf32>
    %cst_58 = arith.constant dense<0.000000e+00> : vector<8x32xf32>
    %225 = tpu.matmul %222, %224, %cst_58 {dimension_numbers = #tpu.dot_dimension_numbers<[1], [0], [0], [1], [0, 0, 1, 1], [], []>} : vector<8x64xf32>, vector<64x32xf32>, vector<8x32xf32> -> vector<8x32xf32>
    %226 = arith.addf %221, %225 : vector<8x32xf32>
    %227 = vector.extract_strided_slice %17 {offsets = [336, 0], sizes = [8, 64], strides = [1, 1]} : vector<392x64xf32> to vector<8x64xf32>
    %228 = vector.extract_strided_slice %0 {offsets = [42, 0, 0], sizes = [1, 64, 32], strides = [1, 1, 1]} : vector<49x64x32xf32> to vector<1x64x32xf32>
    %229 = vector.shape_cast %228 : vector<1x64x32xf32> to vector<64x32xf32>
    %cst_59 = arith.constant dense<0.000000e+00> : vector<8x32xf32>
    %230 = tpu.matmul %227, %229, %cst_59 {dimension_numbers = #tpu.dot_dimension_numbers<[1], [0], [0], [1], [0, 0, 1, 1], [], []>} : vector<8x64xf32>, vector<64x32xf32>, vector<8x32xf32> -> vector<8x32xf32>
    %231 = arith.addf %226, %230 : vector<8x32xf32>
    %232 = vector.extract_strided_slice %17 {offsets = [344, 0], sizes = [8, 64], strides = [1, 1]} : vector<392x64xf32> to vector<8x64xf32>
    %233 = vector.extract_strided_slice %0 {offsets = [43, 0, 0], sizes = [1, 64, 32], strides = [1, 1, 1]} : vector<49x64x32xf32> to vector<1x64x32xf32>
    %234 = vector.shape_cast %233 : vector<1x64x32xf32> to vector<64x32xf32>
    %cst_60 = arith.constant dense<0.000000e+00> : vector<8x32xf32>
    %235 = tpu.matmul %232, %234, %cst_60 {dimension_numbers = #tpu.dot_dimension_numbers<[1], [0], [0], [1], [0, 0, 1, 1], [], []>} : vector<8x64xf32>, vector<64x32xf32>, vector<8x32xf32> -> vector<8x32xf32>
    %236 = arith.addf %231, %235 : vector<8x32xf32>
    %237 = vector.extract_strided_slice %17 {offsets = [352, 0], sizes = [8, 64], strides = [1, 1]} : vector<392x64xf32> to vector<8x64xf32>
    %238 = vector.extract_strided_slice %0 {offsets = [44, 0, 0], sizes = [1, 64, 32], strides = [1, 1, 1]} : vector<49x64x32xf32> to vector<1x64x32xf32>
    %239 = vector.shape_cast %238 : vector<1x64x32xf32> to vector<64x32xf32>
    %cst_61 = arith.constant dense<0.000000e+00> : vector<8x32xf32>
    %240 = tpu.matmul %237, %239, %cst_61 {dimension_numbers = #tpu.dot_dimension_numbers<[1], [0], [0], [1], [0, 0, 1, 1], [], []>} : vector<8x64xf32>, vector<64x32xf32>, vector<8x32xf32> -> vector<8x32xf32>
    %241 = arith.addf %236, %240 : vector<8x32xf32>
    %242 = vector.extract_strided_slice %17 {offsets = [360, 0], sizes = [8, 64], strides = [1, 1]} : vector<392x64xf32> to vector<8x64xf32>
    %243 = vector.extract_strided_slice %0 {offsets = [45, 0, 0], sizes = [1, 64, 32], strides = [1, 1, 1]} : vector<49x64x32xf32> to vector<1x64x32xf32>
    %244 = vector.shape_cast %243 : vector<1x64x32xf32> to vector<64x32xf32>
    %cst_62 = arith.constant dense<0.000000e+00> : vector<8x32xf32>
    %245 = tpu.matmul %242, %244, %cst_62 {dimension_numbers = #tpu.dot_dimension_numbers<[1], [0], [0], [1], [0, 0, 1, 1], [], []>} : vector<8x64xf32>, vector<64x32xf32>, vector<8x32xf32> -> vector<8x32xf32>
    %246 = arith.addf %241, %245 : vector<8x32xf32>
    %247 = vector.extract_strided_slice %17 {offsets = [368, 0], sizes = [8, 64], strides = [1, 1]} : vector<392x64xf32> to vector<8x64xf32>
    %248 = vector.extract_strided_slice %0 {offsets = [46, 0, 0], sizes = [1, 64, 32], strides = [1, 1, 1]} : vector<49x64x32xf32> to vector<1x64x32xf32>
    %249 = vector.shape_cast %248 : vector<1x64x32xf32> to vector<64x32xf32>
    %cst_63 = arith.constant dense<0.000000e+00> : vector<8x32xf32>
    %250 = tpu.matmul %247, %249, %cst_63 {dimension_numbers = #tpu.dot_dimension_numbers<[1], [0], [0], [1], [0, 0, 1, 1], [], []>} : vector<8x64xf32>, vector<64x32xf32>, vector<8x32xf32> -> vector<8x32xf32>
    %251 = arith.addf %246, %250 : vector<8x32xf32>
    %252 = vector.extract_strided_slice %17 {offsets = [376, 0], sizes = [8, 64], strides = [1, 1]} : vector<392x64xf32> to vector<8x64xf32>
    %253 = vector.extract_strided_slice %0 {offsets = [47, 0, 0], sizes = [1, 64, 32], strides = [1, 1, 1]} : vector<49x64x32xf32> to vector<1x64x32xf32>
    %254 = vector.shape_cast %253 : vector<1x64x32xf32> to vector<64x32xf32>
    %cst_64 = arith.constant dense<0.000000e+00> : vector<8x32xf32>
    %255 = tpu.matmul %252, %254, %cst_64 {dimension_numbers = #tpu.dot_dimension_numbers<[1], [0], [0], [1], [0, 0, 1, 1], [], []>} : vector<8x64xf32>, vector<64x32xf32>, vector<8x32xf32> -> vector<8x32xf32>
    %256 = arith.addf %251, %255 : vector<8x32xf32>
    %257 = vector.extract_strided_slice %17 {offsets = [384, 0], sizes = [8, 64], strides = [1, 1]} : vector<392x64xf32> to vector<8x64xf32>
    %258 = vector.extract_strided_slice %0 {offsets = [48, 0, 0], sizes = [1, 64, 32], strides = [1, 1, 1]} : vector<49x64x32xf32> to vector<1x64x32xf32>
    %259 = vector.shape_cast %258 : vector<1x64x32xf32> to vector<64x32xf32>
    %cst_65 = arith.constant dense<0.000000e+00> : vector<8x32xf32>
    %260 = tpu.matmul %257, %259, %cst_65 {dimension_numbers = #tpu.dot_dimension_numbers<[1], [0], [0], [1], [0, 0, 1, 1], [], []>} : vector<8x64xf32>, vector<64x32xf32>, vector<8x32xf32> -> vector<8x32xf32>
    %261 = arith.addf %256, %260 : vector<8x32xf32>
    %c0_66 = arith.constant 0 : index
    %c0_67 = arith.constant 0 : index
    %262 = vector.load %arg10[%c0_66, %c0_67] : memref<1x32xf32, #tpu.memory_space<vmem>>, vector<1x32xf32>
    %263 = vector.broadcast %262 : vector<1x32xf32> to vector<8x32xf32>
    %264 = arith.addf %261, %263 : vector<8x32xf32>
    %cst_68 = arith.constant 0.000000e+00 : f32
    %265 = vector.broadcast %cst_68 : f32 to vector<8x32xf32>
    %266 = arith.maximumf %264, %265 : vector<8x32xf32>
    %c0_69 = arith.constant 0 : index
    %c0_70 = arith.constant 0 : index
    %267 = vector.load %arg11[%c0_69, %c0_70] : memref<1x32xf32, #tpu.memory_space<vmem>>, vector<1x32xf32>
    %268 = vector.broadcast %267 : vector<1x32xf32> to vector<8x32xf32>
    %269 = arith.addf %266, %268 : vector<8x32xf32>
    %c0_71 = arith.constant 0 : index
    %c0_72 = arith.constant 0 : index
    %270 = vector.load %arg3[%c0_71, %c0_72] : memref<8x8xf32, #tpu.memory_space<vmem>>, vector<8x8xf32>
    %c0_73 = arith.constant 0 : index
    %c0_74 = arith.constant 0 : index
    %271 = vector.load %arg12[%c0_73, %c0_74] : memref<32x96xf32, #tpu.memory_space<vmem>>, vector<32x96xf32>
    %c0_75 = arith.constant 0 : index
    %c0_76 = arith.constant 0 : index
    %272 = vector.load %arg13[%c0_75, %c0_76] : memref<1x96xf32, #tpu.memory_space<vmem>>, vector<1x96xf32>
    %c0_77 = arith.constant 0 : index
    %c0_78 = arith.constant 0 : index
    %273 = vector.load %arg14[%c0_77, %c0_78] : memref<32x32xf32, #tpu.memory_space<vmem>>, vector<32x32xf32>
    %c0_79 = arith.constant 0 : index
    %c0_80 = arith.constant 0 : index
    %274 = vector.load %arg15[%c0_79, %c0_80] : memref<1x32xf32, #tpu.memory_space<vmem>>, vector<1x32xf32>
    %c0_81 = arith.constant 0 : index
    %c0_82 = arith.constant 0 : index
    %275 = vector.load %arg16[%c0_81, %c0_82] : memref<1x32xf32, #tpu.memory_space<vmem>>, vector<1x32xf32>
    %c0_83 = arith.constant 0 : index
    %c0_84 = arith.constant 0 : index
    %276 = vector.load %arg17[%c0_83, %c0_84] : memref<1x32xf32, #tpu.memory_space<vmem>>, vector<1x32xf32>
    %c0_85 = arith.constant 0 : index
    %c0_86 = arith.constant 0 : index
    %277 = vector.load %arg18[%c0_85, %c0_86] : memref<32x128xf32, #tpu.memory_space<vmem>>, vector<32x128xf32>
    %c0_87 = arith.constant 0 : index
    %c0_88 = arith.constant 0 : index
    %278 = vector.load %arg19[%c0_87, %c0_88] : memref<1x128xf32, #tpu.memory_space<vmem>>, vector<1x128xf32>
    %c0_89 = arith.constant 0 : index
    %c0_90 = arith.constant 0 : index
    %279 = vector.load %arg20[%c0_89, %c0_90] : memref<128x32xf32, #tpu.memory_space<vmem>>, vector<128x32xf32>
    %c0_91 = arith.constant 0 : index
    %c0_92 = arith.constant 0 : index
    %280 = vector.load %arg21[%c0_91, %c0_92] : memref<1x32xf32, #tpu.memory_space<vmem>>, vector<1x32xf32>
    %c0_93 = arith.constant 0 : index
    %c0_94 = arith.constant 0 : index
    %281 = vector.load %arg22[%c0_93, %c0_94] : memref<1x32xf32, #tpu.memory_space<vmem>>, vector<1x32xf32>
    %c0_95 = arith.constant 0 : index
    %c0_96 = arith.constant 0 : index
    %282 = vector.load %arg23[%c0_95, %c0_96] : memref<1x32xf32, #tpu.memory_space<vmem>>, vector<1x32xf32>
    %cst_97 = arith.constant dense<0.000000e+00> : vector<8x96xf32>
    %283 = tpu.matmul %269, %271, %cst_97 {dimension_numbers = #tpu.dot_dimension_numbers<[1], [0], [0], [1], [0, 0, 1, 1], [], []>} : vector<8x32xf32>, vector<32x96xf32>, vector<8x96xf32> -> vector<8x96xf32>
    %284 = vector.broadcast %272 : vector<1x96xf32> to vector<8x96xf32>
    %285 = arith.addf %283, %284 : vector<8x96xf32>
    %286 = vector.extract_strided_slice %285 {offsets = [0, 0], sizes = [8, 32], strides = [1, 1]} : vector<8x96xf32> to vector<8x32xf32>
    %cst_98 = arith.constant 0.353553385 : f32
    %287 = vector.broadcast %cst_98 : f32 to vector<8x32xf32>
    %288 = arith.mulf %286, %287 : vector<8x32xf32>
    %289 = vector.extract_strided_slice %285 {offsets = [0, 32], sizes = [8, 32], strides = [1, 1]} : vector<8x96xf32> to vector<8x32xf32>
    %290 = vector.extract_strided_slice %285 {offsets = [0, 64], sizes = [8, 32], strides = [1, 1]} : vector<8x96xf32> to vector<8x32xf32>
    %291 = vector.extract_strided_slice %288 {offsets = [0, 0], sizes = [8, 8], strides = [1, 1]} : vector<8x32xf32> to vector<8x8xf32>
    %292 = vector.extract_strided_slice %289 {offsets = [0, 0], sizes = [8, 8], strides = [1, 1]} : vector<8x32xf32> to vector<8x8xf32>
    %293 = vector.extract_strided_slice %290 {offsets = [0, 0], sizes = [8, 8], strides = [1, 1]} : vector<8x32xf32> to vector<8x8xf32>
    %294 = tpu.transpose %292, [1, 0] : vector<8x8xf32> -> vector<8x8xf32>
    %cst_99 = arith.constant dense<0.000000e+00> : vector<8x8xf32>
    %295 = tpu.matmul %291, %294, %cst_99 {dimension_numbers = #tpu.dot_dimension_numbers<[1], [0], [0], [1], [0, 0, 1, 1], [], []>} : vector<8x8xf32>, vector<8x8xf32>, vector<8x8xf32> -> vector<8x8xf32>
    %296 = arith.addf %295, %270 : vector<8x8xf32>
    %cst_100 = arith.constant dense<0xFF800000> : vector<8xf32>
    %297 = vector.multi_reduction <maximumf>, %296, %cst_100 [1] : vector<8x8xf32> to vector<8xf32>
    %298 = vector.shape_cast %297 : vector<8xf32> to vector<8x1xf32>
    %299 = vector.broadcast %298 : vector<8x1xf32> to vector<8x8xf32>
    %300 = arith.subf %296, %299 : vector<8x8xf32>
    %301 = math.exp %300 : vector<8x8xf32>
    %cst_101 = arith.constant dense<0.000000e+00> : vector<8xf32>
    %302 = vector.multi_reduction <add>, %301, %cst_101 [1] : vector<8x8xf32> to vector<8xf32>
    %303 = vector.shape_cast %302 : vector<8xf32> to vector<8x1xf32>
    %304 = tpu.reciprocal %303 {approx = true} : vector<8x1xf32> -> vector<8x1xf32>
    %305 = vector.broadcast %304 : vector<8x1xf32> to vector<8x8xf32>
    %306 = arith.mulf %301, %305 : vector<8x8xf32>
    %cst_102 = arith.constant dense<0.000000e+00> : vector<8x8xf32>
    %307 = tpu.matmul %306, %293, %cst_102 {dimension_numbers = #tpu.dot_dimension_numbers<[1], [0], [0], [1], [0, 0, 1, 1], [], []>} : vector<8x8xf32>, vector<8x8xf32>, vector<8x8xf32> -> vector<8x8xf32>
    %308 = vector.extract_strided_slice %288 {offsets = [0, 8], sizes = [8, 8], strides = [1, 1]} : vector<8x32xf32> to vector<8x8xf32>
    %309 = vector.extract_strided_slice %289 {offsets = [0, 8], sizes = [8, 8], strides = [1, 1]} : vector<8x32xf32> to vector<8x8xf32>
    %310 = vector.extract_strided_slice %290 {offsets = [0, 8], sizes = [8, 8], strides = [1, 1]} : vector<8x32xf32> to vector<8x8xf32>
    %311 = tpu.transpose %309, [1, 0] : vector<8x8xf32> -> vector<8x8xf32>
    %cst_103 = arith.constant dense<0.000000e+00> : vector<8x8xf32>
    %312 = tpu.matmul %308, %311, %cst_103 {dimension_numbers = #tpu.dot_dimension_numbers<[1], [0], [0], [1], [0, 0, 1, 1], [], []>} : vector<8x8xf32>, vector<8x8xf32>, vector<8x8xf32> -> vector<8x8xf32>
    %313 = arith.addf %312, %270 : vector<8x8xf32>
    %cst_104 = arith.constant dense<0xFF800000> : vector<8xf32>
    %314 = vector.multi_reduction <maximumf>, %313, %cst_104 [1] : vector<8x8xf32> to vector<8xf32>
    %315 = vector.shape_cast %314 : vector<8xf32> to vector<8x1xf32>
    %316 = vector.broadcast %315 : vector<8x1xf32> to vector<8x8xf32>
    %317 = arith.subf %313, %316 : vector<8x8xf32>
    %318 = math.exp %317 : vector<8x8xf32>
    %cst_105 = arith.constant dense<0.000000e+00> : vector<8xf32>
    %319 = vector.multi_reduction <add>, %318, %cst_105 [1] : vector<8x8xf32> to vector<8xf32>
    %320 = vector.shape_cast %319 : vector<8xf32> to vector<8x1xf32>
    %321 = tpu.reciprocal %320 {approx = true} : vector<8x1xf32> -> vector<8x1xf32>
    %322 = vector.broadcast %321 : vector<8x1xf32> to vector<8x8xf32>
    %323 = arith.mulf %318, %322 : vector<8x8xf32>
    %cst_106 = arith.constant dense<0.000000e+00> : vector<8x8xf32>
    %324 = tpu.matmul %323, %310, %cst_106 {dimension_numbers = #tpu.dot_dimension_numbers<[1], [0], [0], [1], [0, 0, 1, 1], [], []>} : vector<8x8xf32>, vector<8x8xf32>, vector<8x8xf32> -> vector<8x8xf32>
    %325 = vector.extract_strided_slice %288 {offsets = [0, 16], sizes = [8, 8], strides = [1, 1]} : vector<8x32xf32> to vector<8x8xf32>
    %326 = vector.extract_strided_slice %289 {offsets = [0, 16], sizes = [8, 8], strides = [1, 1]} : vector<8x32xf32> to vector<8x8xf32>
    %327 = vector.extract_strided_slice %290 {offsets = [0, 16], sizes = [8, 8], strides = [1, 1]} : vector<8x32xf32> to vector<8x8xf32>
    %328 = tpu.transpose %326, [1, 0] : vector<8x8xf32> -> vector<8x8xf32>
    %cst_107 = arith.constant dense<0.000000e+00> : vector<8x8xf32>
    %329 = tpu.matmul %325, %328, %cst_107 {dimension_numbers = #tpu.dot_dimension_numbers<[1], [0], [0], [1], [0, 0, 1, 1], [], []>} : vector<8x8xf32>, vector<8x8xf32>, vector<8x8xf32> -> vector<8x8xf32>
    %330 = arith.addf %329, %270 : vector<8x8xf32>
    %cst_108 = arith.constant dense<0xFF800000> : vector<8xf32>
    %331 = vector.multi_reduction <maximumf>, %330, %cst_108 [1] : vector<8x8xf32> to vector<8xf32>
    %332 = vector.shape_cast %331 : vector<8xf32> to vector<8x1xf32>
    %333 = vector.broadcast %332 : vector<8x1xf32> to vector<8x8xf32>
    %334 = arith.subf %330, %333 : vector<8x8xf32>
    %335 = math.exp %334 : vector<8x8xf32>
    %cst_109 = arith.constant dense<0.000000e+00> : vector<8xf32>
    %336 = vector.multi_reduction <add>, %335, %cst_109 [1] : vector<8x8xf32> to vector<8xf32>
    %337 = vector.shape_cast %336 : vector<8xf32> to vector<8x1xf32>
    %338 = tpu.reciprocal %337 {approx = true} : vector<8x1xf32> -> vector<8x1xf32>
    %339 = vector.broadcast %338 : vector<8x1xf32> to vector<8x8xf32>
    %340 = arith.mulf %335, %339 : vector<8x8xf32>
    %cst_110 = arith.constant dense<0.000000e+00> : vector<8x8xf32>
    %341 = tpu.matmul %340, %327, %cst_110 {dimension_numbers = #tpu.dot_dimension_numbers<[1], [0], [0], [1], [0, 0, 1, 1], [], []>} : vector<8x8xf32>, vector<8x8xf32>, vector<8x8xf32> -> vector<8x8xf32>
    %342 = vector.extract_strided_slice %288 {offsets = [0, 24], sizes = [8, 8], strides = [1, 1]} : vector<8x32xf32> to vector<8x8xf32>
    %343 = vector.extract_strided_slice %289 {offsets = [0, 24], sizes = [8, 8], strides = [1, 1]} : vector<8x32xf32> to vector<8x8xf32>
    %344 = vector.extract_strided_slice %290 {offsets = [0, 24], sizes = [8, 8], strides = [1, 1]} : vector<8x32xf32> to vector<8x8xf32>
    %345 = tpu.transpose %343, [1, 0] : vector<8x8xf32> -> vector<8x8xf32>
    %cst_111 = arith.constant dense<0.000000e+00> : vector<8x8xf32>
    %346 = tpu.matmul %342, %345, %cst_111 {dimension_numbers = #tpu.dot_dimension_numbers<[1], [0], [0], [1], [0, 0, 1, 1], [], []>} : vector<8x8xf32>, vector<8x8xf32>, vector<8x8xf32> -> vector<8x8xf32>
    %347 = arith.addf %346, %270 : vector<8x8xf32>
    %cst_112 = arith.constant dense<0xFF800000> : vector<8xf32>
    %348 = vector.multi_reduction <maximumf>, %347, %cst_112 [1] : vector<8x8xf32> to vector<8xf32>
    %349 = vector.shape_cast %348 : vector<8xf32> to vector<8x1xf32>
    %350 = vector.broadcast %349 : vector<8x1xf32> to vector<8x8xf32>
    %351 = arith.subf %347, %350 : vector<8x8xf32>
    %352 = math.exp %351 : vector<8x8xf32>
    %cst_113 = arith.constant dense<0.000000e+00> : vector<8xf32>
    %353 = vector.multi_reduction <add>, %352, %cst_113 [1] : vector<8x8xf32> to vector<8xf32>
    %354 = vector.shape_cast %353 : vector<8xf32> to vector<8x1xf32>
    %355 = tpu.reciprocal %354 {approx = true} : vector<8x1xf32> -> vector<8x1xf32>
    %356 = vector.broadcast %355 : vector<8x1xf32> to vector<8x8xf32>
    %357 = arith.mulf %352, %356 : vector<8x8xf32>
    %cst_114 = arith.constant dense<0.000000e+00> : vector<8x8xf32>
    %358 = tpu.matmul %357, %344, %cst_114 {dimension_numbers = #tpu.dot_dimension_numbers<[1], [0], [0], [1], [0, 0, 1, 1], [], []>} : vector<8x8xf32>, vector<8x8xf32>, vector<8x8xf32> -> vector<8x8xf32>
    %359 = tpu.concatenate %307, %324, %341, %358 in 1 : vector<8x8xf32>, vector<8x8xf32>, vector<8x8xf32>, vector<8x8xf32> -> vector<8x32xf32>
    %cst_115 = arith.constant dense<0.000000e+00> : vector<8x32xf32>
    %360 = tpu.matmul %359, %273, %cst_115 {dimension_numbers = #tpu.dot_dimension_numbers<[1], [0], [0], [1], [0, 0, 1, 1], [], []>} : vector<8x32xf32>, vector<32x32xf32>, vector<8x32xf32> -> vector<8x32xf32>
    %361 = vector.broadcast %274 : vector<1x32xf32> to vector<8x32xf32>
    %362 = arith.addf %360, %361 : vector<8x32xf32>
    %363 = arith.addf %269, %362 : vector<8x32xf32>
    %cst_116 = arith.constant dense<0.000000e+00> : vector<8xf32>
    %364 = vector.multi_reduction <add>, %363, %cst_116 [1] : vector<8x32xf32> to vector<8xf32>
    %365 = vector.shape_cast %364 : vector<8xf32> to vector<8x1xf32>
    %cst_117 = arith.constant 3.200000e+01 : f32
    %366 = vector.broadcast %cst_117 : f32 to vector<8x1xf32>
    %367 = arith.divf %365, %366 : vector<8x1xf32>
    %368 = vector.broadcast %367 : vector<8x1xf32> to vector<8x32xf32>
    %369 = arith.subf %363, %368 : vector<8x32xf32>
    %370 = arith.mulf %369, %369 : vector<8x32xf32>
    %cst_118 = arith.constant dense<0.000000e+00> : vector<8xf32>
    %371 = vector.multi_reduction <add>, %370, %cst_118 [1] : vector<8x32xf32> to vector<8xf32>
    %372 = vector.shape_cast %371 : vector<8xf32> to vector<8x1xf32>
    %cst_119 = arith.constant 3.200000e+01 : f32
    %373 = vector.broadcast %cst_119 : f32 to vector<8x1xf32>
    %374 = arith.divf %372, %373 : vector<8x1xf32>
    %375 = vector.broadcast %367 : vector<8x1xf32> to vector<8x32xf32>
    %376 = arith.subf %363, %375 : vector<8x32xf32>
    %cst_120 = arith.constant 9.99999974E-6 : f32
    %377 = vector.broadcast %cst_120 : f32 to vector<8x1xf32>
    %378 = arith.addf %374, %377 : vector<8x1xf32>
    %379 = math.rsqrt %378 : vector<8x1xf32>
    %380 = vector.broadcast %379 : vector<8x1xf32> to vector<8x32xf32>
    %381 = arith.mulf %376, %380 : vector<8x32xf32>
    %382 = vector.broadcast %275 : vector<1x32xf32> to vector<8x32xf32>
    %383 = arith.mulf %381, %382 : vector<8x32xf32>
    %384 = vector.broadcast %276 : vector<1x32xf32> to vector<8x32xf32>
    %385 = arith.addf %383, %384 : vector<8x32xf32>
    %cst_121 = arith.constant dense<0.000000e+00> : vector<8x128xf32>
    %386 = tpu.matmul %385, %277, %cst_121 {dimension_numbers = #tpu.dot_dimension_numbers<[1], [0], [0], [1], [0, 0, 1, 1], [], []>} : vector<8x32xf32>, vector<32x128xf32>, vector<8x128xf32> -> vector<8x128xf32>
    %387 = vector.broadcast %278 : vector<1x128xf32> to vector<8x128xf32>
    %388 = arith.addf %386, %387 : vector<8x128xf32>
    %cst_122 = arith.constant 0.000000e+00 : f32
    %389 = vector.broadcast %cst_122 : f32 to vector<8x128xf32>
    %390 = arith.maximumf %388, %389 : vector<8x128xf32>
    %cst_123 = arith.constant dense<0.000000e+00> : vector<8x32xf32>
    %391 = tpu.matmul %390, %279, %cst_123 {dimension_numbers = #tpu.dot_dimension_numbers<[1], [0], [0], [1], [0, 0, 1, 1], [], []>} : vector<8x128xf32>, vector<128x32xf32>, vector<8x32xf32> -> vector<8x32xf32>
    %392 = vector.broadcast %280 : vector<1x32xf32> to vector<8x32xf32>
    %393 = arith.addf %391, %392 : vector<8x32xf32>
    %394 = arith.addf %385, %393 : vector<8x32xf32>
    %cst_124 = arith.constant dense<0.000000e+00> : vector<8xf32>
    %395 = vector.multi_reduction <add>, %394, %cst_124 [1] : vector<8x32xf32> to vector<8xf32>
    %396 = vector.shape_cast %395 : vector<8xf32> to vector<8x1xf32>
    %cst_125 = arith.constant 3.200000e+01 : f32
    %397 = vector.broadcast %cst_125 : f32 to vector<8x1xf32>
    %398 = arith.divf %396, %397 : vector<8x1xf32>
    %399 = vector.broadcast %398 : vector<8x1xf32> to vector<8x32xf32>
    %400 = arith.subf %394, %399 : vector<8x32xf32>
    %401 = arith.mulf %400, %400 : vector<8x32xf32>
    %cst_126 = arith.constant dense<0.000000e+00> : vector<8xf32>
    %402 = vector.multi_reduction <add>, %401, %cst_126 [1] : vector<8x32xf32> to vector<8xf32>
    %403 = vector.shape_cast %402 : vector<8xf32> to vector<8x1xf32>
    %cst_127 = arith.constant 3.200000e+01 : f32
    %404 = vector.broadcast %cst_127 : f32 to vector<8x1xf32>
    %405 = arith.divf %403, %404 : vector<8x1xf32>
    %406 = vector.broadcast %398 : vector<8x1xf32> to vector<8x32xf32>
    %407 = arith.subf %394, %406 : vector<8x32xf32>
    %cst_128 = arith.constant 9.99999974E-6 : f32
    %408 = vector.broadcast %cst_128 : f32 to vector<8x1xf32>
    %409 = arith.addf %405, %408 : vector<8x1xf32>
    %410 = math.rsqrt %409 : vector<8x1xf32>
    %411 = vector.broadcast %410 : vector<8x1xf32> to vector<8x32xf32>
    %412 = arith.mulf %407, %411 : vector<8x32xf32>
    %413 = vector.broadcast %281 : vector<1x32xf32> to vector<8x32xf32>
    %414 = arith.mulf %412, %413 : vector<8x32xf32>
    %415 = vector.broadcast %282 : vector<1x32xf32> to vector<8x32xf32>
    %416 = arith.addf %414, %415 : vector<8x32xf32>
    %c0_129 = arith.constant 0 : index
    %c0_130 = arith.constant 0 : index
    %417 = vector.load %arg24[%c0_129, %c0_130] : memref<32x96xf32, #tpu.memory_space<vmem>>, vector<32x96xf32>
    %c0_131 = arith.constant 0 : index
    %c0_132 = arith.constant 0 : index
    %418 = vector.load %arg25[%c0_131, %c0_132] : memref<1x96xf32, #tpu.memory_space<vmem>>, vector<1x96xf32>
    %c0_133 = arith.constant 0 : index
    %c0_134 = arith.constant 0 : index
    %419 = vector.load %arg26[%c0_133, %c0_134] : memref<32x32xf32, #tpu.memory_space<vmem>>, vector<32x32xf32>
    %c0_135 = arith.constant 0 : index
    %c0_136 = arith.constant 0 : index
    %420 = vector.load %arg27[%c0_135, %c0_136] : memref<1x32xf32, #tpu.memory_space<vmem>>, vector<1x32xf32>
    %c0_137 = arith.constant 0 : index
    %c0_138 = arith.constant 0 : index
    %421 = vector.load %arg28[%c0_137, %c0_138] : memref<1x32xf32, #tpu.memory_space<vmem>>, vector<1x32xf32>
    %c0_139 = arith.constant 0 : index
    %c0_140 = arith.constant 0 : index
    %422 = vector.load %arg29[%c0_139, %c0_140] : memref<1x32xf32, #tpu.memory_space<vmem>>, vector<1x32xf32>
    %c0_141 = arith.constant 0 : index
    %c0_142 = arith.constant 0 : index
    %423 = vector.load %arg30[%c0_141, %c0_142] : memref<32x128xf32, #tpu.memory_space<vmem>>, vector<32x128xf32>
    %c0_143 = arith.constant 0 : index
    %c0_144 = arith.constant 0 : index
    %424 = vector.load %arg31[%c0_143, %c0_144] : memref<1x128xf32, #tpu.memory_space<vmem>>, vector<1x128xf32>
    %c0_145 = arith.constant 0 : index
    %c0_146 = arith.constant 0 : index
    %425 = vector.load %arg32[%c0_145, %c0_146] : memref<128x32xf32, #tpu.memory_space<vmem>>, vector<128x32xf32>
    %c0_147 = arith.constant 0 : index
    %c0_148 = arith.constant 0 : index
    %426 = vector.load %arg33[%c0_147, %c0_148] : memref<1x32xf32, #tpu.memory_space<vmem>>, vector<1x32xf32>
    %c0_149 = arith.constant 0 : index
    %c0_150 = arith.constant 0 : index
    %427 = vector.load %arg34[%c0_149, %c0_150] : memref<1x32xf32, #tpu.memory_space<vmem>>, vector<1x32xf32>
    %c0_151 = arith.constant 0 : index
    %c0_152 = arith.constant 0 : index
    %428 = vector.load %arg35[%c0_151, %c0_152] : memref<1x32xf32, #tpu.memory_space<vmem>>, vector<1x32xf32>
    %cst_153 = arith.constant dense<0.000000e+00> : vector<8x96xf32>
    %429 = tpu.matmul %416, %417, %cst_153 {dimension_numbers = #tpu.dot_dimension_numbers<[1], [0], [0], [1], [0, 0, 1, 1], [], []>} : vector<8x32xf32>, vector<32x96xf32>, vector<8x96xf32> -> vector<8x96xf32>
    %430 = vector.broadcast %418 : vector<1x96xf32> to vector<8x96xf32>
    %431 = arith.addf %429, %430 : vector<8x96xf32>
    %432 = vector.extract_strided_slice %431 {offsets = [0, 0], sizes = [8, 32], strides = [1, 1]} : vector<8x96xf32> to vector<8x32xf32>
    %cst_154 = arith.constant 0.353553385 : f32
    %433 = vector.broadcast %cst_154 : f32 to vector<8x32xf32>
    %434 = arith.mulf %432, %433 : vector<8x32xf32>
    %435 = vector.extract_strided_slice %431 {offsets = [0, 32], sizes = [8, 32], strides = [1, 1]} : vector<8x96xf32> to vector<8x32xf32>
    %436 = vector.extract_strided_slice %431 {offsets = [0, 64], sizes = [8, 32], strides = [1, 1]} : vector<8x96xf32> to vector<8x32xf32>
    %437 = vector.extract_strided_slice %434 {offsets = [0, 0], sizes = [8, 8], strides = [1, 1]} : vector<8x32xf32> to vector<8x8xf32>
    %438 = vector.extract_strided_slice %435 {offsets = [0, 0], sizes = [8, 8], strides = [1, 1]} : vector<8x32xf32> to vector<8x8xf32>
    %439 = vector.extract_strided_slice %436 {offsets = [0, 0], sizes = [8, 8], strides = [1, 1]} : vector<8x32xf32> to vector<8x8xf32>
    %440 = tpu.transpose %438, [1, 0] : vector<8x8xf32> -> vector<8x8xf32>
    %cst_155 = arith.constant dense<0.000000e+00> : vector<8x8xf32>
    %441 = tpu.matmul %437, %440, %cst_155 {dimension_numbers = #tpu.dot_dimension_numbers<[1], [0], [0], [1], [0, 0, 1, 1], [], []>} : vector<8x8xf32>, vector<8x8xf32>, vector<8x8xf32> -> vector<8x8xf32>
    %442 = arith.addf %441, %270 : vector<8x8xf32>
    %cst_156 = arith.constant dense<0xFF800000> : vector<8xf32>
    %443 = vector.multi_reduction <maximumf>, %442, %cst_156 [1] : vector<8x8xf32> to vector<8xf32>
    %444 = vector.shape_cast %443 : vector<8xf32> to vector<8x1xf32>
    %445 = vector.broadcast %444 : vector<8x1xf32> to vector<8x8xf32>
    %446 = arith.subf %442, %445 : vector<8x8xf32>
    %447 = math.exp %446 : vector<8x8xf32>
    %cst_157 = arith.constant dense<0.000000e+00> : vector<8xf32>
    %448 = vector.multi_reduction <add>, %447, %cst_157 [1] : vector<8x8xf32> to vector<8xf32>
    %449 = vector.shape_cast %448 : vector<8xf32> to vector<8x1xf32>
    %450 = tpu.reciprocal %449 {approx = true} : vector<8x1xf32> -> vector<8x1xf32>
    %451 = vector.broadcast %450 : vector<8x1xf32> to vector<8x8xf32>
    %452 = arith.mulf %447, %451 : vector<8x8xf32>
    %cst_158 = arith.constant dense<0.000000e+00> : vector<8x8xf32>
    %453 = tpu.matmul %452, %439, %cst_158 {dimension_numbers = #tpu.dot_dimension_numbers<[1], [0], [0], [1], [0, 0, 1, 1], [], []>} : vector<8x8xf32>, vector<8x8xf32>, vector<8x8xf32> -> vector<8x8xf32>
    %454 = vector.extract_strided_slice %434 {offsets = [0, 8], sizes = [8, 8], strides = [1, 1]} : vector<8x32xf32> to vector<8x8xf32>
    %455 = vector.extract_strided_slice %435 {offsets = [0, 8], sizes = [8, 8], strides = [1, 1]} : vector<8x32xf32> to vector<8x8xf32>
    %456 = vector.extract_strided_slice %436 {offsets = [0, 8], sizes = [8, 8], strides = [1, 1]} : vector<8x32xf32> to vector<8x8xf32>
    %457 = tpu.transpose %455, [1, 0] : vector<8x8xf32> -> vector<8x8xf32>
    %cst_159 = arith.constant dense<0.000000e+00> : vector<8x8xf32>
    %458 = tpu.matmul %454, %457, %cst_159 {dimension_numbers = #tpu.dot_dimension_numbers<[1], [0], [0], [1], [0, 0, 1, 1], [], []>} : vector<8x8xf32>, vector<8x8xf32>, vector<8x8xf32> -> vector<8x8xf32>
    %459 = arith.addf %458, %270 : vector<8x8xf32>
    %cst_160 = arith.constant dense<0xFF800000> : vector<8xf32>
    %460 = vector.multi_reduction <maximumf>, %459, %cst_160 [1] : vector<8x8xf32> to vector<8xf32>
    %461 = vector.shape_cast %460 : vector<8xf32> to vector<8x1xf32>
    %462 = vector.broadcast %461 : vector<8x1xf32> to vector<8x8xf32>
    %463 = arith.subf %459, %462 : vector<8x8xf32>
    %464 = math.exp %463 : vector<8x8xf32>
    %cst_161 = arith.constant dense<0.000000e+00> : vector<8xf32>
    %465 = vector.multi_reduction <add>, %464, %cst_161 [1] : vector<8x8xf32> to vector<8xf32>
    %466 = vector.shape_cast %465 : vector<8xf32> to vector<8x1xf32>
    %467 = tpu.reciprocal %466 {approx = true} : vector<8x1xf32> -> vector<8x1xf32>
    %468 = vector.broadcast %467 : vector<8x1xf32> to vector<8x8xf32>
    %469 = arith.mulf %464, %468 : vector<8x8xf32>
    %cst_162 = arith.constant dense<0.000000e+00> : vector<8x8xf32>
    %470 = tpu.matmul %469, %456, %cst_162 {dimension_numbers = #tpu.dot_dimension_numbers<[1], [0], [0], [1], [0, 0, 1, 1], [], []>} : vector<8x8xf32>, vector<8x8xf32>, vector<8x8xf32> -> vector<8x8xf32>
    %471 = vector.extract_strided_slice %434 {offsets = [0, 16], sizes = [8, 8], strides = [1, 1]} : vector<8x32xf32> to vector<8x8xf32>
    %472 = vector.extract_strided_slice %435 {offsets = [0, 16], sizes = [8, 8], strides = [1, 1]} : vector<8x32xf32> to vector<8x8xf32>
    %473 = vector.extract_strided_slice %436 {offsets = [0, 16], sizes = [8, 8], strides = [1, 1]} : vector<8x32xf32> to vector<8x8xf32>
    %474 = tpu.transpose %472, [1, 0] : vector<8x8xf32> -> vector<8x8xf32>
    %cst_163 = arith.constant dense<0.000000e+00> : vector<8x8xf32>
    %475 = tpu.matmul %471, %474, %cst_163 {dimension_numbers = #tpu.dot_dimension_numbers<[1], [0], [0], [1], [0, 0, 1, 1], [], []>} : vector<8x8xf32>, vector<8x8xf32>, vector<8x8xf32> -> vector<8x8xf32>
    %476 = arith.addf %475, %270 : vector<8x8xf32>
    %cst_164 = arith.constant dense<0xFF800000> : vector<8xf32>
    %477 = vector.multi_reduction <maximumf>, %476, %cst_164 [1] : vector<8x8xf32> to vector<8xf32>
    %478 = vector.shape_cast %477 : vector<8xf32> to vector<8x1xf32>
    %479 = vector.broadcast %478 : vector<8x1xf32> to vector<8x8xf32>
    %480 = arith.subf %476, %479 : vector<8x8xf32>
    %481 = math.exp %480 : vector<8x8xf32>
    %cst_165 = arith.constant dense<0.000000e+00> : vector<8xf32>
    %482 = vector.multi_reduction <add>, %481, %cst_165 [1] : vector<8x8xf32> to vector<8xf32>
    %483 = vector.shape_cast %482 : vector<8xf32> to vector<8x1xf32>
    %484 = tpu.reciprocal %483 {approx = true} : vector<8x1xf32> -> vector<8x1xf32>
    %485 = vector.broadcast %484 : vector<8x1xf32> to vector<8x8xf32>
    %486 = arith.mulf %481, %485 : vector<8x8xf32>
    %cst_166 = arith.constant dense<0.000000e+00> : vector<8x8xf32>
    %487 = tpu.matmul %486, %473, %cst_166 {dimension_numbers = #tpu.dot_dimension_numbers<[1], [0], [0], [1], [0, 0, 1, 1], [], []>} : vector<8x8xf32>, vector<8x8xf32>, vector<8x8xf32> -> vector<8x8xf32>
    %488 = vector.extract_strided_slice %434 {offsets = [0, 24], sizes = [8, 8], strides = [1, 1]} : vector<8x32xf32> to vector<8x8xf32>
    %489 = vector.extract_strided_slice %435 {offsets = [0, 24], sizes = [8, 8], strides = [1, 1]} : vector<8x32xf32> to vector<8x8xf32>
    %490 = vector.extract_strided_slice %436 {offsets = [0, 24], sizes = [8, 8], strides = [1, 1]} : vector<8x32xf32> to vector<8x8xf32>
    %491 = tpu.transpose %489, [1, 0] : vector<8x8xf32> -> vector<8x8xf32>
    %cst_167 = arith.constant dense<0.000000e+00> : vector<8x8xf32>
    %492 = tpu.matmul %488, %491, %cst_167 {dimension_numbers = #tpu.dot_dimension_numbers<[1], [0], [0], [1], [0, 0, 1, 1], [], []>} : vector<8x8xf32>, vector<8x8xf32>, vector<8x8xf32> -> vector<8x8xf32>
    %493 = arith.addf %492, %270 : vector<8x8xf32>
    %cst_168 = arith.constant dense<0xFF800000> : vector<8xf32>
    %494 = vector.multi_reduction <maximumf>, %493, %cst_168 [1] : vector<8x8xf32> to vector<8xf32>
    %495 = vector.shape_cast %494 : vector<8xf32> to vector<8x1xf32>
    %496 = vector.broadcast %495 : vector<8x1xf32> to vector<8x8xf32>
    %497 = arith.subf %493, %496 : vector<8x8xf32>
    %498 = math.exp %497 : vector<8x8xf32>
    %cst_169 = arith.constant dense<0.000000e+00> : vector<8xf32>
    %499 = vector.multi_reduction <add>, %498, %cst_169 [1] : vector<8x8xf32> to vector<8xf32>
    %500 = vector.shape_cast %499 : vector<8xf32> to vector<8x1xf32>
    %501 = tpu.reciprocal %500 {approx = true} : vector<8x1xf32> -> vector<8x1xf32>
    %502 = vector.broadcast %501 : vector<8x1xf32> to vector<8x8xf32>
    %503 = arith.mulf %498, %502 : vector<8x8xf32>
    %cst_170 = arith.constant dense<0.000000e+00> : vector<8x8xf32>
    %504 = tpu.matmul %503, %490, %cst_170 {dimension_numbers = #tpu.dot_dimension_numbers<[1], [0], [0], [1], [0, 0, 1, 1], [], []>} : vector<8x8xf32>, vector<8x8xf32>, vector<8x8xf32> -> vector<8x8xf32>
    %505 = tpu.concatenate %453, %470, %487, %504 in 1 : vector<8x8xf32>, vector<8x8xf32>, vector<8x8xf32>, vector<8x8xf32> -> vector<8x32xf32>
    %cst_171 = arith.constant dense<0.000000e+00> : vector<8x32xf32>
    %506 = tpu.matmul %505, %419, %cst_171 {dimension_numbers = #tpu.dot_dimension_numbers<[1], [0], [0], [1], [0, 0, 1, 1], [], []>} : vector<8x32xf32>, vector<32x32xf32>, vector<8x32xf32> -> vector<8x32xf32>
    %507 = vector.broadcast %420 : vector<1x32xf32> to vector<8x32xf32>
    %508 = arith.addf %506, %507 : vector<8x32xf32>
    %509 = arith.addf %416, %508 : vector<8x32xf32>
    %cst_172 = arith.constant dense<0.000000e+00> : vector<8xf32>
    %510 = vector.multi_reduction <add>, %509, %cst_172 [1] : vector<8x32xf32> to vector<8xf32>
    %511 = vector.shape_cast %510 : vector<8xf32> to vector<8x1xf32>
    %cst_173 = arith.constant 3.200000e+01 : f32
    %512 = vector.broadcast %cst_173 : f32 to vector<8x1xf32>
    %513 = arith.divf %511, %512 : vector<8x1xf32>
    %514 = vector.broadcast %513 : vector<8x1xf32> to vector<8x32xf32>
    %515 = arith.subf %509, %514 : vector<8x32xf32>
    %516 = arith.mulf %515, %515 : vector<8x32xf32>
    %cst_174 = arith.constant dense<0.000000e+00> : vector<8xf32>
    %517 = vector.multi_reduction <add>, %516, %cst_174 [1] : vector<8x32xf32> to vector<8xf32>
    %518 = vector.shape_cast %517 : vector<8xf32> to vector<8x1xf32>
    %cst_175 = arith.constant 3.200000e+01 : f32
    %519 = vector.broadcast %cst_175 : f32 to vector<8x1xf32>
    %520 = arith.divf %518, %519 : vector<8x1xf32>
    %521 = vector.broadcast %513 : vector<8x1xf32> to vector<8x32xf32>
    %522 = arith.subf %509, %521 : vector<8x32xf32>
    %cst_176 = arith.constant 9.99999974E-6 : f32
    %523 = vector.broadcast %cst_176 : f32 to vector<8x1xf32>
    %524 = arith.addf %520, %523 : vector<8x1xf32>
    %525 = math.rsqrt %524 : vector<8x1xf32>
    %526 = vector.broadcast %525 : vector<8x1xf32> to vector<8x32xf32>
    %527 = arith.mulf %522, %526 : vector<8x32xf32>
    %528 = vector.broadcast %421 : vector<1x32xf32> to vector<8x32xf32>
    %529 = arith.mulf %527, %528 : vector<8x32xf32>
    %530 = vector.broadcast %422 : vector<1x32xf32> to vector<8x32xf32>
    %531 = arith.addf %529, %530 : vector<8x32xf32>
    %cst_177 = arith.constant dense<0.000000e+00> : vector<8x128xf32>
    %532 = tpu.matmul %531, %423, %cst_177 {dimension_numbers = #tpu.dot_dimension_numbers<[1], [0], [0], [1], [0, 0, 1, 1], [], []>} : vector<8x32xf32>, vector<32x128xf32>, vector<8x128xf32> -> vector<8x128xf32>
    %533 = vector.broadcast %424 : vector<1x128xf32> to vector<8x128xf32>
    %534 = arith.addf %532, %533 : vector<8x128xf32>
    %cst_178 = arith.constant 0.000000e+00 : f32
    %535 = vector.broadcast %cst_178 : f32 to vector<8x128xf32>
    %536 = arith.maximumf %534, %535 : vector<8x128xf32>
    %cst_179 = arith.constant dense<0.000000e+00> : vector<8x32xf32>
    %537 = tpu.matmul %536, %425, %cst_179 {dimension_numbers = #tpu.dot_dimension_numbers<[1], [0], [0], [1], [0, 0, 1, 1], [], []>} : vector<8x128xf32>, vector<128x32xf32>, vector<8x32xf32> -> vector<8x32xf32>
    %538 = vector.broadcast %426 : vector<1x32xf32> to vector<8x32xf32>
    %539 = arith.addf %537, %538 : vector<8x32xf32>
    %540 = arith.addf %531, %539 : vector<8x32xf32>
    %cst_180 = arith.constant dense<0.000000e+00> : vector<8xf32>
    %541 = vector.multi_reduction <add>, %540, %cst_180 [1] : vector<8x32xf32> to vector<8xf32>
    %542 = vector.shape_cast %541 : vector<8xf32> to vector<8x1xf32>
    %cst_181 = arith.constant 3.200000e+01 : f32
    %543 = vector.broadcast %cst_181 : f32 to vector<8x1xf32>
    %544 = arith.divf %542, %543 : vector<8x1xf32>
    %545 = vector.broadcast %544 : vector<8x1xf32> to vector<8x32xf32>
    %546 = arith.subf %540, %545 : vector<8x32xf32>
    %547 = arith.mulf %546, %546 : vector<8x32xf32>
    %cst_182 = arith.constant dense<0.000000e+00> : vector<8xf32>
    %548 = vector.multi_reduction <add>, %547, %cst_182 [1] : vector<8x32xf32> to vector<8xf32>
    %549 = vector.shape_cast %548 : vector<8xf32> to vector<8x1xf32>
    %cst_183 = arith.constant 3.200000e+01 : f32
    %550 = vector.broadcast %cst_183 : f32 to vector<8x1xf32>
    %551 = arith.divf %549, %550 : vector<8x1xf32>
    %552 = vector.broadcast %544 : vector<8x1xf32> to vector<8x32xf32>
    %553 = arith.subf %540, %552 : vector<8x32xf32>
    %cst_184 = arith.constant 9.99999974E-6 : f32
    %554 = vector.broadcast %cst_184 : f32 to vector<8x1xf32>
    %555 = arith.addf %551, %554 : vector<8x1xf32>
    %556 = math.rsqrt %555 : vector<8x1xf32>
    %557 = vector.broadcast %556 : vector<8x1xf32> to vector<8x32xf32>
    %558 = arith.mulf %553, %557 : vector<8x32xf32>
    %559 = vector.broadcast %427 : vector<1x32xf32> to vector<8x32xf32>
    %560 = arith.mulf %558, %559 : vector<8x32xf32>
    %561 = vector.broadcast %428 : vector<1x32xf32> to vector<8x32xf32>
    %562 = arith.addf %560, %561 : vector<8x32xf32>
    %c0_185 = arith.constant 0 : index
    %c0_186 = arith.constant 0 : index
    %563 = vector.load %arg4[%c0_185, %c0_186] : memref<2x8xf32, #tpu.memory_space<vmem>>, vector<2x8xf32>
    %cst_187 = arith.constant dense<0.000000e+00> : vector<2x32xf32>
    %564 = tpu.matmul %563, %562, %cst_187 {dimension_numbers = #tpu.dot_dimension_numbers<[1], [0], [0], [1], [0, 0, 1, 1], [], []>} : vector<2x8xf32>, vector<8x32xf32>, vector<2x32xf32> -> vector<2x32xf32>
    %c0_188 = arith.constant 0 : index
    %c0_189 = arith.constant 0 : index
    %565 = vector.load %arg36[%c0_188, %c0_189] : memref<32x32xf32, #tpu.memory_space<vmem>>, vector<32x32xf32>
    %cst_190 = arith.constant dense<0.000000e+00> : vector<2x32xf32>
    %566 = tpu.matmul %564, %565, %cst_190 {dimension_numbers = #tpu.dot_dimension_numbers<[1], [0], [0], [1], [0, 0, 1, 1], [], []>} : vector<2x32xf32>, vector<32x32xf32>, vector<2x32xf32> -> vector<2x32xf32>
    %c0_191 = arith.constant 0 : index
    %c0_192 = arith.constant 0 : index
    %567 = vector.load %arg37[%c0_191, %c0_192] : memref<1x32xf32, #tpu.memory_space<vmem>>, vector<1x32xf32>
    %568 = vector.broadcast %567 : vector<1x32xf32> to vector<2x32xf32>
    %569 = arith.addf %566, %568 : vector<2x32xf32>
    %cst_193 = arith.constant 0.000000e+00 : f32
    %570 = vector.broadcast %cst_193 : f32 to vector<2x32xf32>
    %571 = arith.maximumf %569, %570 : vector<2x32xf32>
    %c0_194 = arith.constant 0 : index
    %c0_195 = arith.constant 0 : index
    %572 = vector.load %arg38[%c0_194, %c0_195] : memref<32x6xf32, #tpu.memory_space<vmem>>, vector<32x6xf32>
    %cst_196 = arith.constant dense<0.000000e+00> : vector<2x6xf32>
    %573 = tpu.matmul %571, %572, %cst_196 {dimension_numbers = #tpu.dot_dimension_numbers<[1], [0], [0], [1], [0, 0, 1, 1], [], []>} : vector<2x32xf32>, vector<32x6xf32>, vector<2x6xf32> -> vector<2x6xf32>
    %c0_197 = arith.constant 0 : index
    %c0_198 = arith.constant 0 : index
    %574 = vector.load %arg39[%c0_197, %c0_198] : memref<1x6xf32, #tpu.memory_space<vmem>>, vector<1x6xf32>
    %575 = vector.broadcast %574 : vector<1x6xf32> to vector<2x6xf32>
    %576 = arith.addf %573, %575 : vector<2x6xf32>
    %c0_199 = arith.constant 0 : index
    %c0_200 = arith.constant 0 : index
    %577 = vector.load %arg40[%c0_199, %c0_200] : memref<2x6xf32, #tpu.memory_space<vmem>>, vector<2x6xf32>
    tpu.vector_store %arg40[%c0_199, %c0_200], %576 {strides = array<i32>} : memref<2x6xf32, #tpu.memory_space<vmem>>, vector<2x6xf32>,
    return
  }
  func.func @transform_0(%arg0: i32) -> (i32, i32) {
    %c0_i32 = arith.constant 0 : i32
    %c0_i32_0 = arith.constant 0 : i32
    %c0_i32_1 = arith.constant 0 : i32
    return %c0_i32, %c0_i32_0 : i32, i32
  }
  func.func @transform_1(%arg0: i32) -> (i32, i32) {
    %c0_i32 = arith.constant 0 : i32
    %c0_i32_0 = arith.constant 0 : i32
    %c0_i32_1 = arith.constant 0 : i32
    return %c0_i32, %c0_i32_0 : i32, i32
  }
  func.func @transform_2(%arg0: i32) -> (i32, i32) {
    %c0_i32 = arith.constant 0 : i32
    %c0_i32_0 = arith.constant 0 : i32
    %c0_i32_1 = arith.constant 0 : i32
    return %c0_i32, %c0_i32_0 : i32, i32
  }
  func.func @transform_3(%arg0: i32) -> (i32, i32) {
    %c0_i32 = arith.constant 0 : i32
    %c0_i32_0 = arith.constant 0 : i32
    %c0_i32_1 = arith.constant 0 : i32
    return %c0_i32, %c0_i32_0 : i32, i32
  }
  func.func @transform_4(%arg0: i32) -> (i32, i32) {
    %c0_i32 = arith.constant 0 : i32
    %c0_i32_0 = arith.constant 0 : i32
    %c0_i32_1 = arith.constant 0 : i32
    return %c0_i32, %c0_i32_0 : i32, i32
  }
  func.func @transform_5(%arg0: i32) -> (i32, i32) {
    %c0_i32 = arith.constant 0 : i32
    %c0_i32_0 = arith.constant 0 : i32
    %c0_i32_1 = arith.constant 0 : i32
    return %c0_i32, %c0_i32_0 : i32, i32
  }
  func.func @transform_6(%arg0: i32) -> (i32, i32) {
    %c0_i32 = arith.constant 0 : i32
    %c0_i32_0 = arith.constant 0 : i32
    %c0_i32_1 = arith.constant 0 : i32
    return %c0_i32, %c0_i32_0 : i32, i32
  }
  func.func @transform_7(%arg0: i32) -> (i32, i32) {
    %c0_i32 = arith.constant 0 : i32
    %c0_i32_0 = arith.constant 0 : i32
    %c0_i32_1 = arith.constant 0 : i32
    return %c0_i32, %c0_i32_0 : i32, i32
  }
  func.func @transform_8(%arg0: i32) -> (i32, i32, i32) {
    %c0_i32 = arith.constant 0 : i32
    %c0_i32_0 = arith.constant 0 : i32
    %c0_i32_1 = arith.constant 0 : i32
    %c0_i32_2 = arith.constant 0 : i32
    return %c0_i32, %c0_i32_0, %c0_i32_1 : i32, i32, i32
  }
  func.func @transform_9(%arg0: i32) -> (i32, i32) {
    %c0_i32 = arith.constant 0 : i32
    %c0_i32_0 = arith.constant 0 : i32
    %c0_i32_1 = arith.constant 0 : i32
    return %c0_i32, %c0_i32_0 : i32, i32
  }
  func.func @transform_10(%arg0: i32) -> (i32, i32) {
    %c0_i32 = arith.constant 0 : i32
    %c0_i32_0 = arith.constant 0 : i32
    %c0_i32_1 = arith.constant 0 : i32
    return %c0_i32, %c0_i32_0 : i32, i32
  }
  func.func @transform_11(%arg0: i32) -> (i32, i32) {
    %c0_i32 = arith.constant 0 : i32
    %c0_i32_0 = arith.constant 0 : i32
    %c0_i32_1 = arith.constant 0 : i32
    return %c0_i32, %c0_i32_0 : i32, i32
  }
  func.func @transform_12(%arg0: i32) -> (i32, i32) {
    %c0_i32 = arith.constant 0 : i32
    %c0_i32_0 = arith.constant 0 : i32
    %c0_i32_1 = arith.constant 0 : i32
    return %c0_i32, %c0_i32_0 : i32, i32
  }
  func.func @transform_13(%arg0: i32) -> (i32, i32) {
    %c0_i32 = arith.constant 0 : i32
    %c0_i32_0 = arith.constant 0 : i32
    %c0_i32_1 = arith.constant 0 : i32
    return %c0_i32, %c0_i32_0 : i32, i32
  }
  func.func @transform_14(%arg0: i32) -> (i32, i32) {
    %c0_i32 = arith.constant 0 : i32
    %c0_i32_0 = arith.constant 0 : i32
    %c0_i32_1 = arith.constant 0 : i32
    return %c0_i32, %c0_i32_0 : i32, i32
  }
  func.func @transform_15(%arg0: i32) -> (i32, i32) {
    %c0_i32 = arith.constant 0 : i32
    %c0_i32_0 = arith.constant 0 : i32
    %c0_i32_1 = arith.constant 0 : i32
    return %c0_i32, %c0_i32_0 : i32, i32
  }
  func.func @transform_16(%arg0: i32) -> (i32, i32) {
    %c0_i32 = arith.constant 0 : i32
    %c0_i32_0 = arith.constant 0 : i32
    %c0_i32_1 = arith.constant 0 : i32
    return %c0_i32, %c0_i32_0 : i32, i32
  }
  func.func @transform_17(%arg0: i32) -> (i32, i32) {
    %c0_i32 = arith.constant 0 : i32
    %c0_i32_0 = arith.constant 0 : i32
    %c0_i32_1 = arith.constant 0 : i32
    return %c0_i32, %c0_i32_0 : i32, i32
  }
  func.func @transform_18(%arg0: i32) -> (i32, i32) {
    %c0_i32 = arith.constant 0 : i32
    %c0_i32_0 = arith.constant 0 : i32
    %c0_i32_1 = arith.constant 0 : i32
    return %c0_i32, %c0_i32_0 : i32, i32
  }
  func.func @transform_19(%arg0: i32) -> (i32, i32) {
    %c0_i32 = arith.constant 0 : i32
    %c0_i32_0 = arith.constant 0 : i32
    %c0_i32_1 = arith.constant 0 : i32
    return %c0_i32, %c0_i32_0 : i32, i32
  }
  func.func @transform_20(%arg0: i32) -> (i32, i32) {
    %c0_i32 = arith.constant 0 : i32
    %c0_i32_0 = arith.constant 0 : i32
    %c0_i32_1 = arith.constant 0 : i32
    return %c0_i32, %c0_i32_0 : i32, i32
  }
  func.func @transform_21(%arg0: i32) -> (i32, i32) {
    %c0_i32 = arith.constant 0 : i32
    %c0_i32_0 = arith.constant 0 : i32
    %c0_i32_1 = arith.constant 0 : i32
    return %c0_i32, %c0_i32_0 : i32, i32
  }
  func.func @transform_22(%arg0: i32) -> (i32, i32) {
    %c0_i32 = arith.constant 0 : i32
    %c0_i32_0 = arith.constant 0 : i32
    %c0_i32_1 = arith.constant 0 : i32
    return %c0_i32, %c0_i32_0 : i32, i32
  }
  func.func @transform_23(%arg0: i32) -> (i32, i32) {
    %c0_i32 = arith.constant 0 : i32
    %c0_i32_0 = arith.constant 0 : i32
    %c0_i32_1 = arith.constant 0 : i32
    return %c0_i32, %c0_i32_0 : i32, i32
  }
  func.func @transform_24(%arg0: i32) -> (i32, i32) {
    %c0_i32 = arith.constant 0 : i32
    %c0_i32_0 = arith.constant 0 : i32
    %c0_i32_1 = arith.constant 0 : i32
    return %c0_i32, %c0_i32_0 : i32, i32
  }
  func.func @transform_25(%arg0: i32) -> (i32, i32) {
    %c0_i32 = arith.constant 0 : i32
    %c0_i32_0 = arith.constant 0 : i32
    %c0_i32_1 = arith.constant 0 : i32
    return %c0_i32, %c0_i32_0 : i32, i32
  }
  func.func @transform_26(%arg0: i32) -> (i32, i32) {
    %c0_i32 = arith.constant 0 : i32
    %c0_i32_0 = arith.constant 0 : i32
    %c0_i32_1 = arith.constant 0 : i32
    return %c0_i32, %c0_i32_0 : i32, i32
  }
  func.func @transform_27(%arg0: i32) -> (i32, i32) {
    %c0_i32 = arith.constant 0 : i32
    %c0_i32_0 = arith.constant 0 : i32
    %c0_i32_1 = arith.constant 0 : i32
    return %c0_i32, %c0_i32_0 : i32, i32
  }
  func.func @transform_28(%arg0: i32) -> (i32, i32) {
    %c0_i32 = arith.constant 0 : i32
    %c0_i32_0 = arith.constant 0 : i32
    %c0_i32_1 = arith.constant 0 : i32
    return %c0_i32, %c0_i32_0 : i32, i32
  }
  func.func @transform_29(%arg0: i32) -> (i32, i32) {
    %c0_i32 = arith.constant 0 : i32
    %c0_i32_0 = arith.constant 0 : i32
    %c0_i32_1 = arith.constant 0 : i32
    return %c0_i32, %c0_i32_0 : i32, i32
  }
  func.func @transform_30(%arg0: i32) -> (i32, i32) {
    %c0_i32 = arith.constant 0 : i32
    %c0_i32_0 = arith.constant 0 : i32
    %c0_i32_1 = arith.constant 0 : i32
    return %c0_i32, %c0_i32_0 : i32, i32
  }
  func.func @transform_31(%arg0: i32) -> (i32, i32) {
    %c0_i32 = arith.constant 0 : i32
    %c0_i32_0 = arith.constant 0 : i32
    %c0_i32_1 = arith.constant 0 : i32
    return %c0_i32, %c0_i32_0 : i32, i32
  }
  func.func @transform_32(%arg0: i32) -> (i32, i32) {
    %c0_i32 = arith.constant 0 : i32
    %c0_i32_0 = arith.constant 0 : i32
    %c0_i32_1 = arith.constant 0 : i32
    return %c0_i32, %c0_i32_0 : i32, i32
  }
  func.func @transform_33(%arg0: i32) -> (i32, i32) {
    %c0_i32 = arith.constant 0 : i32
    %c0_i32_0 = arith.constant 0 : i32
    %c0_i32_1 = arith.constant 0 : i32
    return %c0_i32, %c0_i32_0 : i32, i32
  }
  func.func @transform_34(%arg0: i32) -> (i32, i32) {
    %c0_i32 = arith.constant 0 : i32
    %c0_i32_0 = arith.constant 0 : i32
    %c0_i32_1 = arith.constant 0 : i32
    return %c0_i32, %c0_i32_0 : i32, i32
  }
  func.func @transform_35(%arg0: i32) -> (i32, i32) {
    %c0_i32 = arith.constant 0 : i32
    %c0_i32_0 = arith.constant 0 : i32
    %c0_i32_1 = arith.constant 0 : i32
    return %c0_i32, %c0_i32_0 : i32, i32
  }
  func.func @transform_36(%arg0: i32) -> (i32, i32) {
    %c0_i32 = arith.constant 0 : i32
    %c0_i32_0 = arith.constant 0 : i32
    %c0_i32_1 = arith.constant 0 : i32
    return %c0_i32, %c0_i32_0 : i32, i32
  }
  func.func @transform_37(%arg0: i32) -> (i32, i32) {
    %c0_i32 = arith.constant 0 : i32
    %c0_i32_0 = arith.constant 0 : i32
    %c0_i32_1 = arith.constant 0 : i32
    return %c0_i32, %c0_i32_0 : i32, i32
  }
  func.func @transform_38(%arg0: i32) -> (i32, i32) {
    %c0_i32 = arith.constant 0 : i32
    %c0_i32_0 = arith.constant 0 : i32
    %c0_i32_1 = arith.constant 0 : i32
    return %c0_i32, %c0_i32_0 : i32, i32
  }
  func.func @transform_39(%arg0: i32) -> (i32, i32) {
    %c0_i32 = arith.constant 0 : i32
    %c0_i32_0 = arith.constant 0 : i32
    %c0_i32_1 = arith.constant 0 : i32
    return %c0_i32, %c0_i32_0 : i32, i32
  }
}

</mosaic_0001>

<llo_original>
// kernel: transformer_policy_forward.1
$region0: #{transformer_policy_forward.1}
  #allocation0 [shape = 'u32[]', space=smem, size = 0x4, offset = 0x4, fixed_abs, tag = 'smem constant byte address 0x4 - core index']
  #allocation1 [shape = 'u32[144,128]{1,0:T(1,128)}', space=vmem, size = 0x12000, scoped, tag = 'internal scratch']
  %s0 = inlined_call_operand.smem [shape: u32[40], index: -1, kind: input, shape index: {}]
  %s1 = sld [smem:[%s0]]
  %s2 = scalar_lea.smem %s0, 1
  %s3 = sld [smem:[%s2]]
  %s4 = scalar_lea.smem %s0, 2
  %s5 = sld [smem:[%s4]]
  %s6 = scalar_lea.smem %s0, 3
  %s7 = sld [smem:[%s6]]
  %s8 = scalar_lea.smem %s0, 4
  %s9 = sld [smem:[%s8]]
  %s10 = scalar_lea.smem %s0, 5
  %s11 = sld [smem:[%s10]]
  %s12 = scalar_lea.smem %s0, 6
  %s13 = sld [smem:[%s12]]
  %s14 = scalar_lea.smem %s0, 7
  %s15 = sld [smem:[%s14]]
  %s16 = scalar_lea.smem %s0, 8
  %s17 = sld [smem:[%s16]]
  %s18 = scalar_lea.smem %s0, 9
  %s19 = sld [smem:[%s18]]
  %s20 = scalar_lea.smem %s0, 10
  %s21 = sld [smem:[%s20]]
  %s22 = scalar_lea.smem %s0, 11
  %s23 = sld [smem:[%s22]]
  %s24 = scalar_lea.smem %s0, 12
  %s25 = sld [smem:[%s24]]
  %s26 = scalar_lea.smem %s0, 13
  %s27 = sld [smem:[%s26]]
  %s28 = scalar_lea.smem %s0, 14
  %s29 = sld [smem:[%s28]]
  %s30 = scalar_lea.smem %s0, 15
  %s31 = sld [smem:[%s30]]
  %s32 = scalar_lea.smem %s0, 16
  %s33 = sld [smem:[%s32]]
  %s34 = scalar_lea.smem %s0, 17
  %s35 = sld [smem:[%s34]]
  %s36 = scalar_lea.smem %s0, 18
  %s37 = sld [smem:[%s36]]
  %s38 = scalar_lea.smem %s0, 19
  %s39 = sld [smem:[%s38]]
  %s40 = scalar_lea.smem %s0, 20
  %s41 = sld [smem:[%s40]]
  %s42 = scalar_lea.smem %s0, 21
  %s43 = sld [smem:[%s42]]
  %s44 = scalar_lea.smem %s0, 22
  %s45 = sld [smem:[%s44]]
  %s46 = scalar_lea.smem %s0, 23
  %s47 = sld [smem:[%s46]]
  %s48 = scalar_lea.smem %s0, 24
  %s49 = sld [smem:[%s48]]
  %s50 = scalar_lea.smem %s0, 25
  %s51 = sld [smem:[%s50]]
  %s52 = scalar_lea.smem %s0, 26
  %s53 = sld [smem:[%s52]]
  %s54 = scalar_lea.smem %s0, 27
  %s55 = sld [smem:[%s54]]
  %s56 = scalar_lea.smem %s0, 28
  %s57 = sld [smem:[%s56]]
  %s58 = scalar_lea.smem %s0, 29
  %s59 = sld [smem:[%s58]]
  %s60 = scalar_lea.smem %s0, 30
  %s61 = sld [smem:[%s60]]
  %s62 = scalar_lea.smem %s0, 31
  %s63 = sld [smem:[%s62]]
  %s64 = scalar_lea.smem %s0, 32
  %s65 = sld [smem:[%s64]]
  %s66 = scalar_lea.smem %s0, 33
  %s67 = sld [smem:[%s66]]
  %s68 = scalar_lea.smem %s0, 34
  %s69 = sld [smem:[%s68]]
  %s70 = scalar_lea.smem %s0, 35
  %s71 = sld [smem:[%s70]]
  %s72 = scalar_lea.smem %s0, 36
  %s73 = sld [smem:[%s72]]
  %s74 = scalar_lea.smem %s0, 37
  %s75 = sld [smem:[%s74]]
  %s76 = scalar_lea.smem %s0, 38
  %s77 = sld [smem:[%s76]]
  %s78 = scalar_lea.smem %s0, 39
  %s79 = sld [smem:[%s78]]
  %s80 = sld [smem:[#allocation0]]
  $region166: #{transformer_policy_forward.1} parent=0
    _
  %s82 = ssub.s32 1, %s80
  %s83 = scalar_select 0, %s82, %s80
  $region1: #{transformer_policy_forward.1} parent=0
    #allocation2 [shape = 'u8[1024]{0}', space=vmem, size = 0x400, scoped, tag = 'output window, operand 0, single buffered']
    #allocation3 [shape = 's32[1]{0}', space=sflag, size = 0x4, scoped, tag = 'scoped memory for transformer_policy_forward.1']
    %84 = vsyncpa [#allocation3], 0
    // Predicated region
    $region2: #{transformer_policy_forward.1} parent=1 // pred_check
      _
    $region3: #{transformer_policy_forward.1} parent=1 // pred_check_branch
      %86 = sbr.rel (0) target = $region5
    $region4: #{transformer_policy_forward.1} parent=1 // pred_region
      _
    $region5: #{transformer_policy_forward.1} parent=1 // pred_fallthru
      _
    // Predicated region
    $region6: #{transformer_policy_forward.1} parent=1 // pred_check
      _
    $region7: #{transformer_policy_forward.1} parent=1 // pred_check_branch
      %88 = sbr.rel (0) target = $region9
    $region8: #{transformer_policy_forward.1} parent=1 // pred_region
      _
    $region9: #{transformer_policy_forward.1} parent=1 // pred_fallthru
      _
    // Predicated region
    $region10: #{transformer_policy_forward.1} parent=1 // pred_check
      _
    $region11: #{transformer_policy_forward.1} parent=1 // pred_check_branch
      %90 = sbr.rel (0) target = $region13
    $region12: #{transformer_policy_forward.1} parent=1 // pred_region
      _
    $region13: #{transformer_policy_forward.1} parent=1 // pred_fallthru
      _
    // Predicated region
    $region14: #{transformer_policy_forward.1} parent=1 // pred_check
      _
    $region15: #{transformer_policy_forward.1} parent=1 // pred_check_branch
      %92 = sbr.rel (0) target = $region17
    $region16: #{transformer_policy_forward.1} parent=1 // pred_region
      _
    $region17: #{transformer_policy_forward.1} parent=1 // pred_fallthru
      _
    // Predicated region
    $region18: #{transformer_policy_forward.1} parent=1 // pred_check
      _
    $region19: #{transformer_policy_forward.1} parent=1 // pred_check_branch
      %94 = sbr.rel (0) target = $region21
    $region20: #{transformer_policy_forward.1} parent=1 // pred_region
      _
    $region21: #{transformer_policy_forward.1} parent=1 // pred_fallthru
      _
    // Predicated region
    $region22: #{transformer_policy_forward.1} parent=1 // pred_check
      _
    $region23: #{transformer_policy_forward.1} parent=1 // pred_check_branch
      %96 = sbr.rel (0) target = $region25
    $region24: #{transformer_policy_forward.1} parent=1 // pred_region
      _
    $region25: #{transformer_policy_forward.1} parent=1 // pred_fallthru
      _
    // Predicated region
    $region26: #{transformer_policy_forward.1} parent=1 // pred_check
      _
    $region27: #{transformer_policy_forward.1} parent=1 // pred_check_branch
      %98 = sbr.rel (0) target = $region29
    $region28: #{transformer_policy_forward.1} parent=1 // pred_region
      _
    $region29: #{transformer_policy_forward.1} parent=1 // pred_fallthru
      _
    // Predicated region
    $region30: #{transformer_policy_forward.1} parent=1 // pred_check
      _
    $region31: #{transformer_policy_forward.1} parent=1 // pred_check_branch
      %100 = sbr.rel (0) target = $region33
    $region32: #{transformer_policy_forward.1} parent=1 // pred_region
      _
    $region33: #{transformer_policy_forward.1} parent=1 // pred_fallthru
      _
    // Predicated region
    $region34: #{transformer_policy_forward.1} parent=1 // pred_check
      _
    $region35: #{transformer_policy_forward.1} parent=1 // pred_check_branch
      %102 = sbr.rel (0) target = $region37
    $region36: #{transformer_policy_forward.1} parent=1 // pred_region
      _
    $region37: #{transformer_policy_forward.1} parent=1 // pred_fallthru
      _
    // Predicated region
    $region38: #{transformer_policy_forward.1} parent=1 // pred_check
      _
    $region39: #{transformer_policy_forward.1} parent=1 // pred_check_branch
      %104 = sbr.rel (0) target = $region41
    $region40: #{transformer_policy_forward.1} parent=1 // pred_region
      _
    $region41: #{transformer_policy_forward.1} parent=1 // pred_fallthru
      _
    // Predicated region
    $region42: #{transformer_policy_forward.1} parent=1 // pred_check
      _
    $region43: #{transformer_policy_forward.1} parent=1 // pred_check_branch
      %106 = sbr.rel (0) target = $region45
    $region44: #{transformer_policy_forward.1} parent=1 // pred_region
      _
    $region45: #{transformer_policy_forward.1} parent=1 // pred_fallthru
      _
    // Predicated region
    $region46: #{transformer_policy_forward.1} parent=1 // pred_check
      _
    $region47: #{transformer_policy_forward.1} parent=1 // pred_check_branch
      %108 = sbr.rel (0) target = $region49
    $region48: #{transformer_policy_forward.1} parent=1 // pred_region
      _
    $region49: #{transformer_policy_forward.1} parent=1 // pred_fallthru
      _
    // Predicated region
    $region50: #{transformer_policy_forward.1} parent=1 // pred_check
      _
    $region51: #{transformer_policy_forward.1} parent=1 // pred_check_branch
      %110 = sbr.rel (0) target = $region53
    $region52: #{transformer_policy_forward.1} parent=1 // pred_region
      _
    $region53: #{transformer_policy_forward.1} parent=1 // pred_fallthru
      _
    // Predicated region
    $region54: #{transformer_policy_forward.1} parent=1 // pred_check
      _
    $region55: #{transformer_policy_forward.1} parent=1 // pred_check_branch
      %112 = sbr.rel (0) target = $region57
    $region56: #{transformer_policy_forward.1} parent=1 // pred_region
      _
    $region57: #{transformer_policy_forward.1} parent=1 // pred_fallthru
      _
    // Predicated region
    $region58: #{transformer_policy_forward.1} parent=1 // pred_check
      _
    $region59: #{transformer_policy_forward.1} parent=1 // pred_check_branch
      %114 = sbr.rel (0) target = $region61
    $region60: #{transformer_policy_forward.1} parent=1 // pred_region
      _
    $region61: #{transformer_policy_forward.1} parent=1 // pred_fallthru
      _
    // Predicated region
    $region62: #{transformer_policy_forward.1} parent=1 // pred_check
      _
    $region63: #{transformer_policy_forward.1} parent=1 // pred_check_branch
      %116 = sbr.rel (0) target = $region65
    $region64: #{transformer_policy_forward.1} parent=1 // pred_region
      _
    $region65: #{transformer_policy_forward.1} parent=1 // pred_fallthru
      _
    // Predicated region
    $region66: #{transformer_policy_forward.1} parent=1 // pred_check
      _
    $region67: #{transformer_policy_forward.1} parent=1 // pred_check_branch
      %118 = sbr.rel (0) target = $region69
    $region68: #{transformer_policy_forward.1} parent=1 // pred_region
      _
    $region69: #{transformer_policy_forward.1} parent=1 // pred_fallthru
      _
    // Predicated region
    $region70: #{transformer_policy_forward.1} parent=1 // pred_check
      _
    $region71: #{transformer_policy_forward.1} parent=1 // pred_check_branch
      %120 = sbr.rel (0) target = $region73
    $region72: #{transformer_policy_forward.1} parent=1 // pred_region
      _
    $region73: #{transformer_policy_forward.1} parent=1 // pred_fallthru
      _
    // Predicated region
    $region74: #{transformer_policy_forward.1} parent=1 // pred_check
      _
    $region75: #{transformer_policy_forward.1} parent=1 // pred_check_branch
      %122 = sbr.rel (0) target = $region77
    $region76: #{transformer_policy_forward.1} parent=1 // pred_region
      _
    $region77: #{transformer_policy_forward.1} parent=1 // pred_fallthru
      _
    // Predicated region
    $region78: #{transformer_policy_forward.1} parent=1 // pred_check
      _
    $region79: #{transformer_policy_forward.1} parent=1 // pred_check_branch
      %124 = sbr.rel (0) target = $region81
    $region80: #{transformer_policy_forward.1} parent=1 // pred_region
      _
    $region81: #{transformer_policy_forward.1} parent=1 // pred_fallthru
      _
    // Predicated region
    $region82: #{transformer_policy_forward.1} parent=1 // pred_check
      _
    $region83: #{transformer_policy_forward.1} parent=1 // pred_check_branch
      %126 = sbr.rel (0) target = $region85
    $region84: #{transformer_policy_forward.1} parent=1 // pred_region
      _
    $region85: #{transformer_policy_forward.1} parent=1 // pred_fallthru
      _
    // Predicated region
    $region86: #{transformer_policy_forward.1} parent=1 // pred_check
      _
    $region87: #{transformer_policy_forward.1} parent=1 // pred_check_branch
      %128 = sbr.rel (0) target = $region89
    $region88: #{transformer_policy_forward.1} parent=1 // pred_region
      _
    $region89: #{transformer_policy_forward.1} parent=1 // pred_fallthru
      _
    // Predicated region
    $region90: #{transformer_policy_forward.1} parent=1 // pred_check
      _
    $region91: #{transformer_policy_forward.1} parent=1 // pred_check_branch
      %130 = sbr.rel (0) target = $region93
    $region92: #{transformer_policy_forward.1} parent=1 // pred_region
      _
    $region93: #{transformer_policy_forward.1} parent=1 // pred_fallthru
      _
    // Predicated region
    $region94: #{transformer_policy_forward.1} parent=1 // pred_check
      _
    $region95: #{transformer_policy_forward.1} parent=1 // pred_check_branch
      %132 = sbr.rel (0) target = $region97
    $region96: #{transformer_policy_forward.1} parent=1 // pred_region
      _
    $region97: #{transformer_policy_forward.1} parent=1 // pred_fallthru
      _
    // Predicated region
    $region98: #{transformer_policy_forward.1} parent=1 // pred_check
      _
    $region99: #{transformer_policy_forward.1} parent=1 // pred_check_branch
      %134 = sbr.rel (0) target = $region101
    $region100: #{transformer_policy_forward.1} parent=1 // pred_region
      _
    $region101: #{transformer_policy_forward.1} parent=1 // pred_fallthru
      _
    // Predicated region
    $region102: #{transformer_policy_forward.1} parent=1 // pred_check
      _
    $region103: #{transformer_policy_forward.1} parent=1 // pred_check_branch
      %136 = sbr.rel (0) target = $region105
    $region104: #{transformer_policy_forward.1} parent=1 // pred_region
      _
    $region105: #{transformer_policy_forward.1} parent=1 // pred_fallthru
      _
    // Predicated region
    $region106: #{transformer_policy_forward.1} parent=1 // pred_check
      _
    $region107: #{transformer_policy_forward.1} parent=1 // pred_check_branch
      %138 = sbr.rel (0) target = $region109
    $region108: #{transformer_policy_forward.1} parent=1 // pred_region
      _
    $region109: #{transformer_policy_forward.1} parent=1 // pred_fallthru
      _
    // Predicated region
    $region110: #{transformer_policy_forward.1} parent=1 // pred_check
      _
    $region111: #{transformer_policy_forward.1} parent=1 // pred_check_branch
      %140 = sbr.rel (0) target = $region113
    $region112: #{transformer_policy_forward.1} parent=1 // pred_region
      _
    $region113: #{transformer_policy_forward.1} parent=1 // pred_fallthru
      _
    // Predicated region
    $region114: #{transformer_policy_forward.1} parent=1 // pred_check
      _
    $region115: #{transformer_policy_forward.1} parent=1 // pred_check_branch
      %142 = sbr.rel (0) target = $region117
    $region116: #{transformer_policy_forward.1} parent=1 // pred_region
      _
    $region117: #{transformer_policy_forward.1} parent=1 // pred_fallthru
      _
    // Predicated region
    $region118: #{transformer_policy_forward.1} parent=1 // pred_check
      _
    $region119: #{transformer_policy_forward.1} parent=1 // pred_check_branch
      %144 = sbr.rel (0) target = $region121
    $region120: #{transformer_policy_forward.1} parent=1 // pred_region
      _
    $region121: #{transformer_policy_forward.1} parent=1 // pred_fallthru
      _
    // Predicated region
    $region122: #{transformer_policy_forward.1} parent=1 // pred_check
      _
    $region123: #{transformer_policy_forward.1} parent=1 // pred_check_branch
      %146 = sbr.rel (0) target = $region125
    $region124: #{transformer_policy_forward.1} parent=1 // pred_region
      _
    $region125: #{transformer_policy_forward.1} parent=1 // pred_fallthru
      _
    // Predicated region
    $region126: #{transformer_policy_forward.1} parent=1 // pred_check
      _
    $region127: #{transformer_policy_forward.1} parent=1 // pred_check_branch
      %148 = sbr.rel (0) target = $region129
    $region128: #{transformer_policy_forward.1} parent=1 // pred_region
      _
    $region129: #{transformer_policy_forward.1} parent=1 // pred_fallthru
      _
    // Predicated region
    $region130: #{transformer_policy_forward.1} parent=1 // pred_check
      _
    $region131: #{transformer_policy_forward.1} parent=1 // pred_check_branch
      %150 = sbr.rel (0) target = $region133
    $region132: #{transformer_policy_forward.1} parent=1 // pred_region
      _
    $region133: #{transformer_policy_forward.1} parent=1 // pred_fallthru
      _
    // Predicated region
    $region134: #{transformer_policy_forward.1} parent=1 // pred_check
      _
    $region135: #{transformer_policy_forward.1} parent=1 // pred_check_branch
      %152 = sbr.rel (0) target = $region137
    $region136: #{transformer_policy_forward.1} parent=1 // pred_region
      _
    $region137: #{transformer_policy_forward.1} parent=1 // pred_fallthru
      _
    // Predicated region
    $region138: #{transformer_policy_forward.1} parent=1 // pred_check
      _
    $region139: #{transformer_policy_forward.1} parent=1 // pred_check_branch
      %154 = sbr.rel (0) target = $region141
    $region140: #{transformer_policy_forward.1} parent=1 // pred_region
      _
    $region141: #{transformer_policy_forward.1} parent=1 // pred_fallthru
      _
    // Predicated region
    $region142: #{transformer_policy_forward.1} parent=1 // pred_check
      _
    $region143: #{transformer_policy_forward.1} parent=1 // pred_check_branch
      %156 = sbr.rel (0) target = $region145
    $region144: #{transformer_policy_forward.1} parent=1 // pred_region
      _
    $region145: #{transformer_policy_forward.1} parent=1 // pred_fallthru
      _
    // Predicated region
    $region146: #{transformer_policy_forward.1} parent=1 // pred_check
      _
    $region147: #{transformer_policy_forward.1} parent=1 // pred_check_branch
      %158 = sbr.rel (0) target = $region149
    $region148: #{transformer_policy_forward.1} parent=1 // pred_region
      _
    $region149: #{transformer_policy_forward.1} parent=1 // pred_fallthru
      _
    // Predicated region
    $region150: #{transformer_policy_forward.1} parent=1 // pred_check
      _
    $region151: #{transformer_policy_forward.1} parent=1 // pred_check_branch
      %160 = sbr.rel (0) target = $region153
    $region152: #{transformer_policy_forward.1} parent=1 // pred_region
      _
    $region153: #{transformer_policy_forward.1} parent=1 // pred_fallthru
      _
    // Predicated region
    $region154: #{transformer_policy_forward.1} parent=1 // pred_check
      _
    $region155: #{transformer_policy_forward.1} parent=1 // pred_check_branch
      %162 = sbr.rel (0) target = $region157
    $region156: #{transformer_policy_forward.1} parent=1 // pred_region
      _
    $region157: #{transformer_policy_forward.1} parent=1 // pred_fallthru
      _
    %v163 = vld [vmem:[%s17] sm:$0xff]
    %v164 = vld [vmem:[%s17 + $0x8] sm:$0xff]
    %v165 = vld [vmem:[%s17 + $0x10] sm:$0xff]
    %v166 = vld [vmem:[%s17 + $0x18] sm:$0xff]
    %v167 = vld [vmem:[%s17 + $0x20] sm:$0xff]
    %v168 = vld [vmem:[%s17 + $0x28] sm:$0xff]
    %v169 = vld [vmem:[%s17 + $0x30] sm:$0xff]
    %v170 = vld [vmem:[%s17 + $0x38] sm:$0xff]
    %v171 = vld [vmem:[%s17 + $0x40] sm:$0xff]
    %v172 = vld [vmem:[%s17 + $0x48] sm:$0xff]
    %v173 = vld [vmem:[%s17 + $0x50] sm:$0xff]
    %v174 = vld [vmem:[%s17 + $0x58] sm:$0xff]
    %v175 = vld [vmem:[%s17 + $0x60] sm:$0xff]
    %v176 = vld [vmem:[%s17 + $0x68] sm:$0xff]
    %v177 = vld [vmem:[%s17 + $0x70] sm:$0xff]
    %v178 = vld [vmem:[%s17 + $0x78] sm:$0xff]
    %v179 = vld [vmem:[%s17 + $0x80] sm:$0xff]
    %v180 = vld [vmem:[%s17 + $0x88] sm:$0xff]
    %v181 = vld [vmem:[%s17 + $0x90] sm:$0xff]
    %v182 = vld [vmem:[%s17 + $0x98] sm:$0xff]
    %v183 = vld [vmem:[%s17 + $0xa0] sm:$0xff]
    %v184 = vld [vmem:[%s17 + $0xa8] sm:$0xff]
    %v185 = vld [vmem:[%s17 + $0xb0] sm:$0xff]
    %v186 = vld [vmem:[%s17 + $0xb8] sm:$0xff]
    %v187 = vld [vmem:[%s17 + $0xc0] sm:$0xff]
    %v188 = vld [vmem:[%s17 + $0xc8] sm:$0xff]
    %v189 = vld [vmem:[%s17 + $0xd0] sm:$0xff]
    %v190 = vld [vmem:[%s17 + $0xd8] sm:$0xff]
    %v191 = vld [vmem:[%s17 + $0xe0] sm:$0xff]
    %v192 = vld [vmem:[%s17 + $0xe8] sm:$0xff]
    %v193 = vld [vmem:[%s17 + $0xf0] sm:$0xff]
    %v194 = vld [vmem:[%s17 + $0xf8] sm:$0xff]
    %v195 = vld [vmem:[%s17 + $0x100] sm:$0xff]
    %v196 = vld [vmem:[%s17 + $0x108] sm:$0xff]
    %v197 = vld [vmem:[%s17 + $0x110] sm:$0xff]
    %v198 = vld [vmem:[%s17 + $0x118] sm:$0xff]
    %v199 = vld [vmem:[%s17 + $0x120] sm:$0xff]
    %v200 = vld [vmem:[%s17 + $0x128] sm:$0xff]
    %v201 = vld [vmem:[%s17 + $0x130] sm:$0xff]
    %v202 = vld [vmem:[%s17 + $0x138] sm:$0xff]
    %v203 = vld [vmem:[%s17 + $0x140] sm:$0xff]
    %v204 = vld [vmem:[%s17 + $0x148] sm:$0xff]
    %v205 = vld [vmem:[%s17 + $0x150] sm:$0xff]
    %v206 = vld [vmem:[%s17 + $0x158] sm:$0xff]
    %v207 = vld [vmem:[%s17 + $0x160] sm:$0xff]
    %v208 = vld [vmem:[%s17 + $0x168] sm:$0xff]
    %v209 = vld [vmem:[%s17 + $0x170] sm:$0xff]
    %v210 = vld [vmem:[%s17 + $0x178] sm:$0xff]
    %v211 = vld [vmem:[%s17 + $0x180] sm:$0xff]
    %v212 = vld [vmem:[%s17 + $0x188] sm:$0xff]
    %v213 = vld [vmem:[%s17 + $0x190] sm:$0xff]
    %v214 = vld [vmem:[%s17 + $0x198] sm:$0xff]
    %v215 = vld [vmem:[%s17 + $0x1a0] sm:$0xff]
    %v216 = vld [vmem:[%s17 + $0x1a8] sm:$0xff]
    %v217 = vld [vmem:[%s17 + $0x1b0] sm:$0xff]
    %v218 = vld [vmem:[%s17 + $0x1b8] sm:$0xff]
    %v219 = vld [vmem:[%s17 + $0x1c0] sm:$0xff]
    %v220 = vld [vmem:[%s17 + $0x1c8] sm:$0xff]
    %v221 = vld [vmem:[%s17 + $0x1d0] sm:$0xff]
    %v222 = vld [vmem:[%s17 + $0x1d8] sm:$0xff]
    %v223 = vld [vmem:[%s17 + $0x1e0] sm:$0xff]
    %v224 = vld [vmem:[%s17 + $0x1e8] sm:$0xff]
    %v225 = vld [vmem:[%s17 + $0x1f0] sm:$0xff]
    %v226 = vld [vmem:[%s17 + $0x1f8] sm:$0xff]
    %v227 = vld [vmem:[%s17 + $0x200] sm:$0xff]
    %v228 = vld [vmem:[%s17 + $0x208] sm:$0xff]
    %v229 = vld [vmem:[%s17 + $0x210] sm:$0xff]
    %v230 = vld [vmem:[%s17 + $0x218] sm:$0xff]
    %v231 = vld [vmem:[%s17 + $0x220] sm:$0xff]
    %v232 = vld [vmem:[%s17 + $0x228] sm:$0xff]
    %v233 = vld [vmem:[%s17 + $0x230] sm:$0xff]
    %v234 = vld [vmem:[%s17 + $0x238] sm:$0xff]
    %v235 = vld [vmem:[%s17 + $0x240] sm:$0xff]
    %v236 = vld [vmem:[%s17 + $0x248] sm:$0xff]
    %v237 = vld [vmem:[%s17 + $0x250] sm:$0xff]
    %v238 = vld [vmem:[%s17 + $0x258] sm:$0xff]
    %v239 = vld [vmem:[%s17 + $0x260] sm:$0xff]
    %v240 = vld [vmem:[%s17 + $0x268] sm:$0xff]
    %v241 = vld [vmem:[%s17 + $0x270] sm:$0xff]
    %v242 = vld [vmem:[%s17 + $0x278] sm:$0xff]
    %v243 = vld [vmem:[%s17 + $0x280] sm:$0xff]
    %v244 = vld [vmem:[%s17 + $0x288] sm:$0xff]
    %v245 = vld [vmem:[%s17 + $0x290] sm:$0xff]
    %v246 = vld [vmem:[%s17 + $0x298] sm:$0xff]
    %v247 = vld [vmem:[%s17 + $0x2a0] sm:$0xff]
    %v248 = vld [vmem:[%s17 + $0x2a8] sm:$0xff]
    %v249 = vld [vmem:[%s17 + $0x2b0] sm:$0xff]
    %v250 = vld [vmem:[%s17 + $0x2b8] sm:$0xff]
    %v251 = vld [vmem:[%s17 + $0x2c0] sm:$0xff]
    %v252 = vld [vmem:[%s17 + $0x2c8] sm:$0xff]
    %v253 = vld [vmem:[%s17 + $0x2d0] sm:$0xff]
    %v254 = vld [vmem:[%s17 + $0x2d8] sm:$0xff]
    %v255 = vld [vmem:[%s17 + $0x2e0] sm:$0xff]
    %v256 = vld [vmem:[%s17 + $0x2e8] sm:$0xff]
    %v257 = vld [vmem:[%s17 + $0x2f0] sm:$0xff]
    %v258 = vld [vmem:[%s17 + $0x2f8] sm:$0xff]
    %v259 = vld [vmem:[%s17 + $0x300] sm:$0xff]
    %v260 = vld [vmem:[%s17 + $0x308] sm:$0xff]
    %v261 = vld [vmem:[%s17 + $0x310] sm:$0xff]
    %v262 = vld [vmem:[%s17 + $0x318] sm:$0xff]
    %v263 = vld [vmem:[%s17 + $0x320] sm:$0xff]
    %v264 = vld [vmem:[%s17 + $0x328] sm:$0xff]
    %v265 = vld [vmem:[%s17 + $0x330] sm:$0xff]
    %v266 = vld [vmem:[%s17 + $0x338] sm:$0xff]
    %v267 = vld [vmem:[%s17 + $0x340] sm:$0xff]
    %v268 = vld [vmem:[%s17 + $0x348] sm:$0xff]
    %v269 = vld [vmem:[%s17 + $0x350] sm:$0xff]
    %v270 = vld [vmem:[%s17 + $0x358] sm:$0xff]
    %v271 = vld [vmem:[%s17 + $0x360] sm:$0xff]
    %v272 = vld [vmem:[%s17 + $0x368] sm:$0xff]
    %v273 = vld [vmem:[%s17 + $0x370] sm:$0xff]
    %v274 = vld [vmem:[%s17 + $0x378] sm:$0xff]
    %v275 = vld [vmem:[%s17 + $0x380] sm:$0xff]
    %v276 = vld [vmem:[%s17 + $0x388] sm:$0xff]
    %v277 = vld [vmem:[%s17 + $0x390] sm:$0xff]
    %v278 = vld [vmem:[%s17 + $0x398] sm:$0xff]
    %v279 = vld [vmem:[%s17 + $0x3a0] sm:$0xff]
    %v280 = vld [vmem:[%s17 + $0x3a8] sm:$0xff]
    %v281 = vld [vmem:[%s17 + $0x3b0] sm:$0xff]
    %v282 = vld [vmem:[%s17 + $0x3b8] sm:$0xff]
    %v283 = vld [vmem:[%s17 + $0x3c0] sm:$0xff]
    %v284 = vld [vmem:[%s17 + $0x3c8] sm:$0xff]
    %v285 = vld [vmem:[%s17 + $0x3d0] sm:$0xff]
    %v286 = vld [vmem:[%s17 + $0x3d8] sm:$0xff]
    %v287 = vld [vmem:[%s17 + $0x3e0] sm:$0xff]
    %v288 = vld [vmem:[%s17 + $0x3e8] sm:$0xff]
    %v289 = vld [vmem:[%s17 + $0x3f0] sm:$0xff]
    %v290 = vld [vmem:[%s17 + $0x3f8] sm:$0xff]
    %v291 = vld [vmem:[%s17 + $0x400] sm:$0xff]
    %v292 = vld [vmem:[%s17 + $0x408] sm:$0xff]
    %v293 = vld [vmem:[%s17 + $0x410] sm:$0xff]
    %v294 = vld [vmem:[%s17 + $0x418] sm:$0xff]
    %v295 = vld [vmem:[%s17 + $0x420] sm:$0xff]
    %v296 = vld [vmem:[%s17 + $0x428] sm:$0xff]
    %v297 = vld [vmem:[%s17 + $0x430] sm:$0xff]
    %v298 = vld [vmem:[%s17 + $0x438] sm:$0xff]
    %v299 = vld [vmem:[%s17 + $0x440] sm:$0xff]
    %v300 = vld [vmem:[%s17 + $0x448] sm:$0xff]
    %v301 = vld [vmem:[%s17 + $0x450] sm:$0xff]
    %v302 = vld [vmem:[%s17 + $0x458] sm:$0xff]
    %v303 = vld [vmem:[%s17 + $0x460] sm:$0xff]
    %v304 = vld [vmem:[%s17 + $0x468] sm:$0xff]
    %v305 = vld [vmem:[%s17 + $0x470] sm:$0xff]
    %v306 = vld [vmem:[%s17 + $0x478] sm:$0xff]
    %v307 = vld [vmem:[%s17 + $0x480] sm:$0xff]
    %v308 = vld [vmem:[%s17 + $0x488] sm:$0xff]
    %v309 = vld [vmem:[%s17 + $0x490] sm:$0xff]
    %v310 = vld [vmem:[%s17 + $0x498] sm:$0xff]
    %v311 = vld [vmem:[%s17 + $0x4a0] sm:$0xff]
    %v312 = vld [vmem:[%s17 + $0x4a8] sm:$0xff]
    %v313 = vld [vmem:[%s17 + $0x4b0] sm:$0xff]
    %v314 = vld [vmem:[%s17 + $0x4b8] sm:$0xff]
    %v315 = vld [vmem:[%s17 + $0x4c0] sm:$0xff]
    %v316 = vld [vmem:[%s17 + $0x4c8] sm:$0xff]
    %v317 = vld [vmem:[%s17 + $0x4d0] sm:$0xff]
    %v318 = vld [vmem:[%s17 + $0x4d8] sm:$0xff]
    %v319 = vld [vmem:[%s17 + $0x4e0] sm:$0xff]
    %v320 = vld [vmem:[%s17 + $0x4e8] sm:$0xff]
    %v321 = vld [vmem:[%s17 + $0x4f0] sm:$0xff]
    %v322 = vld [vmem:[%s17 + $0x4f8] sm:$0xff]
    %v323 = vld [vmem:[%s17 + $0x500] sm:$0xff]
    %v324 = vld [vmem:[%s17 + $0x508] sm:$0xff]
    %v325 = vld [vmem:[%s17 + $0x510] sm:$0xff]
    %v326 = vld [vmem:[%s17 + $0x518] sm:$0xff]
    %v327 = vld [vmem:[%s17 + $0x520] sm:$0xff]
    %v328 = vld [vmem:[%s17 + $0x528] sm:$0xff]
    %v329 = vld [vmem:[%s17 + $0x530] sm:$0xff]
    %v330 = vld [vmem:[%s17 + $0x538] sm:$0xff]
    %v331 = vld [vmem:[%s17 + $0x540] sm:$0xff]
    %v332 = vld [vmem:[%s17 + $0x548] sm:$0xff]
    %v333 = vld [vmem:[%s17 + $0x550] sm:$0xff]
    %v334 = vld [vmem:[%s17 + $0x558] sm:$0xff]
    %v335 = vld [vmem:[%s17 + $0x560] sm:$0xff]
    %v336 = vld [vmem:[%s17 + $0x568] sm:$0xff]
    %v337 = vld [vmem:[%s17 + $0x570] sm:$0xff]
    %v338 = vld [vmem:[%s17 + $0x578] sm:$0xff]
    %v339 = vld [vmem:[%s17 + $0x580] sm:$0xff]
    %v340 = vld [vmem:[%s17 + $0x588] sm:$0xff]
    %v341 = vld [vmem:[%s17 + $0x590] sm:$0xff]
    %v342 = vld [vmem:[%s17 + $0x598] sm:$0xff]
    %v343 = vld [vmem:[%s17 + $0x5a0] sm:$0xff]
    %v344 = vld [vmem:[%s17 + $0x5a8] sm:$0xff]
    %v345 = vld [vmem:[%s17 + $0x5b0] sm:$0xff]
    %v346 = vld [vmem:[%s17 + $0x5b8] sm:$0xff]
    %v347 = vld [vmem:[%s17 + $0x5c0] sm:$0xff]
    %v348 = vld [vmem:[%s17 + $0x5c8] sm:$0xff]
    %v349 = vld [vmem:[%s17 + $0x5d0] sm:$0xff]
    %v350 = vld [vmem:[%s17 + $0x5d8] sm:$0xff]
    %v351 = vld [vmem:[%s17 + $0x5e0] sm:$0xff]
    %v352 = vld [vmem:[%s17 + $0x5e8] sm:$0xff]
    %v353 = vld [vmem:[%s17 + $0x5f0] sm:$0xff]
    %v354 = vld [vmem:[%s17 + $0x5f8] sm:$0xff]
    %v355 = vld [vmem:[%s17 + $0x600] sm:$0xff]
    %v356 = vld [vmem:[%s17 + $0x608] sm:$0xff]
    %v357 = vld [vmem:[%s17 + $0x610] sm:$0xff]
    %v358 = vld [vmem:[%s17 + $0x618] sm:$0xff]
    %v359 = vld [vmem:[%s17 + $0x620] sm:$0xff]
    %v360 = vld [vmem:[%s17 + $0x628] sm:$0xff]
    %v361 = vld [vmem:[%s17 + $0x630] sm:$0xff]
    %v362 = vld [vmem:[%s17 + $0x638] sm:$0xff]
    %v363 = vld [vmem:[%s17 + $0x640] sm:$0xff]
    %v364 = vld [vmem:[%s17 + $0x648] sm:$0xff]
    %v365 = vld [vmem:[%s17 + $0x650] sm:$0xff]
    %v366 = vld [vmem:[%s17 + $0x658] sm:$0xff]
    %v367 = vld [vmem:[%s17 + $0x660] sm:$0xff]
    %v368 = vld [vmem:[%s17 + $0x668] sm:$0xff]
    %v369 = vld [vmem:[%s17 + $0x670] sm:$0xff]
    %v370 = vld [vmem:[%s17 + $0x678] sm:$0xff]
    %v371 = vld [vmem:[%s17 + $0x680] sm:$0xff]
    %v372 = vld [vmem:[%s17 + $0x688] sm:$0xff]
    %v373 = vld [vmem:[%s17 + $0x690] sm:$0xff]
    %v374 = vld [vmem:[%s17 + $0x698] sm:$0xff]
    %v375 = vld [vmem:[%s17 + $0x6a0] sm:$0xff]
    %v376 = vld [vmem:[%s17 + $0x6a8] sm:$0xff]
    %v377 = vld [vmem:[%s17 + $0x6b0] sm:$0xff]
    %v378 = vld [vmem:[%s17 + $0x6b8] sm:$0xff]
    %v379 = vld [vmem:[%s17 + $0x6c0] sm:$0xff]
    %v380 = vld [vmem:[%s17 + $0x6c8] sm:$0xff]
    %v381 = vld [vmem:[%s17 + $0x6d0] sm:$0xff]
    %v382 = vld [vmem:[%s17 + $0x6d8] sm:$0xff]
    %v383 = vld [vmem:[%s17 + $0x6e0] sm:$0xff]
    %v384 = vld [vmem:[%s17 + $0x6e8] sm:$0xff]
    %v385 = vld [vmem:[%s17 + $0x6f0] sm:$0xff]
    %v386 = vld [vmem:[%s17 + $0x6f8] sm:$0xff]
    %v387 = vld [vmem:[%s17 + $0x700] sm:$0xff]
    %v388 = vld [vmem:[%s17 + $0x708] sm:$0xff]
    %v389 = vld [vmem:[%s17 + $0x710] sm:$0xff]
    %v390 = vld [vmem:[%s17 + $0x718] sm:$0xff]
    %v391 = vld [vmem:[%s17 + $0x720] sm:$0xff]
    %v392 = vld [vmem:[%s17 + $0x728] sm:$0xff]
    %v393 = vld [vmem:[%s17 + $0x730] sm:$0xff]
    %v394 = vld [vmem:[%s17 + $0x738] sm:$0xff]
    %v395 = vld [vmem:[%s17 + $0x740] sm:$0xff]
    %v396 = vld [vmem:[%s17 + $0x748] sm:$0xff]
    %v397 = vld [vmem:[%s17 + $0x750] sm:$0xff]
    %v398 = vld [vmem:[%s17 + $0x758] sm:$0xff]
    %v399 = vld [vmem:[%s17 + $0x760] sm:$0xff]
    %v400 = vld [vmem:[%s17 + $0x768] sm:$0xff]
    %v401 = vld [vmem:[%s17 + $0x770] sm:$0xff]
    %v402 = vld [vmem:[%s17 + $0x778] sm:$0xff]
    %v403 = vld [vmem:[%s17 + $0x780] sm:$0xff]
    %v404 = vld [vmem:[%s17 + $0x788] sm:$0xff]
    %v405 = vld [vmem:[%s17 + $0x790] sm:$0xff]
    %v406 = vld [vmem:[%s17 + $0x798] sm:$0xff]
    %v407 = vld [vmem:[%s17 + $0x7a0] sm:$0xff]
    %v408 = vld [vmem:[%s17 + $0x7a8] sm:$0xff]
    %v409 = vld [vmem:[%s17 + $0x7b0] sm:$0xff]
    %v410 = vld [vmem:[%s17 + $0x7b8] sm:$0xff]
    %v411 = vld [vmem:[%s17 + $0x7c0] sm:$0xff]
    %v412 = vld [vmem:[%s17 + $0x7c8] sm:$0xff]
    %v413 = vld [vmem:[%s17 + $0x7d0] sm:$0xff]
    %v414 = vld [vmem:[%s17 + $0x7d8] sm:$0xff]
    %v415 = vld [vmem:[%s17 + $0x7e0] sm:$0xff]
    %v416 = vld [vmem:[%s17 + $0x7e8] sm:$0xff]
    %v417 = vld [vmem:[%s17 + $0x7f0] sm:$0xff]
    %v418 = vld [vmem:[%s17 + $0x7f8] sm:$0xff]
    %v419 = vld [vmem:[%s17 + $0x800] sm:$0xff]
    %v420 = vld [vmem:[%s17 + $0x808] sm:$0xff]
    %v421 = vld [vmem:[%s17 + $0x810] sm:$0xff]
    %v422 = vld [vmem:[%s17 + $0x818] sm:$0xff]
    %v423 = vld [vmem:[%s17 + $0x820] sm:$0xff]
    %v424 = vld [vmem:[%s17 + $0x828] sm:$0xff]
    %v425 = vld [vmem:[%s17 + $0x830] sm:$0xff]
    %v426 = vld [vmem:[%s17 + $0x838] sm:$0xff]
    %v427 = vld [vmem:[%s17 + $0x840] sm:$0xff]
    %v428 = vld [vmem:[%s17 + $0x848] sm:$0xff]
    %v429 = vld [vmem:[%s17 + $0x850] sm:$0xff]
    %v430 = vld [vmem:[%s17 + $0x858] sm:$0xff]
    %v431 = vld [vmem:[%s17 + $0x860] sm:$0xff]
    %v432 = vld [vmem:[%s17 + $0x868] sm:$0xff]
    %v433 = vld [vmem:[%s17 + $0x870] sm:$0xff]
    %v434 = vld [vmem:[%s17 + $0x878] sm:$0xff]
    %v435 = vld [vmem:[%s17 + $0x880] sm:$0xff]
    %v436 = vld [vmem:[%s17 + $0x888] sm:$0xff]
    %v437 = vld [vmem:[%s17 + $0x890] sm:$0xff]
    %v438 = vld [vmem:[%s17 + $0x898] sm:$0xff]
    %v439 = vld [vmem:[%s17 + $0x8a0] sm:$0xff]
    %v440 = vld [vmem:[%s17 + $0x8a8] sm:$0xff]
    %v441 = vld [vmem:[%s17 + $0x8b0] sm:$0xff]
    %v442 = vld [vmem:[%s17 + $0x8b8] sm:$0xff]
    %v443 = vld [vmem:[%s17 + $0x8c0] sm:$0xff]
    %v444 = vld [vmem:[%s17 + $0x8c8] sm:$0xff]
    %v445 = vld [vmem:[%s17 + $0x8d0] sm:$0xff]
    %v446 = vld [vmem:[%s17 + $0x8d8] sm:$0xff]
    %v447 = vld [vmem:[%s17 + $0x8e0] sm:$0xff]
    %v448 = vld [vmem:[%s17 + $0x8e8] sm:$0xff]
    %v449 = vld [vmem:[%s17 + $0x8f0] sm:$0xff]
    %v450 = vld [vmem:[%s17 + $0x8f8] sm:$0xff]
    %v451 = vld [vmem:[%s17 + $0x900] sm:$0xff]
    %v452 = vld [vmem:[%s17 + $0x908] sm:$0xff]
    %v453 = vld [vmem:[%s17 + $0x910] sm:$0xff]
    %v454 = vld [vmem:[%s17 + $0x918] sm:$0xff]
    %v455 = vld [vmem:[%s17 + $0x920] sm:$0xff]
    %v456 = vld [vmem:[%s17 + $0x928] sm:$0xff]
    %v457 = vld [vmem:[%s17 + $0x930] sm:$0xff]
    %v458 = vld [vmem:[%s17 + $0x938] sm:$0xff]
    %v459 = vld [vmem:[%s17 + $0x940] sm:$0xff]
    %v460 = vld [vmem:[%s17 + $0x948] sm:$0xff]
    %v461 = vld [vmem:[%s17 + $0x950] sm:$0xff]
    %v462 = vld [vmem:[%s17 + $0x958] sm:$0xff]
    %v463 = vld [vmem:[%s17 + $0x960] sm:$0xff]
    %v464 = vld [vmem:[%s17 + $0x968] sm:$0xff]
    %v465 = vld [vmem:[%s17 + $0x970] sm:$0xff]
    %v466 = vld [vmem:[%s17 + $0x978] sm:$0xff]
    %v467 = vld [vmem:[%s17 + $0x980] sm:$0xff]
    %v468 = vld [vmem:[%s17 + $0x988] sm:$0xff]
    %v469 = vld [vmem:[%s17 + $0x990] sm:$0xff]
    %v470 = vld [vmem:[%s17 + $0x998] sm:$0xff]
    %v471 = vld [vmem:[%s17 + $0x9a0] sm:$0xff]
    %v472 = vld [vmem:[%s17 + $0x9a8] sm:$0xff]
    %v473 = vld [vmem:[%s17 + $0x9b0] sm:$0xff]
    %v474 = vld [vmem:[%s17 + $0x9b8] sm:$0xff]
    %v475 = vld [vmem:[%s17 + $0x9c0] sm:$0xff]
    %v476 = vld [vmem:[%s17 + $0x9c8] sm:$0xff]
    %v477 = vld [vmem:[%s17 + $0x9d0] sm:$0xff]
    %v478 = vld [vmem:[%s17 + $0x9d8] sm:$0xff]
    %v479 = vld [vmem:[%s17 + $0x9e0] sm:$0xff]
    %v480 = vld [vmem:[%s17 + $0x9e8] sm:$0xff]
    %v481 = vld [vmem:[%s17 + $0x9f0] sm:$0xff]
    %v482 = vld [vmem:[%s17 + $0x9f8] sm:$0xff]
    %v483 = vld [vmem:[%s17 + $0xa00] sm:$0xff]
    %v484 = vld [vmem:[%s17 + $0xa08] sm:$0xff]
    %v485 = vld [vmem:[%s17 + $0xa10] sm:$0xff]
    %v486 = vld [vmem:[%s17 + $0xa18] sm:$0xff]
    %v487 = vld [vmem:[%s17 + $0xa20] sm:$0xff]
    %v488 = vld [vmem:[%s17 + $0xa28] sm:$0xff]
    %v489 = vld [vmem:[%s17 + $0xa30] sm:$0xff]
    %v490 = vld [vmem:[%s17 + $0xa38] sm:$0xff]
    %v491 = vld [vmem:[%s17 + $0xa40] sm:$0xff]
    %v492 = vld [vmem:[%s17 + $0xa48] sm:$0xff]
    %v493 = vld [vmem:[%s17 + $0xa50] sm:$0xff]
    %v494 = vld [vmem:[%s17 + $0xa58] sm:$0xff]
    %v495 = vld [vmem:[%s17 + $0xa60] sm:$0xff]
    %v496 = vld [vmem:[%s17 + $0xa68] sm:$0xff]
    %v497 = vld [vmem:[%s17 + $0xa70] sm:$0xff]
    %v498 = vld [vmem:[%s17 + $0xa78] sm:$0xff]
    %v499 = vld [vmem:[%s17 + $0xa80] sm:$0xff]
    %v500 = vld [vmem:[%s17 + $0xa88] sm:$0xff]
    %v501 = vld [vmem:[%s17 + $0xa90] sm:$0xff]
    %v502 = vld [vmem:[%s17 + $0xa98] sm:$0xff]
    %v503 = vld [vmem:[%s17 + $0xaa0] sm:$0xff]
    %v504 = vld [vmem:[%s17 + $0xaa8] sm:$0xff]
    %v505 = vld [vmem:[%s17 + $0xab0] sm:$0xff]
    %v506 = vld [vmem:[%s17 + $0xab8] sm:$0xff]
    %v507 = vld [vmem:[%s17 + $0xac0] sm:$0xff]
    %v508 = vld [vmem:[%s17 + $0xac8] sm:$0xff]
    %v509 = vld [vmem:[%s17 + $0xad0] sm:$0xff]
    %v510 = vld [vmem:[%s17 + $0xad8] sm:$0xff]
    %v511 = vld [vmem:[%s17 + $0xae0] sm:$0xff]
    %v512 = vld [vmem:[%s17 + $0xae8] sm:$0xff]
    %v513 = vld [vmem:[%s17 + $0xaf0] sm:$0xff]
    %v514 = vld [vmem:[%s17 + $0xaf8] sm:$0xff]
    %v515 = vld [vmem:[%s17 + $0xb00] sm:$0xff]
    %v516 = vld [vmem:[%s17 + $0xb08] sm:$0xff]
    %v517 = vld [vmem:[%s17 + $0xb10] sm:$0xff]
    %v518 = vld [vmem:[%s17 + $0xb18] sm:$0xff]
    %v519 = vld [vmem:[%s17 + $0xb20] sm:$0xff]
    %v520 = vld [vmem:[%s17 + $0xb28] sm:$0xff]
    %v521 = vld [vmem:[%s17 + $0xb30] sm:$0xff]
    %v522 = vld [vmem:[%s17 + $0xb38] sm:$0xff]
    %v523 = vld [vmem:[%s17 + $0xb40] sm:$0xff]
    %v524 = vld [vmem:[%s17 + $0xb48] sm:$0xff]
    %v525 = vld [vmem:[%s17 + $0xb50] sm:$0xff]
    %v526 = vld [vmem:[%s17 + $0xb58] sm:$0xff]
    %v527 = vld [vmem:[%s17 + $0xb60] sm:$0xff]
    %v528 = vld [vmem:[%s17 + $0xb68] sm:$0xff]
    %v529 = vld [vmem:[%s17 + $0xb70] sm:$0xff]
    %v530 = vld [vmem:[%s17 + $0xb78] sm:$0xff]
    %v531 = vld [vmem:[%s17 + $0xb80] sm:$0xff]
    %v532 = vld [vmem:[%s17 + $0xb88] sm:$0xff]
    %v533 = vld [vmem:[%s17 + $0xb90] sm:$0xff]
    %v534 = vld [vmem:[%s17 + $0xb98] sm:$0xff]
    %v535 = vld [vmem:[%s17 + $0xba0] sm:$0xff]
    %v536 = vld [vmem:[%s17 + $0xba8] sm:$0xff]
    %v537 = vld [vmem:[%s17 + $0xbb0] sm:$0xff]
    %v538 = vld [vmem:[%s17 + $0xbb8] sm:$0xff]
    %v539 = vld [vmem:[%s17 + $0xbc0] sm:$0xff]
    %v540 = vld [vmem:[%s17 + $0xbc8] sm:$0xff]
    %v541 = vld [vmem:[%s17 + $0xbd0] sm:$0xff]
    %v542 = vld [vmem:[%s17 + $0xbd8] sm:$0xff]
    %v543 = vld [vmem:[%s17 + $0xbe0] sm:$0xff]
    %v544 = vld [vmem:[%s17 + $0xbe8] sm:$0xff]
    %v545 = vld [vmem:[%s17 + $0xbf0] sm:$0xff]
    %v546 = vld [vmem:[%s17 + $0xbf8] sm:$0xff]
    %v547 = vld [vmem:[%s17 + $0xc00] sm:$0xff]
    %v548 = vld [vmem:[%s17 + $0xc08] sm:$0xff]
    %v549 = vld [vmem:[%s17 + $0xc10] sm:$0xff]
    %v550 = vld [vmem:[%s17 + $0xc18] sm:$0xff]
    %v551 = vld [vmem:[%s17 + $0xc20] sm:$0xff]
    %v552 = vld [vmem:[%s17 + $0xc28] sm:$0xff]
    %v553 = vld [vmem:[%s17 + $0xc30] sm:$0xff]
    %v554 = vld [vmem:[%s17 + $0xc38] sm:$0xff]
    %v555 = vld [vmem:[%s1] sm:$0xff]
    %v556 = vld [vmem:[%s1 + $0x8] sm:$0xff]
    %v557 = vld [vmem:[%s1 + $0x10] sm:$0xff]
    %v558 = vld [vmem:[%s1 + $0x18] sm:$0xff]
    %v559 = vld [vmem:[%s1 + $0x20] sm:$0xff]
    %v560 = vld [vmem:[%s1 + $0x28] sm:$0xff]
    %v561 = vld [vmem:[%s1 + $0x30] sm:$0xff]
    %v562 = vld [vmem:[%s1 + $0x38] sm:$0xff]
    %v563 = vld [vmem:[%s1 + $0x40] sm:$0xff]
    %v564 = vld [vmem:[%s1 + $0x48] sm:$0xff]
    %v565 = vld [vmem:[%s1 + $0x50] sm:$0xff]
    %v566 = vld [vmem:[%s1 + $0x58] sm:$0xff]
    %v567 = vld [vmem:[%s1 + $0x60] sm:$0xff]
    %v568 = vld [vmem:[%s1 + $0x68] sm:$0xff]
    %v569 = vld [vmem:[%s1 + $0x70] sm:$0xff]
    %v570 = vld [vmem:[%s1 + $0x78] sm:$0xff]
    %v571 = vld [vmem:[%s1 + $0x80] sm:$0xff]
    %v572 = vld [vmem:[%s1 + $0x88] sm:$0xff]
    %v573 = vld [vmem:[%s1 + $0x90] sm:$0xff]
    %v574 = vld [vmem:[%s1 + $0x98] sm:$0xff]
    %v575 = vld [vmem:[%s1 + $0xa0] sm:$0xff]
    %v576 = vld [vmem:[%s1 + $0xa8] sm:$0xff]
    %v577 = vld [vmem:[%s1 + $0xb0] sm:$0xff]
    %v578 = vld [vmem:[%s1 + $0xb8] sm:$0xff]
    %v579 = vld [vmem:[%s1 + $0xc0] sm:$0xff]
    %v580 = vld [vmem:[%s1 + $0xc8] sm:$0xff]
    %v581 = vld [vmem:[%s1 + $0xd0] sm:$0xff]
    %v582 = vld [vmem:[%s1 + $0xd8] sm:$0xff]
    %v583 = vld [vmem:[%s1 + $0xe0] sm:$0xff]
    %v584 = vld [vmem:[%s1 + $0xe8] sm:$0xff]
    %v585 = vld [vmem:[%s1 + $0xf0] sm:$0xff]
    %v586 = vld [vmem:[%s1 + $0xf8] sm:$0xff]
    %v587 = vld [vmem:[%s1 + $0x100] sm:$0xff]
    %v588 = vld [vmem:[%s1 + $0x108] sm:$0xff]
    %v589 = vld [vmem:[%s1 + $0x110] sm:$0xff]
    %v590 = vld [vmem:[%s1 + $0x118] sm:$0xff]
    %v591 = vld [vmem:[%s1 + $0x120] sm:$0xff]
    %v592 = vld [vmem:[%s1 + $0x128] sm:$0xff]
    %v593 = vld [vmem:[%s1 + $0x130] sm:$0xff]
    %v594 = vld [vmem:[%s1 + $0x138] sm:$0xff]
    %v595 = vld [vmem:[%s1 + $0x140] sm:$0xff]
    %v596 = vld [vmem:[%s1 + $0x148] sm:$0xff]
    %v597 = vld [vmem:[%s1 + $0x150] sm:$0xff]
    %v598 = vld [vmem:[%s1 + $0x158] sm:$0xff]
    %v599 = vld [vmem:[%s1 + $0x160] sm:$0xff]
    %v600 = vld [vmem:[%s1 + $0x168] sm:$0xff]
    %v601 = vld [vmem:[%s1 + $0x170] sm:$0xff]
    %v602 = vld [vmem:[%s1 + $0x178] sm:$0xff]
    %v603 = vld [vmem:[%s1 + $0x180] sm:$0xff]
    %v604 = vld [vmem:[%s9] sm:$0xff]
    %v605 = vld [vmem:[%s9 + $0x8] sm:$0xff]
    %v606 = vld [vmem:[%s9 + $0x10] sm:$0xff]
    %v607 = vld [vmem:[%s9 + $0x18] sm:$0xff]
    %v608 = vld [vmem:[%s9 + $0x20] sm:$0xff]
    %v609 = vld [vmem:[%s9 + $0x28] sm:$0xff]
    %v610 = vld [vmem:[%s9 + $0x30] sm:$0xff]
    %v611 = vld [vmem:[%s9 + $0x38] sm:$0xff]
    %v612 = vld [vmem:[%s9 + $0x40] sm:$0xff]
    %v613 = vld [vmem:[%s9 + $0x48] sm:$0xff]
    %v614 = vld [vmem:[%s9 + $0x50] sm:$0xff]
    %v615 = vld [vmem:[%s9 + $0x58] sm:$0xff]
    %v616 = vld [vmem:[%s9 + $0x60] sm:$0xff]
    %v617 = vld [vmem:[%s9 + $0x68] sm:$0xff]
    %v618 = vld [vmem:[%s9 + $0x70] sm:$0xff]
    %v619 = vld [vmem:[%s9 + $0x78] sm:$0xff]
    %v620 = vld [vmem:[%s9 + $0x80] sm:$0xff]
    %v621 = vld [vmem:[%s9 + $0x88] sm:$0xff]
    %v622 = vld [vmem:[%s9 + $0x90] sm:$0xff]
    %v623 = vld [vmem:[%s9 + $0x98] sm:$0xff]
    %v624 = vld [vmem:[%s9 + $0xa0] sm:$0xff]
    %v625 = vld [vmem:[%s9 + $0xa8] sm:$0xff]
    %v626 = vld [vmem:[%s9 + $0xb0] sm:$0xff]
    %v627 = vld [vmem:[%s9 + $0xb8] sm:$0xff]
    %v628 = vld [vmem:[%s9 + $0xc0] sm:$0xff]
    %v629 = vld [vmem:[%s9 + $0xc8] sm:$0xff]
    %v630 = vld [vmem:[%s9 + $0xd0] sm:$0xff]
    %v631 = vld [vmem:[%s9 + $0xd8] sm:$0x7]
    %v632 = vld [vmem:[%s9 + $0xe0] sm:$0x7]
    %v633 = vld [vmem:[%s9 + $0xe8] sm:$0x7]
    %v634 = vld [vmem:[%s11] sm:$0x7]
    %v636 = vlaneseq
    %v637 = vshrl.u32 %v636, 7
    %v638 = vsub.s32 0, %v637
    %v639 = vrot.slane %v634, %v638
    %v640 = vlaneseq
    %v641 = vshrl.u32 %v640, 7
    %v642 = vsub.s32 1, %v641
    %v643 = vrot.slane %v634, %v642
    %v644 = vlaneseq
    %v645 = vshrl.u32 %v644, 7
    %v646 = vsub.s32 2, %v645
    %v647 = vrot.slane %v634, %v646
    %vm651 = vcmask 613376
    %v653 = vsel %vm651, %v555, 0
    %v656 = vsel %vm651, %v556, 0
    %v659 = vsel %vm651, %v557, 0
    %v662 = vsel %vm651, %v558, 0
    %v665 = vsel %vm651, %v559, 0
    %v668 = vsel %vm651, %v560, 0
    %v671 = vsel %vm651, %v561, 0
    %v674 = vsel %vm651, %v562, 0
    %v677 = vsel %vm651, %v563, 0
    %v680 = vsel %vm651, %v564, 0
    %v683 = vsel %vm651, %v565, 0
    %v686 = vsel %vm651, %v566, 0
    %v689 = vsel %vm651, %v567, 0
    %v692 = vsel %vm651, %v568, 0
    %v695 = vsel %vm651, %v569, 0
    %v698 = vsel %vm651, %v570, 0
    %v701 = vsel %vm651, %v571, 0
    %v704 = vsel %vm651, %v572, 0
    %v707 = vsel %vm651, %v573, 0
    %v710 = vsel %vm651, %v574, 0
    %v713 = vsel %vm651, %v575, 0
    %v716 = vsel %vm651, %v576, 0
    %v719 = vsel %vm651, %v577, 0
    %v722 = vsel %vm651, %v578, 0
    %v725 = vsel %vm651, %v579, 0
    %v728 = vsel %vm651, %v580, 0
    %v731 = vsel %vm651, %v581, 0
    %v734 = vsel %vm651, %v582, 0
    %v737 = vsel %vm651, %v583, 0
    %v740 = vsel %vm651, %v584, 0
    %v743 = vsel %vm651, %v585, 0
    %v746 = vsel %vm651, %v586, 0
    %v749 = vsel %vm651, %v587, 0
    %v752 = vsel %vm651, %v588, 0
    %v755 = vsel %vm651, %v589, 0
    %v758 = vsel %vm651, %v590, 0
    %v761 = vsel %vm651, %v591, 0
    %v764 = vsel %vm651, %v592, 0
    %v767 = vsel %vm651, %v593, 0
    %v770 = vsel %vm651, %v594, 0
    %v773 = vsel %vm651, %v595, 0
    %v776 = vsel %vm651, %v596, 0
    %v779 = vsel %vm651, %v597, 0
    %v782 = vsel %vm651, %v598, 0
    %v785 = vsel %vm651, %v599, 0
    %v788 = vsel %vm651, %v600, 0
    %v791 = vsel %vm651, %v601, 0
    %v794 = vsel %vm651, %v602, 0
    %v797 = vsel %vm651, %v603, 0
    %vm799 = vcmask 1042432
    %v801 = vsel %vm799, %v631, 0
    %v804 = vsel %vm799, %v632, 0
    %v807 = vsel %vm799, %v633, 0
    %809 = vmatprep.subr.mxu0 0.0
    %810 = vmatpush1.msra.mxu0 0.0
    %811 = vmatprep.subr.mxu0 0.0
    %812 = vmatpush1.msra.mxu0 0.0
    %813 = vmatprep.subr.mxu0 0.0
    %814 = vmatpush1.msra.mxu0 0.0
    %815 = vmatprep.subr.mxu0 0.0
    %816 = vmatpush1.msra.mxu0 0.0
    %817 = vmatprep.subr.mxu0 0.0
    %818 = vmatpush1.msra.mxu0 0.0
    %819 = vmatprep.subr.mxu0 0.0
    %820 = vmatpush1.msra.mxu0 0.0
    %821 = vmatprep.subr.mxu0 %v804
    %822 = vmatpush1.msra.mxu0 %v801
    %823 = vmatprep.subr.mxu0 %v629
    %824 = vmatpush1.msra.mxu0 %v628
    %825 = vmatprep.subr.mxu0 %v626
    %826 = vmatpush1.msra.mxu0 %v625
    %827 = vmatprep.subr.mxu0 %v623
    %828 = vmatpush1.msra.mxu0 %v622
    %829 = vmatprep.subr.mxu0 %v620
    %830 = vmatpush1.msra.mxu0 %v619
    %831 = vmatprep.subr.mxu0 %v617
    %832 = vmatpush1.msra.mxu0 %v616
    %833 = vmatprep.subr.mxu0 %v614
    %834 = vmatpush1.msra.mxu0 %v613
    %835 = vmatprep.subr.mxu0 %v611
    %836 = vmatpush1.msra.mxu0 %v610
    %837 = vmatprep.subr.mxu0 %v608
    %838 = vmatpush1.msra.mxu0 %v607
    %839 = vmatprep.subr.mxu0 %v605
    %840 = vmatpush1.msra.mxu0 %v604
    %841 = vmatprep.subr.mxu0 0.0
    %842 = vmatpush2.msra.mxu0 0.0
    %843 = vmatprep.subr.mxu0 0.0
    %844 = vmatpush2.msra.mxu0 0.0
    %845 = vmatprep.subr.mxu0 0.0
    %846 = vmatpush2.msra.mxu0 0.0
    %847 = vmatprep.subr.mxu0 0.0
    %848 = vmatpush2.msra.mxu0 0.0
    %849 = vmatprep.subr.mxu0 0.0
    %850 = vmatpush2.msra.mxu0 0.0
    %851 = vmatprep.subr.mxu0 0.0
    %852 = vmatpush2.msra.mxu0 0.0
    %853 = vmatprep.subr.mxu0 0.0
    %854 = vmatpush2.msra.mxu0 0.0
    %855 = vmatprep.subr.mxu0 0.0
    %856 = vmatpush2.msra.mxu0 0.0
    %857 = vmatprep.subr.mxu0 0.0
    %858 = vmatpush2.msra.mxu0 0.0
    %859 = vmatprep.subr.mxu0 0.0
    %860 = vmatpush2.msra.mxu0 0.0
    %861 = vmatprep.subr.mxu0 0.0
    %862 = vmatpush2.msra.mxu0 0.0
    %863 = vmatprep.subr.mxu0 0.0
    %864 = vmatpush2.msra.mxu0 0.0
    %865 = vmatprep.subr.mxu0 0.0
    %866 = vmatpush2.msra.mxu0 0.0
    %867 = vmatprep.subr.mxu0 0.0
    %868 = vmatpush2.msra.mxu0 0.0
    %869 = vmatprep.subr.mxu0 0.0
    %870 = vmatpush2.msra.mxu0 0.0
    %871 = vmatprep.subr.mxu0 0.0
    %872 = vmatpush2.msra.mxu0 0.0
    %873 = vmatprep.mubr.f32.mxu0 0.0
    %874 = vmatmul.mubr.f32.gmra.mxu0 %v653
    %v875 = vpop.f32.mrf.mxu0
    %v876 = vadd.f32 %v639, %v875
    %v877 = vpop.f32.mrf.mxu0
    %v878 = vadd.f32 %v643, %v877
    %879 = vmatprep.mubr.f32.mxu0 0.0
    %880 = vmatmul.mubr.f32.gmra.mxu0 %v656
    %v881 = vpop.f32.mrf.mxu0
    %v882 = vadd.f32 %v639, %v881
    %v883 = vpop.f32.mrf.mxu0
    %v884 = vadd.f32 %v643, %v883
    %885 = vmatprep.mubr.f32.mxu0 0.0
    %886 = vmatmul.mubr.f32.gmra.mxu0 %v659
    %v887 = vpop.f32.mrf.mxu0
    %v888 = vadd.f32 %v639, %v887
    %v889 = vpop.f32.mrf.mxu0
    %v890 = vadd.f32 %v643, %v889
    %891 = vmatprep.mubr.f32.mxu0 0.0
    %892 = vmatmul.mubr.f32.gmra.mxu0 %v662
    %v893 = vpop.f32.mrf.mxu0
    %v894 = vadd.f32 %v639, %v893
    %v895 = vpop.f32.mrf.mxu0
    %v896 = vadd.f32 %v643, %v895
    %897 = vmatprep.mubr.f32.mxu0 0.0
    %898 = vmatmul.mubr.f32.gmra.mxu0 %v665
    %v899 = vpop.f32.mrf.mxu0
    %v900 = vadd.f32 %v639, %v899
    %v901 = vpop.f32.mrf.mxu0
    %v902 = vadd.f32 %v643, %v901
    %903 = vmatprep.mubr.f32.mxu0 0.0
    %904 = vmatmul.mubr.f32.gmra.mxu0 %v668
    %v905 = vpop.f32.mrf.mxu0
    %v906 = vadd.f32 %v639, %v905
    %v907 = vpop.f32.mrf.mxu0
    %v908 = vadd.f32 %v643, %v907
    %909 = vmatprep.mubr.f32.mxu0 0.0
    %910 = vmatmul.mubr.f32.gmra.mxu0 %v671
    %v911 = vpop.f32.mrf.mxu0
    %v912 = vadd.f32 %v639, %v911
    %v913 = vpop.f32.mrf.mxu0
    %v914 = vadd.f32 %v643, %v913
    %915 = vmatprep.mubr.f32.mxu0 0.0
    %916 = vmatmul.mubr.f32.gmra.mxu0 %v674
    %v917 = vpop.f32.mrf.mxu0
    %v918 = vadd.f32 %v639, %v917
    %v919 = vpop.f32.mrf.mxu0
    %v920 = vadd.f32 %v643, %v919
    %921 = vmatprep.mubr.f32.mxu0 0.0
    %922 = vmatmul.mubr.f32.gmra.mxu0 %v677
    %v923 = vpop.f32.mrf.mxu0
    %v924 = vadd.f32 %v639, %v923
    %v925 = vpop.f32.mrf.mxu0
    %v926 = vadd.f32 %v643, %v925
    %927 = vmatprep.mubr.f32.mxu0 0.0
    %928 = vmatmul.mubr.f32.gmra.mxu0 %v680
    %v929 = vpop.f32.mrf.mxu0
    %v930 = vadd.f32 %v639, %v929
    %v931 = vpop.f32.mrf.mxu0
    %v932 = vadd.f32 %v643, %v931
    %933 = vmatprep.mubr.f32.mxu0 0.0
    %934 = vmatmul.mubr.f32.gmra.mxu0 %v683
    %v935 = vpop.f32.mrf.mxu0
    %v936 = vadd.f32 %v639, %v935
    %v937 = vpop.f32.mrf.mxu0
    %v938 = vadd.f32 %v643, %v937
    %939 = vmatprep.mubr.f32.mxu0 0.0
    %940 = vmatmul.mubr.f32.gmra.mxu0 %v686
    %v941 = vpop.f32.mrf.mxu0
    %v942 = vadd.f32 %v639, %v941
    %v943 = vpop.f32.mrf.mxu0
    %v944 = vadd.f32 %v643, %v943
    %945 = vmatprep.mubr.f32.mxu0 0.0
    %946 = vmatmul.mubr.f32.gmra.mxu0 %v689
    %v947 = vpop.f32.mrf.mxu0
    %v948 = vadd.f32 %v639, %v947
    %v949 = vpop.f32.mrf.mxu0
    %v950 = vadd.f32 %v643, %v949
    %951 = vmatprep.mubr.f32.mxu0 0.0
    %952 = vmatmul.mubr.f32.gmra.mxu0 %v692
    %v953 = vpop.f32.mrf.mxu0
    %v954 = vadd.f32 %v639, %v953
    %v955 = vpop.f32.mrf.mxu0
    %v956 = vadd.f32 %v643, %v955
    %957 = vmatprep.mubr.f32.mxu0 0.0
    %958 = vmatmul.mubr.f32.gmra.mxu0 %v695
    %v959 = vpop.f32.mrf.mxu0
    %v960 = vadd.f32 %v639, %v959
    %v961 = vpop.f32.mrf.mxu0
    %v962 = vadd.f32 %v643, %v961
    %963 = vmatprep.mubr.f32.mxu0 0.0
    %964 = vmatmul.mubr.f32.gmra.mxu0 %v698
    %v965 = vpop.f32.mrf.mxu0
    %v966 = vadd.f32 %v639, %v965
    %v967 = vpop.f32.mrf.mxu0
    %v968 = vadd.f32 %v643, %v967
    %969 = vmatprep.mubr.f32.mxu0 0.0
    %970 = vmatmul.mubr.f32.gmra.mxu0 %v701
    %v971 = vpop.f32.mrf.mxu0
    %v972 = vadd.f32 %v639, %v971
    %v973 = vpop.f32.mrf.mxu0
    %v974 = vadd.f32 %v643, %v973
    %975 = vmatprep.mubr.f32.mxu0 0.0
    %976 = vmatmul.mubr.f32.gmra.mxu0 %v704
    %v977 = vpop.f32.mrf.mxu0
    %v978 = vadd.f32 %v639, %v977
    %v979 = vpop.f32.mrf.mxu0
    %v980 = vadd.f32 %v643, %v979
    %981 = vmatprep.mubr.f32.mxu0 0.0
    %982 = vmatmul.mubr.f32.gmra.mxu0 %v707
    %v983 = vpop.f32.mrf.mxu0
    %v984 = vadd.f32 %v639, %v983
    %v985 = vpop.f32.mrf.mxu0
    %v986 = vadd.f32 %v643, %v985
    %987 = vmatprep.mubr.f32.mxu0 0.0
    %988 = vmatmul.mubr.f32.gmra.mxu0 %v710
    %v989 = vpop.f32.mrf.mxu0
    %v990 = vadd.f32 %v639, %v989
    %v991 = vpop.f32.mrf.mxu0
    %v992 = vadd.f32 %v643, %v991
    %993 = vmatprep.mubr.f32.mxu0 0.0
    %994 = vmatmul.mubr.f32.gmra.mxu0 %v713
    %v995 = vpop.f32.mrf.mxu0
    %v996 = vadd.f32 %v639, %v995
    %v997 = vpop.f32.mrf.mxu0
    %v998 = vadd.f32 %v643, %v997
    %999 = vmatprep.mubr.f32.mxu0 0.0
    %1000 = vmatmul.mubr.f32.gmra.mxu0 %v716
    %v1001 = vpop.f32.mrf.mxu0
    %v1002 = vadd.f32 %v639, %v1001
    %v1003 = vpop.f32.mrf.mxu0
    %v1004 = vadd.f32 %v643, %v1003
    %1005 = vmatprep.mubr.f32.mxu0 0.0
    %1006 = vmatmul.mubr.f32.gmra.mxu0 %v719
    %v1007 = vpop.f32.mrf.mxu0
    %v1008 = vadd.f32 %v639, %v1007
    %v1009 = vpop.f32.mrf.mxu0
    %v1010 = vadd.f32 %v643, %v1009
    %1011 = vmatprep.mubr.f32.mxu0 0.0
    %1012 = vmatmul.mubr.f32.gmra.mxu0 %v722
    %v1013 = vpop.f32.mrf.mxu0
    %v1014 = vadd.f32 %v639, %v1013
    %v1015 = vpop.f32.mrf.mxu0
    %v1016 = vadd.f32 %v643, %v1015
    %1017 = vmatprep.mubr.f32.mxu0 0.0
    %1018 = vmatmul.mubr.f32.gmra.mxu0 %v725
    %v1019 = vpop.f32.mrf.mxu0
    %v1020 = vadd.f32 %v639, %v1019
    %v1021 = vpop.f32.mrf.mxu0
    %v1022 = vadd.f32 %v643, %v1021
    %1023 = vmatprep.mubr.f32.mxu0 0.0
    %1024 = vmatmul.mubr.f32.gmra.mxu0 %v728
    %v1025 = vpop.f32.mrf.mxu0
    %v1026 = vadd.f32 %v639, %v1025
    %v1027 = vpop.f32.mrf.mxu0
    %v1028 = vadd.f32 %v643, %v1027
    %1029 = vmatprep.mubr.f32.mxu0 0.0
    %1030 = vmatmul.mubr.f32.gmra.mxu0 %v731
    %v1031 = vpop.f32.mrf.mxu0
    %v1032 = vadd.f32 %v639, %v1031
    %v1033 = vpop.f32.mrf.mxu0
    %v1034 = vadd.f32 %v643, %v1033
    %1035 = vmatprep.mubr.f32.mxu0 0.0
    %1036 = vmatmul.mubr.f32.gmra.mxu0 %v734
    %v1037 = vpop.f32.mrf.mxu0
    %v1038 = vadd.f32 %v639, %v1037
    %v1039 = vpop.f32.mrf.mxu0
    %v1040 = vadd.f32 %v643, %v1039
    %1041 = vmatprep.mubr.f32.mxu0 0.0
    %1042 = vmatmul.mubr.f32.gmra.mxu0 %v737
    %v1043 = vpop.f32.mrf.mxu0
    %v1044 = vadd.f32 %v639, %v1043
    %v1045 = vpop.f32.mrf.mxu0
    %v1046 = vadd.f32 %v643, %v1045
    %1047 = vmatprep.mubr.f32.mxu0 0.0
    %1048 = vmatmul.mubr.f32.gmra.mxu0 %v740
    %v1049 = vpop.f32.mrf.mxu0
    %v1050 = vadd.f32 %v639, %v1049
    %v1051 = vpop.f32.mrf.mxu0
    %v1052 = vadd.f32 %v643, %v1051
    %1053 = vmatprep.mubr.f32.mxu0 0.0
    %1054 = vmatmul.mubr.f32.gmra.mxu0 %v743
    %v1055 = vpop.f32.mrf.mxu0
    %v1056 = vadd.f32 %v639, %v1055
    %v1057 = vpop.f32.mrf.mxu0
    %v1058 = vadd.f32 %v643, %v1057
    %1059 = vmatprep.mubr.f32.mxu0 0.0
    %1060 = vmatmul.mubr.f32.gmra.mxu0 %v746
    %v1061 = vpop.f32.mrf.mxu0
    %v1062 = vadd.f32 %v639, %v1061
    %v1063 = vpop.f32.mrf.mxu0
    %v1064 = vadd.f32 %v643, %v1063
    %1065 = vmatprep.mubr.f32.mxu0 0.0
    %1066 = vmatmul.mubr.f32.gmra.mxu0 %v749
    %v1067 = vpop.f32.mrf.mxu0
    %v1068 = vadd.f32 %v639, %v1067
    %v1069 = vpop.f32.mrf.mxu0
    %v1070 = vadd.f32 %v643, %v1069
    %1071 = vmatprep.mubr.f32.mxu0 0.0
    %1072 = vmatmul.mubr.f32.gmra.mxu0 %v752
    %v1073 = vpop.f32.mrf.mxu0
    %v1074 = vadd.f32 %v639, %v1073
    %v1075 = vpop.f32.mrf.mxu0
    %v1076 = vadd.f32 %v643, %v1075
    %1077 = vmatprep.mubr.f32.mxu0 0.0
    %1078 = vmatmul.mubr.f32.gmra.mxu0 %v755
    %v1079 = vpop.f32.mrf.mxu0
    %v1080 = vadd.f32 %v639, %v1079
    %v1081 = vpop.f32.mrf.mxu0
    %v1082 = vadd.f32 %v643, %v1081
    %1083 = vmatprep.mubr.f32.mxu0 0.0
    %1084 = vmatmul.mubr.f32.gmra.mxu0 %v758
    %v1085 = vpop.f32.mrf.mxu0
    %v1086 = vadd.f32 %v639, %v1085
    %v1087 = vpop.f32.mrf.mxu0
    %v1088 = vadd.f32 %v643, %v1087
    %1089 = vmatprep.mubr.f32.mxu0 0.0
    %1090 = vmatmul.mubr.f32.gmra.mxu0 %v761
    %v1091 = vpop.f32.mrf.mxu0
    %v1092 = vadd.f32 %v639, %v1091
    %v1093 = vpop.f32.mrf.mxu0
    %v1094 = vadd.f32 %v643, %v1093
    %1095 = vmatprep.mubr.f32.mxu0 0.0
    %1096 = vmatmul.mubr.f32.gmra.mxu0 %v764
    %v1097 = vpop.f32.mrf.mxu0
    %v1098 = vadd.f32 %v639, %v1097
    %v1099 = vpop.f32.mrf.mxu0
    %v1100 = vadd.f32 %v643, %v1099
    %1101 = vmatprep.mubr.f32.mxu0 0.0
    %1102 = vmatmul.mubr.f32.gmra.mxu0 %v767
    %v1103 = vpop.f32.mrf.mxu0
    %v1104 = vadd.f32 %v639, %v1103
    %v1105 = vpop.f32.mrf.mxu0
    %v1106 = vadd.f32 %v643, %v1105
    %1107 = vmatprep.mubr.f32.mxu0 0.0
    %1108 = vmatmul.mubr.f32.gmra.mxu0 %v770
    %v1109 = vpop.f32.mrf.mxu0
    %v1110 = vadd.f32 %v639, %v1109
    %v1111 = vpop.f32.mrf.mxu0
    %v1112 = vadd.f32 %v643, %v1111
    %1113 = vmatprep.mubr.f32.mxu0 0.0
    %1114 = vmatmul.mubr.f32.gmra.mxu0 %v773
    %v1115 = vpop.f32.mrf.mxu0
    %v1116 = vadd.f32 %v639, %v1115
    %v1117 = vpop.f32.mrf.mxu0
    %v1118 = vadd.f32 %v643, %v1117
    %1119 = vmatprep.mubr.f32.mxu0 0.0
    %1120 = vmatmul.mubr.f32.gmra.mxu0 %v776
    %v1121 = vpop.f32.mrf.mxu0
    %v1122 = vadd.f32 %v639, %v1121
    %v1123 = vpop.f32.mrf.mxu0
    %v1124 = vadd.f32 %v643, %v1123
    %1125 = vmatprep.mubr.f32.mxu0 0.0
    %1126 = vmatmul.mubr.f32.gmra.mxu0 %v779
    %v1127 = vpop.f32.mrf.mxu0
    %v1128 = vadd.f32 %v639, %v1127
    %v1129 = vpop.f32.mrf.mxu0
    %v1130 = vadd.f32 %v643, %v1129
    %1131 = vmatprep.mubr.f32.mxu0 0.0
    %1132 = vmatmul.mubr.f32.gmra.mxu0 %v782
    %v1133 = vpop.f32.mrf.mxu0
    %v1134 = vadd.f32 %v639, %v1133
    %v1135 = vpop.f32.mrf.mxu0
    %v1136 = vadd.f32 %v643, %v1135
    %1137 = vmatprep.mubr.f32.mxu0 0.0
    %1138 = vmatmul.mubr.f32.gmra.mxu0 %v785
    %v1139 = vpop.f32.mrf.mxu0
    %v1140 = vadd.f32 %v639, %v1139
    %v1141 = vpop.f32.mrf.mxu0
    %v1142 = vadd.f32 %v643, %v1141
    %1143 = vmatprep.mubr.f32.mxu0 0.0
    %1144 = vmatmul.mubr.f32.gmra.mxu0 %v788
    %v1145 = vpop.f32.mrf.mxu0
    %v1146 = vadd.f32 %v639, %v1145
    %v1147 = vpop.f32.mrf.mxu0
    %v1148 = vadd.f32 %v643, %v1147
    %1149 = vmatprep.mubr.f32.mxu0 0.0
    %1150 = vmatmul.mubr.f32.gmra.mxu0 %v791
    %v1151 = vpop.f32.mrf.mxu0
    %v1152 = vadd.f32 %v639, %v1151
    %v1153 = vpop.f32.mrf.mxu0
    %v1154 = vadd.f32 %v643, %v1153
    %1155 = vmatprep.mubr.f32.mxu0 0.0
    %1156 = vmatmul.mubr.f32.gmra.mxu0 %v794
    %v1157 = vpop.f32.mrf.mxu0
    %v1158 = vadd.f32 %v639, %v1157
    %v1159 = vpop.f32.mrf.mxu0
    %v1160 = vadd.f32 %v643, %v1159
    %1161 = vmatprep.mubr.f32.mxu0 0.0
    %1162 = vmatmul.mubr.f32.gmra.mxu0 %v797
    %v1163 = vpop.f32.mrf.mxu0
    %v1164 = vadd.f32 %v639, %v1163
    %v1165 = vpop.f32.mrf.mxu0
    %v1166 = vadd.f32 %v643, %v1165
    %1167 = vdwg.mxu0
    %1168 = vmatprep.subr.mxu0 0.0
    %1169 = vmatpush1.msra.mxu0 0.0
    %1170 = vmatprep.subr.mxu0 0.0
    %1171 = vmatpush1.msra.mxu0 0.0
    %1172 = vmatprep.subr.mxu0 0.0
    %1173 = vmatpush1.msra.mxu0 0.0
    %1174 = vmatprep.subr.mxu0 0.0
    %1175 = vmatpush1.msra.mxu0 0.0
    %1176 = vmatprep.subr.mxu0 0.0
    %1177 = vmatpush1.msra.mxu0 0.0
    %1178 = vmatprep.subr.mxu0 0.0
    %1179 = vmatpush1.msra.mxu0 0.0
    %1180 = vmatprep.subr.mxu0 0.0
    %1181 = vmatpush1.msra.mxu0 %v807
    %1182 = vmatprep.subr.mxu0 0.0
    %1183 = vmatpush1.msra.mxu0 %v630
    %1184 = vmatprep.subr.mxu0 0.0
    %1185 = vmatpush1.msra.mxu0 %v627
    %1186 = vmatprep.subr.mxu0 0.0
    %1187 = vmatpush1.msra.mxu0 %v624
    %1188 = vmatprep.subr.mxu0 0.0
    %1189 = vmatpush1.msra.mxu0 %v621
    %1190 = vmatprep.subr.mxu0 0.0
    %1191 = vmatpush1.msra.mxu0 %v618
    %1192 = vmatprep.subr.mxu0 0.0
    %1193 = vmatpush1.msra.mxu0 %v615
    %1194 = vmatprep.subr.mxu0 0.0
    %1195 = vmatpush1.msra.mxu0 %v612
    %1196 = vmatprep.subr.mxu0 0.0
    %1197 = vmatpush1.msra.mxu0 %v609
    %1198 = vmatprep.subr.mxu0 0.0
    %1199 = vmatpush1.msra.mxu0 %v606
    %1200 = vmatprep.subr.mxu0 0.0
    %1201 = vmatpush2.msra.mxu0 0.0
    %1202 = vmatprep.subr.mxu0 0.0
    %1203 = vmatpush2.msra.mxu0 0.0
    %1204 = vmatprep.subr.mxu0 0.0
    %1205 = vmatpush2.msra.mxu0 0.0
    %1206 = vmatprep.subr.mxu0 0.0
    %1207 = vmatpush2.msra.mxu0 0.0
    %1208 = vmatprep.subr.mxu0 0.0
    %1209 = vmatpush2.msra.mxu0 0.0
    %1210 = vmatprep.subr.mxu0 0.0
    %1211 = vmatpush2.msra.mxu0 0.0
    %1212 = vmatprep.subr.mxu0 0.0
    %1213 = vmatpush2.msra.mxu0 0.0
    %1214 = vmatprep.subr.mxu0 0.0
    %1215 = vmatpush2.msra.mxu0 0.0
    %1216 = vmatprep.subr.mxu0 0.0
    %1217 = vmatpush2.msra.mxu0 0.0
    %1218 = vmatprep.subr.mxu0 0.0
    %1219 = vmatpush2.msra.mxu0 0.0
    %1220 = vmatprep.subr.mxu0 0.0
    %1221 = vmatpush2.msra.mxu0 0.0
    %1222 = vmatprep.subr.mxu0 0.0
    %1223 = vmatpush2.msra.mxu0 0.0
    %1224 = vmatprep.subr.mxu0 0.0
    %1225 = vmatpush2.msra.mxu0 0.0
    %1226 = vmatprep.subr.mxu0 0.0
    %1227 = vmatpush2.msra.mxu0 0.0
    %1228 = vmatprep.subr.mxu0 0.0
    %1229 = vmatpush2.msra.mxu0 0.0
    %1230 = vmatprep.subr.mxu0 0.0
    %1231 = vmatpush2.msra.mxu0 0.0
    %1232 = vmatprep.mubr.f32.mxu0 0.0
    %1233 = vmatmul.mubr.f32.gmra.mxu0 %v653
    %v1234 = vpop.f32.mrf.mxu0
    %v1235 = vadd.f32 %v647, %v1234
    %v1236 = vpop.f32.mrf.mxu0
    %1237 = vmatprep.mubr.f32.mxu0 0.0
    %1238 = vmatmul.mubr.f32.gmra.mxu0 %v656
    %v1239 = vpop.f32.mrf.mxu0
    %v1240 = vadd.f32 %v647, %v1239
    %v1241 = vpop.f32.mrf.mxu0
    %1242 = vmatprep.mubr.f32.mxu0 0.0
    %1243 = vmatmul.mubr.f32.gmra.mxu0 %v659
    %v1244 = vpop.f32.mrf.mxu0
    %v1245 = vadd.f32 %v647, %v1244
    %v1246 = vpop.f32.mrf.mxu0
    %1247 = vmatprep.mubr.f32.mxu0 0.0
    %1248 = vmatmul.mubr.f32.gmra.mxu0 %v662
    %v1249 = vpop.f32.mrf.mxu0
    %v1250 = vadd.f32 %v647, %v1249
    %v1251 = vpop.f32.mrf.mxu0
    %1252 = vmatprep.mubr.f32.mxu0 0.0
    %1253 = vmatmul.mubr.f32.gmra.mxu0 %v665
    %v1254 = vpop.f32.mrf.mxu0
    %v1255 = vadd.f32 %v647, %v1254
    %v1256 = vpop.f32.mrf.mxu0
    %1257 = vmatprep.mubr.f32.mxu0 0.0
    %1258 = vmatmul.mubr.f32.gmra.mxu0 %v668
    %v1259 = vpop.f32.mrf.mxu0
    %v1260 = vadd.f32 %v647, %v1259
    %v1261 = vpop.f32.mrf.mxu0
    %1262 = vmatprep.mubr.f32.mxu0 0.0
    %1263 = vmatmul.mubr.f32.gmra.mxu0 %v671
    %v1264 = vpop.f32.mrf.mxu0
    %v1265 = vadd.f32 %v647, %v1264
    %v1266 = vpop.f32.mrf.mxu0
    %1267 = vmatprep.mubr.f32.mxu0 0.0
    %1268 = vmatmul.mubr.f32.gmra.mxu0 %v674
    %v1269 = vpop.f32.mrf.mxu0
    %v1270 = vadd.f32 %v647, %v1269
    %v1271 = vpop.f32.mrf.mxu0
    %1272 = vmatprep.mubr.f32.mxu0 0.0
    %1273 = vmatmul.mubr.f32.gmra.mxu0 %v677
    %v1274 = vpop.f32.mrf.mxu0
    %v1275 = vadd.f32 %v647, %v1274
    %v1276 = vpop.f32.mrf.mxu0
    %1277 = vmatprep.mubr.f32.mxu0 0.0
    %1278 = vmatmul.mubr.f32.gmra.mxu0 %v680
    %v1279 = vpop.f32.mrf.mxu0
    %v1280 = vadd.f32 %v647, %v1279
    %v1281 = vpop.f32.mrf.mxu0
    %1282 = vmatprep.mubr.f32.mxu0 0.0
    %1283 = vmatmul.mubr.f32.gmra.mxu0 %v683
    %v1284 = vpop.f32.mrf.mxu0
    %v1285 = vadd.f32 %v647, %v1284
    %v1286 = vpop.f32.mrf.mxu0
    %1287 = vmatprep.mubr.f32.mxu0 0.0
    %1288 = vmatmul.mubr.f32.gmra.mxu0 %v686
    %v1289 = vpop.f32.mrf.mxu0
    %v1290 = vadd.f32 %v647, %v1289
    %v1291 = vpop.f32.mrf.mxu0
    %1292 = vmatprep.mubr.f32.mxu0 0.0
    %1293 = vmatmul.mubr.f32.gmra.mxu0 %v689
    %v1294 = vpop.f32.mrf.mxu0
    %v1295 = vadd.f32 %v647, %v1294
    %v1296 = vpop.f32.mrf.mxu0
    %1297 = vmatprep.mubr.f32.mxu0 0.0
    %1298 = vmatmul.mubr.f32.gmra.mxu0 %v692
    %v1299 = vpop.f32.mrf.mxu0
    %v1300 = vadd.f32 %v647, %v1299
    %v1301 = vpop.f32.mrf.mxu0
    %1302 = vmatprep.mubr.f32.mxu0 0.0
    %1303 = vmatmul.mubr.f32.gmra.mxu0 %v695
    %v1304 = vpop.f32.mrf.mxu0
    %v1305 = vadd.f32 %v647, %v1304
    %v1306 = vpop.f32.mrf.mxu0
    %1307 = vmatprep.mubr.f32.mxu0 0.0
    %1308 = vmatmul.mubr.f32.gmra.mxu0 %v698
    %v1309 = vpop.f32.mrf.mxu0
    %v1310 = vadd.f32 %v647, %v1309
    %v1311 = vpop.f32.mrf.mxu0
    %1312 = vmatprep.mubr.f32.mxu0 0.0
    %1313 = vmatmul.mubr.f32.gmra.mxu0 %v701
    %v1314 = vpop.f32.mrf.mxu0
    %v1315 = vadd.f32 %v647, %v1314
    %v1316 = vpop.f32.mrf.mxu0
    %1317 = vmatprep.mubr.f32.mxu0 0.0
    %1318 = vmatmul.mubr.f32.gmra.mxu0 %v704
    %v1319 = vpop.f32.mrf.mxu0
    %v1320 = vadd.f32 %v647, %v1319
    %v1321 = vpop.f32.mrf.mxu0
    %1322 = vmatprep.mubr.f32.mxu0 0.0
    %1323 = vmatmul.mubr.f32.gmra.mxu0 %v707
    %v1324 = vpop.f32.mrf.mxu0
    %v1325 = vadd.f32 %v647, %v1324
    %v1326 = vpop.f32.mrf.mxu0
    %1327 = vmatprep.mubr.f32.mxu0 0.0
    %1328 = vmatmul.mubr.f32.gmra.mxu0 %v710
    %v1329 = vpop.f32.mrf.mxu0
    %v1330 = vadd.f32 %v647, %v1329
    %v1331 = vpop.f32.mrf.mxu0
    %1332 = vmatprep.mubr.f32.mxu0 0.0
    %1333 = vmatmul.mubr.f32.gmra.mxu0 %v713
    %v1334 = vpop.f32.mrf.mxu0
    %v1335 = vadd.f32 %v647, %v1334
    %v1336 = vpop.f32.mrf.mxu0
    %1337 = vmatprep.mubr.f32.mxu0 0.0
    %1338 = vmatmul.mubr.f32.gmra.mxu0 %v716
    %v1339 = vpop.f32.mrf.mxu0
    %v1340 = vadd.f32 %v647, %v1339
    %v1341 = vpop.f32.mrf.mxu0
    %1342 = vmatprep.mubr.f32.mxu0 0.0
    %1343 = vmatmul.mubr.f32.gmra.mxu0 %v719
    %v1344 = vpop.f32.mrf.mxu0
    %v1345 = vadd.f32 %v647, %v1344
    %v1346 = vpop.f32.mrf.mxu0
    %1347 = vmatprep.mubr.f32.mxu0 0.0
    %1348 = vmatmul.mubr.f32.gmra.mxu0 %v722
    %v1349 = vpop.f32.mrf.mxu0
    %v1350 = vadd.f32 %v647, %v1349
    %v1351 = vpop.f32.mrf.mxu0
    %1352 = vmatprep.mubr.f32.mxu0 0.0
    %1353 = vmatmul.mubr.f32.gmra.mxu0 %v725
    %v1354 = vpop.f32.mrf.mxu0
    %v1355 = vadd.f32 %v647, %v1354
    %v1356 = vpop.f32.mrf.mxu0
    %1357 = vmatprep.mubr.f32.mxu0 0.0
    %1358 = vmatmul.mubr.f32.gmra.mxu0 %v728
    %v1359 = vpop.f32.mrf.mxu0
    %v1360 = vadd.f32 %v647, %v1359
    %v1361 = vpop.f32.mrf.mxu0
    %1362 = vmatprep.mubr.f32.mxu0 0.0
    %1363 = vmatmul.mubr.f32.gmra.mxu0 %v731
    %v1364 = vpop.f32.mrf.mxu0
    %v1365 = vadd.f32 %v647, %v1364
    %v1366 = vpop.f32.mrf.mxu0
    %1367 = vmatprep.mubr.f32.mxu0 0.0
    %1368 = vmatmul.mubr.f32.gmra.mxu0 %v734
    %v1369 = vpop.f32.mrf.mxu0
    %v1370 = vadd.f32 %v647, %v1369
    %v1371 = vpop.f32.mrf.mxu0
    %1372 = vmatprep.mubr.f32.mxu0 0.0
    %1373 = vmatmul.mubr.f32.gmra.mxu0 %v737
    %v1374 = vpop.f32.mrf.mxu0
    %v1375 = vadd.f32 %v647, %v1374
    %v1376 = vpop.f32.mrf.mxu0
    %1377 = vmatprep.mubr.f32.mxu0 0.0
    %1378 = vmatmul.mubr.f32.gmra.mxu0 %v740
    %v1379 = vpop.f32.mrf.mxu0
    %v1380 = vadd.f32 %v647, %v1379
    %v1381 = vpop.f32.mrf.mxu0
    %1382 = vmatprep.mubr.f32.mxu0 0.0
    %1383 = vmatmul.mubr.f32.gmra.mxu0 %v743
    %v1384 = vpop.f32.mrf.mxu0
    %v1385 = vadd.f32 %v647, %v1384
    %v1386 = vpop.f32.mrf.mxu0
    %1387 = vmatprep.mubr.f32.mxu0 0.0
    %1388 = vmatmul.mubr.f32.gmra.mxu0 %v746
    %v1389 = vpop.f32.mrf.mxu0
    %v1390 = vadd.f32 %v647, %v1389
    %v1391 = vpop.f32.mrf.mxu0
    %1392 = vmatprep.mubr.f32.mxu0 0.0
    %1393 = vmatmul.mubr.f32.gmra.mxu0 %v749
    %v1394 = vpop.f32.mrf.mxu0
    %v1395 = vadd.f32 %v647, %v1394
    %v1396 = vpop.f32.mrf.mxu0
    %1397 = vmatprep.mubr.f32.mxu0 0.0
    %1398 = vmatmul.mubr.f32.gmra.mxu0 %v752
    %v1399 = vpop.f32.mrf.mxu0
    %v1400 = vadd.f32 %v647, %v1399
    %v1401 = vpop.f32.mrf.mxu0
    %1402 = vmatprep.mubr.f32.mxu0 0.0
    %1403 = vmatmul.mubr.f32.gmra.mxu0 %v755
    %v1404 = vpop.f32.mrf.mxu0
    %v1405 = vadd.f32 %v647, %v1404
    %v1406 = vpop.f32.mrf.mxu0
    %1407 = vmatprep.mubr.f32.mxu0 0.0
    %1408 = vmatmul.mubr.f32.gmra.mxu0 %v758
    %v1409 = vpop.f32.mrf.mxu0
    %v1410 = vadd.f32 %v647, %v1409
    %v1411 = vpop.f32.mrf.mxu0
    %1412 = vmatprep.mubr.f32.mxu0 0.0
    %1413 = vmatmul.mubr.f32.gmra.mxu0 %v761
    %v1414 = vpop.f32.mrf.mxu0
    %v1415 = vadd.f32 %v647, %v1414
    %v1416 = vpop.f32.mrf.mxu0
    %1417 = vmatprep.mubr.f32.mxu0 0.0
    %1418 = vmatmul.mubr.f32.gmra.mxu0 %v764
    %v1419 = vpop.f32.mrf.mxu0
    %v1420 = vadd.f32 %v647, %v1419
    %v1421 = vpop.f32.mrf.mxu0
    %1422 = vmatprep.mubr.f32.mxu0 0.0
    %1423 = vmatmul.mubr.f32.gmra.mxu0 %v767
    %v1424 = vpop.f32.mrf.mxu0
    %v1425 = vadd.f32 %v647, %v1424
    %v1426 = vpop.f32.mrf.mxu0
    %1427 = vmatprep.mubr.f32.mxu0 0.0
    %1428 = vmatmul.mubr.f32.gmra.mxu0 %v770
    %v1429 = vpop.f32.mrf.mxu0
    %v1430 = vadd.f32 %v647, %v1429
    %v1431 = vpop.f32.mrf.mxu0
    %1432 = vmatprep.mubr.f32.mxu0 0.0
    %1433 = vmatmul.mubr.f32.gmra.mxu0 %v773
    %v1434 = vpop.f32.mrf.mxu0
    %v1435 = vadd.f32 %v647, %v1434
    %v1436 = vpop.f32.mrf.mxu0
    %1437 = vmatprep.mubr.f32.mxu0 0.0
    %1438 = vmatmul.mubr.f32.gmra.mxu0 %v776
    %v1439 = vpop.f32.mrf.mxu0
    %v1440 = vadd.f32 %v647, %v1439
    %v1441 = vpop.f32.mrf.mxu0
    %1442 = vmatprep.mubr.f32.mxu0 0.0
    %1443 = vmatmul.mubr.f32.gmra.mxu0 %v779
    %v1444 = vpop.f32.mrf.mxu0
    %v1445 = vadd.f32 %v647, %v1444
    %v1446 = vpop.f32.mrf.mxu0
    %1447 = vmatprep.mubr.f32.mxu0 0.0
    %1448 = vmatmul.mubr.f32.gmra.mxu0 %v782
    %v1449 = vpop.f32.mrf.mxu0
    %v1450 = vadd.f32 %v647, %v1449
    %v1451 = vpop.f32.mrf.mxu0
    %1452 = vmatprep.mubr.f32.mxu0 0.0
    %1453 = vmatmul.mubr.f32.gmra.mxu0 %v785
    %v1454 = vpop.f32.mrf.mxu0
    %v1455 = vadd.f32 %v647, %v1454
    %v1456 = vpop.f32.mrf.mxu0
    %1457 = vmatprep.mubr.f32.mxu0 0.0
    %1458 = vmatmul.mubr.f32.gmra.mxu0 %v788
    %v1459 = vpop.f32.mrf.mxu0
    %v1460 = vadd.f32 %v647, %v1459
    %v1461 = vpop.f32.mrf.mxu0
    %1462 = vmatprep.mubr.f32.mxu0 0.0
    %1463 = vmatmul.mubr.f32.gmra.mxu0 %v791
    %v1464 = vpop.f32.mrf.mxu0
    %v1465 = vadd.f32 %v647, %v1464
    %v1466 = vpop.f32.mrf.mxu0
    %1467 = vmatprep.mubr.f32.mxu0 0.0
    %1468 = vmatmul.mubr.f32.gmra.mxu0 %v794
    %v1469 = vpop.f32.mrf.mxu0
    %v1470 = vadd.f32 %v647, %v1469
    %v1471 = vpop.f32.mrf.mxu0
    %1472 = vmatprep.mubr.f32.mxu0 0.0
    %1473 = vmatmul.mubr.f32.gmra.mxu0 %v797
    %v1474 = vpop.f32.mrf.mxu0
    %v1475 = vadd.f32 %v647, %v1474
    %v1476 = vpop.f32.mrf.mxu0
    %1477 = vdwg.mxu0
    %v1478 = vmax.f32 %v876, 0.0
    %v1479 = vmax.f32 %v878, 0.0
    %v1480 = vmax.f32 %v1235, 0.0
    %v1481 = vmax.f32 %v882, 0.0
    %v1482 = vmax.f32 %v884, 0.0
    %v1483 = vmax.f32 %v1240, 0.0
    %v1484 = vmax.f32 %v888, 0.0
    %v1485 = vmax.f32 %v890, 0.0
    %v1486 = vmax.f32 %v1245, 0.0
    %v1487 = vmax.f32 %v894, 0.0
    %v1488 = vmax.f32 %v896, 0.0
    %v1489 = vmax.f32 %v1250, 0.0
    %v1490 = vmax.f32 %v900, 0.0
    %v1491 = vmax.f32 %v902, 0.0
    %v1492 = vmax.f32 %v1255, 0.0
    %v1493 = vmax.f32 %v906, 0.0
    %v1494 = vmax.f32 %v908, 0.0
    %v1495 = vmax.f32 %v1260, 0.0
    %v1496 = vmax.f32 %v912, 0.0
    %v1497 = vmax.f32 %v914, 0.0
    %v1498 = vmax.f32 %v1265, 0.0
    %v1499 = vmax.f32 %v918, 0.0
    %v1500 = vmax.f32 %v920, 0.0
    %v1501 = vmax.f32 %v1270, 0.0
    %v1502 = vmax.f32 %v924, 0.0
    %v1503 = vmax.f32 %v926, 0.0
    %v1504 = vmax.f32 %v1275, 0.0
    %v1505 = vmax.f32 %v930, 0.0
    %v1506 = vmax.f32 %v932, 0.0
    %v1507 = vmax.f32 %v1280, 0.0
    %v1508 = vmax.f32 %v936, 0.0
    %v1509 = vmax.f32 %v938, 0.0
    %v1510 = vmax.f32 %v1285, 0.0
    %v1511 = vmax.f32 %v942, 0.0
    %v1512 = vmax.f32 %v944, 0.0
    %v1513 = vmax.f32 %v1290, 0.0
    %v1514 = vmax.f32 %v948, 0.0
    %v1515 = vmax.f32 %v950, 0.0
    %v1516 = vmax.f32 %v1295, 0.0
    %v1517 = vmax.f32 %v954, 0.0
    %v1518 = vmax.f32 %v956, 0.0
    %v1519 = vmax.f32 %v1300, 0.0
    %v1520 = vmax.f32 %v960, 0.0
    %v1521 = vmax.f32 %v962, 0.0
    %v1522 = vmax.f32 %v1305, 0.0
    %v1523 = vmax.f32 %v966, 0.0
    %v1524 = vmax.f32 %v968, 0.0
    %v1525 = vmax.f32 %v1310, 0.0
    %v1526 = vmax.f32 %v972, 0.0
    %v1527 = vmax.f32 %v974, 0.0
    %v1528 = vmax.f32 %v1315, 0.0
    %v1529 = vmax.f32 %v978, 0.0
    %v1530 = vmax.f32 %v980, 0.0
    %v1531 = vmax.f32 %v1320, 0.0
    %v1532 = vmax.f32 %v984, 0.0
    %v1533 = vmax.f32 %v986, 0.0
    %v1534 = vmax.f32 %v1325, 0.0
    %v1535 = vmax.f32 %v990, 0.0
    %v1536 = vmax.f32 %v992, 0.0
    %v1537 = vmax.f32 %v1330, 0.0
    %v1538 = vmax.f32 %v996, 0.0
    %v1539 = vmax.f32 %v998, 0.0
    %v1540 = vmax.f32 %v1335, 0.0
    %v1541 = vmax.f32 %v1002, 0.0
    %v1542 = vmax.f32 %v1004, 0.0
    %v1543 = vmax.f32 %v1340, 0.0
    %v1544 = vmax.f32 %v1008, 0.0
    %v1545 = vmax.f32 %v1010, 0.0
    %v1546 = vmax.f32 %v1345, 0.0
    %v1547 = vmax.f32 %v1014, 0.0
    %v1548 = vmax.f32 %v1016, 0.0
    %v1549 = vmax.f32 %v1350, 0.0
    %v1550 = vmax.f32 %v1020, 0.0
    %v1551 = vmax.f32 %v1022, 0.0
    %v1552 = vmax.f32 %v1355, 0.0
    %v1553 = vmax.f32 %v1026, 0.0
    %v1554 = vmax.f32 %v1028, 0.0
    %v1555 = vmax.f32 %v1360, 0.0
    %v1556 = vmax.f32 %v1032, 0.0
    %v1557 = vmax.f32 %v1034, 0.0
    %v1558 = vmax.f32 %v1365, 0.0
    %v1559 = vmax.f32 %v1038, 0.0
    %v1560 = vmax.f32 %v1040, 0.0
    %v1561 = vmax.f32 %v1370, 0.0
    %v1562 = vmax.f32 %v1044, 0.0
    %v1563 = vmax.f32 %v1046, 0.0
    %v1564 = vmax.f32 %v1375, 0.0
    %v1565 = vmax.f32 %v1050, 0.0
    %v1566 = vmax.f32 %v1052, 0.0
    %v1567 = vmax.f32 %v1380, 0.0
    %v1568 = vmax.f32 %v1056, 0.0
    %v1569 = vmax.f32 %v1058, 0.0
    %v1570 = vmax.f32 %v1385, 0.0
    %v1571 = vmax.f32 %v1062, 0.0
    %v1572 = vmax.f32 %v1064, 0.0
    %v1573 = vmax.f32 %v1390, 0.0
    %v1574 = vmax.f32 %v1068, 0.0
    %v1575 = vmax.f32 %v1070, 0.0
    %v1576 = vmax.f32 %v1395, 0.0
    %v1577 = vmax.f32 %v1074, 0.0
    %v1578 = vmax.f32 %v1076, 0.0
    %v1579 = vmax.f32 %v1400, 0.0
    %v1580 = vmax.f32 %v1080, 0.0
    %v1581 = vmax.f32 %v1082, 0.0
    %v1582 = vmax.f32 %v1405, 0.0
    %v1583 = vmax.f32 %v1086, 0.0
    %v1584 = vmax.f32 %v1088, 0.0
    %v1585 = vmax.f32 %v1410, 0.0
    %v1586 = vmax.f32 %v1092, 0.0
    %v1587 = vmax.f32 %v1094, 0.0
    %v1588 = vmax.f32 %v1415, 0.0
    %v1589 = vmax.f32 %v1098, 0.0
    %v1590 = vmax.f32 %v1100, 0.0
    %v1591 = vmax.f32 %v1420, 0.0
    %v1592 = vmax.f32 %v1104, 0.0
    %v1593 = vmax.f32 %v1106, 0.0
    %v1594 = vmax.f32 %v1425, 0.0
    %v1595 = vmax.f32 %v1110, 0.0
    %v1596 = vmax.f32 %v1112, 0.0
    %v1597 = vmax.f32 %v1430, 0.0
    %v1598 = vmax.f32 %v1116, 0.0
    %v1599 = vmax.f32 %v1118, 0.0
    %v1600 = vmax.f32 %v1435, 0.0
    %v1601 = vmax.f32 %v1122, 0.0
    %v1602 = vmax.f32 %v1124, 0.0
    %v1603 = vmax.f32 %v1440, 0.0
    %v1604 = vmax.f32 %v1128, 0.0
    %v1605 = vmax.f32 %v1130, 0.0
    %v1606 = vmax.f32 %v1445, 0.0
    %v1607 = vmax.f32 %v1134, 0.0
    %v1608 = vmax.f32 %v1136, 0.0
    %v1609 = vmax.f32 %v1450, 0.0
    %v1610 = vmax.f32 %v1140, 0.0
    %v1611 = vmax.f32 %v1142, 0.0
    %v1612 = vmax.f32 %v1455, 0.0
    %v1613 = vmax.f32 %v1146, 0.0
    %v1614 = vmax.f32 %v1148, 0.0
    %v1615 = vmax.f32 %v1460, 0.0
    %v1616 = vmax.f32 %v1152, 0.0
    %v1617 = vmax.f32 %v1154, 0.0
    %v1618 = vmax.f32 %v1465, 0.0
    %v1619 = vmax.f32 %v1158, 0.0
    %v1620 = vmax.f32 %v1160, 0.0
    %v1621 = vmax.f32 %v1470, 0.0
    %v1622 = vmax.f32 %v1164, 0.0
    %v1623 = vmax.f32 %v1166, 0.0
    %v1624 = vmax.f32 %v1475, 0.0
    %v1625 = vld [vmem:[%s3] sm:$0xff]
    %v1626 = vld [vmem:[%s3 + $0x8] sm:$0xff]
    %v1627 = vld [vmem:[%s3 + $0x10] sm:$0xff]
    %v1628 = vld [vmem:[%s3 + $0x18] sm:$0xff]
    %v1629 = vld [vmem:[%s3 + $0x20] sm:$0xff]
    %v1630 = vld [vmem:[%s3 + $0x28] sm:$0xff]
    %v1631 = vld [vmem:[%s3 + $0x30] sm:$0xff]
    %v1632 = vld [vmem:[%s3 + $0x38] sm:$0xff]
    %v1633 = vld [vmem:[%s3 + $0x40] sm:$0xff]
    %v1634 = vld [vmem:[%s3 + $0x48] sm:$0xff]
    %v1635 = vld [vmem:[%s3 + $0x50] sm:$0xff]
    %v1636 = vld [vmem:[%s3 + $0x58] sm:$0xff]
    %v1637 = vld [vmem:[%s3 + $0x60] sm:$0xff]
    %v1638 = vld [vmem:[%s3 + $0x68] sm:$0xff]
    %v1639 = vld [vmem:[%s3 + $0x70] sm:$0xff]
    %v1640 = vld [vmem:[%s3 + $0x78] sm:$0xff]
    %v1641 = vld [vmem:[%s3 + $0x80] sm:$0xff]
    %v1642 = vld [vmem:[%s3 + $0x88] sm:$0xff]
    %v1643 = vld [vmem:[%s3 + $0x90] sm:$0xff]
    %v1644 = vld [vmem:[%s3 + $0x98] sm:$0xff]
    %v1645 = vld [vmem:[%s3 + $0xa0] sm:$0xff]
    %v1646 = vld [vmem:[%s3 + $0xa8] sm:$0xff]
    %v1647 = vld [vmem:[%s3 + $0xb0] sm:$0xff]
    %v1648 = vld [vmem:[%s3 + $0xb8] sm:$0xff]
    %v1649 = vld [vmem:[%s3 + $0xc0] sm:$0xff]
    %v1650 = vld [vmem:[%s3 + $0xc8] sm:$0xff]
    %v1651 = vld [vmem:[%s3 + $0xd0] sm:$0xff]
    %v1652 = vld [vmem:[%s3 + $0xd8] sm:$0xff]
    %v1653 = vld [vmem:[%s3 + $0xe0] sm:$0xff]
    %v1654 = vld [vmem:[%s3 + $0xe8] sm:$0xff]
    %v1655 = vld [vmem:[%s3 + $0xf0] sm:$0xff]
    %v1656 = vld [vmem:[%s3 + $0xf8] sm:$0xff]
    %v1657 = vld [vmem:[%s3 + $0x100] sm:$0xff]
    %v1658 = vld [vmem:[%s3 + $0x108] sm:$0xff]
    %v1659 = vld [vmem:[%s3 + $0x110] sm:$0xff]
    %v1660 = vld [vmem:[%s3 + $0x118] sm:$0xff]
    %v1661 = vld [vmem:[%s3 + $0x120] sm:$0xff]
    %v1662 = vld [vmem:[%s3 + $0x128] sm:$0xff]
    %v1663 = vld [vmem:[%s3 + $0x130] sm:$0xff]
    %v1664 = vld [vmem:[%s3 + $0x138] sm:$0xff]
    %v1665 = vld [vmem:[%s3 + $0x140] sm:$0xff]
    %v1666 = vld [vmem:[%s3 + $0x148] sm:$0xff]
    %v1667 = vld [vmem:[%s3 + $0x150] sm:$0xff]
    %v1668 = vld [vmem:[%s3 + $0x158] sm:$0xff]
    %v1669 = vld [vmem:[%s3 + $0x160] sm:$0xff]
    %v1670 = vld [vmem:[%s3 + $0x168] sm:$0xff]
    %v1671 = vld [vmem:[%s3 + $0x170] sm:$0xff]
    %v1672 = vld [vmem:[%s3 + $0x178] sm:$0xff]
    %v1673 = vld [vmem:[%s3 + $0x180] sm:$0xff]
    %v1674 = vld [vmem:[%s3 + $0x188] sm:$0xff]
    %v1675 = vld [vmem:[%s3 + $0x190] sm:$0xff]
    %v1676 = vld [vmem:[%s3 + $0x198] sm:$0xff]
    %v1677 = vld [vmem:[%s3 + $0x1a0] sm:$0xff]
    %v1678 = vld [vmem:[%s3 + $0x1a8] sm:$0xff]
    %v1679 = vld [vmem:[%s3 + $0x1b0] sm:$0xff]
    %v1680 = vld [vmem:[%s3 + $0x1b8] sm:$0xff]
    %v1681 = vld [vmem:[%s3 + $0x1c0] sm:$0xff]
    %v1682 = vld [vmem:[%s3 + $0x1c8] sm:$0xff]
    %v1683 = vld [vmem:[%s3 + $0x1d0] sm:$0xff]
    %v1684 = vld [vmem:[%s3 + $0x1d8] sm:$0xff]
    %v1685 = vld [vmem:[%s3 + $0x1e0] sm:$0xff]
    %v1686 = vld [vmem:[%s3 + $0x1e8] sm:$0xff]
    %v1687 = vld [vmem:[%s3 + $0x1f0] sm:$0xff]
    %v1688 = vld [vmem:[%s3 + $0x1f8] sm:$0xff]
    %v1689 = vld [vmem:[%s3 + $0x200] sm:$0xff]
    %v1690 = vld [vmem:[%s3 + $0x208] sm:$0xff]
    %v1691 = vld [vmem:[%s3 + $0x210] sm:$0xff]
    %v1692 = vld [vmem:[%s3 + $0x218] sm:$0xff]
    %v1693 = vld [vmem:[%s3 + $0x220] sm:$0xff]
    %v1694 = vld [vmem:[%s3 + $0x228] sm:$0xff]
    %v1695 = vld [vmem:[%s3 + $0x230] sm:$0xff]
    %v1696 = vld [vmem:[%s3 + $0x238] sm:$0xff]
    %v1697 = vld [vmem:[%s3 + $0x240] sm:$0xff]
    %v1698 = vld [vmem:[%s3 + $0x248] sm:$0xff]
    %v1699 = vld [vmem:[%s3 + $0x250] sm:$0xff]
    %v1700 = vld [vmem:[%s3 + $0x258] sm:$0xff]
    %v1701 = vld [vmem:[%s3 + $0x260] sm:$0xff]
    %v1702 = vld [vmem:[%s3 + $0x268] sm:$0xff]
    %v1703 = vld [vmem:[%s3 + $0x270] sm:$0xff]
    %v1704 = vld [vmem:[%s3 + $0x278] sm:$0xff]
    %v1705 = vld [vmem:[%s3 + $0x280] sm:$0xff]
    %v1706 = vld [vmem:[%s3 + $0x288] sm:$0xff]
    %v1707 = vld [vmem:[%s3 + $0x290] sm:$0xff]
    %v1708 = vld [vmem:[%s3 + $0x298] sm:$0xff]
    %v1709 = vld [vmem:[%s3 + $0x2a0] sm:$0xff]
    %v1710 = vld [vmem:[%s3 + $0x2a8] sm:$0xff]
    %v1711 = vld [vmem:[%s3 + $0x2b0] sm:$0xff]
    %v1712 = vld [vmem:[%s3 + $0x2b8] sm:$0xff]
    %v1713 = vld [vmem:[%s3 + $0x2c0] sm:$0xff]
    %v1714 = vld [vmem:[%s3 + $0x2c8] sm:$0xff]
    %v1715 = vld [vmem:[%s3 + $0x2d0] sm:$0xff]
    %v1716 = vld [vmem:[%s3 + $0x2d8] sm:$0xff]
    %v1717 = vld [vmem:[%s3 + $0x2e0] sm:$0xff]
    %v1718 = vld [vmem:[%s3 + $0x2e8] sm:$0xff]
    %v1719 = vld [vmem:[%s3 + $0x2f0] sm:$0xff]
    %v1720 = vld [vmem:[%s3 + $0x2f8] sm:$0xff]
    %v1721 = vld [vmem:[%s3 + $0x300] sm:$0xff]
    %v1722 = vld [vmem:[%s3 + $0x308] sm:$0xff]
    %v1723 = vld [vmem:[%s3 + $0x310] sm:$0xff]
    %v1724 = vld [vmem:[%s3 + $0x318] sm:$0xff]
    %v1725 = vld [vmem:[%s3 + $0x320] sm:$0xff]
    %v1726 = vld [vmem:[%s3 + $0x328] sm:$0xff]
    %v1727 = vld [vmem:[%s3 + $0x330] sm:$0xff]
    %v1728 = vld [vmem:[%s3 + $0x338] sm:$0xff]
    %v1729 = vld [vmem:[%s3 + $0x340] sm:$0xff]
    %v1730 = vld [vmem:[%s3 + $0x348] sm:$0xff]
    %v1731 = vld [vmem:[%s3 + $0x350] sm:$0xff]
    %v1732 = vld [vmem:[%s3 + $0x358] sm:$0xff]
    %v1733 = vld [vmem:[%s3 + $0x360] sm:$0xff]
    %v1734 = vld [vmem:[%s3 + $0x368] sm:$0xff]
    %v1735 = vld [vmem:[%s3 + $0x370] sm:$0xff]
    %v1736 = vld [vmem:[%s3 + $0x378] sm:$0xff]
    %v1737 = vld [vmem:[%s3 + $0x380] sm:$0xff]
    %v1738 = vld [vmem:[%s3 + $0x388] sm:$0xff]
    %v1739 = vld [vmem:[%s3 + $0x390] sm:$0xff]
    %v1740 = vld [vmem:[%s3 + $0x398] sm:$0xff]
    %v1741 = vld [vmem:[%s3 + $0x3a0] sm:$0xff]
    %v1742 = vld [vmem:[%s3 + $0x3a8] sm:$0xff]
    %v1743 = vld [vmem:[%s3 + $0x3b0] sm:$0xff]
    %v1744 = vld [vmem:[%s3 + $0x3b8] sm:$0xff]
    %v1745 = vld [vmem:[%s3 + $0x3c0] sm:$0xff]
    %v1746 = vld [vmem:[%s3 + $0x3c8] sm:$0xff]
    %v1747 = vld [vmem:[%s3 + $0x3d0] sm:$0xff]
    %v1748 = vld [vmem:[%s3 + $0x3d8] sm:$0xff]
    %v1749 = vld [vmem:[%s3 + $0x3e0] sm:$0xff]
    %v1750 = vld [vmem:[%s3 + $0x3e8] sm:$0xff]
    %v1751 = vld [vmem:[%s3 + $0x3f0] sm:$0xff]
    %v1752 = vld [vmem:[%s3 + $0x3f8] sm:$0xff]
    %v1753 = vld [vmem:[%s3 + $0x400] sm:$0xff]
    %v1754 = vld [vmem:[%s3 + $0x408] sm:$0xff]
    %v1755 = vld [vmem:[%s3 + $0x410] sm:$0xff]
    %v1756 = vld [vmem:[%s3 + $0x418] sm:$0xff]
    %v1757 = vld [vmem:[%s3 + $0x420] sm:$0xff]
    %v1758 = vld [vmem:[%s3 + $0x428] sm:$0xff]
    %v1759 = vld [vmem:[%s3 + $0x430] sm:$0xff]
    %v1760 = vld [vmem:[%s3 + $0x438] sm:$0xff]
    %v1761 = vld [vmem:[%s3 + $0x440] sm:$0xff]
    %v1762 = vld [vmem:[%s3 + $0x448] sm:$0xff]
    %v1763 = vld [vmem:[%s3 + $0x450] sm:$0xff]
    %v1764 = vld [vmem:[%s3 + $0x458] sm:$0xff]
    %v1765 = vld [vmem:[%s3 + $0x460] sm:$0xff]
    %v1766 = vld [vmem:[%s3 + $0x468] sm:$0xff]
    %v1767 = vld [vmem:[%s3 + $0x470] sm:$0xff]
    %v1768 = vld [vmem:[%s3 + $0x478] sm:$0xff]
    %v1769 = vld [vmem:[%s3 + $0x480] sm:$0xff]
    %v1770 = vld [vmem:[%s3 + $0x488] sm:$0xff]
    %v1771 = vld [vmem:[%s3 + $0x490] sm:$0xff]
    %v1772 = vmul.f32 %v1478, %v1625
    %v1773 = vmul.f32 %v1479, %v1626
    %v1774 = vmul.f32 %v1480, %v1627
    %v1775 = vmul.f32 %v1481, %v1628
    %v1776 = vmul.f32 %v1482, %v1629
    %v1777 = vmul.f32 %v1483, %v1630
    %v1778 = vmul.f32 %v1484, %v1631
    %v1779 = vmul.f32 %v1485, %v1632
    %v1780 = vmul.f32 %v1486, %v1633
    %v1781 = vmul.f32 %v1487, %v1634
    %v1782 = vmul.f32 %v1488, %v1635
    %v1783 = vmul.f32 %v1489, %v1636
    %v1784 = vmul.f32 %v1490, %v1637
    %v1785 = vmul.f32 %v1491, %v1638
    %v1786 = vmul.f32 %v1492, %v1639
    %v1787 = vmul.f32 %v1493, %v1640
    %v1788 = vmul.f32 %v1494, %v1641
    %v1789 = vmul.f32 %v1495, %v1642
    %v1790 = vmul.f32 %v1496, %v1643
    %v1791 = vmul.f32 %v1497, %v1644
    %v1792 = vmul.f32 %v1498, %v1645
    %v1793 = vmul.f32 %v1499, %v1646
    %v1794 = vmul.f32 %v1500, %v1647
    %v1795 = vmul.f32 %v1501, %v1648
    %v1796 = vmul.f32 %v1502, %v1649
    %v1797 = vmul.f32 %v1503, %v1650
    %v1798 = vmul.f32 %v1504, %v1651
    %v1799 = vmul.f32 %v1505, %v1652
    %v1800 = vmul.f32 %v1506, %v1653
    %v1801 = vmul.f32 %v1507, %v1654
    %v1802 = vmul.f32 %v1508, %v1655
    %v1803 = vmul.f32 %v1509, %v1656
    %v1804 = vmul.f32 %v1510, %v1657
    %v1805 = vmul.f32 %v1511, %v1658
    %v1806 = vmul.f32 %v1512, %v1659
    %v1807 = vmul.f32 %v1513, %v1660
    %v1808 = vmul.f32 %v1514, %v1661
    %v1809 = vmul.f32 %v1515, %v1662
    %v1810 = vmul.f32 %v1516, %v1663
    %v1811 = vmul.f32 %v1517, %v1664
    %v1812 = vmul.f32 %v1518, %v1665
    %v1813 = vmul.f32 %v1519, %v1666
    %v1814 = vmul.f32 %v1520, %v1667
    %v1815 = vmul.f32 %v1521, %v1668
    %v1816 = vmul.f32 %v1522, %v1669
    %v1817 = vmul.f32 %v1523, %v1670
    %v1818 = vmul.f32 %v1524, %v1671
    %v1819 = vmul.f32 %v1525, %v1672
    %v1820 = vmul.f32 %v1526, %v1673
    %v1821 = vmul.f32 %v1527, %v1674
    %v1822 = vmul.f32 %v1528, %v1675
    %v1823 = vmul.f32 %v1529, %v1676
    %v1824 = vmul.f32 %v1530, %v1677
    %v1825 = vmul.f32 %v1531, %v1678
    %v1826 = vmul.f32 %v1532, %v1679
    %v1827 = vmul.f32 %v1533, %v1680
    %v1828 = vmul.f32 %v1534, %v1681
    %v1829 = vmul.f32 %v1535, %v1682
    %v1830 = vmul.f32 %v1536, %v1683
    %v1831 = vmul.f32 %v1537, %v1684
    %v1832 = vmul.f32 %v1538, %v1685
    %v1833 = vmul.f32 %v1539, %v1686
    %v1834 = vmul.f32 %v1540, %v1687
    %v1835 = vmul.f32 %v1541, %v1688
    %v1836 = vmul.f32 %v1542, %v1689
    %v1837 = vmul.f32 %v1543, %v1690
    %v1838 = vmul.f32 %v1544, %v1691
    %v1839 = vmul.f32 %v1545, %v1692
    %v1840 = vmul.f32 %v1546, %v1693
    %v1841 = vmul.f32 %v1547, %v1694
    %v1842 = vmul.f32 %v1548, %v1695
    %v1843 = vmul.f32 %v1549, %v1696
    %v1844 = vmul.f32 %v1550, %v1697
    %v1845 = vmul.f32 %v1551, %v1698
    %v1846 = vmul.f32 %v1552, %v1699
    %v1847 = vmul.f32 %v1553, %v1700
    %v1848 = vmul.f32 %v1554, %v1701
    %v1849 = vmul.f32 %v1555, %v1702
    %v1850 = vmul.f32 %v1556, %v1703
    %v1851 = vmul.f32 %v1557, %v1704
    %v1852 = vmul.f32 %v1558, %v1705
    %v1853 = vmul.f32 %v1559, %v1706
    %v1854 = vmul.f32 %v1560, %v1707
    %v1855 = vmul.f32 %v1561, %v1708
    %v1856 = vmul.f32 %v1562, %v1709
    %v1857 = vmul.f32 %v1563, %v1710
    %v1858 = vmul.f32 %v1564, %v1711
    %v1859 = vmul.f32 %v1565, %v1712
    %v1860 = vmul.f32 %v1566, %v1713
    %v1861 = vmul.f32 %v1567, %v1714
    %v1862 = vmul.f32 %v1568, %v1715
    %v1863 = vmul.f32 %v1569, %v1716
    %v1864 = vmul.f32 %v1570, %v1717
    %v1865 = vmul.f32 %v1571, %v1718
    %v1866 = vmul.f32 %v1572, %v1719
    %v1867 = vmul.f32 %v1573, %v1720
    %v1868 = vmul.f32 %v1574, %v1721
    %v1869 = vmul.f32 %v1575, %v1722
    %v1870 = vmul.f32 %v1576, %v1723
    %v1871 = vmul.f32 %v1577, %v1724
    %v1872 = vmul.f32 %v1578, %v1725
    %v1873 = vmul.f32 %v1579, %v1726
    %v1874 = vmul.f32 %v1580, %v1727
    %v1875 = vmul.f32 %v1581, %v1728
    %v1876 = vmul.f32 %v1582, %v1729
    %v1877 = vmul.f32 %v1583, %v1730
    %v1878 = vmul.f32 %v1584, %v1731
    %v1879 = vmul.f32 %v1585, %v1732
    %v1880 = vmul.f32 %v1586, %v1733
    %v1881 = vmul.f32 %v1587, %v1734
    %v1882 = vmul.f32 %v1588, %v1735
    %v1883 = vmul.f32 %v1589, %v1736
    %v1884 = vmul.f32 %v1590, %v1737
    %v1885 = vmul.f32 %v1591, %v1738
    %v1886 = vmul.f32 %v1592, %v1739
    %v1887 = vmul.f32 %v1593, %v1740
    %v1888 = vmul.f32 %v1594, %v1741
    %v1889 = vmul.f32 %v1595, %v1742
    %v1890 = vmul.f32 %v1596, %v1743
    %v1891 = vmul.f32 %v1597, %v1744
    %v1892 = vmul.f32 %v1598, %v1745
    %v1893 = vmul.f32 %v1599, %v1746
    %v1894 = vmul.f32 %v1600, %v1747
    %v1895 = vmul.f32 %v1601, %v1748
    %v1896 = vmul.f32 %v1602, %v1749
    %v1897 = vmul.f32 %v1603, %v1750
    %v1898 = vmul.f32 %v1604, %v1751
    %v1899 = vmul.f32 %v1605, %v1752
    %v1900 = vmul.f32 %v1606, %v1753
    %v1901 = vmul.f32 %v1607, %v1754
    %v1902 = vmul.f32 %v1608, %v1755
    %v1903 = vmul.f32 %v1609, %v1756
    %v1904 = vmul.f32 %v1610, %v1757
    %v1905 = vmul.f32 %v1611, %v1758
    %v1906 = vmul.f32 %v1612, %v1759
    %v1907 = vmul.f32 %v1613, %v1760
    %v1908 = vmul.f32 %v1614, %v1761
    %v1909 = vmul.f32 %v1615, %v1762
    %v1910 = vmul.f32 %v1616, %v1763
    %v1911 = vmul.f32 %v1617, %v1764
    %v1912 = vmul.f32 %v1618, %v1765
    %v1913 = vmul.f32 %v1619, %v1766
    %v1914 = vmul.f32 %v1620, %v1767
    %v1915 = vmul.f32 %v1621, %v1768
    %v1916 = vmul.f32 %v1622, %v1769
    %v1917 = vmul.f32 %v1623, %v1770
    %v1918 = vmul.f32 %v1624, %v1771
    %v1919 = vld [vmem:[%s13] sm:$0xff]
    %v1920 = vld [vmem:[%s13 + $0x8] sm:$0xff]
    %v1921 = vld [vmem:[%s13 + $0x10] sm:$0xff]
    %v1922 = vld [vmem:[%s13 + $0x18] sm:$0xff]
    %v1923 = vld [vmem:[%s13 + $0x20] sm:$0xff]
    %v1924 = vld [vmem:[%s13 + $0x28] sm:$0xff]
    %v1925 = vld [vmem:[%s13 + $0x30] sm:$0xff]
    %v1926 = vld [vmem:[%s13 + $0x38] sm:$0xff]
    %v1927 = vld [vmem:[%s13 + $0x40] sm:$0xff]
    %v1928 = vld [vmem:[%s13 + $0x48] sm:$0xff]
    %v1929 = vld [vmem:[%s13 + $0x50] sm:$0xff]
    %v1930 = vld [vmem:[%s13 + $0x58] sm:$0xff]
    %v1931 = vld [vmem:[%s13 + $0x60] sm:$0xff]
    %v1932 = vld [vmem:[%s13 + $0x68] sm:$0xff]
    %v1933 = vld [vmem:[%s13 + $0x70] sm:$0xff]
    %v1934 = vld [vmem:[%s13 + $0x78] sm:$0xff]
    %v1935 = vld [vmem:[%s13 + $0x80] sm:$0xff]
    %v1936 = vld [vmem:[%s13 + $0x88] sm:$0xff]
    %v1937 = vld [vmem:[%s13 + $0x90] sm:$0xff]
    %v1938 = vld [vmem:[%s13 + $0x98] sm:$0xff]
    %v1939 = vld [vmem:[%s13 + $0xa0] sm:$0xff]
    %v1940 = vld [vmem:[%s13 + $0xa8] sm:$0xff]
    %v1941 = vld [vmem:[%s13 + $0xb0] sm:$0xff]
    %v1942 = vld [vmem:[%s13 + $0xb8] sm:$0xff]
    %v1943 = vld [vmem:[%s13 + $0xc0] sm:$0xff]
    %v1944 = vld [vmem:[%s13 + $0xc8] sm:$0xff]
    %v1945 = vld [vmem:[%s13 + $0xd0] sm:$0xff]
    %v1946 = vld [vmem:[%s13 + $0xd8] sm:$0xff]
    %v1947 = vld [vmem:[%s13 + $0xe0] sm:$0xff]
    %v1948 = vld [vmem:[%s13 + $0xe8] sm:$0xff]
    %v1949 = vld [vmem:[%s13 + $0xf0] sm:$0xff]
    %v1950 = vld [vmem:[%s13 + $0xf8] sm:$0xff]
    %v1951 = vld [vmem:[%s13 + $0x100] sm:$0xff]
    %v1952 = vld [vmem:[%s13 + $0x108] sm:$0xff]
    %v1953 = vld [vmem:[%s13 + $0x110] sm:$0xff]
    %v1954 = vld [vmem:[%s13 + $0x118] sm:$0xff]
    %v1955 = vld [vmem:[%s15] sm:$0x1]
    %v1957 = vlaneseq
    %v1958 = vshrl.u32 %v1957, 7
    %v1959 = vsub.s32 0, %v1958
    %v1960 = vrot.slane %v1955, %v1959
    %vm1962 = vcmask 261120
    %v1964 = vsel %vm1962, %v1774, 0
    %v1967 = vsel %vm1962, %v1777, 0
    %v1970 = vsel %vm1962, %v1780, 0
    %v1973 = vsel %vm1962, %v1783, 0
    %v1976 = vsel %vm1962, %v1786, 0
    %v1979 = vsel %vm1962, %v1789, 0
    %v1982 = vsel %vm1962, %v1792, 0
    %v1985 = vsel %vm1962, %v1795, 0
    %v1988 = vsel %vm1962, %v1798, 0
    %v1991 = vsel %vm1962, %v1801, 0
    %v1994 = vsel %vm1962, %v1804, 0
    %v1997 = vsel %vm1962, %v1807, 0
    %v2000 = vsel %vm1962, %v1810, 0
    %v2003 = vsel %vm1962, %v1813, 0
    %v2006 = vsel %vm1962, %v1816, 0
    %v2009 = vsel %vm1962, %v1819, 0
    %v2012 = vsel %vm1962, %v1822, 0
    %v2015 = vsel %vm1962, %v1825, 0
    %v2018 = vsel %vm1962, %v1828, 0
    %v2021 = vsel %vm1962, %v1831, 0
    %v2024 = vsel %vm1962, %v1834, 0
    %v2027 = vsel %vm1962, %v1837, 0
    %v2030 = vsel %vm1962, %v1840, 0
    %v2033 = vsel %vm1962, %v1843, 0
    %v2036 = vsel %vm1962, %v1846, 0
    %v2039 = vsel %vm1962, %v1849, 0
    %v2042 = vsel %vm1962, %v1852, 0
    %v2045 = vsel %vm1962, %v1855, 0
    %v2048 = vsel %vm1962, %v1858, 0
    %v2051 = vsel %vm1962, %v1861, 0
    %v2054 = vsel %vm1962, %v1864, 0
    %v2057 = vsel %vm1962, %v1867, 0
    %v2060 = vsel %vm1962, %v1870, 0
    %v2063 = vsel %vm1962, %v1873, 0
    %v2066 = vsel %vm1962, %v1876, 0
    %v2069 = vsel %vm1962, %v1879, 0
    %v2072 = vsel %vm1962, %v1882, 0
    %v2075 = vsel %vm1962, %v1885, 0
    %v2078 = vsel %vm1962, %v1888, 0
    %v2081 = vsel %vm1962, %v1891, 0
    %v2084 = vsel %vm1962, %v1894, 0
    %v2087 = vsel %vm1962, %v1897, 0
    %v2090 = vsel %vm1962, %v1900, 0
    %v2093 = vsel %vm1962, %v1903, 0
    %v2096 = vsel %vm1962, %v1906, 0
    %v2099 = vsel %vm1962, %v1909, 0
    %v2102 = vsel %vm1962, %v1912, 0
    %v2105 = vsel %vm1962, %v1915, 0
    %v2108 = vsel %vm1962, %v1918, 0
    %2110 = vmatprep.subr.mxu0 0.0
    %2111 = vmatpush1.msra.mxu0 %v1934
    %2112 = vmatprep.subr.mxu0 0.0
    %2113 = vmatpush1.msra.mxu0 %v1933
    %2114 = vmatprep.subr.mxu0 0.0
    %2115 = vmatpush1.msra.mxu0 %v1932
    %2116 = vmatprep.subr.mxu0 0.0
    %2117 = vmatpush1.msra.mxu0 %v1931
    %2118 = vmatprep.subr.mxu0 0.0
    %2119 = vmatpush1.msra.mxu0 %v1930
    %2120 = vmatprep.subr.mxu0 0.0
    %2121 = vmatpush1.msra.mxu0 %v1929
    %2122 = vmatprep.subr.mxu0 0.0
    %2123 = vmatpush1.msra.mxu0 %v1928
    %2124 = vmatprep.subr.mxu0 0.0
    %2125 = vmatpush1.msra.mxu0 %v1927
    %2126 = vmatprep.subr.mxu0 0.0
    %2127 = vmatpush1.msra.mxu0 %v1926
    %2128 = vmatprep.subr.mxu0 0.0
    %2129 = vmatpush1.msra.mxu0 %v1925
    %2130 = vmatprep.subr.mxu0 0.0
    %2131 = vmatpush1.msra.mxu0 %v1924
    %2132 = vmatprep.subr.mxu0 0.0
    %2133 = vmatpush1.msra.mxu0 %v1923
    %2134 = vmatprep.subr.mxu0 0.0
    %2135 = vmatpush1.msra.mxu0 %v1922
    %2136 = vmatprep.subr.mxu0 0.0
    %2137 = vmatpush1.msra.mxu0 %v1921
    %2138 = vmatprep.subr.mxu0 0.0
    %2139 = vmatpush1.msra.mxu0 %v1920
    %2140 = vmatprep.subr.mxu0 0.0
    %2141 = vmatpush1.msra.mxu0 %v1919
    %2142 = vmatprep.subr.mxu0 0.0
    %2143 = vmatpush2.msra.mxu0 %v1950
    %2144 = vmatprep.subr.mxu0 0.0
    %2145 = vmatpush2.msra.mxu0 %v1949
    %2146 = vmatprep.subr.mxu0 0.0
    %2147 = vmatpush2.msra.mxu0 %v1948
    %2148 = vmatprep.subr.mxu0 0.0
    %2149 = vmatpush2.msra.mxu0 %v1947
    %2150 = vmatprep.subr.mxu0 0.0
    %2151 = vmatpush2.msra.mxu0 %v1946
    %2152 = vmatprep.subr.mxu0 0.0
    %2153 = vmatpush2.msra.mxu0 %v1945
    %2154 = vmatprep.subr.mxu0 0.0
    %2155 = vmatpush2.msra.mxu0 %v1944
    %2156 = vmatprep.subr.mxu0 0.0
    %2157 = vmatpush2.msra.mxu0 %v1943
    %2158 = vmatprep.subr.mxu0 0.0
    %2159 = vmatpush2.msra.mxu0 %v1942
    %2160 = vmatprep.subr.mxu0 0.0
    %2161 = vmatpush2.msra.mxu0 %v1941
    %2162 = vmatprep.subr.mxu0 0.0
    %2163 = vmatpush2.msra.mxu0 %v1940
    %2164 = vmatprep.subr.mxu0 0.0
    %2165 = vmatpush2.msra.mxu0 %v1939
    %2166 = vmatprep.subr.mxu0 0.0
    %2167 = vmatpush2.msra.mxu0 %v1938
    %2168 = vmatprep.subr.mxu0 0.0
    %2169 = vmatpush2.msra.mxu0 %v1937
    %2170 = vmatprep.subr.mxu0 0.0
    %2171 = vmatpush2.msra.mxu0 %v1936
    %2172 = vmatprep.subr.mxu0 0.0
    %2173 = vmatpush2.msra.mxu0 %v1935
    %2174 = vmatprep.mubr.f32.mxu0 %v1773
    %2175 = vmatmul.mubr.f32.gmra.mxu0 %v1772
    %v2176 = vpop.f32.mrf.mxu0
    %v2177 = vadd.f32 %v1960, %v2176
    %v2178 = vpop.f32.mrf.mxu0
    %2179 = vmatprep.mubr.f32.mxu0 %v1776
    %2180 = vmatmul.mubr.f32.gmra.mxu0 %v1775
    %v2181 = vpop.f32.mrf.mxu0
    %v2182 = vadd.f32 %v1960, %v2181
    %v2183 = vpop.f32.mrf.mxu0
    %2184 = vmatprep.mubr.f32.mxu0 %v1779
    %2185 = vmatmul.mubr.f32.gmra.mxu0 %v1778
    %v2186 = vpop.f32.mrf.mxu0
    %v2187 = vadd.f32 %v1960, %v2186
    %v2188 = vpop.f32.mrf.mxu0
    %2189 = vmatprep.mubr.f32.mxu0 %v1782
    %2190 = vmatmul.mubr.f32.gmra.mxu0 %v1781
    %v2191 = vpop.f32.mrf.mxu0
    %v2192 = vadd.f32 %v1960, %v2191
    %v2193 = vpop.f32.mrf.mxu0
    %2194 = vmatprep.mubr.f32.mxu0 %v1785
    %2195 = vmatmul.mubr.f32.gmra.mxu0 %v1784
    %v2196 = vpop.f32.mrf.mxu0
    %v2197 = vadd.f32 %v1960, %v2196
    %v2198 = vpop.f32.mrf.mxu0
    %2199 = vmatprep.mubr.f32.mxu0 %v1788
    %2200 = vmatmul.mubr.f32.gmra.mxu0 %v1787
    %v2201 = vpop.f32.mrf.mxu0
    %v2202 = vadd.f32 %v1960, %v2201
    %v2203 = vpop.f32.mrf.mxu0
    %2204 = vmatprep.mubr.f32.mxu0 %v1791
    %2205 = vmatmul.mubr.f32.gmra.mxu0 %v1790
    %v2206 = vpop.f32.mrf.mxu0
    %v2207 = vadd.f32 %v1960, %v2206
    %v2208 = vpop.f32.mrf.mxu0
    %2209 = vmatprep.mubr.f32.mxu0 %v1794
    %2210 = vmatmul.mubr.f32.gmra.mxu0 %v1793
    %v2211 = vpop.f32.mrf.mxu0
    %v2212 = vadd.f32 %v1960, %v2211
    %v2213 = vpop.f32.mrf.mxu0
    %2214 = vmatprep.mubr.f32.mxu0 %v1797
    %2215 = vmatmul.mubr.f32.gmra.mxu0 %v1796
    %v2216 = vpop.f32.mrf.mxu0
    %v2217 = vadd.f32 %v1960, %v2216
    %v2218 = vpop.f32.mrf.mxu0
    %2219 = vmatprep.mubr.f32.mxu0 %v1800
    %2220 = vmatmul.mubr.f32.gmra.mxu0 %v1799
    %v2221 = vpop.f32.mrf.mxu0
    %v2222 = vadd.f32 %v1960, %v2221
    %v2223 = vpop.f32.mrf.mxu0
    %2224 = vmatprep.mubr.f32.mxu0 %v1803
    %2225 = vmatmul.mubr.f32.gmra.mxu0 %v1802
    %v2226 = vpop.f32.mrf.mxu0
    %v2227 = vadd.f32 %v1960, %v2226
    %v2228 = vpop.f32.mrf.mxu0
    %2229 = vmatprep.mubr.f32.mxu0 %v1806
    %2230 = vmatmul.mubr.f32.gmra.mxu0 %v1805
    %v2231 = vpop.f32.mrf.mxu0
    %v2232 = vadd.f32 %v1960, %v2231
    %v2233 = vpop.f32.mrf.mxu0
    %2234 = vmatprep.mubr.f32.mxu0 %v1809
    %2235 = vmatmul.mubr.f32.gmra.mxu0 %v1808
    %v2236 = vpop.f32.mrf.mxu0
    %v2237 = vadd.f32 %v1960, %v2236
    %v2238 = vpop.f32.mrf.mxu0
    %2239 = vmatprep.mubr.f32.mxu0 %v1812
    %2240 = vmatmul.mubr.f32.gmra.mxu0 %v1811
    %v2241 = vpop.f32.mrf.mxu0
    %v2242 = vadd.f32 %v1960, %v2241
    %v2243 = vpop.f32.mrf.mxu0
    %2244 = vmatprep.mubr.f32.mxu0 %v1815
    %2245 = vmatmul.mubr.f32.gmra.mxu0 %v1814
    %v2246 = vpop.f32.mrf.mxu0
    %v2247 = vadd.f32 %v1960, %v2246
    %v2248 = vpop.f32.mrf.mxu0
    %2249 = vmatprep.mubr.f32.mxu0 %v1818
    %2250 = vmatmul.mubr.f32.gmra.mxu0 %v1817
    %v2251 = vpop.f32.mrf.mxu0
    %v2252 = vadd.f32 %v1960, %v2251
    %v2253 = vpop.f32.mrf.mxu0
    %2254 = vmatprep.mubr.f32.mxu0 %v1821
    %2255 = vmatmul.mubr.f32.gmra.mxu0 %v1820
    %v2256 = vpop.f32.mrf.mxu0
    %v2257 = vadd.f32 %v1960, %v2256
    %v2258 = vpop.f32.mrf.mxu0
    %2259 = vmatprep.mubr.f32.mxu0 %v1824
    %2260 = vmatmul.mubr.f32.gmra.mxu0 %v1823
    %v2261 = vpop.f32.mrf.mxu0
    %v2262 = vadd.f32 %v1960, %v2261
    %v2263 = vpop.f32.mrf.mxu0
    %2264 = vmatprep.mubr.f32.mxu0 %v1827
    %2265 = vmatmul.mubr.f32.gmra.mxu0 %v1826
    %v2266 = vpop.f32.mrf.mxu0
    %v2267 = vadd.f32 %v1960, %v2266
    %v2268 = vpop.f32.mrf.mxu0
    %2269 = vmatprep.mubr.f32.mxu0 %v1830
    %2270 = vmatmul.mubr.f32.gmra.mxu0 %v1829
    %v2271 = vpop.f32.mrf.mxu0
    %v2272 = vadd.f32 %v1960, %v2271
    %v2273 = vpop.f32.mrf.mxu0
    %2274 = vmatprep.mubr.f32.mxu0 %v1833
    %2275 = vmatmul.mubr.f32.gmra.mxu0 %v1832
    %v2276 = vpop.f32.mrf.mxu0
    %v2277 = vadd.f32 %v1960, %v2276
    %v2278 = vpop.f32.mrf.mxu0
    %2279 = vmatprep.mubr.f32.mxu0 %v1836
    %2280 = vmatmul.mubr.f32.gmra.mxu0 %v1835
    %v2281 = vpop.f32.mrf.mxu0
    %v2282 = vadd.f32 %v1960, %v2281
    %v2283 = vpop.f32.mrf.mxu0
    %2284 = vmatprep.mubr.f32.mxu0 %v1839
    %2285 = vmatmul.mubr.f32.gmra.mxu0 %v1838
    %v2286 = vpop.f32.mrf.mxu0
    %v2287 = vadd.f32 %v1960, %v2286
    %v2288 = vpop.f32.mrf.mxu0
    %2289 = vmatprep.mubr.f32.mxu0 %v1842
    %2290 = vmatmul.mubr.f32.gmra.mxu0 %v1841
    %v2291 = vpop.f32.mrf.mxu0
    %v2292 = vadd.f32 %v1960, %v2291
    %v2293 = vpop.f32.mrf.mxu0
    %2294 = vmatprep.mubr.f32.mxu0 %v1845
    %2295 = vmatmul.mubr.f32.gmra.mxu0 %v1844
    %v2296 = vpop.f32.mrf.mxu0
    %v2297 = vadd.f32 %v1960, %v2296
    %v2298 = vpop.f32.mrf.mxu0
    %2299 = vmatprep.mubr.f32.mxu0 %v1848
    %2300 = vmatmul.mubr.f32.gmra.mxu0 %v1847
    %v2301 = vpop.f32.mrf.mxu0
    %v2302 = vadd.f32 %v1960, %v2301
    %v2303 = vpop.f32.mrf.mxu0
    %2304 = vmatprep.mubr.f32.mxu0 %v1851
    %2305 = vmatmul.mubr.f32.gmra.mxu0 %v1850
    %v2306 = vpop.f32.mrf.mxu0
    %v2307 = vadd.f32 %v1960, %v2306
    %v2308 = vpop.f32.mrf.mxu0
    %2309 = vmatprep.mubr.f32.mxu0 %v1854
    %2310 = vmatmul.mubr.f32.gmra.mxu0 %v1853
    %v2311 = vpop.f32.mrf.mxu0
    %v2312 = vadd.f32 %v1960, %v2311
    %v2313 = vpop.f32.mrf.mxu0
    %2314 = vmatprep.mubr.f32.mxu0 %v1857
    %2315 = vmatmul.mubr.f32.gmra.mxu0 %v1856
    %v2316 = vpop.f32.mrf.mxu0
    %v2317 = vadd.f32 %v1960, %v2316
    %v2318 = vpop.f32.mrf.mxu0
    %2319 = vmatprep.mubr.f32.mxu0 %v1860
    %2320 = vmatmul.mubr.f32.gmra.mxu0 %v1859
    %v2321 = vpop.f32.mrf.mxu0
    %v2322 = vadd.f32 %v1960, %v2321
    %v2323 = vpop.f32.mrf.mxu0
    %2324 = vmatprep.mubr.f32.mxu0 %v1863
    %2325 = vmatmul.mubr.f32.gmra.mxu0 %v1862
    %v2326 = vpop.f32.mrf.mxu0
    %v2327 = vadd.f32 %v1960, %v2326
    %v2328 = vpop.f32.mrf.mxu0
    %2329 = vmatprep.mubr.f32.mxu0 %v1866
    %2330 = vmatmul.mubr.f32.gmra.mxu0 %v1865
    %v2331 = vpop.f32.mrf.mxu0
    %v2332 = vadd.f32 %v1960, %v2331
    %v2333 = vpop.f32.mrf.mxu0
    %2334 = vmatprep.mubr.f32.mxu0 %v1869
    %2335 = vmatmul.mubr.f32.gmra.mxu0 %v1868
    %v2336 = vpop.f32.mrf.mxu0
    %v2337 = vadd.f32 %v1960, %v2336
    %v2338 = vpop.f32.mrf.mxu0
    %2339 = vmatprep.mubr.f32.mxu0 %v1872
    %2340 = vmatmul.mubr.f32.gmra.mxu0 %v1871
    %v2341 = vpop.f32.mrf.mxu0
    %v2342 = vadd.f32 %v1960, %v2341
    %v2343 = vpop.f32.mrf.mxu0
    %2344 = vmatprep.mubr.f32.mxu0 %v1875
    %2345 = vmatmul.mubr.f32.gmra.mxu0 %v1874
    %v2346 = vpop.f32.mrf.mxu0
    %v2347 = vadd.f32 %v1960, %v2346
    %v2348 = vpop.f32.mrf.mxu0
    %2349 = vmatprep.mubr.f32.mxu0 %v1878
    %2350 = vmatmul.mubr.f32.gmra.mxu0 %v1877
    %v2351 = vpop.f32.mrf.mxu0
    %v2352 = vadd.f32 %v1960, %v2351
    %v2353 = vpop.f32.mrf.mxu0
    %2354 = vmatprep.mubr.f32.mxu0 %v1881
    %2355 = vmatmul.mubr.f32.gmra.mxu0 %v1880
    %v2356 = vpop.f32.mrf.mxu0
    %v2357 = vadd.f32 %v1960, %v2356
    %v2358 = vpop.f32.mrf.mxu0
    %2359 = vmatprep.mubr.f32.mxu0 %v1884
    %2360 = vmatmul.mubr.f32.gmra.mxu0 %v1883
    %v2361 = vpop.f32.mrf.mxu0
    %v2362 = vadd.f32 %v1960, %v2361
    %v2363 = vpop.f32.mrf.mxu0
    %2364 = vmatprep.mubr.f32.mxu0 %v1887
    %2365 = vmatmul.mubr.f32.gmra.mxu0 %v1886
    %v2366 = vpop.f32.mrf.mxu0
    %v2367 = vadd.f32 %v1960, %v2366
    %v2368 = vpop.f32.mrf.mxu0
    %2369 = vmatprep.mubr.f32.mxu0 %v1890
    %2370 = vmatmul.mubr.f32.gmra.mxu0 %v1889
    %v2371 = vpop.f32.mrf.mxu0
    %v2372 = vadd.f32 %v1960, %v2371
    %v2373 = vpop.f32.mrf.mxu0
    %2374 = vmatprep.mubr.f32.mxu0 %v1893
    %2375 = vmatmul.mubr.f32.gmra.mxu0 %v1892
    %v2376 = vpop.f32.mrf.mxu0
    %v2377 = vadd.f32 %v1960, %v2376
    %v2378 = vpop.f32.mrf.mxu0
    %2379 = vmatprep.mubr.f32.mxu0 %v1896
    %2380 = vmatmul.mubr.f32.gmra.mxu0 %v1895
    %v2381 = vpop.f32.mrf.mxu0
    %v2382 = vadd.f32 %v1960, %v2381
    %v2383 = vpop.f32.mrf.mxu0
    %2384 = vmatprep.mubr.f32.mxu0 %v1899
    %2385 = vmatmul.mubr.f32.gmra.mxu0 %v1898
    %v2386 = vpop.f32.mrf.mxu0
    %v2387 = vadd.f32 %v1960, %v2386
    %v2388 = vpop.f32.mrf.mxu0
    %2389 = vmatprep.mubr.f32.mxu0 %v1902
    %2390 = vmatmul.mubr.f32.gmra.mxu0 %v1901
    %v2391 = vpop.f32.mrf.mxu0
    %v2392 = vadd.f32 %v1960, %v2391
    %v2393 = vpop.f32.mrf.mxu0
    %2394 = vmatprep.mubr.f32.mxu0 %v1905
    %2395 = vmatmul.mubr.f32.gmra.mxu0 %v1904
    %v2396 = vpop.f32.mrf.mxu0
    %v2397 = vadd.f32 %v1960, %v2396
    %v2398 = vpop.f32.mrf.mxu0
    %2399 = vmatprep.mubr.f32.mxu0 %v1908
    %2400 = vmatmul.mubr.f32.gmra.mxu0 %v1907
    %v2401 = vpop.f32.mrf.mxu0
    %v2402 = vadd.f32 %v1960, %v2401
    %v2403 = vpop.f32.mrf.mxu0
    %2404 = vmatprep.mubr.f32.mxu0 %v1911
    %2405 = vmatmul.mubr.f32.gmra.mxu0 %v1910
    %v2406 = vpop.f32.mrf.mxu0
    %v2407 = vadd.f32 %v1960, %v2406
    %v2408 = vpop.f32.mrf.mxu0
    %2409 = vmatprep.mubr.f32.mxu0 %v1914
    %2410 = vmatmul.mubr.f32.gmra.mxu0 %v1913
    %v2411 = vpop.f32.mrf.mxu0
    %v2412 = vadd.f32 %v1960, %v2411
    %v2413 = vpop.f32.mrf.mxu0
    %2414 = vmatprep.mubr.f32.mxu0 %v1917
    %2415 = vmatmul.mubr.f32.gmra.mxu0 %v1916
    %v2416 = vpop.f32.mrf.mxu0
    %v2417 = vadd.f32 %v1960, %v2416
    %v2418 = vpop.f32.mrf.mxu0
    %2419 = vdwg.mxu0
    %2420 = vmatprep.subr.mxu0 0.0
    %2421 = vmatpush1.msra.mxu0 0.0
    %2422 = vmatprep.subr.mxu0 0.0
    %2423 = vmatpush1.msra.mxu0 0.0
    %2424 = vmatprep.subr.mxu0 0.0
    %2425 = vmatpush1.msra.mxu0 0.0
    %2426 = vmatprep.subr.mxu0 0.0
    %2427 = vmatpush1.msra.mxu0 0.0
    %2428 = vmatprep.subr.mxu0 0.0
    %2429 = vmatpush1.msra.mxu0 0.0
    %2430 = vmatprep.subr.mxu0 0.0
    %2431 = vmatpush1.msra.mxu0 0.0
    %2432 = vmatprep.subr.mxu0 0.0
    %2433 = vmatpush1.msra.mxu0 0.0
    %2434 = vmatprep.subr.mxu0 0.0
    %2435 = vmatpush1.msra.mxu0 0.0
    %2436 = vmatprep.subr.mxu0 0.0
    %2437 = vmatpush1.msra.mxu0 0.0
    %2438 = vmatprep.subr.mxu0 0.0
    %2439 = vmatpush1.msra.mxu0 0.0
    %2440 = vmatprep.subr.mxu0 0.0
    %2441 = vmatpush1.msra.mxu0 0.0
    %2442 = vmatprep.subr.mxu0 0.0
    %2443 = vmatpush1.msra.mxu0 0.0
    %2444 = vmatprep.subr.mxu0 0.0
    %2445 = vmatpush1.msra.mxu0 %v1954
    %2446 = vmatprep.subr.mxu0 0.0
    %2447 = vmatpush1.msra.mxu0 %v1953
    %2448 = vmatprep.subr.mxu0 0.0
    %2449 = vmatpush1.msra.mxu0 %v1952
    %2450 = vmatprep.subr.mxu0 0.0
    %2451 = vmatpush1.msra.mxu0 %v1951
    %2452 = vmatprep.subr.mxu0 0.0
    %2453 = vmatpush2.msra.mxu0 0.0
    %2454 = vmatprep.subr.mxu0 0.0
    %2455 = vmatpush2.msra.mxu0 0.0
    %2456 = vmatprep.subr.mxu0 0.0
    %2457 = vmatpush2.msra.mxu0 0.0
    %2458 = vmatprep.subr.mxu0 0.0
    %2459 = vmatpush2.msra.mxu0 0.0
    %2460 = vmatprep.subr.mxu0 0.0
    %2461 = vmatpush2.msra.mxu0 0.0
    %2462 = vmatprep.subr.mxu0 0.0
    %2463 = vmatpush2.msra.mxu0 0.0
    %2464 = vmatprep.subr.mxu0 0.0
    %2465 = vmatpush2.msra.mxu0 0.0
    %2466 = vmatprep.subr.mxu0 0.0
    %2467 = vmatpush2.msra.mxu0 0.0
    %2468 = vmatprep.subr.mxu0 0.0
    %2469 = vmatpush2.msra.mxu0 0.0
    %2470 = vmatprep.subr.mxu0 0.0
    %2471 = vmatpush2.msra.mxu0 0.0
    %2472 = vmatprep.subr.mxu0 0.0
    %2473 = vmatpush2.msra.mxu0 0.0
    %2474 = vmatprep.subr.mxu0 0.0
    %2475 = vmatpush2.msra.mxu0 0.0
    %2476 = vmatprep.subr.mxu0 0.0
    %2477 = vmatpush2.msra.mxu0 0.0
    %2478 = vmatprep.subr.mxu0 0.0
    %2479 = vmatpush2.msra.mxu0 0.0
    %2480 = vmatprep.subr.mxu0 0.0
    %2481 = vmatpush2.msra.mxu0 0.0
    %2482 = vmatprep.subr.mxu0 0.0
    %2483 = vmatpush2.msra.mxu0 0.0
    %2484 = vmatprep.mubr.f32.mxu0 0.0
    %2485 = vmatmul.mubr.f32.gmra.mxu0 %v1964
    %v2486 = vpop.f32.mrf.mxu0
    %v2487 = vadd.f32 %v2177, %v2486
    %v2488 = vpop.f32.mrf.mxu0
    %2489 = vmatprep.mubr.f32.mxu0 0.0
    %2490 = vmatmul.mubr.f32.gmra.mxu0 %v1967
    %v2491 = vpop.f32.mrf.mxu0
    %v2492 = vadd.f32 %v2182, %v2491
    %v2493 = vpop.f32.mrf.mxu0
    %2494 = vmatprep.mubr.f32.mxu0 0.0
    %2495 = vmatmul.mubr.f32.gmra.mxu0 %v1970
    %v2496 = vpop.f32.mrf.mxu0
    %v2497 = vadd.f32 %v2187, %v2496
    %v2498 = vpop.f32.mrf.mxu0
    %2499 = vmatprep.mubr.f32.mxu0 0.0
    %2500 = vmatmul.mubr.f32.gmra.mxu0 %v1973
    %v2501 = vpop.f32.mrf.mxu0
    %v2502 = vadd.f32 %v2192, %v2501
    %v2503 = vpop.f32.mrf.mxu0
    %2504 = vmatprep.mubr.f32.mxu0 0.0
    %2505 = vmatmul.mubr.f32.gmra.mxu0 %v1976
    %v2506 = vpop.f32.mrf.mxu0
    %v2507 = vadd.f32 %v2197, %v2506
    %v2508 = vpop.f32.mrf.mxu0
    %2509 = vmatprep.mubr.f32.mxu0 0.0
    %2510 = vmatmul.mubr.f32.gmra.mxu0 %v1979
    %v2511 = vpop.f32.mrf.mxu0
    %v2512 = vadd.f32 %v2202, %v2511
    %v2513 = vpop.f32.mrf.mxu0
    %2514 = vmatprep.mubr.f32.mxu0 0.0
    %2515 = vmatmul.mubr.f32.gmra.mxu0 %v1982
    %v2516 = vpop.f32.mrf.mxu0
    %v2517 = vadd.f32 %v2207, %v2516
    %v2518 = vpop.f32.mrf.mxu0
    %2519 = vmatprep.mubr.f32.mxu0 0.0
    %2520 = vmatmul.mubr.f32.gmra.mxu0 %v1985
    %v2521 = vpop.f32.mrf.mxu0
    %v2522 = vadd.f32 %v2212, %v2521
    %v2523 = vpop.f32.mrf.mxu0
    %2524 = vmatprep.mubr.f32.mxu0 0.0
    %2525 = vmatmul.mubr.f32.gmra.mxu0 %v1988
    %v2526 = vpop.f32.mrf.mxu0
    %v2527 = vadd.f32 %v2217, %v2526
    %v2528 = vpop.f32.mrf.mxu0
    %2529 = vmatprep.mubr.f32.mxu0 0.0
    %2530 = vmatmul.mubr.f32.gmra.mxu0 %v1991
    %v2531 = vpop.f32.mrf.mxu0
    %v2532 = vadd.f32 %v2222, %v2531
    %v2533 = vpop.f32.mrf.mxu0
    %2534 = vmatprep.mubr.f32.mxu0 0.0
    %2535 = vmatmul.mubr.f32.gmra.mxu0 %v1994
    %v2536 = vpop.f32.mrf.mxu0
    %v2537 = vadd.f32 %v2227, %v2536
    %v2538 = vpop.f32.mrf.mxu0
    %2539 = vmatprep.mubr.f32.mxu0 0.0
    %2540 = vmatmul.mubr.f32.gmra.mxu0 %v1997
    %v2541 = vpop.f32.mrf.mxu0
    %v2542 = vadd.f32 %v2232, %v2541
    %v2543 = vpop.f32.mrf.mxu0
    %2544 = vmatprep.mubr.f32.mxu0 0.0
    %2545 = vmatmul.mubr.f32.gmra.mxu0 %v2000
    %v2546 = vpop.f32.mrf.mxu0
    %v2547 = vadd.f32 %v2237, %v2546
    %v2548 = vpop.f32.mrf.mxu0
    %2549 = vmatprep.mubr.f32.mxu0 0.0
    %2550 = vmatmul.mubr.f32.gmra.mxu0 %v2003
    %v2551 = vpop.f32.mrf.mxu0
    %v2552 = vadd.f32 %v2242, %v2551
    %v2553 = vpop.f32.mrf.mxu0
    %2554 = vmatprep.mubr.f32.mxu0 0.0
    %2555 = vmatmul.mubr.f32.gmra.mxu0 %v2006
    %v2556 = vpop.f32.mrf.mxu0
    %v2557 = vadd.f32 %v2247, %v2556
    %v2558 = vpop.f32.mrf.mxu0
    %2559 = vmatprep.mubr.f32.mxu0 0.0
    %2560 = vmatmul.mubr.f32.gmra.mxu0 %v2009
    %v2561 = vpop.f32.mrf.mxu0
    %v2562 = vadd.f32 %v2252, %v2561
    %v2563 = vpop.f32.mrf.mxu0
    %2564 = vmatprep.mubr.f32.mxu0 0.0
    %2565 = vmatmul.mubr.f32.gmra.mxu0 %v2012
    %v2566 = vpop.f32.mrf.mxu0
    %v2567 = vadd.f32 %v2257, %v2566
    %v2568 = vpop.f32.mrf.mxu0
    %2569 = vmatprep.mubr.f32.mxu0 0.0
    %2570 = vmatmul.mubr.f32.gmra.mxu0 %v2015
    %v2571 = vpop.f32.mrf.mxu0
    %v2572 = vadd.f32 %v2262, %v2571
    %v2573 = vpop.f32.mrf.mxu0
    %2574 = vmatprep.mubr.f32.mxu0 0.0
    %2575 = vmatmul.mubr.f32.gmra.mxu0 %v2018
    %v2576 = vpop.f32.mrf.mxu0
    %v2577 = vadd.f32 %v2267, %v2576
    %v2578 = vpop.f32.mrf.mxu0
    %2579 = vmatprep.mubr.f32.mxu0 0.0
    %2580 = vmatmul.mubr.f32.gmra.mxu0 %v2021
    %v2581 = vpop.f32.mrf.mxu0
    %v2582 = vadd.f32 %v2272, %v2581
    %v2583 = vpop.f32.mrf.mxu0
    %2584 = vmatprep.mubr.f32.mxu0 0.0
    %2585 = vmatmul.mubr.f32.gmra.mxu0 %v2024
    %v2586 = vpop.f32.mrf.mxu0
    %v2587 = vadd.f32 %v2277, %v2586
    %v2588 = vpop.f32.mrf.mxu0
    %2589 = vmatprep.mubr.f32.mxu0 0.0
    %2590 = vmatmul.mubr.f32.gmra.mxu0 %v2027
    %v2591 = vpop.f32.mrf.mxu0
    %v2592 = vadd.f32 %v2282, %v2591
    %v2593 = vpop.f32.mrf.mxu0
    %2594 = vmatprep.mubr.f32.mxu0 0.0
    %2595 = vmatmul.mubr.f32.gmra.mxu0 %v2030
    %v2596 = vpop.f32.mrf.mxu0
    %v2597 = vadd.f32 %v2287, %v2596
    %v2598 = vpop.f32.mrf.mxu0
    %2599 = vmatprep.mubr.f32.mxu0 0.0
    %2600 = vmatmul.mubr.f32.gmra.mxu0 %v2033
    %v2601 = vpop.f32.mrf.mxu0
    %v2602 = vadd.f32 %v2292, %v2601
    %v2603 = vpop.f32.mrf.mxu0
    %2604 = vmatprep.mubr.f32.mxu0 0.0
    %2605 = vmatmul.mubr.f32.gmra.mxu0 %v2036
    %v2606 = vpop.f32.mrf.mxu0
    %v2607 = vadd.f32 %v2297, %v2606
    %v2608 = vpop.f32.mrf.mxu0
    %2609 = vmatprep.mubr.f32.mxu0 0.0
    %2610 = vmatmul.mubr.f32.gmra.mxu0 %v2039
    %v2611 = vpop.f32.mrf.mxu0
    %v2612 = vadd.f32 %v2302, %v2611
    %v2613 = vpop.f32.mrf.mxu0
    %2614 = vmatprep.mubr.f32.mxu0 0.0
    %2615 = vmatmul.mubr.f32.gmra.mxu0 %v2042
    %v2616 = vpop.f32.mrf.mxu0
    %v2617 = vadd.f32 %v2307, %v2616
    %v2618 = vpop.f32.mrf.mxu0
    %2619 = vmatprep.mubr.f32.mxu0 0.0
    %2620 = vmatmul.mubr.f32.gmra.mxu0 %v2045
    %v2621 = vpop.f32.mrf.mxu0
    %v2622 = vadd.f32 %v2312, %v2621
    %v2623 = vpop.f32.mrf.mxu0
    %2624 = vmatprep.mubr.f32.mxu0 0.0
    %2625 = vmatmul.mubr.f32.gmra.mxu0 %v2048
    %v2626 = vpop.f32.mrf.mxu0
    %v2627 = vadd.f32 %v2317, %v2626
    %v2628 = vpop.f32.mrf.mxu0
    %2629 = vmatprep.mubr.f32.mxu0 0.0
    %2630 = vmatmul.mubr.f32.gmra.mxu0 %v2051
    %v2631 = vpop.f32.mrf.mxu0
    %v2632 = vadd.f32 %v2322, %v2631
    %v2633 = vpop.f32.mrf.mxu0
    %2634 = vmatprep.mubr.f32.mxu0 0.0
    %2635 = vmatmul.mubr.f32.gmra.mxu0 %v2054
    %v2636 = vpop.f32.mrf.mxu0
    %v2637 = vadd.f32 %v2327, %v2636
    %v2638 = vpop.f32.mrf.mxu0
    %2639 = vmatprep.mubr.f32.mxu0 0.0
    %2640 = vmatmul.mubr.f32.gmra.mxu0 %v2057
    %v2641 = vpop.f32.mrf.mxu0
    %v2642 = vadd.f32 %v2332, %v2641
    %v2643 = vpop.f32.mrf.mxu0
    %2644 = vmatprep.mubr.f32.mxu0 0.0
    %2645 = vmatmul.mubr.f32.gmra.mxu0 %v2060
    %v2646 = vpop.f32.mrf.mxu0
    %v2647 = vadd.f32 %v2337, %v2646
    %v2648 = vpop.f32.mrf.mxu0
    %2649 = vmatprep.mubr.f32.mxu0 0.0
    %2650 = vmatmul.mubr.f32.gmra.mxu0 %v2063
    %v2651 = vpop.f32.mrf.mxu0
    %v2652 = vadd.f32 %v2342, %v2651
    %v2653 = vpop.f32.mrf.mxu0
    %2654 = vmatprep.mubr.f32.mxu0 0.0
    %2655 = vmatmul.mubr.f32.gmra.mxu0 %v2066
    %v2656 = vpop.f32.mrf.mxu0
    %v2657 = vadd.f32 %v2347, %v2656
    %v2658 = vpop.f32.mrf.mxu0
    %2659 = vmatprep.mubr.f32.mxu0 0.0
    %2660 = vmatmul.mubr.f32.gmra.mxu0 %v2069
    %v2661 = vpop.f32.mrf.mxu0
    %v2662 = vadd.f32 %v2352, %v2661
    %v2663 = vpop.f32.mrf.mxu0
    %2664 = vmatprep.mubr.f32.mxu0 0.0
    %2665 = vmatmul.mubr.f32.gmra.mxu0 %v2072
    %v2666 = vpop.f32.mrf.mxu0
    %v2667 = vadd.f32 %v2357, %v2666
    %v2668 = vpop.f32.mrf.mxu0
    %2669 = vmatprep.mubr.f32.mxu0 0.0
    %2670 = vmatmul.mubr.f32.gmra.mxu0 %v2075
    %v2671 = vpop.f32.mrf.mxu0
    %v2672 = vadd.f32 %v2362, %v2671
    %v2673 = vpop.f32.mrf.mxu0
    %2674 = vmatprep.mubr.f32.mxu0 0.0
    %2675 = vmatmul.mubr.f32.gmra.mxu0 %v2078
    %v2676 = vpop.f32.mrf.mxu0
    %v2677 = vadd.f32 %v2367, %v2676
    %v2678 = vpop.f32.mrf.mxu0
    %2679 = vmatprep.mubr.f32.mxu0 0.0
    %2680 = vmatmul.mubr.f32.gmra.mxu0 %v2081
    %v2681 = vpop.f32.mrf.mxu0
    %v2682 = vadd.f32 %v2372, %v2681
    %v2683 = vpop.f32.mrf.mxu0
    %2684 = vmatprep.mubr.f32.mxu0 0.0
    %2685 = vmatmul.mubr.f32.gmra.mxu0 %v2084
    %v2686 = vpop.f32.mrf.mxu0
    %v2687 = vadd.f32 %v2377, %v2686
    %v2688 = vpop.f32.mrf.mxu0
    %2689 = vmatprep.mubr.f32.mxu0 0.0
    %2690 = vmatmul.mubr.f32.gmra.mxu0 %v2087
    %v2691 = vpop.f32.mrf.mxu0
    %v2692 = vadd.f32 %v2382, %v2691
    %v2693 = vpop.f32.mrf.mxu0
    %2694 = vmatprep.mubr.f32.mxu0 0.0
    %2695 = vmatmul.mubr.f32.gmra.mxu0 %v2090
    %v2696 = vpop.f32.mrf.mxu0
    %v2697 = vadd.f32 %v2387, %v2696
    %v2698 = vpop.f32.mrf.mxu0
    %2699 = vmatprep.mubr.f32.mxu0 0.0
    %2700 = vmatmul.mubr.f32.gmra.mxu0 %v2093
    %v2701 = vpop.f32.mrf.mxu0
    %v2702 = vadd.f32 %v2392, %v2701
    %v2703 = vpop.f32.mrf.mxu0
    %2704 = vmatprep.mubr.f32.mxu0 0.0
    %2705 = vmatmul.mubr.f32.gmra.mxu0 %v2096
    %v2706 = vpop.f32.mrf.mxu0
    %v2707 = vadd.f32 %v2397, %v2706
    %v2708 = vpop.f32.mrf.mxu0
    %2709 = vmatprep.mubr.f32.mxu0 0.0
    %2710 = vmatmul.mubr.f32.gmra.mxu0 %v2099
    %v2711 = vpop.f32.mrf.mxu0
    %v2712 = vadd.f32 %v2402, %v2711
    %v2713 = vpop.f32.mrf.mxu0
    %2714 = vmatprep.mubr.f32.mxu0 0.0
    %2715 = vmatmul.mubr.f32.gmra.mxu0 %v2102
    %v2716 = vpop.f32.mrf.mxu0
    %v2717 = vadd.f32 %v2407, %v2716
    %v2718 = vpop.f32.mrf.mxu0
    %2719 = vmatprep.mubr.f32.mxu0 0.0
    %2720 = vmatmul.mubr.f32.gmra.mxu0 %v2105
    %v2721 = vpop.f32.mrf.mxu0
    %v2722 = vadd.f32 %v2412, %v2721
    %v2723 = vpop.f32.mrf.mxu0
    %2724 = vmatprep.mubr.f32.mxu0 0.0
    %2725 = vmatmul.mubr.f32.gmra.mxu0 %v2108
    %v2726 = vpop.f32.mrf.mxu0
    %v2727 = vadd.f32 %v2417, %v2726
    %v2728 = vpop.f32.mrf.mxu0
    %2729 = vdwg.mxu0
    %v2730 = vmax.f32 %v2487, 0.0
    %v2731 = vmax.f32 %v2492, 0.0
    %v2732 = vmax.f32 %v2497, 0.0
    %v2733 = vmax.f32 %v2502, 0.0
    %v2734 = vmax.f32 %v2507, 0.0
    %v2735 = vmax.f32 %v2512, 0.0
    %v2736 = vmax.f32 %v2517, 0.0
    %v2737 = vmax.f32 %v2522, 0.0
    %v2738 = vmax.f32 %v2527, 0.0
    %v2739 = vmax.f32 %v2532, 0.0
    %v2740 = vmax.f32 %v2537, 0.0
    %v2741 = vmax.f32 %v2542, 0.0
    %v2742 = vmax.f32 %v2547, 0.0
    %v2743 = vmax.f32 %v2552, 0.0
    %v2744 = vmax.f32 %v2557, 0.0
    %v2745 = vmax.f32 %v2562, 0.0
    %v2746 = vmax.f32 %v2567, 0.0
    %v2747 = vmax.f32 %v2572, 0.0
    %v2748 = vmax.f32 %v2577, 0.0
    %v2749 = vmax.f32 %v2582, 0.0
    %v2750 = vmax.f32 %v2587, 0.0
    %v2751 = vmax.f32 %v2592, 0.0
    %v2752 = vmax.f32 %v2597, 0.0
    %v2753 = vmax.f32 %v2602, 0.0
    %v2754 = vmax.f32 %v2607, 0.0
    %v2755 = vmax.f32 %v2612, 0.0
    %v2756 = vmax.f32 %v2617, 0.0
    %v2757 = vmax.f32 %v2622, 0.0
    %v2758 = vmax.f32 %v2627, 0.0
    %v2759 = vmax.f32 %v2632, 0.0
    %v2760 = vmax.f32 %v2637, 0.0
    %v2761 = vmax.f32 %v2642, 0.0
    %v2762 = vmax.f32 %v2647, 0.0
    %v2763 = vmax.f32 %v2652, 0.0
    %v2764 = vmax.f32 %v2657, 0.0
    %v2765 = vmax.f32 %v2662, 0.0
    %v2766 = vmax.f32 %v2667, 0.0
    %v2767 = vmax.f32 %v2672, 0.0
    %v2768 = vmax.f32 %v2677, 0.0
    %v2769 = vmax.f32 %v2682, 0.0
    %v2770 = vmax.f32 %v2687, 0.0
    %v2771 = vmax.f32 %v2692, 0.0
    %v2772 = vmax.f32 %v2697, 0.0
    %v2773 = vmax.f32 %v2702, 0.0
    %v2774 = vmax.f32 %v2707, 0.0
    %v2775 = vmax.f32 %v2712, 0.0
    %v2776 = vmax.f32 %v2717, 0.0
    %v2777 = vmax.f32 %v2722, 0.0
    %v2778 = vmax.f32 %v2727, 0.0
    %vm2779 = vcmask 523264
    %v2781 = vsel %vm2779, %v2731, 0
    %2783 = vmatprep.subr.mxu0 0.0
    %2784 = vmatpush1.msra.mxu0 0.0
    %2785 = vmatprep.subr.mxu0 0.0
    %2786 = vmatpush1.msra.mxu0 0.0
    %2787 = vmatprep.subr.mxu0 0.0
    %2788 = vmatpush1.msra.mxu0 0.0
    %2789 = vmatprep.subr.mxu0 0.0
    %2790 = vmatpush1.msra.mxu0 0.0
    %2791 = vmatprep.subr.mxu0 0.0
    %2792 = vmatpush1.msra.mxu0 0.0
    %2793 = vmatprep.subr.mxu0 0.0
    %2794 = vmatpush1.msra.mxu0 0.0
    %2795 = vmatprep.subr.mxu0 0.0
    %2796 = vmatpush1.msra.mxu0 0.0
    %2797 = vmatprep.subr.mxu0 0.0
    %2798 = vmatpush1.msra.mxu0 0.0
    %2799 = vmatprep.subr.mxu0 0.0
    %2800 = vmatpush1.msra.mxu0 %v178
    %2801 = vmatprep.subr.mxu0 0.0
    %2802 = vmatpush1.msra.mxu0 %v177
    %2803 = vmatprep.subr.mxu0 0.0
    %2804 = vmatpush1.msra.mxu0 %v176
    %2805 = vmatprep.subr.mxu0 0.0
    %2806 = vmatpush1.msra.mxu0 %v175
    %2807 = vmatprep.subr.mxu0 0.0
    %2808 = vmatpush1.msra.mxu0 %v174
    %2809 = vmatprep.subr.mxu0 0.0
    %2810 = vmatpush1.msra.mxu0 %v173
    %2811 = vmatprep.subr.mxu0 0.0
    %2812 = vmatpush1.msra.mxu0 %v172
    %2813 = vmatprep.subr.mxu0 0.0
    %2814 = vmatpush1.msra.mxu0 %v171
    %2815 = vmatprep.subr.mxu0 0.0
    %2816 = vmatpush2.msra.mxu0 0.0
    %2817 = vmatprep.subr.mxu0 0.0
    %2818 = vmatpush2.msra.mxu0 0.0
    %2819 = vmatprep.subr.mxu0 0.0
    %2820 = vmatpush2.msra.mxu0 0.0
    %2821 = vmatprep.subr.mxu0 0.0
    %2822 = vmatpush2.msra.mxu0 0.0
    %2823 = vmatprep.subr.mxu0 0.0
    %2824 = vmatpush2.msra.mxu0 0.0
    %2825 = vmatprep.subr.mxu0 0.0
    %2826 = vmatpush2.msra.mxu0 0.0
    %2827 = vmatprep.subr.mxu0 0.0
    %2828 = vmatpush2.msra.mxu0 0.0
    %2829 = vmatprep.subr.mxu0 0.0
    %2830 = vmatpush2.msra.mxu0 0.0
    %2831 = vmatprep.subr.mxu0 0.0
    %2832 = vmatpush2.msra.mxu0 0.0
    %2833 = vmatprep.subr.mxu0 0.0
    %2834 = vmatpush2.msra.mxu0 0.0
    %2835 = vmatprep.subr.mxu0 0.0
    %2836 = vmatpush2.msra.mxu0 0.0
    %2837 = vmatprep.subr.mxu0 0.0
    %2838 = vmatpush2.msra.mxu0 0.0
    %2839 = vmatprep.subr.mxu0 0.0
    %2840 = vmatpush2.msra.mxu0 0.0
    %2841 = vmatprep.subr.mxu0 0.0
    %2842 = vmatpush2.msra.mxu0 0.0
    %2843 = vmatprep.subr.mxu0 0.0
    %2844 = vmatpush2.msra.mxu0 0.0
    %2845 = vmatprep.subr.mxu0 0.0
    %2846 = vmatpush2.msra.mxu0 0.0
    %2847 = vmatprep.mubr.f32.mxu0 0.0
    %2848 = vmatmul.mubr.f32.gmra.mxu0 %v2781
    %v2849 = vpop.f32.mrf.mxu0
    %v2850 = vadd.f32 0.0, %v2849
    %v2851 = vpop.f32.mrf.mxu0
    %2852 = vdwg.mxu0
    %v2854 = vsel %vm2779, %v2730, 0
    %2856 = vmatprep.subr.mxu0 0.0
    %2857 = vmatpush1.msra.mxu0 0.0
    %2858 = vmatprep.subr.mxu0 0.0
    %2859 = vmatpush1.msra.mxu0 0.0
    %2860 = vmatprep.subr.mxu0 0.0
    %2861 = vmatpush1.msra.mxu0 0.0
    %2862 = vmatprep.subr.mxu0 0.0
    %2863 = vmatpush1.msra.mxu0 0.0
    %2864 = vmatprep.subr.mxu0 0.0
    %2865 = vmatpush1.msra.mxu0 0.0
    %2866 = vmatprep.subr.mxu0 0.0
    %2867 = vmatpush1.msra.mxu0 0.0
    %2868 = vmatprep.subr.mxu0 0.0
    %2869 = vmatpush1.msra.mxu0 0.0
    %2870 = vmatprep.subr.mxu0 0.0
    %2871 = vmatpush1.msra.mxu0 0.0
    %2872 = vmatprep.subr.mxu0 0.0
    %2873 = vmatpush1.msra.mxu0 %v170
    %2874 = vmatprep.subr.mxu0 0.0
    %2875 = vmatpush1.msra.mxu0 %v169
    %2876 = vmatprep.subr.mxu0 0.0
    %2877 = vmatpush1.msra.mxu0 %v168
    %2878 = vmatprep.subr.mxu0 0.0
    %2879 = vmatpush1.msra.mxu0 %v167
    %2880 = vmatprep.subr.mxu0 0.0
    %2881 = vmatpush1.msra.mxu0 %v166
    %2882 = vmatprep.subr.mxu0 0.0
    %2883 = vmatpush1.msra.mxu0 %v165
    %2884 = vmatprep.subr.mxu0 0.0
    %2885 = vmatpush1.msra.mxu0 %v164
    %2886 = vmatprep.subr.mxu0 0.0
    %2887 = vmatpush1.msra.mxu0 %v163
    %2888 = vmatprep.subr.mxu0 0.0
    %2889 = vmatpush2.msra.mxu0 0.0
    %2890 = vmatprep.subr.mxu0 0.0
    %2891 = vmatpush2.msra.mxu0 0.0
    %2892 = vmatprep.subr.mxu0 0.0
    %2893 = vmatpush2.msra.mxu0 0.0
    %2894 = vmatprep.subr.mxu0 0.0
    %2895 = vmatpush2.msra.mxu0 0.0
    %2896 = vmatprep.subr.mxu0 0.0
    %2897 = vmatpush2.msra.mxu0 0.0
    %2898 = vmatprep.subr.mxu0 0.0
    %2899 = vmatpush2.msra.mxu0 0.0
    %2900 = vmatprep.subr.mxu0 0.0
    %2901 = vmatpush2.msra.mxu0 0.0
    %2902 = vmatprep.subr.mxu0 0.0
    %2903 = vmatpush2.msra.mxu0 0.0
    %2904 = vmatprep.subr.mxu0 0.0
    %2905 = vmatpush2.msra.mxu0 0.0
    %2906 = vmatprep.subr.mxu0 0.0
    %2907 = vmatpush2.msra.mxu0 0.0
    %2908 = vmatprep.subr.mxu0 0.0
    %2909 = vmatpush2.msra.mxu0 0.0
    %2910 = vmatprep.subr.mxu0 0.0
    %2911 = vmatpush2.msra.mxu0 0.0
    %2912 = vmatprep.subr.mxu0 0.0
    %2913 = vmatpush2.msra.mxu0 0.0
    %2914 = vmatprep.subr.mxu0 0.0
    %2915 = vmatpush2.msra.mxu0 0.0
    %2916 = vmatprep.subr.mxu0 0.0
    %2917 = vmatpush2.msra.mxu0 0.0
    %2918 = vmatprep.subr.mxu0 0.0
    %2919 = vmatpush2.msra.mxu0 0.0
    %2920 = vmatprep.mubr.f32.mxu0 0.0
    %2921 = vmatmul.mubr.f32.gmra.mxu0 %v2854
    %v2922 = vpop.f32.mrf.mxu0
    %v2923 = vadd.f32 %v2850, %v2922
    %v2924 = vpop.f32.mrf.mxu0
    %2925 = vdwg.mxu0
    %v2927 = vsel %vm2779, %v2732, 0
    %2929 = vmatprep.subr.mxu0 0.0
    %2930 = vmatpush1.msra.mxu0 0.0
    %2931 = vmatprep.subr.mxu0 0.0
    %2932 = vmatpush1.msra.mxu0 0.0
    %2933 = vmatprep.subr.mxu0 0.0
    %2934 = vmatpush1.msra.mxu0 0.0
    %2935 = vmatprep.subr.mxu0 0.0
    %2936 = vmatpush1.msra.mxu0 0.0
    %2937 = vmatprep.subr.mxu0 0.0
    %2938 = vmatpush1.msra.mxu0 0.0
    %2939 = vmatprep.subr.mxu0 0.0
    %2940 = vmatpush1.msra.mxu0 0.0
    %2941 = vmatprep.subr.mxu0 0.0
    %2942 = vmatpush1.msra.mxu0 0.0
    %2943 = vmatprep.subr.mxu0 0.0
    %2944 = vmatpush1.msra.mxu0 0.0
    %2945 = vmatprep.subr.mxu0 0.0
    %2946 = vmatpush1.msra.mxu0 %v186
    %2947 = vmatprep.subr.mxu0 0.0
    %2948 = vmatpush1.msra.mxu0 %v185
    %2949 = vmatprep.subr.mxu0 0.0
    %2950 = vmatpush1.msra.mxu0 %v184
    %2951 = vmatprep.subr.mxu0 0.0
    %2952 = vmatpush1.msra.mxu0 %v183
    %2953 = vmatprep.subr.mxu0 0.0
    %2954 = vmatpush1.msra.mxu0 %v182
    %2955 = vmatprep.subr.mxu0 0.0
    %2956 = vmatpush1.msra.mxu0 %v181
    %2957 = vmatprep.subr.mxu0 0.0
    %2958 = vmatpush1.msra.mxu0 %v180
    %2959 = vmatprep.subr.mxu0 0.0
    %2960 = vmatpush1.msra.mxu0 %v179
    %2961 = vmatprep.subr.mxu0 0.0
    %2962 = vmatpush2.msra.mxu0 0.0
    %2963 = vmatprep.subr.mxu0 0.0
    %2964 = vmatpush2.msra.mxu0 0.0
    %2965 = vmatprep.subr.mxu0 0.0
    %2966 = vmatpush2.msra.mxu0 0.0
    %2967 = vmatprep.subr.mxu0 0.0
    %2968 = vmatpush2.msra.mxu0 0.0
    %2969 = vmatprep.subr.mxu0 0.0
    %2970 = vmatpush2.msra.mxu0 0.0
    %2971 = vmatprep.subr.mxu0 0.0
    %2972 = vmatpush2.msra.mxu0 0.0
    %2973 = vmatprep.subr.mxu0 0.0
    %2974 = vmatpush2.msra.mxu0 0.0
    %2975 = vmatprep.subr.mxu0 0.0
    %2976 = vmatpush2.msra.mxu0 0.0
    %2977 = vmatprep.subr.mxu0 0.0
    %2978 = vmatpush2.msra.mxu0 0.0
    %2979 = vmatprep.subr.mxu0 0.0
    %2980 = vmatpush2.msra.mxu0 0.0
    %2981 = vmatprep.subr.mxu0 0.0
    %2982 = vmatpush2.msra.mxu0 0.0
    %2983 = vmatprep.subr.mxu0 0.0
    %2984 = vmatpush2.msra.mxu0 0.0
    %2985 = vmatprep.subr.mxu0 0.0
    %2986 = vmatpush2.msra.mxu0 0.0
    %2987 = vmatprep.subr.mxu0 0.0
    %2988 = vmatpush2.msra.mxu0 0.0
    %2989 = vmatprep.subr.mxu0 0.0
    %2990 = vmatpush2.msra.mxu0 0.0
    %2991 = vmatprep.subr.mxu0 0.0
    %2992 = vmatpush2.msra.mxu0 0.0
    %2993 = vmatprep.mubr.f32.mxu0 0.0
    %2994 = vmatmul.mubr.f32.gmra.mxu0 %v2927
    %v2995 = vpop.f32.mrf.mxu0
    %v2996 = vadd.f32 0.0, %v2995
    %v2997 = vpop.f32.mrf.mxu0
    %2998 = vdwg.mxu0
    %v2999 = vadd.f32 %v2923, %v2996
    %v3001 = vsel %vm2779, %v2733, 0
    %3003 = vmatprep.subr.mxu0 0.0
    %3004 = vmatpush1.msra.mxu0 0.0
    %3005 = vmatprep.subr.mxu0 0.0
    %3006 = vmatpush1.msra.mxu0 0.0
    %3007 = vmatprep.subr.mxu0 0.0
    %3008 = vmatpush1.msra.mxu0 0.0
    %3009 = vmatprep.subr.mxu0 0.0
    %3010 = vmatpush1.msra.mxu0 0.0
    %3011 = vmatprep.subr.mxu0 0.0
    %3012 = vmatpush1.msra.mxu0 0.0
    %3013 = vmatprep.subr.mxu0 0.0
    %3014 = vmatpush1.msra.mxu0 0.0
    %3015 = vmatprep.subr.mxu0 0.0
    %3016 = vmatpush1.msra.mxu0 0.0
    %3017 = vmatprep.subr.mxu0 0.0
    %3018 = vmatpush1.msra.mxu0 0.0
    %3019 = vmatprep.subr.mxu0 0.0
    %3020 = vmatpush1.msra.mxu0 %v194
    %3021 = vmatprep.subr.mxu0 0.0
    %3022 = vmatpush1.msra.mxu0 %v193
    %3023 = vmatprep.subr.mxu0 0.0
    %3024 = vmatpush1.msra.mxu0 %v192
    %3025 = vmatprep.subr.mxu0 0.0
    %3026 = vmatpush1.msra.mxu0 %v191
    %3027 = vmatprep.subr.mxu0 0.0
    %3028 = vmatpush1.msra.mxu0 %v190
    %3029 = vmatprep.subr.mxu0 0.0
    %3030 = vmatpush1.msra.mxu0 %v189
    %3031 = vmatprep.subr.mxu0 0.0
    %3032 = vmatpush1.msra.mxu0 %v188
    %3033 = vmatprep.subr.mxu0 0.0
    %3034 = vmatpush1.msra.mxu0 %v187
    %3035 = vmatprep.subr.mxu0 0.0
    %3036 = vmatpush2.msra.mxu0 0.0
    %3037 = vmatprep.subr.mxu0 0.0
    %3038 = vmatpush2.msra.mxu0 0.0
    %3039 = vmatprep.subr.mxu0 0.0
    %3040 = vmatpush2.msra.mxu0 0.0
    %3041 = vmatprep.subr.mxu0 0.0
    %3042 = vmatpush2.msra.mxu0 0.0
    %3043 = vmatprep.subr.mxu0 0.0
    %3044 = vmatpush2.msra.mxu0 0.0
    %3045 = vmatprep.subr.mxu0 0.0
    %3046 = vmatpush2.msra.mxu0 0.0
    %3047 = vmatprep.subr.mxu0 0.0
    %3048 = vmatpush2.msra.mxu0 0.0
    %3049 = vmatprep.subr.mxu0 0.0
    %3050 = vmatpush2.msra.mxu0 0.0
    %3051 = vmatprep.subr.mxu0 0.0
    %3052 = vmatpush2.msra.mxu0 0.0
    %3053 = vmatprep.subr.mxu0 0.0
    %3054 = vmatpush2.msra.mxu0 0.0
    %3055 = vmatprep.subr.mxu0 0.0
    %3056 = vmatpush2.msra.mxu0 0.0
    %3057 = vmatprep.subr.mxu0 0.0
    %3058 = vmatpush2.msra.mxu0 0.0
    %3059 = vmatprep.subr.mxu0 0.0
    %3060 = vmatpush2.msra.mxu0 0.0
    %3061 = vmatprep.subr.mxu0 0.0
    %3062 = vmatpush2.msra.mxu0 0.0
    %3063 = vmatprep.subr.mxu0 0.0
    %3064 = vmatpush2.msra.mxu0 0.0
    %3065 = vmatprep.subr.mxu0 0.0
    %3066 = vmatpush2.msra.mxu0 0.0
    %3067 = vmatprep.mubr.f32.mxu0 0.0
    %3068 = vmatmul.mubr.f32.gmra.mxu0 %v3001
    %v3069 = vpop.f32.mrf.mxu0
    %v3070 = vadd.f32 0.0, %v3069
    %v3071 = vpop.f32.mrf.mxu0
    %3072 = vdwg.mxu0
    %v3073 = vadd.f32 %v2999, %v3070
    %v3075 = vsel %vm2779, %v2734, 0
    %3077 = vmatprep.subr.mxu0 0.0
    %3078 = vmatpush1.msra.mxu0 0.0
    %3079 = vmatprep.subr.mxu0 0.0
    %3080 = vmatpush1.msra.mxu0 0.0
    %3081 = vmatprep.subr.mxu0 0.0
    %3082 = vmatpush1.msra.mxu0 0.0
    %3083 = vmatprep.subr.mxu0 0.0
    %3084 = vmatpush1.msra.mxu0 0.0
    %3085 = vmatprep.subr.mxu0 0.0
    %3086 = vmatpush1.msra.mxu0 0.0
    %3087 = vmatprep.subr.mxu0 0.0
    %3088 = vmatpush1.msra.mxu0 0.0
    %3089 = vmatprep.subr.mxu0 0.0
    %3090 = vmatpush1.msra.mxu0 0.0
    %3091 = vmatprep.subr.mxu0 0.0
    %3092 = vmatpush1.msra.mxu0 0.0
    %3093 = vmatprep.subr.mxu0 0.0
    %3094 = vmatpush1.msra.mxu0 %v202
    %3095 = vmatprep.subr.mxu0 0.0
    %3096 = vmatpush1.msra.mxu0 %v201
    %3097 = vmatprep.subr.mxu0 0.0
    %3098 = vmatpush1.msra.mxu0 %v200
    %3099 = vmatprep.subr.mxu0 0.0
    %3100 = vmatpush1.msra.mxu0 %v199
    %3101 = vmatprep.subr.mxu0 0.0
    %3102 = vmatpush1.msra.mxu0 %v198
    %3103 = vmatprep.subr.mxu0 0.0
    %3104 = vmatpush1.msra.mxu0 %v197
    %3105 = vmatprep.subr.mxu0 0.0
    %3106 = vmatpush1.msra.mxu0 %v196
    %3107 = vmatprep.subr.mxu0 0.0
    %3108 = vmatpush1.msra.mxu0 %v195
    %3109 = vmatprep.subr.mxu0 0.0
    %3110 = vmatpush2.msra.mxu0 0.0
    %3111 = vmatprep.subr.mxu0 0.0
    %3112 = vmatpush2.msra.mxu0 0.0
    %3113 = vmatprep.subr.mxu0 0.0
    %3114 = vmatpush2.msra.mxu0 0.0
    %3115 = vmatprep.subr.mxu0 0.0
    %3116 = vmatpush2.msra.mxu0 0.0
    %3117 = vmatprep.subr.mxu0 0.0
    %3118 = vmatpush2.msra.mxu0 0.0
    %3119 = vmatprep.subr.mxu0 0.0
    %3120 = vmatpush2.msra.mxu0 0.0
    %3121 = vmatprep.subr.mxu0 0.0
    %3122 = vmatpush2.msra.mxu0 0.0
    %3123 = vmatprep.subr.mxu0 0.0
    %3124 = vmatpush2.msra.mxu0 0.0
    %3125 = vmatprep.subr.mxu0 0.0
    %3126 = vmatpush2.msra.mxu0 0.0
    %3127 = vmatprep.subr.mxu0 0.0
    %3128 = vmatpush2.msra.mxu0 0.0
    %3129 = vmatprep.subr.mxu0 0.0
    %3130 = vmatpush2.msra.mxu0 0.0
    %3131 = vmatprep.subr.mxu0 0.0
    %3132 = vmatpush2.msra.mxu0 0.0
    %3133 = vmatprep.subr.mxu0 0.0
    %3134 = vmatpush2.msra.mxu0 0.0
    %3135 = vmatprep.subr.mxu0 0.0
    %3136 = vmatpush2.msra.mxu0 0.0
    %3137 = vmatprep.subr.mxu0 0.0
    %3138 = vmatpush2.msra.mxu0 0.0
    %3139 = vmatprep.subr.mxu0 0.0
    %3140 = vmatpush2.msra.mxu0 0.0
    %3141 = vmatprep.mubr.f32.mxu0 0.0
    %3142 = vmatmul.mubr.f32.gmra.mxu0 %v3075
    %v3143 = vpop.f32.mrf.mxu0
    %v3144 = vadd.f32 0.0, %v3143
    %v3145 = vpop.f32.mrf.mxu0
    %3146 = vdwg.mxu0
    %v3147 = vadd.f32 %v3073, %v3144
    %v3149 = vsel %vm2779, %v2735, 0
    %3151 = vmatprep.subr.mxu0 0.0
    %3152 = vmatpush1.msra.mxu0 0.0
    %3153 = vmatprep.subr.mxu0 0.0
    %3154 = vmatpush1.msra.mxu0 0.0
    %3155 = vmatprep.subr.mxu0 0.0
    %3156 = vmatpush1.msra.mxu0 0.0
    %3157 = vmatprep.subr.mxu0 0.0
    %3158 = vmatpush1.msra.mxu0 0.0
    %3159 = vmatprep.subr.mxu0 0.0
    %3160 = vmatpush1.msra.mxu0 0.0
    %3161 = vmatprep.subr.mxu0 0.0
    %3162 = vmatpush1.msra.mxu0 0.0
    %3163 = vmatprep.subr.mxu0 0.0
    %3164 = vmatpush1.msra.mxu0 0.0
    %3165 = vmatprep.subr.mxu0 0.0
    %3166 = vmatpush1.msra.mxu0 0.0
    %3167 = vmatprep.subr.mxu0 0.0
    %3168 = vmatpush1.msra.mxu0 %v210
    %3169 = vmatprep.subr.mxu0 0.0
    %3170 = vmatpush1.msra.mxu0 %v209
    %3171 = vmatprep.subr.mxu0 0.0
    %3172 = vmatpush1.msra.mxu0 %v208
    %3173 = vmatprep.subr.mxu0 0.0
    %3174 = vmatpush1.msra.mxu0 %v207
    %3175 = vmatprep.subr.mxu0 0.0
    %3176 = vmatpush1.msra.mxu0 %v206
    %3177 = vmatprep.subr.mxu0 0.0
    %3178 = vmatpush1.msra.mxu0 %v205
    %3179 = vmatprep.subr.mxu0 0.0
    %3180 = vmatpush1.msra.mxu0 %v204
    %3181 = vmatprep.subr.mxu0 0.0
    %3182 = vmatpush1.msra.mxu0 %v203
    %3183 = vmatprep.subr.mxu0 0.0
    %3184 = vmatpush2.msra.mxu0 0.0
    %3185 = vmatprep.subr.mxu0 0.0
    %3186 = vmatpush2.msra.mxu0 0.0
    %3187 = vmatprep.subr.mxu0 0.0
    %3188 = vmatpush2.msra.mxu0 0.0
    %3189 = vmatprep.subr.mxu0 0.0
    %3190 = vmatpush2.msra.mxu0 0.0
    %3191 = vmatprep.subr.mxu0 0.0
    %3192 = vmatpush2.msra.mxu0 0.0
    %3193 = vmatprep.subr.mxu0 0.0
    %3194 = vmatpush2.msra.mxu0 0.0
    %3195 = vmatprep.subr.mxu0 0.0
    %3196 = vmatpush2.msra.mxu0 0.0
    %3197 = vmatprep.subr.mxu0 0.0
    %3198 = vmatpush2.msra.mxu0 0.0
    %3199 = vmatprep.subr.mxu0 0.0
    %3200 = vmatpush2.msra.mxu0 0.0
    %3201 = vmatprep.subr.mxu0 0.0
    %3202 = vmatpush2.msra.mxu0 0.0
    %3203 = vmatprep.subr.mxu0 0.0
    %3204 = vmatpush2.msra.mxu0 0.0
    %3205 = vmatprep.subr.mxu0 0.0
    %3206 = vmatpush2.msra.mxu0 0.0
    %3207 = vmatprep.subr.mxu0 0.0
    %3208 = vmatpush2.msra.mxu0 0.0
    %3209 = vmatprep.subr.mxu0 0.0
    %3210 = vmatpush2.msra.mxu0 0.0
    %3211 = vmatprep.subr.mxu0 0.0
    %3212 = vmatpush2.msra.mxu0 0.0
    %3213 = vmatprep.subr.mxu0 0.0
    %3214 = vmatpush2.msra.mxu0 0.0
    %3215 = vmatprep.mubr.f32.mxu0 0.0
    %3216 = vmatmul.mubr.f32.gmra.mxu0 %v3149
    %v3217 = vpop.f32.mrf.mxu0
    %v3218 = vadd.f32 0.0, %v3217
    %v3219 = vpop.f32.mrf.mxu0
    %3220 = vdwg.mxu0
    %v3221 = vadd.f32 %v3147, %v3218
    %v3223 = vsel %vm2779, %v2736, 0
    %3225 = vmatprep.subr.mxu0 0.0
    %3226 = vmatpush1.msra.mxu0 0.0
    %3227 = vmatprep.subr.mxu0 0.0
    %3228 = vmatpush1.msra.mxu0 0.0
    %3229 = vmatprep.subr.mxu0 0.0
    %3230 = vmatpush1.msra.mxu0 0.0
    %3231 = vmatprep.subr.mxu0 0.0
    %3232 = vmatpush1.msra.mxu0 0.0
    %3233 = vmatprep.subr.mxu0 0.0
    %3234 = vmatpush1.msra.mxu0 0.0
    %3235 = vmatprep.subr.mxu0 0.0
    %3236 = vmatpush1.msra.mxu0 0.0
    %3237 = vmatprep.subr.mxu0 0.0
    %3238 = vmatpush1.msra.mxu0 0.0
    %3239 = vmatprep.subr.mxu0 0.0
    %3240 = vmatpush1.msra.mxu0 0.0
    %3241 = vmatprep.subr.mxu0 0.0
    %3242 = vmatpush1.msra.mxu0 %v218
    %3243 = vmatprep.subr.mxu0 0.0
    %3244 = vmatpush1.msra.mxu0 %v217
    %3245 = vmatprep.subr.mxu0 0.0
    %3246 = vmatpush1.msra.mxu0 %v216
    %3247 = vmatprep.subr.mxu0 0.0
    %3248 = vmatpush1.msra.mxu0 %v215
    %3249 = vmatprep.subr.mxu0 0.0
    %3250 = vmatpush1.msra.mxu0 %v214
    %3251 = vmatprep.subr.mxu0 0.0
    %3252 = vmatpush1.msra.mxu0 %v213
    %3253 = vmatprep.subr.mxu0 0.0
    %3254 = vmatpush1.msra.mxu0 %v212
    %3255 = vmatprep.subr.mxu0 0.0
    %3256 = vmatpush1.msra.mxu0 %v211
    %3257 = vmatprep.subr.mxu0 0.0
    %3258 = vmatpush2.msra.mxu0 0.0
    %3259 = vmatprep.subr.mxu0 0.0
    %3260 = vmatpush2.msra.mxu0 0.0
    %3261 = vmatprep.subr.mxu0 0.0
    %3262 = vmatpush2.msra.mxu0 0.0
    %3263 = vmatprep.subr.mxu0 0.0
    %3264 = vmatpush2.msra.mxu0 0.0
    %3265 = vmatprep.subr.mxu0 0.0
    %3266 = vmatpush2.msra.mxu0 0.0
    %3267 = vmatprep.subr.mxu0 0.0
    %3268 = vmatpush2.msra.mxu0 0.0
    %3269 = vmatprep.subr.mxu0 0.0
    %3270 = vmatpush2.msra.mxu0 0.0
    %3271 = vmatprep.subr.mxu0 0.0
    %3272 = vmatpush2.msra.mxu0 0.0
    %3273 = vmatprep.subr.mxu0 0.0
    %3274 = vmatpush2.msra.mxu0 0.0
    %3275 = vmatprep.subr.mxu0 0.0
    %3276 = vmatpush2.msra.mxu0 0.0
    %3277 = vmatprep.subr.mxu0 0.0
    %3278 = vmatpush2.msra.mxu0 0.0
    %3279 = vmatprep.subr.mxu0 0.0
    %3280 = vmatpush2.msra.mxu0 0.0
    %3281 = vmatprep.subr.mxu0 0.0
    %3282 = vmatpush2.msra.mxu0 0.0
    %3283 = vmatprep.subr.mxu0 0.0
    %3284 = vmatpush2.msra.mxu0 0.0
    %3285 = vmatprep.subr.mxu0 0.0
    %3286 = vmatpush2.msra.mxu0 0.0
    %3287 = vmatprep.subr.mxu0 0.0
    %3288 = vmatpush2.msra.mxu0 0.0
    %3289 = vmatprep.mubr.f32.mxu0 0.0
    %3290 = vmatmul.mubr.f32.gmra.mxu0 %v3223
    %v3291 = vpop.f32.mrf.mxu0
    %v3292 = vadd.f32 0.0, %v3291
    %v3293 = vpop.f32.mrf.mxu0
    %3294 = vdwg.mxu0
    %v3295 = vadd.f32 %v3221, %v3292
    %v3297 = vsel %vm2779, %v2737, 0
    %3299 = vmatprep.subr.mxu0 0.0
    %3300 = vmatpush1.msra.mxu0 0.0
    %3301 = vmatprep.subr.mxu0 0.0
    %3302 = vmatpush1.msra.mxu0 0.0
    %3303 = vmatprep.subr.mxu0 0.0
    %3304 = vmatpush1.msra.mxu0 0.0
    %3305 = vmatprep.subr.mxu0 0.0
    %3306 = vmatpush1.msra.mxu0 0.0
    %3307 = vmatprep.subr.mxu0 0.0
    %3308 = vmatpush1.msra.mxu0 0.0
    %3309 = vmatprep.subr.mxu0 0.0
    %3310 = vmatpush1.msra.mxu0 0.0
    %3311 = vmatprep.subr.mxu0 0.0
    %3312 = vmatpush1.msra.mxu0 0.0
    %3313 = vmatprep.subr.mxu0 0.0
    %3314 = vmatpush1.msra.mxu0 0.0
    %3315 = vmatprep.subr.mxu0 0.0
    %3316 = vmatpush1.msra.mxu0 %v226
    %3317 = vmatprep.subr.mxu0 0.0
    %3318 = vmatpush1.msra.mxu0 %v225
    %3319 = vmatprep.subr.mxu0 0.0
    %3320 = vmatpush1.msra.mxu0 %v224
    %3321 = vmatprep.subr.mxu0 0.0
    %3322 = vmatpush1.msra.mxu0 %v223
    %3323 = vmatprep.subr.mxu0 0.0
    %3324 = vmatpush1.msra.mxu0 %v222
    %3325 = vmatprep.subr.mxu0 0.0
    %3326 = vmatpush1.msra.mxu0 %v221
    %3327 = vmatprep.subr.mxu0 0.0
    %3328 = vmatpush1.msra.mxu0 %v220
    %3329 = vmatprep.subr.mxu0 0.0
    %3330 = vmatpush1.msra.mxu0 %v219
    %3331 = vmatprep.subr.mxu0 0.0
    %3332 = vmatpush2.msra.mxu0 0.0
    %3333 = vmatprep.subr.mxu0 0.0
    %3334 = vmatpush2.msra.mxu0 0.0
    %3335 = vmatprep.subr.mxu0 0.0
    %3336 = vmatpush2.msra.mxu0 0.0
    %3337 = vmatprep.subr.mxu0 0.0
    %3338 = vmatpush2.msra.mxu0 0.0
    %3339 = vmatprep.subr.mxu0 0.0
    %3340 = vmatpush2.msra.mxu0 0.0
    %3341 = vmatprep.subr.mxu0 0.0
    %3342 = vmatpush2.msra.mxu0 0.0
    %3343 = vmatprep.subr.mxu0 0.0
    %3344 = vmatpush2.msra.mxu0 0.0
    %3345 = vmatprep.subr.mxu0 0.0
    %3346 = vmatpush2.msra.mxu0 0.0
    %3347 = vmatprep.subr.mxu0 0.0
    %3348 = vmatpush2.msra.mxu0 0.0
    %3349 = vmatprep.subr.mxu0 0.0
    %3350 = vmatpush2.msra.mxu0 0.0
    %3351 = vmatprep.subr.mxu0 0.0
    %3352 = vmatpush2.msra.mxu0 0.0
    %3353 = vmatprep.subr.mxu0 0.0
    %3354 = vmatpush2.msra.mxu0 0.0
    %3355 = vmatprep.subr.mxu0 0.0
    %3356 = vmatpush2.msra.mxu0 0.0
    %3357 = vmatprep.subr.mxu0 0.0
    %3358 = vmatpush2.msra.mxu0 0.0
    %3359 = vmatprep.subr.mxu0 0.0
    %3360 = vmatpush2.msra.mxu0 0.0
    %3361 = vmatprep.subr.mxu0 0.0
    %3362 = vmatpush2.msra.mxu0 0.0
    %3363 = vmatprep.mubr.f32.mxu0 0.0
    %3364 = vmatmul.mubr.f32.gmra.mxu0 %v3297
    %v3365 = vpop.f32.mrf.mxu0
    %v3366 = vadd.f32 0.0, %v3365
    %v3367 = vpop.f32.mrf.mxu0
    %3368 = vdwg.mxu0
    %v3369 = vadd.f32 %v3295, %v3366
    %v3371 = vsel %vm2779, %v2738, 0
    %3373 = vmatprep.subr.mxu0 0.0
    %3374 = vmatpush1.msra.mxu0 0.0
    %3375 = vmatprep.subr.mxu0 0.0
    %3376 = vmatpush1.msra.mxu0 0.0
    %3377 = vmatprep.subr.mxu0 0.0
    %3378 = vmatpush1.msra.mxu0 0.0
    %3379 = vmatprep.subr.mxu0 0.0
    %3380 = vmatpush1.msra.mxu0 0.0
    %3381 = vmatprep.subr.mxu0 0.0
    %3382 = vmatpush1.msra.mxu0 0.0
    %3383 = vmatprep.subr.mxu0 0.0
    %3384 = vmatpush1.msra.mxu0 0.0
    %3385 = vmatprep.subr.mxu0 0.0
    %3386 = vmatpush1.msra.mxu0 0.0
    %3387 = vmatprep.subr.mxu0 0.0
    %3388 = vmatpush1.msra.mxu0 0.0
    %3389 = vmatprep.subr.mxu0 0.0
    %3390 = vmatpush1.msra.mxu0 %v234
    %3391 = vmatprep.subr.mxu0 0.0
    %3392 = vmatpush1.msra.mxu0 %v233
    %3393 = vmatprep.subr.mxu0 0.0
    %3394 = vmatpush1.msra.mxu0 %v232
    %3395 = vmatprep.subr.mxu0 0.0
    %3396 = vmatpush1.msra.mxu0 %v231
    %3397 = vmatprep.subr.mxu0 0.0
    %3398 = vmatpush1.msra.mxu0 %v230
    %3399 = vmatprep.subr.mxu0 0.0
    %3400 = vmatpush1.msra.mxu0 %v229
    %3401 = vmatprep.subr.mxu0 0.0
    %3402 = vmatpush1.msra.mxu0 %v228
    %3403 = vmatprep.subr.mxu0 0.0
    %3404 = vmatpush1.msra.mxu0 %v227
    %3405 = vmatprep.subr.mxu0 0.0
    %3406 = vmatpush2.msra.mxu0 0.0
    %3407 = vmatprep.subr.mxu0 0.0
    %3408 = vmatpush2.msra.mxu0 0.0
    %3409 = vmatprep.subr.mxu0 0.0
    %3410 = vmatpush2.msra.mxu0 0.0
    %3411 = vmatprep.subr.mxu0 0.0
    %3412 = vmatpush2.msra.mxu0 0.0
    %3413 = vmatprep.subr.mxu0 0.0
    %3414 = vmatpush2.msra.mxu0 0.0
    %3415 = vmatprep.subr.mxu0 0.0
    %3416 = vmatpush2.msra.mxu0 0.0
    %3417 = vmatprep.subr.mxu0 0.0
    %3418 = vmatpush2.msra.mxu0 0.0
    %3419 = vmatprep.subr.mxu0 0.0
    %3420 = vmatpush2.msra.mxu0 0.0
    %3421 = vmatprep.subr.mxu0 0.0
    %3422 = vmatpush2.msra.mxu0 0.0
    %3423 = vmatprep.subr.mxu0 0.0
    %3424 = vmatpush2.msra.mxu0 0.0
    %3425 = vmatprep.subr.mxu0 0.0
    %3426 = vmatpush2.msra.mxu0 0.0
    %3427 = vmatprep.subr.mxu0 0.0
    %3428 = vmatpush2.msra.mxu0 0.0
    %3429 = vmatprep.subr.mxu0 0.0
    %3430 = vmatpush2.msra.mxu0 0.0
    %3431 = vmatprep.subr.mxu0 0.0
    %3432 = vmatpush2.msra.mxu0 0.0
    %3433 = vmatprep.subr.mxu0 0.0
    %3434 = vmatpush2.msra.mxu0 0.0
    %3435 = vmatprep.subr.mxu0 0.0
    %3436 = vmatpush2.msra.mxu0 0.0
    %3437 = vmatprep.mubr.f32.mxu0 0.0
    %3438 = vmatmul.mubr.f32.gmra.mxu0 %v3371
    %v3439 = vpop.f32.mrf.mxu0
    %v3440 = vadd.f32 0.0, %v3439
    %v3441 = vpop.f32.mrf.mxu0
    %3442 = vdwg.mxu0
    %v3443 = vadd.f32 %v3369, %v3440
    %v3445 = vsel %vm2779, %v2739, 0
    %3447 = vmatprep.subr.mxu0 0.0
    %3448 = vmatpush1.msra.mxu0 0.0
    %3449 = vmatprep.subr.mxu0 0.0
    %3450 = vmatpush1.msra.mxu0 0.0
    %3451 = vmatprep.subr.mxu0 0.0
    %3452 = vmatpush1.msra.mxu0 0.0
    %3453 = vmatprep.subr.mxu0 0.0
    %3454 = vmatpush1.msra.mxu0 0.0
    %3455 = vmatprep.subr.mxu0 0.0
    %3456 = vmatpush1.msra.mxu0 0.0
    %3457 = vmatprep.subr.mxu0 0.0
    %3458 = vmatpush1.msra.mxu0 0.0
    %3459 = vmatprep.subr.mxu0 0.0
    %3460 = vmatpush1.msra.mxu0 0.0
    %3461 = vmatprep.subr.mxu0 0.0
    %3462 = vmatpush1.msra.mxu0 0.0
    %3463 = vmatprep.subr.mxu0 0.0
    %3464 = vmatpush1.msra.mxu0 %v242
    %3465 = vmatprep.subr.mxu0 0.0
    %3466 = vmatpush1.msra.mxu0 %v241
    %3467 = vmatprep.subr.mxu0 0.0
    %3468 = vmatpush1.msra.mxu0 %v240
    %3469 = vmatprep.subr.mxu0 0.0
    %3470 = vmatpush1.msra.mxu0 %v239
    %3471 = vmatprep.subr.mxu0 0.0
    %3472 = vmatpush1.msra.mxu0 %v238
    %3473 = vmatprep.subr.mxu0 0.0
    %3474 = vmatpush1.msra.mxu0 %v237
    %3475 = vmatprep.subr.mxu0 0.0
    %3476 = vmatpush1.msra.mxu0 %v236
    %3477 = vmatprep.subr.mxu0 0.0
    %3478 = vmatpush1.msra.mxu0 %v235
    %3479 = vmatprep.subr.mxu0 0.0
    %3480 = vmatpush2.msra.mxu0 0.0
    %3481 = vmatprep.subr.mxu0 0.0
    %3482 = vmatpush2.msra.mxu0 0.0
    %3483 = vmatprep.subr.mxu0 0.0
    %3484 = vmatpush2.msra.mxu0 0.0
    %3485 = vmatprep.subr.mxu0 0.0
    %3486 = vmatpush2.msra.mxu0 0.0
    %3487 = vmatprep.subr.mxu0 0.0
    %3488 = vmatpush2.msra.mxu0 0.0
    %3489 = vmatprep.subr.mxu0 0.0
    %3490 = vmatpush2.msra.mxu0 0.0
    %3491 = vmatprep.subr.mxu0 0.0
    %3492 = vmatpush2.msra.mxu0 0.0
    %3493 = vmatprep.subr.mxu0 0.0
    %3494 = vmatpush2.msra.mxu0 0.0
    %3495 = vmatprep.subr.mxu0 0.0
    %3496 = vmatpush2.msra.mxu0 0.0
    %3497 = vmatprep.subr.mxu0 0.0
    %3498 = vmatpush2.msra.mxu0 0.0
    %3499 = vmatprep.subr.mxu0 0.0
    %3500 = vmatpush2.msra.mxu0 0.0
    %3501 = vmatprep.subr.mxu0 0.0
    %3502 = vmatpush2.msra.mxu0 0.0
    %3503 = vmatprep.subr.mxu0 0.0
    %3504 = vmatpush2.msra.mxu0 0.0
    %3505 = vmatprep.subr.mxu0 0.0
    %3506 = vmatpush2.msra.mxu0 0.0
    %3507 = vmatprep.subr.mxu0 0.0
    %3508 = vmatpush2.msra.mxu0 0.0
    %3509 = vmatprep.subr.mxu0 0.0
    %3510 = vmatpush2.msra.mxu0 0.0
    %3511 = vmatprep.mubr.f32.mxu0 0.0
    %3512 = vmatmul.mubr.f32.gmra.mxu0 %v3445
    %v3513 = vpop.f32.mrf.mxu0
    %v3514 = vadd.f32 0.0, %v3513
    %v3515 = vpop.f32.mrf.mxu0
    %3516 = vdwg.mxu0
    %v3517 = vadd.f32 %v3443, %v3514
    %v3519 = vsel %vm2779, %v2740, 0
    %3521 = vmatprep.subr.mxu0 0.0
    %3522 = vmatpush1.msra.mxu0 0.0
    %3523 = vmatprep.subr.mxu0 0.0
    %3524 = vmatpush1.msra.mxu0 0.0
    %3525 = vmatprep.subr.mxu0 0.0
    %3526 = vmatpush1.msra.mxu0 0.0
    %3527 = vmatprep.subr.mxu0 0.0
    %3528 = vmatpush1.msra.mxu0 0.0
    %3529 = vmatprep.subr.mxu0 0.0
    %3530 = vmatpush1.msra.mxu0 0.0
    %3531 = vmatprep.subr.mxu0 0.0
    %3532 = vmatpush1.msra.mxu0 0.0
    %3533 = vmatprep.subr.mxu0 0.0
    %3534 = vmatpush1.msra.mxu0 0.0
    %3535 = vmatprep.subr.mxu0 0.0
    %3536 = vmatpush1.msra.mxu0 0.0
    %3537 = vmatprep.subr.mxu0 0.0
    %3538 = vmatpush1.msra.mxu0 %v250
    %3539 = vmatprep.subr.mxu0 0.0
    %3540 = vmatpush1.msra.mxu0 %v249
    %3541 = vmatprep.subr.mxu0 0.0
    %3542 = vmatpush1.msra.mxu0 %v248
    %3543 = vmatprep.subr.mxu0 0.0
    %3544 = vmatpush1.msra.mxu0 %v247
    %3545 = vmatprep.subr.mxu0 0.0
    %3546 = vmatpush1.msra.mxu0 %v246
    %3547 = vmatprep.subr.mxu0 0.0
    %3548 = vmatpush1.msra.mxu0 %v245
    %3549 = vmatprep.subr.mxu0 0.0
    %3550 = vmatpush1.msra.mxu0 %v244
    %3551 = vmatprep.subr.mxu0 0.0
    %3552 = vmatpush1.msra.mxu0 %v243
    %3553 = vmatprep.subr.mxu0 0.0
    %3554 = vmatpush2.msra.mxu0 0.0
    %3555 = vmatprep.subr.mxu0 0.0
    %3556 = vmatpush2.msra.mxu0 0.0
    %3557 = vmatprep.subr.mxu0 0.0
    %3558 = vmatpush2.msra.mxu0 0.0
    %3559 = vmatprep.subr.mxu0 0.0
    %3560 = vmatpush2.msra.mxu0 0.0
    %3561 = vmatprep.subr.mxu0 0.0
    %3562 = vmatpush2.msra.mxu0 0.0
    %3563 = vmatprep.subr.mxu0 0.0
    %3564 = vmatpush2.msra.mxu0 0.0
    %3565 = vmatprep.subr.mxu0 0.0
    %3566 = vmatpush2.msra.mxu0 0.0
    %3567 = vmatprep.subr.mxu0 0.0
    %3568 = vmatpush2.msra.mxu0 0.0
    %3569 = vmatprep.subr.mxu0 0.0
    %3570 = vmatpush2.msra.mxu0 0.0
    %3571 = vmatprep.subr.mxu0 0.0
    %3572 = vmatpush2.msra.mxu0 0.0
    %3573 = vmatprep.subr.mxu0 0.0
    %3574 = vmatpush2.msra.mxu0 0.0
    %3575 = vmatprep.subr.mxu0 0.0
    %3576 = vmatpush2.msra.mxu0 0.0
    %3577 = vmatprep.subr.mxu0 0.0
    %3578 = vmatpush2.msra.mxu0 0.0
    %3579 = vmatprep.subr.mxu0 0.0
    %3580 = vmatpush2.msra.mxu0 0.0
    %3581 = vmatprep.subr.mxu0 0.0
    %3582 = vmatpush2.msra.mxu0 0.0
    %3583 = vmatprep.subr.mxu0 0.0
    %3584 = vmatpush2.msra.mxu0 0.0
    %3585 = vmatprep.mubr.f32.mxu0 0.0
    %3586 = vmatmul.mubr.f32.gmra.mxu0 %v3519
    %v3587 = vpop.f32.mrf.mxu0
    %v3588 = vadd.f32 0.0, %v3587
    %v3589 = vpop.f32.mrf.mxu0
    %3590 = vdwg.mxu0
    %v3591 = vadd.f32 %v3517, %v3588
    %v3593 = vsel %vm2779, %v2741, 0
    %3595 = vmatprep.subr.mxu0 0.0
    %3596 = vmatpush1.msra.mxu0 0.0
    %3597 = vmatprep.subr.mxu0 0.0
    %3598 = vmatpush1.msra.mxu0 0.0
    %3599 = vmatprep.subr.mxu0 0.0
    %3600 = vmatpush1.msra.mxu0 0.0
    %3601 = vmatprep.subr.mxu0 0.0
    %3602 = vmatpush1.msra.mxu0 0.0
    %3603 = vmatprep.subr.mxu0 0.0
    %3604 = vmatpush1.msra.mxu0 0.0
    %3605 = vmatprep.subr.mxu0 0.0
    %3606 = vmatpush1.msra.mxu0 0.0
    %3607 = vmatprep.subr.mxu0 0.0
    %3608 = vmatpush1.msra.mxu0 0.0
    %3609 = vmatprep.subr.mxu0 0.0
    %3610 = vmatpush1.msra.mxu0 0.0
    %3611 = vmatprep.subr.mxu0 0.0
    %3612 = vmatpush1.msra.mxu0 %v258
    %3613 = vmatprep.subr.mxu0 0.0
    %3614 = vmatpush1.msra.mxu0 %v257
    %3615 = vmatprep.subr.mxu0 0.0
    %3616 = vmatpush1.msra.mxu0 %v256
    %3617 = vmatprep.subr.mxu0 0.0
    %3618 = vmatpush1.msra.mxu0 %v255
    %3619 = vmatprep.subr.mxu0 0.0
    %3620 = vmatpush1.msra.mxu0 %v254
    %3621 = vmatprep.subr.mxu0 0.0
    %3622 = vmatpush1.msra.mxu0 %v253
    %3623 = vmatprep.subr.mxu0 0.0
    %3624 = vmatpush1.msra.mxu0 %v252
    %3625 = vmatprep.subr.mxu0 0.0
    %3626 = vmatpush1.msra.mxu0 %v251
    %3627 = vmatprep.subr.mxu0 0.0
    %3628 = vmatpush2.msra.mxu0 0.0
    %3629 = vmatprep.subr.mxu0 0.0
    %3630 = vmatpush2.msra.mxu0 0.0
    %3631 = vmatprep.subr.mxu0 0.0
    %3632 = vmatpush2.msra.mxu0 0.0
    %3633 = vmatprep.subr.mxu0 0.0
    %3634 = vmatpush2.msra.mxu0 0.0
    %3635 = vmatprep.subr.mxu0 0.0
    %3636 = vmatpush2.msra.mxu0 0.0
    %3637 = vmatprep.subr.mxu0 0.0
    %3638 = vmatpush2.msra.mxu0 0.0
    %3639 = vmatprep.subr.mxu0 0.0
    %3640 = vmatpush2.msra.mxu0 0.0
    %3641 = vmatprep.subr.mxu0 0.0
    %3642 = vmatpush2.msra.mxu0 0.0
    %3643 = vmatprep.subr.mxu0 0.0
    %3644 = vmatpush2.msra.mxu0 0.0
    %3645 = vmatprep.subr.mxu0 0.0
    %3646 = vmatpush2.msra.mxu0 0.0
    %3647 = vmatprep.subr.mxu0 0.0
    %3648 = vmatpush2.msra.mxu0 0.0
    %3649 = vmatprep.subr.mxu0 0.0
    %3650 = vmatpush2.msra.mxu0 0.0
    %3651 = vmatprep.subr.mxu0 0.0
    %3652 = vmatpush2.msra.mxu0 0.0
    %3653 = vmatprep.subr.mxu0 0.0
    %3654 = vmatpush2.msra.mxu0 0.0
    %3655 = vmatprep.subr.mxu0 0.0
    %3656 = vmatpush2.msra.mxu0 0.0
    %3657 = vmatprep.subr.mxu0 0.0
    %3658 = vmatpush2.msra.mxu0 0.0
    %3659 = vmatprep.mubr.f32.mxu0 0.0
    %3660 = vmatmul.mubr.f32.gmra.mxu0 %v3593
    %v3661 = vpop.f32.mrf.mxu0
    %v3662 = vadd.f32 0.0, %v3661
    %v3663 = vpop.f32.mrf.mxu0
    %3664 = vdwg.mxu0
    %v3665 = vadd.f32 %v3591, %v3662
    %v3667 = vsel %vm2779, %v2742, 0
    %3669 = vmatprep.subr.mxu0 0.0
    %3670 = vmatpush1.msra.mxu0 0.0
    %3671 = vmatprep.subr.mxu0 0.0
    %3672 = vmatpush1.msra.mxu0 0.0
    %3673 = vmatprep.subr.mxu0 0.0
    %3674 = vmatpush1.msra.mxu0 0.0
    %3675 = vmatprep.subr.mxu0 0.0
    %3676 = vmatpush1.msra.mxu0 0.0
    %3677 = vmatprep.subr.mxu0 0.0
    %3678 = vmatpush1.msra.mxu0 0.0
    %3679 = vmatprep.subr.mxu0 0.0
    %3680 = vmatpush1.msra.mxu0 0.0
    %3681 = vmatprep.subr.mxu0 0.0
    %3682 = vmatpush1.msra.mxu0 0.0
    %3683 = vmatprep.subr.mxu0 0.0
    %3684 = vmatpush1.msra.mxu0 0.0
    %3685 = vmatprep.subr.mxu0 0.0
    %3686 = vmatpush1.msra.mxu0 %v266
    %3687 = vmatprep.subr.mxu0 0.0
    %3688 = vmatpush1.msra.mxu0 %v265
    %3689 = vmatprep.subr.mxu0 0.0
    %3690 = vmatpush1.msra.mxu0 %v264
    %3691 = vmatprep.subr.mxu0 0.0
    %3692 = vmatpush1.msra.mxu0 %v263
    %3693 = vmatprep.subr.mxu0 0.0
    %3694 = vmatpush1.msra.mxu0 %v262
    %3695 = vmatprep.subr.mxu0 0.0
    %3696 = vmatpush1.msra.mxu0 %v261
    %3697 = vmatprep.subr.mxu0 0.0
    %3698 = vmatpush1.msra.mxu0 %v260
    %3699 = vmatprep.subr.mxu0 0.0
    %3700 = vmatpush1.msra.mxu0 %v259
    %3701 = vmatprep.subr.mxu0 0.0
    %3702 = vmatpush2.msra.mxu0 0.0
    %3703 = vmatprep.subr.mxu0 0.0
    %3704 = vmatpush2.msra.mxu0 0.0
    %3705 = vmatprep.subr.mxu0 0.0
    %3706 = vmatpush2.msra.mxu0 0.0
    %3707 = vmatprep.subr.mxu0 0.0
    %3708 = vmatpush2.msra.mxu0 0.0
    %3709 = vmatprep.subr.mxu0 0.0
    %3710 = vmatpush2.msra.mxu0 0.0
    %3711 = vmatprep.subr.mxu0 0.0
    %3712 = vmatpush2.msra.mxu0 0.0
    %3713 = vmatprep.subr.mxu0 0.0
    %3714 = vmatpush2.msra.mxu0 0.0
    %3715 = vmatprep.subr.mxu0 0.0
    %3716 = vmatpush2.msra.mxu0 0.0
    %3717 = vmatprep.subr.mxu0 0.0
    %3718 = vmatpush2.msra.mxu0 0.0
    %3719 = vmatprep.subr.mxu0 0.0
    %3720 = vmatpush2.msra.mxu0 0.0
    %3721 = vmatprep.subr.mxu0 0.0
    %3722 = vmatpush2.msra.mxu0 0.0
    %3723 = vmatprep.subr.mxu0 0.0
    %3724 = vmatpush2.msra.mxu0 0.0
    %3725 = vmatprep.subr.mxu0 0.0
    %3726 = vmatpush2.msra.mxu0 0.0
    %3727 = vmatprep.subr.mxu0 0.0
    %3728 = vmatpush2.msra.mxu0 0.0
    %3729 = vmatprep.subr.mxu0 0.0
    %3730 = vmatpush2.msra.mxu0 0.0
    %3731 = vmatprep.subr.mxu0 0.0
    %3732 = vmatpush2.msra.mxu0 0.0
    %3733 = vmatprep.mubr.f32.mxu0 0.0
    %3734 = vmatmul.mubr.f32.gmra.mxu0 %v3667
    %v3735 = vpop.f32.mrf.mxu0
    %v3736 = vadd.f32 0.0, %v3735
    %v3737 = vpop.f32.mrf.mxu0
    %3738 = vdwg.mxu0
    %v3739 = vadd.f32 %v3665, %v3736
    %v3741 = vsel %vm2779, %v2743, 0
    %3743 = vmatprep.subr.mxu0 0.0
    %3744 = vmatpush1.msra.mxu0 0.0
    %3745 = vmatprep.subr.mxu0 0.0
    %3746 = vmatpush1.msra.mxu0 0.0
    %3747 = vmatprep.subr.mxu0 0.0
    %3748 = vmatpush1.msra.mxu0 0.0
    %3749 = vmatprep.subr.mxu0 0.0
    %3750 = vmatpush1.msra.mxu0 0.0
    %3751 = vmatprep.subr.mxu0 0.0
    %3752 = vmatpush1.msra.mxu0 0.0
    %3753 = vmatprep.subr.mxu0 0.0
    %3754 = vmatpush1.msra.mxu0 0.0
    %3755 = vmatprep.subr.mxu0 0.0
    %3756 = vmatpush1.msra.mxu0 0.0
    %3757 = vmatprep.subr.mxu0 0.0
    %3758 = vmatpush1.msra.mxu0 0.0
    %3759 = vmatprep.subr.mxu0 0.0
    %3760 = vmatpush1.msra.mxu0 %v274
    %3761 = vmatprep.subr.mxu0 0.0
    %3762 = vmatpush1.msra.mxu0 %v273
    %3763 = vmatprep.subr.mxu0 0.0
    %3764 = vmatpush1.msra.mxu0 %v272
    %3765 = vmatprep.subr.mxu0 0.0
    %3766 = vmatpush1.msra.mxu0 %v271
    %3767 = vmatprep.subr.mxu0 0.0
    %3768 = vmatpush1.msra.mxu0 %v270
    %3769 = vmatprep.subr.mxu0 0.0
    %3770 = vmatpush1.msra.mxu0 %v269
    %3771 = vmatprep.subr.mxu0 0.0
    %3772 = vmatpush1.msra.mxu0 %v268
    %3773 = vmatprep.subr.mxu0 0.0
    %3774 = vmatpush1.msra.mxu0 %v267
    %3775 = vmatprep.subr.mxu0 0.0
    %3776 = vmatpush2.msra.mxu0 0.0
    %3777 = vmatprep.subr.mxu0 0.0
    %3778 = vmatpush2.msra.mxu0 0.0
    %3779 = vmatprep.subr.mxu0 0.0
    %3780 = vmatpush2.msra.mxu0 0.0
    %3781 = vmatprep.subr.mxu0 0.0
    %3782 = vmatpush2.msra.mxu0 0.0
    %3783 = vmatprep.subr.mxu0 0.0
    %3784 = vmatpush2.msra.mxu0 0.0
    %3785 = vmatprep.subr.mxu0 0.0
    %3786 = vmatpush2.msra.mxu0 0.0
    %3787 = vmatprep.subr.mxu0 0.0
    %3788 = vmatpush2.msra.mxu0 0.0
    %3789 = vmatprep.subr.mxu0 0.0
    %3790 = vmatpush2.msra.mxu0 0.0
    %3791 = vmatprep.subr.mxu0 0.0
    %3792 = vmatpush2.msra.mxu0 0.0
    %3793 = vmatprep.subr.mxu0 0.0
    %3794 = vmatpush2.msra.mxu0 0.0
    %3795 = vmatprep.subr.mxu0 0.0
    %3796 = vmatpush2.msra.mxu0 0.0
    %3797 = vmatprep.subr.mxu0 0.0
    %3798 = vmatpush2.msra.mxu0 0.0
    %3799 = vmatprep.subr.mxu0 0.0
    %3800 = vmatpush2.msra.mxu0 0.0
    %3801 = vmatprep.subr.mxu0 0.0
    %3802 = vmatpush2.msra.mxu0 0.0
    %3803 = vmatprep.subr.mxu0 0.0
    %3804 = vmatpush2.msra.mxu0 0.0
    %3805 = vmatprep.subr.mxu0 0.0
    %3806 = vmatpush2.msra.mxu0 0.0
    %3807 = vmatprep.mubr.f32.mxu0 0.0
    %3808 = vmatmul.mubr.f32.gmra.mxu0 %v3741
    %v3809 = vpop.f32.mrf.mxu0
    %v3810 = vadd.f32 0.0, %v3809
    %v3811 = vpop.f32.mrf.mxu0
    %3812 = vdwg.mxu0
    %v3813 = vadd.f32 %v3739, %v3810
    %v3815 = vsel %vm2779, %v2744, 0
    %3817 = vmatprep.subr.mxu0 0.0
    %3818 = vmatpush1.msra.mxu0 0.0
    %3819 = vmatprep.subr.mxu0 0.0
    %3820 = vmatpush1.msra.mxu0 0.0
    %3821 = vmatprep.subr.mxu0 0.0
    %3822 = vmatpush1.msra.mxu0 0.0
    %3823 = vmatprep.subr.mxu0 0.0
    %3824 = vmatpush1.msra.mxu0 0.0
    %3825 = vmatprep.subr.mxu0 0.0
    %3826 = vmatpush1.msra.mxu0 0.0
    %3827 = vmatprep.subr.mxu0 0.0
    %3828 = vmatpush1.msra.mxu0 0.0
    %3829 = vmatprep.subr.mxu0 0.0
    %3830 = vmatpush1.msra.mxu0 0.0
    %3831 = vmatprep.subr.mxu0 0.0
    %3832 = vmatpush1.msra.mxu0 0.0
    %3833 = vmatprep.subr.mxu0 0.0
    %3834 = vmatpush1.msra.mxu0 %v282
    %3835 = vmatprep.subr.mxu0 0.0
    %3836 = vmatpush1.msra.mxu0 %v281
    %3837 = vmatprep.subr.mxu0 0.0
    %3838 = vmatpush1.msra.mxu0 %v280
    %3839 = vmatprep.subr.mxu0 0.0
    %3840 = vmatpush1.msra.mxu0 %v279
    %3841 = vmatprep.subr.mxu0 0.0
    %3842 = vmatpush1.msra.mxu0 %v278
    %3843 = vmatprep.subr.mxu0 0.0
    %3844 = vmatpush1.msra.mxu0 %v277
    %3845 = vmatprep.subr.mxu0 0.0
    %3846 = vmatpush1.msra.mxu0 %v276
    %3847 = vmatprep.subr.mxu0 0.0
    %3848 = vmatpush1.msra.mxu0 %v275
    %3849 = vmatprep.subr.mxu0 0.0
    %3850 = vmatpush2.msra.mxu0 0.0
    %3851 = vmatprep.subr.mxu0 0.0
    %3852 = vmatpush2.msra.mxu0 0.0
    %3853 = vmatprep.subr.mxu0 0.0
    %3854 = vmatpush2.msra.mxu0 0.0
    %3855 = vmatprep.subr.mxu0 0.0
    %3856 = vmatpush2.msra.mxu0 0.0
    %3857 = vmatprep.subr.mxu0 0.0
    %3858 = vmatpush2.msra.mxu0 0.0
    %3859 = vmatprep.subr.mxu0 0.0
    %3860 = vmatpush2.msra.mxu0 0.0
    %3861 = vmatprep.subr.mxu0 0.0
    %3862 = vmatpush2.msra.mxu0 0.0
    %3863 = vmatprep.subr.mxu0 0.0
    %3864 = vmatpush2.msra.mxu0 0.0
    %3865 = vmatprep.subr.mxu0 0.0
    %3866 = vmatpush2.msra.mxu0 0.0
    %3867 = vmatprep.subr.mxu0 0.0
    %3868 = vmatpush2.msra.mxu0 0.0
    %3869 = vmatprep.subr.mxu0 0.0
    %3870 = vmatpush2.msra.mxu0 0.0
    %3871 = vmatprep.subr.mxu0 0.0
    %3872 = vmatpush2.msra.mxu0 0.0
    %3873 = vmatprep.subr.mxu0 0.0
    %3874 = vmatpush2.msra.mxu0 0.0
    %3875 = vmatprep.subr.mxu0 0.0
    %3876 = vmatpush2.msra.mxu0 0.0
    %3877 = vmatprep.subr.mxu0 0.0
    %3878 = vmatpush2.msra.mxu0 0.0
    %3879 = vmatprep.subr.mxu0 0.0
    %3880 = vmatpush2.msra.mxu0 0.0
    %3881 = vmatprep.mubr.f32.mxu0 0.0
    %3882 = vmatmul.mubr.f32.gmra.mxu0 %v3815
    %v3883 = vpop.f32.mrf.mxu0
    %v3884 = vadd.f32 0.0, %v3883
    %v3885 = vpop.f32.mrf.mxu0
    %3886 = vdwg.mxu0
    %v3887 = vadd.f32 %v3813, %v3884
    %v3889 = vsel %vm2779, %v2745, 0
    %3891 = vmatprep.subr.mxu0 0.0
    %3892 = vmatpush1.msra.mxu0 0.0
    %3893 = vmatprep.subr.mxu0 0.0
    %3894 = vmatpush1.msra.mxu0 0.0
    %3895 = vmatprep.subr.mxu0 0.0
    %3896 = vmatpush1.msra.mxu0 0.0
    %3897 = vmatprep.subr.mxu0 0.0
    %3898 = vmatpush1.msra.mxu0 0.0
    %3899 = vmatprep.subr.mxu0 0.0
    %3900 = vmatpush1.msra.mxu0 0.0
    %3901 = vmatprep.subr.mxu0 0.0
    %3902 = vmatpush1.msra.mxu0 0.0
    %3903 = vmatprep.subr.mxu0 0.0
    %3904 = vmatpush1.msra.mxu0 0.0
    %3905 = vmatprep.subr.mxu0 0.0
    %3906 = vmatpush1.msra.mxu0 0.0
    %3907 = vmatprep.subr.mxu0 0.0
    %3908 = vmatpush1.msra.mxu0 %v290
    %3909 = vmatprep.subr.mxu0 0.0
    %3910 = vmatpush1.msra.mxu0 %v289
    %3911 = vmatprep.subr.mxu0 0.0
    %3912 = vmatpush1.msra.mxu0 %v288
    %3913 = vmatprep.subr.mxu0 0.0
    %3914 = vmatpush1.msra.mxu0 %v287
    %3915 = vmatprep.subr.mxu0 0.0
    %3916 = vmatpush1.msra.mxu0 %v286
    %3917 = vmatprep.subr.mxu0 0.0
    %3918 = vmatpush1.msra.mxu0 %v285
    %3919 = vmatprep.subr.mxu0 0.0
    %3920 = vmatpush1.msra.mxu0 %v284
    %3921 = vmatprep.subr.mxu0 0.0
    %3922 = vmatpush1.msra.mxu0 %v283
    %3923 = vmatprep.subr.mxu0 0.0
    %3924 = vmatpush2.msra.mxu0 0.0
    %3925 = vmatprep.subr.mxu0 0.0
    %3926 = vmatpush2.msra.mxu0 0.0
    %3927 = vmatprep.subr.mxu0 0.0
    %3928 = vmatpush2.msra.mxu0 0.0
    %3929 = vmatprep.subr.mxu0 0.0
    %3930 = vmatpush2.msra.mxu0 0.0
    %3931 = vmatprep.subr.mxu0 0.0
    %3932 = vmatpush2.msra.mxu0 0.0
    %3933 = vmatprep.subr.mxu0 0.0
    %3934 = vmatpush2.msra.mxu0 0.0
    %3935 = vmatprep.subr.mxu0 0.0
    %3936 = vmatpush2.msra.mxu0 0.0
    %3937 = vmatprep.subr.mxu0 0.0
    %3938 = vmatpush2.msra.mxu0 0.0
    %3939 = vmatprep.subr.mxu0 0.0
    %3940 = vmatpush2.msra.mxu0 0.0
    %3941 = vmatprep.subr.mxu0 0.0
    %3942 = vmatpush2.msra.mxu0 0.0
    %3943 = vmatprep.subr.mxu0 0.0
    %3944 = vmatpush2.msra.mxu0 0.0
    %3945 = vmatprep.subr.mxu0 0.0
    %3946 = vmatpush2.msra.mxu0 0.0
    %3947 = vmatprep.subr.mxu0 0.0
    %3948 = vmatpush2.msra.mxu0 0.0
    %3949 = vmatprep.subr.mxu0 0.0
    %3950 = vmatpush2.msra.mxu0 0.0
    %3951 = vmatprep.subr.mxu0 0.0
    %3952 = vmatpush2.msra.mxu0 0.0
    %3953 = vmatprep.subr.mxu0 0.0
    %3954 = vmatpush2.msra.mxu0 0.0
    %3955 = vmatprep.mubr.f32.mxu0 0.0
    %3956 = vmatmul.mubr.f32.gmra.mxu0 %v3889
    %v3957 = vpop.f32.mrf.mxu0
    %v3958 = vadd.f32 0.0, %v3957
    %v3959 = vpop.f32.mrf.mxu0
    %3960 = vdwg.mxu0
    %v3961 = vadd.f32 %v3887, %v3958
    %v3963 = vsel %vm2779, %v2746, 0
    %3965 = vmatprep.subr.mxu0 0.0
    %3966 = vmatpush1.msra.mxu0 0.0
    %3967 = vmatprep.subr.mxu0 0.0
    %3968 = vmatpush1.msra.mxu0 0.0
    %3969 = vmatprep.subr.mxu0 0.0
    %3970 = vmatpush1.msra.mxu0 0.0
    %3971 = vmatprep.subr.mxu0 0.0
    %3972 = vmatpush1.msra.mxu0 0.0
    %3973 = vmatprep.subr.mxu0 0.0
    %3974 = vmatpush1.msra.mxu0 0.0
    %3975 = vmatprep.subr.mxu0 0.0
    %3976 = vmatpush1.msra.mxu0 0.0
    %3977 = vmatprep.subr.mxu0 0.0
    %3978 = vmatpush1.msra.mxu0 0.0
    %3979 = vmatprep.subr.mxu0 0.0
    %3980 = vmatpush1.msra.mxu0 0.0
    %3981 = vmatprep.subr.mxu0 0.0
    %3982 = vmatpush1.msra.mxu0 %v298
    %3983 = vmatprep.subr.mxu0 0.0
    %3984 = vmatpush1.msra.mxu0 %v297
    %3985 = vmatprep.subr.mxu0 0.0
    %3986 = vmatpush1.msra.mxu0 %v296
    %3987 = vmatprep.subr.mxu0 0.0
    %3988 = vmatpush1.msra.mxu0 %v295
    %3989 = vmatprep.subr.mxu0 0.0
    %3990 = vmatpush1.msra.mxu0 %v294
    %3991 = vmatprep.subr.mxu0 0.0
    %3992 = vmatpush1.msra.mxu0 %v293
    %3993 = vmatprep.subr.mxu0 0.0
    %3994 = vmatpush1.msra.mxu0 %v292
    %3995 = vmatprep.subr.mxu0 0.0
    %3996 = vmatpush1.msra.mxu0 %v291
    %3997 = vmatprep.subr.mxu0 0.0
    %3998 = vmatpush2.msra.mxu0 0.0
    %3999 = vmatprep.subr.mxu0 0.0
    %4000 = vmatpush2.msra.mxu0 0.0
    %4001 = vmatprep.subr.mxu0 0.0
    %4002 = vmatpush2.msra.mxu0 0.0
    %4003 = vmatprep.subr.mxu0 0.0
    %4004 = vmatpush2.msra.mxu0 0.0
    %4005 = vmatprep.subr.mxu0 0.0
    %4006 = vmatpush2.msra.mxu0 0.0
    %4007 = vmatprep.subr.mxu0 0.0
    %4008 = vmatpush2.msra.mxu0 0.0
    %4009 = vmatprep.subr.mxu0 0.0
    %4010 = vmatpush2.msra.mxu0 0.0
    %4011 = vmatprep.subr.mxu0 0.0
    %4012 = vmatpush2.msra.mxu0 0.0
    %4013 = vmatprep.subr.mxu0 0.0
    %4014 = vmatpush2.msra.mxu0 0.0
    %4015 = vmatprep.subr.mxu0 0.0
    %4016 = vmatpush2.msra.mxu0 0.0
    %4017 = vmatprep.subr.mxu0 0.0
    %4018 = vmatpush2.msra.mxu0 0.0
    %4019 = vmatprep.subr.mxu0 0.0
    %4020 = vmatpush2.msra.mxu0 0.0
    %4021 = vmatprep.subr.mxu0 0.0
    %4022 = vmatpush2.msra.mxu0 0.0
    %4023 = vmatprep.subr.mxu0 0.0
    %4024 = vmatpush2.msra.mxu0 0.0
    %4025 = vmatprep.subr.mxu0 0.0
    %4026 = vmatpush2.msra.mxu0 0.0
    %4027 = vmatprep.subr.mxu0 0.0
    %4028 = vmatpush2.msra.mxu0 0.0
    %4029 = vmatprep.mubr.f32.mxu0 0.0
    %4030 = vmatmul.mubr.f32.gmra.mxu0 %v3963
    %v4031 = vpop.f32.mrf.mxu0
    %v4032 = vadd.f32 0.0, %v4031
    %v4033 = vpop.f32.mrf.mxu0
    %4034 = vdwg.mxu0
    %v4035 = vadd.f32 %v3961, %v4032
    %v4037 = vsel %vm2779, %v2747, 0
    %4039 = vmatprep.subr.mxu0 0.0
    %4040 = vmatpush1.msra.mxu0 0.0
    %4041 = vmatprep.subr.mxu0 0.0
    %4042 = vmatpush1.msra.mxu0 0.0
    %4043 = vmatprep.subr.mxu0 0.0
    %4044 = vmatpush1.msra.mxu0 0.0
    %4045 = vmatprep.subr.mxu0 0.0
    %4046 = vmatpush1.msra.mxu0 0.0
    %4047 = vmatprep.subr.mxu0 0.0
    %4048 = vmatpush1.msra.mxu0 0.0
    %4049 = vmatprep.subr.mxu0 0.0
    %4050 = vmatpush1.msra.mxu0 0.0
    %4051 = vmatprep.subr.mxu0 0.0
    %4052 = vmatpush1.msra.mxu0 0.0
    %4053 = vmatprep.subr.mxu0 0.0
    %4054 = vmatpush1.msra.mxu0 0.0
    %4055 = vmatprep.subr.mxu0 0.0
    %4056 = vmatpush1.msra.mxu0 %v306
    %4057 = vmatprep.subr.mxu0 0.0
    %4058 = vmatpush1.msra.mxu0 %v305
    %4059 = vmatprep.subr.mxu0 0.0
    %4060 = vmatpush1.msra.mxu0 %v304
    %4061 = vmatprep.subr.mxu0 0.0
    %4062 = vmatpush1.msra.mxu0 %v303
    %4063 = vmatprep.subr.mxu0 0.0
    %4064 = vmatpush1.msra.mxu0 %v302
    %4065 = vmatprep.subr.mxu0 0.0
    %4066 = vmatpush1.msra.mxu0 %v301
    %4067 = vmatprep.subr.mxu0 0.0
    %4068 = vmatpush1.msra.mxu0 %v300
    %4069 = vmatprep.subr.mxu0 0.0
    %4070 = vmatpush1.msra.mxu0 %v299
    %4071 = vmatprep.subr.mxu0 0.0
    %4072 = vmatpush2.msra.mxu0 0.0
    %4073 = vmatprep.subr.mxu0 0.0
    %4074 = vmatpush2.msra.mxu0 0.0
    %4075 = vmatprep.subr.mxu0 0.0
    %4076 = vmatpush2.msra.mxu0 0.0
    %4077 = vmatprep.subr.mxu0 0.0
    %4078 = vmatpush2.msra.mxu0 0.0
    %4079 = vmatprep.subr.mxu0 0.0
    %4080 = vmatpush2.msra.mxu0 0.0
    %4081 = vmatprep.subr.mxu0 0.0
    %4082 = vmatpush2.msra.mxu0 0.0
    %4083 = vmatprep.subr.mxu0 0.0
    %4084 = vmatpush2.msra.mxu0 0.0
    %4085 = vmatprep.subr.mxu0 0.0
    %4086 = vmatpush2.msra.mxu0 0.0
    %4087 = vmatprep.subr.mxu0 0.0
    %4088 = vmatpush2.msra.mxu0 0.0
    %4089 = vmatprep.subr.mxu0 0.0
    %4090 = vmatpush2.msra.mxu0 0.0
    %4091 = vmatprep.subr.mxu0 0.0
    %4092 = vmatpush2.msra.mxu0 0.0
    %4093 = vmatprep.subr.mxu0 0.0
    %4094 = vmatpush2.msra.mxu0 0.0
    %4095 = vmatprep.subr.mxu0 0.0
    %4096 = vmatpush2.msra.mxu0 0.0
    %4097 = vmatprep.subr.mxu0 0.0
    %4098 = vmatpush2.msra.mxu0 0.0
    %4099 = vmatprep.subr.mxu0 0.0
    %4100 = vmatpush2.msra.mxu0 0.0
    %4101 = vmatprep.subr.mxu0 0.0
    %4102 = vmatpush2.msra.mxu0 0.0
    %4103 = vmatprep.mubr.f32.mxu0 0.0
    %4104 = vmatmul.mubr.f32.gmra.mxu0 %v4037
    %v4105 = vpop.f32.mrf.mxu0
    %v4106 = vadd.f32 0.0, %v4105
    %v4107 = vpop.f32.mrf.mxu0
    %4108 = vdwg.mxu0
    %v4109 = vadd.f32 %v4035, %v4106
    %v4111 = vsel %vm2779, %v2748, 0
    %4113 = vmatprep.subr.mxu0 0.0
    %4114 = vmatpush1.msra.mxu0 0.0
    %4115 = vmatprep.subr.mxu0 0.0
    %4116 = vmatpush1.msra.mxu0 0.0
    %4117 = vmatprep.subr.mxu0 0.0
    %4118 = vmatpush1.msra.mxu0 0.0
    %4119 = vmatprep.subr.mxu0 0.0
    %4120 = vmatpush1.msra.mxu0 0.0
    %4121 = vmatprep.subr.mxu0 0.0
    %4122 = vmatpush1.msra.mxu0 0.0
    %4123 = vmatprep.subr.mxu0 0.0
    %4124 = vmatpush1.msra.mxu0 0.0
    %4125 = vmatprep.subr.mxu0 0.0
    %4126 = vmatpush1.msra.mxu0 0.0
    %4127 = vmatprep.subr.mxu0 0.0
    %4128 = vmatpush1.msra.mxu0 0.0
    %4129 = vmatprep.subr.mxu0 0.0
    %4130 = vmatpush1.msra.mxu0 %v314
    %4131 = vmatprep.subr.mxu0 0.0
    %4132 = vmatpush1.msra.mxu0 %v313
    %4133 = vmatprep.subr.mxu0 0.0
    %4134 = vmatpush1.msra.mxu0 %v312
    %4135 = vmatprep.subr.mxu0 0.0
    %4136 = vmatpush1.msra.mxu0 %v311
    %4137 = vmatprep.subr.mxu0 0.0
    %4138 = vmatpush1.msra.mxu0 %v310
    %4139 = vmatprep.subr.mxu0 0.0
    %4140 = vmatpush1.msra.mxu0 %v309
    %4141 = vmatprep.subr.mxu0 0.0
    %4142 = vmatpush1.msra.mxu0 %v308
    %4143 = vmatprep.subr.mxu0 0.0
    %4144 = vmatpush1.msra.mxu0 %v307
    %4145 = vmatprep.subr.mxu0 0.0
    %4146 = vmatpush2.msra.mxu0 0.0
    %4147 = vmatprep.subr.mxu0 0.0
    %4148 = vmatpush2.msra.mxu0 0.0
    %4149 = vmatprep.subr.mxu0 0.0
    %4150 = vmatpush2.msra.mxu0 0.0
    %4151 = vmatprep.subr.mxu0 0.0
    %4152 = vmatpush2.msra.mxu0 0.0
    %4153 = vmatprep.subr.mxu0 0.0
    %4154 = vmatpush2.msra.mxu0 0.0
    %4155 = vmatprep.subr.mxu0 0.0
    %4156 = vmatpush2.msra.mxu0 0.0
    %4157 = vmatprep.subr.mxu0 0.0
    %4158 = vmatpush2.msra.mxu0 0.0
    %4159 = vmatprep.subr.mxu0 0.0
    %4160 = vmatpush2.msra.mxu0 0.0
    %4161 = vmatprep.subr.mxu0 0.0
    %4162 = vmatpush2.msra.mxu0 0.0
    %4163 = vmatprep.subr.mxu0 0.0
    %4164 = vmatpush2.msra.mxu0 0.0
    %4165 = vmatprep.subr.mxu0 0.0
    %4166 = vmatpush2.msra.mxu0 0.0
    %4167 = vmatprep.subr.mxu0 0.0
    %4168 = vmatpush2.msra.mxu0 0.0
    %4169 = vmatprep.subr.mxu0 0.0
    %4170 = vmatpush2.msra.mxu0 0.0
    %4171 = vmatprep.subr.mxu0 0.0
    %4172 = vmatpush2.msra.mxu0 0.0
    %4173 = vmatprep.subr.mxu0 0.0
    %4174 = vmatpush2.msra.mxu0 0.0
    %4175 = vmatprep.subr.mxu0 0.0
    %4176 = vmatpush2.msra.mxu0 0.0
    %4177 = vmatprep.mubr.f32.mxu0 0.0
    %4178 = vmatmul.mubr.f32.gmra.mxu0 %v4111
    %v4179 = vpop.f32.mrf.mxu0
    %v4180 = vadd.f32 0.0, %v4179
    %v4181 = vpop.f32.mrf.mxu0
    %4182 = vdwg.mxu0
    %v4183 = vadd.f32 %v4109, %v4180
    %v4185 = vsel %vm2779, %v2749, 0
    %4187 = vmatprep.subr.mxu0 0.0
    %4188 = vmatpush1.msra.mxu0 0.0
    %4189 = vmatprep.subr.mxu0 0.0
    %4190 = vmatpush1.msra.mxu0 0.0
    %4191 = vmatprep.subr.mxu0 0.0
    %4192 = vmatpush1.msra.mxu0 0.0
    %4193 = vmatprep.subr.mxu0 0.0
    %4194 = vmatpush1.msra.mxu0 0.0
    %4195 = vmatprep.subr.mxu0 0.0
    %4196 = vmatpush1.msra.mxu0 0.0
    %4197 = vmatprep.subr.mxu0 0.0
    %4198 = vmatpush1.msra.mxu0 0.0
    %4199 = vmatprep.subr.mxu0 0.0
    %4200 = vmatpush1.msra.mxu0 0.0
    %4201 = vmatprep.subr.mxu0 0.0
    %4202 = vmatpush1.msra.mxu0 0.0
    %4203 = vmatprep.subr.mxu0 0.0
    %4204 = vmatpush1.msra.mxu0 %v322
    %4205 = vmatprep.subr.mxu0 0.0
    %4206 = vmatpush1.msra.mxu0 %v321
    %4207 = vmatprep.subr.mxu0 0.0
    %4208 = vmatpush1.msra.mxu0 %v320
    %4209 = vmatprep.subr.mxu0 0.0
    %4210 = vmatpush1.msra.mxu0 %v319
    %4211 = vmatprep.subr.mxu0 0.0
    %4212 = vmatpush1.msra.mxu0 %v318
    %4213 = vmatprep.subr.mxu0 0.0
    %4214 = vmatpush1.msra.mxu0 %v317
    %4215 = vmatprep.subr.mxu0 0.0
    %4216 = vmatpush1.msra.mxu0 %v316
    %4217 = vmatprep.subr.mxu0 0.0
    %4218 = vmatpush1.msra.mxu0 %v315
    %4219 = vmatprep.subr.mxu0 0.0
    %4220 = vmatpush2.msra.mxu0 0.0
    %4221 = vmatprep.subr.mxu0 0.0
    %4222 = vmatpush2.msra.mxu0 0.0
    %4223 = vmatprep.subr.mxu0 0.0
    %4224 = vmatpush2.msra.mxu0 0.0
    %4225 = vmatprep.subr.mxu0 0.0
    %4226 = vmatpush2.msra.mxu0 0.0
    %4227 = vmatprep.subr.mxu0 0.0
    %4228 = vmatpush2.msra.mxu0 0.0
    %4229 = vmatprep.subr.mxu0 0.0
    %4230 = vmatpush2.msra.mxu0 0.0
    %4231 = vmatprep.subr.mxu0 0.0
    %4232 = vmatpush2.msra.mxu0 0.0
    %4233 = vmatprep.subr.mxu0 0.0
    %4234 = vmatpush2.msra.mxu0 0.0
    %4235 = vmatprep.subr.mxu0 0.0
    %4236 = vmatpush2.msra.mxu0 0.0
    %4237 = vmatprep.subr.mxu0 0.0
    %4238 = vmatpush2.msra.mxu0 0.0
    %4239 = vmatprep.subr.mxu0 0.0
    %4240 = vmatpush2.msra.mxu0 0.0
    %4241 = vmatprep.subr.mxu0 0.0
    %4242 = vmatpush2.msra.mxu0 0.0
    %4243 = vmatprep.subr.mxu0 0.0
    %4244 = vmatpush2.msra.mxu0 0.0
    %4245 = vmatprep.subr.mxu0 0.0
    %4246 = vmatpush2.msra.mxu0 0.0
    %4247 = vmatprep.subr.mxu0 0.0
    %4248 = vmatpush2.msra.mxu0 0.0
    %4249 = vmatprep.subr.mxu0 0.0
    %4250 = vmatpush2.msra.mxu0 0.0
    %4251 = vmatprep.mubr.f32.mxu0 0.0
    %4252 = vmatmul.mubr.f32.gmra.mxu0 %v4185
    %v4253 = vpop.f32.mrf.mxu0
    %v4254 = vadd.f32 0.0, %v4253
    %v4255 = vpop.f32.mrf.mxu0
    %4256 = vdwg.mxu0
    %v4257 = vadd.f32 %v4183, %v4254
    %v4259 = vsel %vm2779, %v2750, 0
    %4261 = vmatprep.subr.mxu0 0.0
    %4262 = vmatpush1.msra.mxu0 0.0
    %4263 = vmatprep.subr.mxu0 0.0
    %4264 = vmatpush1.msra.mxu0 0.0
    %4265 = vmatprep.subr.mxu0 0.0
    %4266 = vmatpush1.msra.mxu0 0.0
    %4267 = vmatprep.subr.mxu0 0.0
    %4268 = vmatpush1.msra.mxu0 0.0
    %4269 = vmatprep.subr.mxu0 0.0
    %4270 = vmatpush1.msra.mxu0 0.0
    %4271 = vmatprep.subr.mxu0 0.0
    %4272 = vmatpush1.msra.mxu0 0.0
    %4273 = vmatprep.subr.mxu0 0.0
    %4274 = vmatpush1.msra.mxu0 0.0
    %4275 = vmatprep.subr.mxu0 0.0
    %4276 = vmatpush1.msra.mxu0 0.0
    %4277 = vmatprep.subr.mxu0 0.0
    %4278 = vmatpush1.msra.mxu0 %v330
    %4279 = vmatprep.subr.mxu0 0.0
    %4280 = vmatpush1.msra.mxu0 %v329
    %4281 = vmatprep.subr.mxu0 0.0
    %4282 = vmatpush1.msra.mxu0 %v328
    %4283 = vmatprep.subr.mxu0 0.0
    %4284 = vmatpush1.msra.mxu0 %v327
    %4285 = vmatprep.subr.mxu0 0.0
    %4286 = vmatpush1.msra.mxu0 %v326
    %4287 = vmatprep.subr.mxu0 0.0
    %4288 = vmatpush1.msra.mxu0 %v325
    %4289 = vmatprep.subr.mxu0 0.0
    %4290 = vmatpush1.msra.mxu0 %v324
    %4291 = vmatprep.subr.mxu0 0.0
    %4292 = vmatpush1.msra.mxu0 %v323
    %4293 = vmatprep.subr.mxu0 0.0
    %4294 = vmatpush2.msra.mxu0 0.0
    %4295 = vmatprep.subr.mxu0 0.0
    %4296 = vmatpush2.msra.mxu0 0.0
    %4297 = vmatprep.subr.mxu0 0.0
    %4298 = vmatpush2.msra.mxu0 0.0
    %4299 = vmatprep.subr.mxu0 0.0
    %4300 = vmatpush2.msra.mxu0 0.0
    %4301 = vmatprep.subr.mxu0 0.0
    %4302 = vmatpush2.msra.mxu0 0.0
    %4303 = vmatprep.subr.mxu0 0.0
    %4304 = vmatpush2.msra.mxu0 0.0
    %4305 = vmatprep.subr.mxu0 0.0
    %4306 = vmatpush2.msra.mxu0 0.0
    %4307 = vmatprep.subr.mxu0 0.0
    %4308 = vmatpush2.msra.mxu0 0.0
    %4309 = vmatprep.subr.mxu0 0.0
    %4310 = vmatpush2.msra.mxu0 0.0
    %4311 = vmatprep.subr.mxu0 0.0
    %4312 = vmatpush2.msra.mxu0 0.0
    %4313 = vmatprep.subr.mxu0 0.0
    %4314 = vmatpush2.msra.mxu0 0.0
    %4315 = vmatprep.subr.mxu0 0.0
    %4316 = vmatpush2.msra.mxu0 0.0
    %4317 = vmatprep.subr.mxu0 0.0
    %4318 = vmatpush2.msra.mxu0 0.0
    %4319 = vmatprep.subr.mxu0 0.0
    %4320 = vmatpush2.msra.mxu0 0.0
    %4321 = vmatprep.subr.mxu0 0.0
    %4322 = vmatpush2.msra.mxu0 0.0
    %4323 = vmatprep.subr.mxu0 0.0
    %4324 = vmatpush2.msra.mxu0 0.0
    %4325 = vmatprep.mubr.f32.mxu0 0.0
    %4326 = vmatmul.mubr.f32.gmra.mxu0 %v4259
    %v4327 = vpop.f32.mrf.mxu0
    %v4328 = vadd.f32 0.0, %v4327
    %v4329 = vpop.f32.mrf.mxu0
    %4330 = vdwg.mxu0
    %v4331 = vadd.f32 %v4257, %v4328
    %v4333 = vsel %vm2779, %v2751, 0
    %4335 = vmatprep.subr.mxu0 0.0
    %4336 = vmatpush1.msra.mxu0 0.0
    %4337 = vmatprep.subr.mxu0 0.0
    %4338 = vmatpush1.msra.mxu0 0.0
    %4339 = vmatprep.subr.mxu0 0.0
    %4340 = vmatpush1.msra.mxu0 0.0
    %4341 = vmatprep.subr.mxu0 0.0
    %4342 = vmatpush1.msra.mxu0 0.0
    %4343 = vmatprep.subr.mxu0 0.0
    %4344 = vmatpush1.msra.mxu0 0.0
    %4345 = vmatprep.subr.mxu0 0.0
    %4346 = vmatpush1.msra.mxu0 0.0
    %4347 = vmatprep.subr.mxu0 0.0
    %4348 = vmatpush1.msra.mxu0 0.0
    %4349 = vmatprep.subr.mxu0 0.0
    %4350 = vmatpush1.msra.mxu0 0.0
    %4351 = vmatprep.subr.mxu0 0.0
    %4352 = vmatpush1.msra.mxu0 %v338
    %4353 = vmatprep.subr.mxu0 0.0
    %4354 = vmatpush1.msra.mxu0 %v337
    %4355 = vmatprep.subr.mxu0 0.0
    %4356 = vmatpush1.msra.mxu0 %v336
    %4357 = vmatprep.subr.mxu0 0.0
    %4358 = vmatpush1.msra.mxu0 %v335
    %4359 = vmatprep.subr.mxu0 0.0
    %4360 = vmatpush1.msra.mxu0 %v334
    %4361 = vmatprep.subr.mxu0 0.0
    %4362 = vmatpush1.msra.mxu0 %v333
    %4363 = vmatprep.subr.mxu0 0.0
    %4364 = vmatpush1.msra.mxu0 %v332
    %4365 = vmatprep.subr.mxu0 0.0
    %4366 = vmatpush1.msra.mxu0 %v331
    %4367 = vmatprep.subr.mxu0 0.0
    %4368 = vmatpush2.msra.mxu0 0.0
    %4369 = vmatprep.subr.mxu0 0.0
    %4370 = vmatpush2.msra.mxu0 0.0
    %4371 = vmatprep.subr.mxu0 0.0
    %4372 = vmatpush2.msra.mxu0 0.0
    %4373 = vmatprep.subr.mxu0 0.0
    %4374 = vmatpush2.msra.mxu0 0.0
    %4375 = vmatprep.subr.mxu0 0.0
    %4376 = vmatpush2.msra.mxu0 0.0
    %4377 = vmatprep.subr.mxu0 0.0
    %4378 = vmatpush2.msra.mxu0 0.0
    %4379 = vmatprep.subr.mxu0 0.0
    %4380 = vmatpush2.msra.mxu0 0.0
    %4381 = vmatprep.subr.mxu0 0.0
    %4382 = vmatpush2.msra.mxu0 0.0
    %4383 = vmatprep.subr.mxu0 0.0
    %4384 = vmatpush2.msra.mxu0 0.0
    %4385 = vmatprep.subr.mxu0 0.0
    %4386 = vmatpush2.msra.mxu0 0.0
    %4387 = vmatprep.subr.mxu0 0.0
    %4388 = vmatpush2.msra.mxu0 0.0
    %4389 = vmatprep.subr.mxu0 0.0
    %4390 = vmatpush2.msra.mxu0 0.0
    %4391 = vmatprep.subr.mxu0 0.0
    %4392 = vmatpush2.msra.mxu0 0.0
    %4393 = vmatprep.subr.mxu0 0.0
    %4394 = vmatpush2.msra.mxu0 0.0
    %4395 = vmatprep.subr.mxu0 0.0
    %4396 = vmatpush2.msra.mxu0 0.0
    %4397 = vmatprep.subr.mxu0 0.0
    %4398 = vmatpush2.msra.mxu0 0.0
    %4399 = vmatprep.mubr.f32.mxu0 0.0
    %4400 = vmatmul.mubr.f32.gmra.mxu0 %v4333
    %v4401 = vpop.f32.mrf.mxu0
    %v4402 = vadd.f32 0.0, %v4401
    %v4403 = vpop.f32.mrf.mxu0
    %4404 = vdwg.mxu0
    %v4405 = vadd.f32 %v4331, %v4402
    %v4407 = vsel %vm2779, %v2752, 0
    %4409 = vmatprep.subr.mxu0 0.0
    %4410 = vmatpush1.msra.mxu0 0.0
    %4411 = vmatprep.subr.mxu0 0.0
    %4412 = vmatpush1.msra.mxu0 0.0
    %4413 = vmatprep.subr.mxu0 0.0
    %4414 = vmatpush1.msra.mxu0 0.0
    %4415 = vmatprep.subr.mxu0 0.0
    %4416 = vmatpush1.msra.mxu0 0.0
    %4417 = vmatprep.subr.mxu0 0.0
    %4418 = vmatpush1.msra.mxu0 0.0
    %4419 = vmatprep.subr.mxu0 0.0
    %4420 = vmatpush1.msra.mxu0 0.0
    %4421 = vmatprep.subr.mxu0 0.0
    %4422 = vmatpush1.msra.mxu0 0.0
    %4423 = vmatprep.subr.mxu0 0.0
    %4424 = vmatpush1.msra.mxu0 0.0
    %4425 = vmatprep.subr.mxu0 0.0
    %4426 = vmatpush1.msra.mxu0 %v346
    %4427 = vmatprep.subr.mxu0 0.0
    %4428 = vmatpush1.msra.mxu0 %v345
    %4429 = vmatprep.subr.mxu0 0.0
    %4430 = vmatpush1.msra.mxu0 %v344
    %4431 = vmatprep.subr.mxu0 0.0
    %4432 = vmatpush1.msra.mxu0 %v343
    %4433 = vmatprep.subr.mxu0 0.0
    %4434 = vmatpush1.msra.mxu0 %v342
    %4435 = vmatprep.subr.mxu0 0.0
    %4436 = vmatpush1.msra.mxu0 %v341
    %4437 = vmatprep.subr.mxu0 0.0
    %4438 = vmatpush1.msra.mxu0 %v340
    %4439 = vmatprep.subr.mxu0 0.0
    %4440 = vmatpush1.msra.mxu0 %v339
    %4441 = vmatprep.subr.mxu0 0.0
    %4442 = vmatpush2.msra.mxu0 0.0
    %4443 = vmatprep.subr.mxu0 0.0
    %4444 = vmatpush2.msra.mxu0 0.0
    %4445 = vmatprep.subr.mxu0 0.0
    %4446 = vmatpush2.msra.mxu0 0.0
    %4447 = vmatprep.subr.mxu0 0.0
    %4448 = vmatpush2.msra.mxu0 0.0
    %4449 = vmatprep.subr.mxu0 0.0
    %4450 = vmatpush2.msra.mxu0 0.0
    %4451 = vmatprep.subr.mxu0 0.0
    %4452 = vmatpush2.msra.mxu0 0.0
    %4453 = vmatprep.subr.mxu0 0.0
    %4454 = vmatpush2.msra.mxu0 0.0
    %4455 = vmatprep.subr.mxu0 0.0
    %4456 = vmatpush2.msra.mxu0 0.0
    %4457 = vmatprep.subr.mxu0 0.0
    %4458 = vmatpush2.msra.mxu0 0.0
    %4459 = vmatprep.subr.mxu0 0.0
    %4460 = vmatpush2.msra.mxu0 0.0
    %4461 = vmatprep.subr.mxu0 0.0
    %4462 = vmatpush2.msra.mxu0 0.0
    %4463 = vmatprep.subr.mxu0 0.0
    %4464 = vmatpush2.msra.mxu0 0.0
    %4465 = vmatprep.subr.mxu0 0.0
    %4466 = vmatpush2.msra.mxu0 0.0
    %4467 = vmatprep.subr.mxu0 0.0
    %4468 = vmatpush2.msra.mxu0 0.0
    %4469 = vmatprep.subr.mxu0 0.0
    %4470 = vmatpush2.msra.mxu0 0.0
    %4471 = vmatprep.subr.mxu0 0.0
    %4472 = vmatpush2.msra.mxu0 0.0
    %4473 = vmatprep.mubr.f32.mxu0 0.0
    %4474 = vmatmul.mubr.f32.gmra.mxu0 %v4407
    %v4475 = vpop.f32.mrf.mxu0
    %v4476 = vadd.f32 0.0, %v4475
    %v4477 = vpop.f32.mrf.mxu0
    %4478 = vdwg.mxu0
    %v4479 = vadd.f32 %v4405, %v4476
    %v4481 = vsel %vm2779, %v2753, 0
    %4483 = vmatprep.subr.mxu0 0.0
    %4484 = vmatpush1.msra.mxu0 0.0
    %4485 = vmatprep.subr.mxu0 0.0
    %4486 = vmatpush1.msra.mxu0 0.0
    %4487 = vmatprep.subr.mxu0 0.0
    %4488 = vmatpush1.msra.mxu0 0.0
    %4489 = vmatprep.subr.mxu0 0.0
    %4490 = vmatpush1.msra.mxu0 0.0
    %4491 = vmatprep.subr.mxu0 0.0
    %4492 = vmatpush1.msra.mxu0 0.0
    %4493 = vmatprep.subr.mxu0 0.0
    %4494 = vmatpush1.msra.mxu0 0.0
    %4495 = vmatprep.subr.mxu0 0.0
    %4496 = vmatpush1.msra.mxu0 0.0
    %4497 = vmatprep.subr.mxu0 0.0
    %4498 = vmatpush1.msra.mxu0 0.0
    %4499 = vmatprep.subr.mxu0 0.0
    %4500 = vmatpush1.msra.mxu0 %v354
    %4501 = vmatprep.subr.mxu0 0.0
    %4502 = vmatpush1.msra.mxu0 %v353
    %4503 = vmatprep.subr.mxu0 0.0
    %4504 = vmatpush1.msra.mxu0 %v352
    %4505 = vmatprep.subr.mxu0 0.0
    %4506 = vmatpush1.msra.mxu0 %v351
    %4507 = vmatprep.subr.mxu0 0.0
    %4508 = vmatpush1.msra.mxu0 %v350
    %4509 = vmatprep.subr.mxu0 0.0
    %4510 = vmatpush1.msra.mxu0 %v349
    %4511 = vmatprep.subr.mxu0 0.0
    %4512 = vmatpush1.msra.mxu0 %v348
    %4513 = vmatprep.subr.mxu0 0.0
    %4514 = vmatpush1.msra.mxu0 %v347
    %4515 = vmatprep.subr.mxu0 0.0
    %4516 = vmatpush2.msra.mxu0 0.0
    %4517 = vmatprep.subr.mxu0 0.0
    %4518 = vmatpush2.msra.mxu0 0.0
    %4519 = vmatprep.subr.mxu0 0.0
    %4520 = vmatpush2.msra.mxu0 0.0
    %4521 = vmatprep.subr.mxu0 0.0
    %4522 = vmatpush2.msra.mxu0 0.0
    %4523 = vmatprep.subr.mxu0 0.0
    %4524 = vmatpush2.msra.mxu0 0.0
    %4525 = vmatprep.subr.mxu0 0.0
    %4526 = vmatpush2.msra.mxu0 0.0
    %4527 = vmatprep.subr.mxu0 0.0
    %4528 = vmatpush2.msra.mxu0 0.0
    %4529 = vmatprep.subr.mxu0 0.0
    %4530 = vmatpush2.msra.mxu0 0.0
    %4531 = vmatprep.subr.mxu0 0.0
    %4532 = vmatpush2.msra.mxu0 0.0
    %4533 = vmatprep.subr.mxu0 0.0
    %4534 = vmatpush2.msra.mxu0 0.0
    %4535 = vmatprep.subr.mxu0 0.0
    %4536 = vmatpush2.msra.mxu0 0.0
    %4537 = vmatprep.subr.mxu0 0.0
    %4538 = vmatpush2.msra.mxu0 0.0
    %4539 = vmatprep.subr.mxu0 0.0
    %4540 = vmatpush2.msra.mxu0 0.0
    %4541 = vmatprep.subr.mxu0 0.0
    %4542 = vmatpush2.msra.mxu0 0.0
    %4543 = vmatprep.subr.mxu0 0.0
    %4544 = vmatpush2.msra.mxu0 0.0
    %4545 = vmatprep.subr.mxu0 0.0
    %4546 = vmatpush2.msra.mxu0 0.0
    %4547 = vmatprep.mubr.f32.mxu0 0.0
    %4548 = vmatmul.mubr.f32.gmra.mxu0 %v4481
    %v4549 = vpop.f32.mrf.mxu0
    %v4550 = vadd.f32 0.0, %v4549
    %v4551 = vpop.f32.mrf.mxu0
    %4552 = vdwg.mxu0
    %v4553 = vadd.f32 %v4479, %v4550
    %v4555 = vsel %vm2779, %v2754, 0
    %4557 = vmatprep.subr.mxu0 0.0
    %4558 = vmatpush1.msra.mxu0 0.0
    %4559 = vmatprep.subr.mxu0 0.0
    %4560 = vmatpush1.msra.mxu0 0.0
    %4561 = vmatprep.subr.mxu0 0.0
    %4562 = vmatpush1.msra.mxu0 0.0
    %4563 = vmatprep.subr.mxu0 0.0
    %4564 = vmatpush1.msra.mxu0 0.0
    %4565 = vmatprep.subr.mxu0 0.0
    %4566 = vmatpush1.msra.mxu0 0.0
    %4567 = vmatprep.subr.mxu0 0.0
    %4568 = vmatpush1.msra.mxu0 0.0
    %4569 = vmatprep.subr.mxu0 0.0
    %4570 = vmatpush1.msra.mxu0 0.0
    %4571 = vmatprep.subr.mxu0 0.0
    %4572 = vmatpush1.msra.mxu0 0.0
    %4573 = vmatprep.subr.mxu0 0.0
    %4574 = vmatpush1.msra.mxu0 %v362
    %4575 = vmatprep.subr.mxu0 0.0
    %4576 = vmatpush1.msra.mxu0 %v361
    %4577 = vmatprep.subr.mxu0 0.0
    %4578 = vmatpush1.msra.mxu0 %v360
    %4579 = vmatprep.subr.mxu0 0.0
    %4580 = vmatpush1.msra.mxu0 %v359
    %4581 = vmatprep.subr.mxu0 0.0
    %4582 = vmatpush1.msra.mxu0 %v358
    %4583 = vmatprep.subr.mxu0 0.0
    %4584 = vmatpush1.msra.mxu0 %v357
    %4585 = vmatprep.subr.mxu0 0.0
    %4586 = vmatpush1.msra.mxu0 %v356
    %4587 = vmatprep.subr.mxu0 0.0
    %4588 = vmatpush1.msra.mxu0 %v355
    %4589 = vmatprep.subr.mxu0 0.0
    %4590 = vmatpush2.msra.mxu0 0.0
    %4591 = vmatprep.subr.mxu0 0.0
    %4592 = vmatpush2.msra.mxu0 0.0
    %4593 = vmatprep.subr.mxu0 0.0
    %4594 = vmatpush2.msra.mxu0 0.0
    %4595 = vmatprep.subr.mxu0 0.0
    %4596 = vmatpush2.msra.mxu0 0.0
    %4597 = vmatprep.subr.mxu0 0.0
    %4598 = vmatpush2.msra.mxu0 0.0
    %4599 = vmatprep.subr.mxu0 0.0
    %4600 = vmatpush2.msra.mxu0 0.0
    %4601 = vmatprep.subr.mxu0 0.0
    %4602 = vmatpush2.msra.mxu0 0.0
    %4603 = vmatprep.subr.mxu0 0.0
    %4604 = vmatpush2.msra.mxu0 0.0
    %4605 = vmatprep.subr.mxu0 0.0
    %4606 = vmatpush2.msra.mxu0 0.0
    %4607 = vmatprep.subr.mxu0 0.0
    %4608 = vmatpush2.msra.mxu0 0.0
    %4609 = vmatprep.subr.mxu0 0.0
    %4610 = vmatpush2.msra.mxu0 0.0
    %4611 = vmatprep.subr.mxu0 0.0
    %4612 = vmatpush2.msra.mxu0 0.0
    %4613 = vmatprep.subr.mxu0 0.0
    %4614 = vmatpush2.msra.mxu0 0.0
    %4615 = vmatprep.subr.mxu0 0.0
    %4616 = vmatpush2.msra.mxu0 0.0
    %4617 = vmatprep.subr.mxu0 0.0
    %4618 = vmatpush2.msra.mxu0 0.0
    %4619 = vmatprep.subr.mxu0 0.0
    %4620 = vmatpush2.msra.mxu0 0.0
    %4621 = vmatprep.mubr.f32.mxu0 0.0
    %4622 = vmatmul.mubr.f32.gmra.mxu0 %v4555
    %v4623 = vpop.f32.mrf.mxu0
    %v4624 = vadd.f32 0.0, %v4623
    %v4625 = vpop.f32.mrf.mxu0
    %4626 = vdwg.mxu0
    %v4627 = vadd.f32 %v4553, %v4624
    %v4629 = vsel %vm2779, %v2755, 0
    %4631 = vmatprep.subr.mxu0 0.0
    %4632 = vmatpush1.msra.mxu0 0.0
    %4633 = vmatprep.subr.mxu0 0.0
    %4634 = vmatpush1.msra.mxu0 0.0
    %4635 = vmatprep.subr.mxu0 0.0
    %4636 = vmatpush1.msra.mxu0 0.0
    %4637 = vmatprep.subr.mxu0 0.0
    %4638 = vmatpush1.msra.mxu0 0.0
    %4639 = vmatprep.subr.mxu0 0.0
    %4640 = vmatpush1.msra.mxu0 0.0
    %4641 = vmatprep.subr.mxu0 0.0
    %4642 = vmatpush1.msra.mxu0 0.0
    %4643 = vmatprep.subr.mxu0 0.0
    %4644 = vmatpush1.msra.mxu0 0.0
    %4645 = vmatprep.subr.mxu0 0.0
    %4646 = vmatpush1.msra.mxu0 0.0
    %4647 = vmatprep.subr.mxu0 0.0
    %4648 = vmatpush1.msra.mxu0 %v370
    %4649 = vmatprep.subr.mxu0 0.0
    %4650 = vmatpush1.msra.mxu0 %v369
    %4651 = vmatprep.subr.mxu0 0.0
    %4652 = vmatpush1.msra.mxu0 %v368
    %4653 = vmatprep.subr.mxu0 0.0
    %4654 = vmatpush1.msra.mxu0 %v367
    %4655 = vmatprep.subr.mxu0 0.0
    %4656 = vmatpush1.msra.mxu0 %v366
    %4657 = vmatprep.subr.mxu0 0.0
    %4658 = vmatpush1.msra.mxu0 %v365
    %4659 = vmatprep.subr.mxu0 0.0
    %4660 = vmatpush1.msra.mxu0 %v364
    %4661 = vmatprep.subr.mxu0 0.0
    %4662 = vmatpush1.msra.mxu0 %v363
    %4663 = vmatprep.subr.mxu0 0.0
    %4664 = vmatpush2.msra.mxu0 0.0
    %4665 = vmatprep.subr.mxu0 0.0
    %4666 = vmatpush2.msra.mxu0 0.0
    %4667 = vmatprep.subr.mxu0 0.0
    %4668 = vmatpush2.msra.mxu0 0.0
    %4669 = vmatprep.subr.mxu0 0.0
    %4670 = vmatpush2.msra.mxu0 0.0
    %4671 = vmatprep.subr.mxu0 0.0
    %4672 = vmatpush2.msra.mxu0 0.0
    %4673 = vmatprep.subr.mxu0 0.0
    %4674 = vmatpush2.msra.mxu0 0.0
    %4675 = vmatprep.subr.mxu0 0.0
    %4676 = vmatpush2.msra.mxu0 0.0
    %4677 = vmatprep.subr.mxu0 0.0
    %4678 = vmatpush2.msra.mxu0 0.0
    %4679 = vmatprep.subr.mxu0 0.0
    %4680 = vmatpush2.msra.mxu0 0.0
    %4681 = vmatprep.subr.mxu0 0.0
    %4682 = vmatpush2.msra.mxu0 0.0
    %4683 = vmatprep.subr.mxu0 0.0
    %4684 = vmatpush2.msra.mxu0 0.0
    %4685 = vmatprep.subr.mxu0 0.0
    %4686 = vmatpush2.msra.mxu0 0.0
    %4687 = vmatprep.subr.mxu0 0.0
    %4688 = vmatpush2.msra.mxu0 0.0
    %4689 = vmatprep.subr.mxu0 0.0
    %4690 = vmatpush2.msra.mxu0 0.0
    %4691 = vmatprep.subr.mxu0 0.0
    %4692 = vmatpush2.msra.mxu0 0.0
    %4693 = vmatprep.subr.mxu0 0.0
    %4694 = vmatpush2.msra.mxu0 0.0
    %4695 = vmatprep.mubr.f32.mxu0 0.0
    %4696 = vmatmul.mubr.f32.gmra.mxu0 %v4629
    %v4697 = vpop.f32.mrf.mxu0
    %v4698 = vadd.f32 0.0, %v4697
    %v4699 = vpop.f32.mrf.mxu0
    %4700 = vdwg.mxu0
    %v4701 = vadd.f32 %v4627, %v4698
    %v4703 = vsel %vm2779, %v2756, 0
    %4705 = vmatprep.subr.mxu0 0.0
    %4706 = vmatpush1.msra.mxu0 0.0
    %4707 = vmatprep.subr.mxu0 0.0
    %4708 = vmatpush1.msra.mxu0 0.0
    %4709 = vmatprep.subr.mxu0 0.0
    %4710 = vmatpush1.msra.mxu0 0.0
    %4711 = vmatprep.subr.mxu0 0.0
    %4712 = vmatpush1.msra.mxu0 0.0
    %4713 = vmatprep.subr.mxu0 0.0
    %4714 = vmatpush1.msra.mxu0 0.0
    %4715 = vmatprep.subr.mxu0 0.0
    %4716 = vmatpush1.msra.mxu0 0.0
    %4717 = vmatprep.subr.mxu0 0.0
    %4718 = vmatpush1.msra.mxu0 0.0
    %4719 = vmatprep.subr.mxu0 0.0
    %4720 = vmatpush1.msra.mxu0 0.0
    %4721 = vmatprep.subr.mxu0 0.0
    %4722 = vmatpush1.msra.mxu0 %v378
    %4723 = vmatprep.subr.mxu0 0.0
    %4724 = vmatpush1.msra.mxu0 %v377
    %4725 = vmatprep.subr.mxu0 0.0
    %4726 = vmatpush1.msra.mxu0 %v376
    %4727 = vmatprep.subr.mxu0 0.0
    %4728 = vmatpush1.msra.mxu0 %v375
    %4729 = vmatprep.subr.mxu0 0.0
    %4730 = vmatpush1.msra.mxu0 %v374
    %4731 = vmatprep.subr.mxu0 0.0
    %4732 = vmatpush1.msra.mxu0 %v373
    %4733 = vmatprep.subr.mxu0 0.0
    %4734 = vmatpush1.msra.mxu0 %v372
    %4735 = vmatprep.subr.mxu0 0.0
    %4736 = vmatpush1.msra.mxu0 %v371
    %4737 = vmatprep.subr.mxu0 0.0
    %4738 = vmatpush2.msra.mxu0 0.0
    %4739 = vmatprep.subr.mxu0 0.0
    %4740 = vmatpush2.msra.mxu0 0.0
    %4741 = vmatprep.subr.mxu0 0.0
    %4742 = vmatpush2.msra.mxu0 0.0
    %4743 = vmatprep.subr.mxu0 0.0
    %4744 = vmatpush2.msra.mxu0 0.0
    %4745 = vmatprep.subr.mxu0 0.0
    %4746 = vmatpush2.msra.mxu0 0.0
    %4747 = vmatprep.subr.mxu0 0.0
    %4748 = vmatpush2.msra.mxu0 0.0
    %4749 = vmatprep.subr.mxu0 0.0
    %4750 = vmatpush2.msra.mxu0 0.0
    %4751 = vmatprep.subr.mxu0 0.0
    %4752 = vmatpush2.msra.mxu0 0.0
    %4753 = vmatprep.subr.mxu0 0.0
    %4754 = vmatpush2.msra.mxu0 0.0
    %4755 = vmatprep.subr.mxu0 0.0
    %4756 = vmatpush2.msra.mxu0 0.0
    %4757 = vmatprep.subr.mxu0 0.0
    %4758 = vmatpush2.msra.mxu0 0.0
    %4759 = vmatprep.subr.mxu0 0.0
    %4760 = vmatpush2.msra.mxu0 0.0
    %4761 = vmatprep.subr.mxu0 0.0
    %4762 = vmatpush2.msra.mxu0 0.0
    %4763 = vmatprep.subr.mxu0 0.0
    %4764 = vmatpush2.msra.mxu0 0.0
    %4765 = vmatprep.subr.mxu0 0.0
    %4766 = vmatpush2.msra.mxu0 0.0
    %4767 = vmatprep.subr.mxu0 0.0
    %4768 = vmatpush2.msra.mxu0 0.0
    %4769 = vmatprep.mubr.f32.mxu0 0.0
    %4770 = vmatmul.mubr.f32.gmra.mxu0 %v4703
    %v4771 = vpop.f32.mrf.mxu0
    %v4772 = vadd.f32 0.0, %v4771
    %v4773 = vpop.f32.mrf.mxu0
    %4774 = vdwg.mxu0
    %v4775 = vadd.f32 %v4701, %v4772
    %v4777 = vsel %vm2779, %v2757, 0
    %4779 = vmatprep.subr.mxu0 0.0
    %4780 = vmatpush1.msra.mxu0 0.0
    %4781 = vmatprep.subr.mxu0 0.0
    %4782 = vmatpush1.msra.mxu0 0.0
    %4783 = vmatprep.subr.mxu0 0.0
    %4784 = vmatpush1.msra.mxu0 0.0
    %4785 = vmatprep.subr.mxu0 0.0
    %4786 = vmatpush1.msra.mxu0 0.0
    %4787 = vmatprep.subr.mxu0 0.0
    %4788 = vmatpush1.msra.mxu0 0.0
    %4789 = vmatprep.subr.mxu0 0.0
    %4790 = vmatpush1.msra.mxu0 0.0
    %4791 = vmatprep.subr.mxu0 0.0
    %4792 = vmatpush1.msra.mxu0 0.0
    %4793 = vmatprep.subr.mxu0 0.0
    %4794 = vmatpush1.msra.mxu0 0.0
    %4795 = vmatprep.subr.mxu0 0.0
    %4796 = vmatpush1.msra.mxu0 %v386
    %4797 = vmatprep.subr.mxu0 0.0
    %4798 = vmatpush1.msra.mxu0 %v385
    %4799 = vmatprep.subr.mxu0 0.0
    %4800 = vmatpush1.msra.mxu0 %v384
    %4801 = vmatprep.subr.mxu0 0.0
    %4802 = vmatpush1.msra.mxu0 %v383
    %4803 = vmatprep.subr.mxu0 0.0
    %4804 = vmatpush1.msra.mxu0 %v382
    %4805 = vmatprep.subr.mxu0 0.0
    %4806 = vmatpush1.msra.mxu0 %v381
    %4807 = vmatprep.subr.mxu0 0.0
    %4808 = vmatpush1.msra.mxu0 %v380
    %4809 = vmatprep.subr.mxu0 0.0
    %4810 = vmatpush1.msra.mxu0 %v379
    %4811 = vmatprep.subr.mxu0 0.0
    %4812 = vmatpush2.msra.mxu0 0.0
    %4813 = vmatprep.subr.mxu0 0.0
    %4814 = vmatpush2.msra.mxu0 0.0
    %4815 = vmatprep.subr.mxu0 0.0
    %4816 = vmatpush2.msra.mxu0 0.0
    %4817 = vmatprep.subr.mxu0 0.0
    %4818 = vmatpush2.msra.mxu0 0.0
    %4819 = vmatprep.subr.mxu0 0.0
    %4820 = vmatpush2.msra.mxu0 0.0
    %4821 = vmatprep.subr.mxu0 0.0
    %4822 = vmatpush2.msra.mxu0 0.0
    %4823 = vmatprep.subr.mxu0 0.0
    %4824 = vmatpush2.msra.mxu0 0.0
    %4825 = vmatprep.subr.mxu0 0.0
    %4826 = vmatpush2.msra.mxu0 0.0
    %4827 = vmatprep.subr.mxu0 0.0
    %4828 = vmatpush2.msra.mxu0 0.0
    %4829 = vmatprep.subr.mxu0 0.0
    %4830 = vmatpush2.msra.mxu0 0.0
    %4831 = vmatprep.subr.mxu0 0.0
    %4832 = vmatpush2.msra.mxu0 0.0
    %4833 = vmatprep.subr.mxu0 0.0
    %4834 = vmatpush2.msra.mxu0 0.0
    %4835 = vmatprep.subr.mxu0 0.0
    %4836 = vmatpush2.msra.mxu0 0.0
    %4837 = vmatprep.subr.mxu0 0.0
    %4838 = vmatpush2.msra.mxu0 0.0
    %4839 = vmatprep.subr.mxu0 0.0
    %4840 = vmatpush2.msra.mxu0 0.0
    %4841 = vmatprep.subr.mxu0 0.0
    %4842 = vmatpush2.msra.mxu0 0.0
    %4843 = vmatprep.mubr.f32.mxu0 0.0
    %4844 = vmatmul.mubr.f32.gmra.mxu0 %v4777
    %v4845 = vpop.f32.mrf.mxu0
    %v4846 = vadd.f32 0.0, %v4845
    %v4847 = vpop.f32.mrf.mxu0
    %4848 = vdwg.mxu0
    %v4849 = vadd.f32 %v4775, %v4846
    %v4851 = vsel %vm2779, %v2758, 0
    %4853 = vmatprep.subr.mxu0 0.0
    %4854 = vmatpush1.msra.mxu0 0.0
    %4855 = vmatprep.subr.mxu0 0.0
    %4856 = vmatpush1.msra.mxu0 0.0
    %4857 = vmatprep.subr.mxu0 0.0
    %4858 = vmatpush1.msra.mxu0 0.0
    %4859 = vmatprep.subr.mxu0 0.0
    %4860 = vmatpush1.msra.mxu0 0.0
    %4861 = vmatprep.subr.mxu0 0.0
    %4862 = vmatpush1.msra.mxu0 0.0
    %4863 = vmatprep.subr.mxu0 0.0
    %4864 = vmatpush1.msra.mxu0 0.0
    %4865 = vmatprep.subr.mxu0 0.0
    %4866 = vmatpush1.msra.mxu0 0.0
    %4867 = vmatprep.subr.mxu0 0.0
    %4868 = vmatpush1.msra.mxu0 0.0
    %4869 = vmatprep.subr.mxu0 0.0
    %4870 = vmatpush1.msra.mxu0 %v394
    %4871 = vmatprep.subr.mxu0 0.0
    %4872 = vmatpush1.msra.mxu0 %v393
    %4873 = vmatprep.subr.mxu0 0.0
    %4874 = vmatpush1.msra.mxu0 %v392
    %4875 = vmatprep.subr.mxu0 0.0
    %4876 = vmatpush1.msra.mxu0 %v391
    %4877 = vmatprep.subr.mxu0 0.0
    %4878 = vmatpush1.msra.mxu0 %v390
    %4879 = vmatprep.subr.mxu0 0.0
    %4880 = vmatpush1.msra.mxu0 %v389
    %4881 = vmatprep.subr.mxu0 0.0
    %4882 = vmatpush1.msra.mxu0 %v388
    %4883 = vmatprep.subr.mxu0 0.0
    %4884 = vmatpush1.msra.mxu0 %v387
    %4885 = vmatprep.subr.mxu0 0.0
    %4886 = vmatpush2.msra.mxu0 0.0
    %4887 = vmatprep.subr.mxu0 0.0
    %4888 = vmatpush2.msra.mxu0 0.0
    %4889 = vmatprep.subr.mxu0 0.0
    %4890 = vmatpush2.msra.mxu0 0.0
    %4891 = vmatprep.subr.mxu0 0.0
    %4892 = vmatpush2.msra.mxu0 0.0
    %4893 = vmatprep.subr.mxu0 0.0
    %4894 = vmatpush2.msra.mxu0 0.0
    %4895 = vmatprep.subr.mxu0 0.0
    %4896 = vmatpush2.msra.mxu0 0.0
    %4897 = vmatprep.subr.mxu0 0.0
    %4898 = vmatpush2.msra.mxu0 0.0
    %4899 = vmatprep.subr.mxu0 0.0
    %4900 = vmatpush2.msra.mxu0 0.0
    %4901 = vmatprep.subr.mxu0 0.0
    %4902 = vmatpush2.msra.mxu0 0.0
    %4903 = vmatprep.subr.mxu0 0.0
    %4904 = vmatpush2.msra.mxu0 0.0
    %4905 = vmatprep.subr.mxu0 0.0
    %4906 = vmatpush2.msra.mxu0 0.0
    %4907 = vmatprep.subr.mxu0 0.0
    %4908 = vmatpush2.msra.mxu0 0.0
    %4909 = vmatprep.subr.mxu0 0.0
    %4910 = vmatpush2.msra.mxu0 0.0
    %4911 = vmatprep.subr.mxu0 0.0
    %4912 = vmatpush2.msra.mxu0 0.0
    %4913 = vmatprep.subr.mxu0 0.0
    %4914 = vmatpush2.msra.mxu0 0.0
    %4915 = vmatprep.subr.mxu0 0.0
    %4916 = vmatpush2.msra.mxu0 0.0
    %4917 = vmatprep.mubr.f32.mxu0 0.0
    %4918 = vmatmul.mubr.f32.gmra.mxu0 %v4851
    %v4919 = vpop.f32.mrf.mxu0
    %v4920 = vadd.f32 0.0, %v4919
    %v4921 = vpop.f32.mrf.mxu0
    %4922 = vdwg.mxu0
    %v4923 = vadd.f32 %v4849, %v4920
    %v4925 = vsel %vm2779, %v2759, 0
    %4927 = vmatprep.subr.mxu0 0.0
    %4928 = vmatpush1.msra.mxu0 0.0
    %4929 = vmatprep.subr.mxu0 0.0
    %4930 = vmatpush1.msra.mxu0 0.0
    %4931 = vmatprep.subr.mxu0 0.0
    %4932 = vmatpush1.msra.mxu0 0.0
    %4933 = vmatprep.subr.mxu0 0.0
    %4934 = vmatpush1.msra.mxu0 0.0
    %4935 = vmatprep.subr.mxu0 0.0
    %4936 = vmatpush1.msra.mxu0 0.0
    %4937 = vmatprep.subr.mxu0 0.0
    %4938 = vmatpush1.msra.mxu0 0.0
    %4939 = vmatprep.subr.mxu0 0.0
    %4940 = vmatpush1.msra.mxu0 0.0
    %4941 = vmatprep.subr.mxu0 0.0
    %4942 = vmatpush1.msra.mxu0 0.0
    %4943 = vmatprep.subr.mxu0 0.0
    %4944 = vmatpush1.msra.mxu0 %v402
    %4945 = vmatprep.subr.mxu0 0.0
    %4946 = vmatpush1.msra.mxu0 %v401
    %4947 = vmatprep.subr.mxu0 0.0
    %4948 = vmatpush1.msra.mxu0 %v400
    %4949 = vmatprep.subr.mxu0 0.0
    %4950 = vmatpush1.msra.mxu0 %v399
    %4951 = vmatprep.subr.mxu0 0.0
    %4952 = vmatpush1.msra.mxu0 %v398
    %4953 = vmatprep.subr.mxu0 0.0
    %4954 = vmatpush1.msra.mxu0 %v397
    %4955 = vmatprep.subr.mxu0 0.0
    %4956 = vmatpush1.msra.mxu0 %v396
    %4957 = vmatprep.subr.mxu0 0.0
    %4958 = vmatpush1.msra.mxu0 %v395
    %4959 = vmatprep.subr.mxu0 0.0
    %4960 = vmatpush2.msra.mxu0 0.0
    %4961 = vmatprep.subr.mxu0 0.0
    %4962 = vmatpush2.msra.mxu0 0.0
    %4963 = vmatprep.subr.mxu0 0.0
    %4964 = vmatpush2.msra.mxu0 0.0
    %4965 = vmatprep.subr.mxu0 0.0
    %4966 = vmatpush2.msra.mxu0 0.0
    %4967 = vmatprep.subr.mxu0 0.0
    %4968 = vmatpush2.msra.mxu0 0.0
    %4969 = vmatprep.subr.mxu0 0.0
    %4970 = vmatpush2.msra.mxu0 0.0
    %4971 = vmatprep.subr.mxu0 0.0
    %4972 = vmatpush2.msra.mxu0 0.0
    %4973 = vmatprep.subr.mxu0 0.0
    %4974 = vmatpush2.msra.mxu0 0.0
    %4975 = vmatprep.subr.mxu0 0.0
    %4976 = vmatpush2.msra.mxu0 0.0
    %4977 = vmatprep.subr.mxu0 0.0
    %4978 = vmatpush2.msra.mxu0 0.0
    %4979 = vmatprep.subr.mxu0 0.0
    %4980 = vmatpush2.msra.mxu0 0.0
    %4981 = vmatprep.subr.mxu0 0.0
    %4982 = vmatpush2.msra.mxu0 0.0
    %4983 = vmatprep.subr.mxu0 0.0
    %4984 = vmatpush2.msra.mxu0 0.0
    %4985 = vmatprep.subr.mxu0 0.0
    %4986 = vmatpush2.msra.mxu0 0.0
    %4987 = vmatprep.subr.mxu0 0.0
    %4988 = vmatpush2.msra.mxu0 0.0
    %4989 = vmatprep.subr.mxu0 0.0
    %4990 = vmatpush2.msra.mxu0 0.0
    %4991 = vmatprep.mubr.f32.mxu0 0.0
    %4992 = vmatmul.mubr.f32.gmra.mxu0 %v4925
    %v4993 = vpop.f32.mrf.mxu0
    %v4994 = vadd.f32 0.0, %v4993
    %v4995 = vpop.f32.mrf.mxu0
    %4996 = vdwg.mxu0
    %v4997 = vadd.f32 %v4923, %v4994
    %v4999 = vsel %vm2779, %v2760, 0
    %5001 = vmatprep.subr.mxu0 0.0
    %5002 = vmatpush1.msra.mxu0 0.0
    %5003 = vmatprep.subr.mxu0 0.0
    %5004 = vmatpush1.msra.mxu0 0.0
    %5005 = vmatprep.subr.mxu0 0.0
    %5006 = vmatpush1.msra.mxu0 0.0
    %5007 = vmatprep.subr.mxu0 0.0
    %5008 = vmatpush1.msra.mxu0 0.0
    %5009 = vmatprep.subr.mxu0 0.0
    %5010 = vmatpush1.msra.mxu0 0.0
    %5011 = vmatprep.subr.mxu0 0.0
    %5012 = vmatpush1.msra.mxu0 0.0
    %5013 = vmatprep.subr.mxu0 0.0
    %5014 = vmatpush1.msra.mxu0 0.0
    %5015 = vmatprep.subr.mxu0 0.0
    %5016 = vmatpush1.msra.mxu0 0.0
    %5017 = vmatprep.subr.mxu0 0.0
    %5018 = vmatpush1.msra.mxu0 %v410
    %5019 = vmatprep.subr.mxu0 0.0
    %5020 = vmatpush1.msra.mxu0 %v409
    %5021 = vmatprep.subr.mxu0 0.0
    %5022 = vmatpush1.msra.mxu0 %v408
    %5023 = vmatprep.subr.mxu0 0.0
    %5024 = vmatpush1.msra.mxu0 %v407
    %5025 = vmatprep.subr.mxu0 0.0
    %5026 = vmatpush1.msra.mxu0 %v406
    %5027 = vmatprep.subr.mxu0 0.0
    %5028 = vmatpush1.msra.mxu0 %v405
    %5029 = vmatprep.subr.mxu0 0.0
    %5030 = vmatpush1.msra.mxu0 %v404
    %5031 = vmatprep.subr.mxu0 0.0
    %5032 = vmatpush1.msra.mxu0 %v403
    %5033 = vmatprep.subr.mxu0 0.0
    %5034 = vmatpush2.msra.mxu0 0.0
    %5035 = vmatprep.subr.mxu0 0.0
    %5036 = vmatpush2.msra.mxu0 0.0
    %5037 = vmatprep.subr.mxu0 0.0
    %5038 = vmatpush2.msra.mxu0 0.0
    %5039 = vmatprep.subr.mxu0 0.0
    %5040 = vmatpush2.msra.mxu0 0.0
    %5041 = vmatprep.subr.mxu0 0.0
    %5042 = vmatpush2.msra.mxu0 0.0
    %5043 = vmatprep.subr.mxu0 0.0
    %5044 = vmatpush2.msra.mxu0 0.0
    %5045 = vmatprep.subr.mxu0 0.0
    %5046 = vmatpush2.msra.mxu0 0.0
    %5047 = vmatprep.subr.mxu0 0.0
    %5048 = vmatpush2.msra.mxu0 0.0
    %5049 = vmatprep.subr.mxu0 0.0
    %5050 = vmatpush2.msra.mxu0 0.0
    %5051 = vmatprep.subr.mxu0 0.0
    %5052 = vmatpush2.msra.mxu0 0.0
    %5053 = vmatprep.subr.mxu0 0.0
    %5054 = vmatpush2.msra.mxu0 0.0
    %5055 = vmatprep.subr.mxu0 0.0
    %5056 = vmatpush2.msra.mxu0 0.0
    %5057 = vmatprep.subr.mxu0 0.0
    %5058 = vmatpush2.msra.mxu0 0.0
    %5059 = vmatprep.subr.mxu0 0.0
    %5060 = vmatpush2.msra.mxu0 0.0
    %5061 = vmatprep.subr.mxu0 0.0
    %5062 = vmatpush2.msra.mxu0 0.0
    %5063 = vmatprep.subr.mxu0 0.0
    %5064 = vmatpush2.msra.mxu0 0.0
    %5065 = vmatprep.mubr.f32.mxu0 0.0
    %5066 = vmatmul.mubr.f32.gmra.mxu0 %v4999
    %v5067 = vpop.f32.mrf.mxu0
    %v5068 = vadd.f32 0.0, %v5067
    %v5069 = vpop.f32.mrf.mxu0
    %5070 = vdwg.mxu0
    %v5071 = vadd.f32 %v4997, %v5068
    %v5073 = vsel %vm2779, %v2761, 0
    %5075 = vmatprep.subr.mxu0 0.0
    %5076 = vmatpush1.msra.mxu0 0.0
    %5077 = vmatprep.subr.mxu0 0.0
    %5078 = vmatpush1.msra.mxu0 0.0
    %5079 = vmatprep.subr.mxu0 0.0
    %5080 = vmatpush1.msra.mxu0 0.0
    %5081 = vmatprep.subr.mxu0 0.0
    %5082 = vmatpush1.msra.mxu0 0.0
    %5083 = vmatprep.subr.mxu0 0.0
    %5084 = vmatpush1.msra.mxu0 0.0
    %5085 = vmatprep.subr.mxu0 0.0
    %5086 = vmatpush1.msra.mxu0 0.0
    %5087 = vmatprep.subr.mxu0 0.0
    %5088 = vmatpush1.msra.mxu0 0.0
    %5089 = vmatprep.subr.mxu0 0.0
    %5090 = vmatpush1.msra.mxu0 0.0
    %5091 = vmatprep.subr.mxu0 0.0
    %5092 = vmatpush1.msra.mxu0 %v418
    %5093 = vmatprep.subr.mxu0 0.0
    %5094 = vmatpush1.msra.mxu0 %v417
    %5095 = vmatprep.subr.mxu0 0.0
    %5096 = vmatpush1.msra.mxu0 %v416
    %5097 = vmatprep.subr.mxu0 0.0
    %5098 = vmatpush1.msra.mxu0 %v415
    %5099 = vmatprep.subr.mxu0 0.0
    %5100 = vmatpush1.msra.mxu0 %v414
    %5101 = vmatprep.subr.mxu0 0.0
    %5102 = vmatpush1.msra.mxu0 %v413
    %5103 = vmatprep.subr.mxu0 0.0
    %5104 = vmatpush1.msra.mxu0 %v412
    %5105 = vmatprep.subr.mxu0 0.0
    %5106 = vmatpush1.msra.mxu0 %v411
    %5107 = vmatprep.subr.mxu0 0.0
    %5108 = vmatpush2.msra.mxu0 0.0
    %5109 = vmatprep.subr.mxu0 0.0
    %5110 = vmatpush2.msra.mxu0 0.0
    %5111 = vmatprep.subr.mxu0 0.0
    %5112 = vmatpush2.msra.mxu0 0.0
    %5113 = vmatprep.subr.mxu0 0.0
    %5114 = vmatpush2.msra.mxu0 0.0
    %5115 = vmatprep.subr.mxu0 0.0
    %5116 = vmatpush2.msra.mxu0 0.0
    %5117 = vmatprep.subr.mxu0 0.0
    %5118 = vmatpush2.msra.mxu0 0.0
    %5119 = vmatprep.subr.mxu0 0.0
    %5120 = vmatpush2.msra.mxu0 0.0
    %5121 = vmatprep.subr.mxu0 0.0
    %5122 = vmatpush2.msra.mxu0 0.0
    %5123 = vmatprep.subr.mxu0 0.0
    %5124 = vmatpush2.msra.mxu0 0.0
    %5125 = vmatprep.subr.mxu0 0.0
    %5126 = vmatpush2.msra.mxu0 0.0
    %5127 = vmatprep.subr.mxu0 0.0
    %5128 = vmatpush2.msra.mxu0 0.0
    %5129 = vmatprep.subr.mxu0 0.0
    %5130 = vmatpush2.msra.mxu0 0.0
    %5131 = vmatprep.subr.mxu0 0.0
    %5132 = vmatpush2.msra.mxu0 0.0
    %5133 = vmatprep.subr.mxu0 0.0
    %5134 = vmatpush2.msra.mxu0 0.0
    %5135 = vmatprep.subr.mxu0 0.0
    %5136 = vmatpush2.msra.mxu0 0.0
    %5137 = vmatprep.subr.mxu0 0.0
    %5138 = vmatpush2.msra.mxu0 0.0
    %5139 = vmatprep.mubr.f32.mxu0 0.0
    %5140 = vmatmul.mubr.f32.gmra.mxu0 %v5073
    %v5141 = vpop.f32.mrf.mxu0
    %v5142 = vadd.f32 0.0, %v5141
    %v5143 = vpop.f32.mrf.mxu0
    %5144 = vdwg.mxu0
    %v5145 = vadd.f32 %v5071, %v5142
    %v5147 = vsel %vm2779, %v2762, 0
    %5149 = vmatprep.subr.mxu0 0.0
    %5150 = vmatpush1.msra.mxu0 0.0
    %5151 = vmatprep.subr.mxu0 0.0
    %5152 = vmatpush1.msra.mxu0 0.0
    %5153 = vmatprep.subr.mxu0 0.0
    %5154 = vmatpush1.msra.mxu0 0.0
    %5155 = vmatprep.subr.mxu0 0.0
    %5156 = vmatpush1.msra.mxu0 0.0
    %5157 = vmatprep.subr.mxu0 0.0
    %5158 = vmatpush1.msra.mxu0 0.0
    %5159 = vmatprep.subr.mxu0 0.0
    %5160 = vmatpush1.msra.mxu0 0.0
    %5161 = vmatprep.subr.mxu0 0.0
    %5162 = vmatpush1.msra.mxu0 0.0
    %5163 = vmatprep.subr.mxu0 0.0
    %5164 = vmatpush1.msra.mxu0 0.0
    %5165 = vmatprep.subr.mxu0 0.0
    %5166 = vmatpush1.msra.mxu0 %v426
    %5167 = vmatprep.subr.mxu0 0.0
    %5168 = vmatpush1.msra.mxu0 %v425
    %5169 = vmatprep.subr.mxu0 0.0
    %5170 = vmatpush1.msra.mxu0 %v424
    %5171 = vmatprep.subr.mxu0 0.0
    %5172 = vmatpush1.msra.mxu0 %v423
    %5173 = vmatprep.subr.mxu0 0.0
    %5174 = vmatpush1.msra.mxu0 %v422
    %5175 = vmatprep.subr.mxu0 0.0
    %5176 = vmatpush1.msra.mxu0 %v421
    %5177 = vmatprep.subr.mxu0 0.0
    %5178 = vmatpush1.msra.mxu0 %v420
    %5179 = vmatprep.subr.mxu0 0.0
    %5180 = vmatpush1.msra.mxu0 %v419
    %5181 = vmatprep.subr.mxu0 0.0
    %5182 = vmatpush2.msra.mxu0 0.0
    %5183 = vmatprep.subr.mxu0 0.0
    %5184 = vmatpush2.msra.mxu0 0.0
    %5185 = vmatprep.subr.mxu0 0.0
    %5186 = vmatpush2.msra.mxu0 0.0
    %5187 = vmatprep.subr.mxu0 0.0
    %5188 = vmatpush2.msra.mxu0 0.0
    %5189 = vmatprep.subr.mxu0 0.0
    %5190 = vmatpush2.msra.mxu0 0.0
    %5191 = vmatprep.subr.mxu0 0.0
    %5192 = vmatpush2.msra.mxu0 0.0
    %5193 = vmatprep.subr.mxu0 0.0
    %5194 = vmatpush2.msra.mxu0 0.0
    %5195 = vmatprep.subr.mxu0 0.0
    %5196 = vmatpush2.msra.mxu0 0.0
    %5197 = vmatprep.subr.mxu0 0.0
    %5198 = vmatpush2.msra.mxu0 0.0
    %5199 = vmatprep.subr.mxu0 0.0
    %5200 = vmatpush2.msra.mxu0 0.0
    %5201 = vmatprep.subr.mxu0 0.0
    %5202 = vmatpush2.msra.mxu0 0.0
    %5203 = vmatprep.subr.mxu0 0.0
    %5204 = vmatpush2.msra.mxu0 0.0
    %5205 = vmatprep.subr.mxu0 0.0
    %5206 = vmatpush2.msra.mxu0 0.0
    %5207 = vmatprep.subr.mxu0 0.0
    %5208 = vmatpush2.msra.mxu0 0.0
    %5209 = vmatprep.subr.mxu0 0.0
    %5210 = vmatpush2.msra.mxu0 0.0
    %5211 = vmatprep.subr.mxu0 0.0
    %5212 = vmatpush2.msra.mxu0 0.0
    %5213 = vmatprep.mubr.f32.mxu0 0.0
    %5214 = vmatmul.mubr.f32.gmra.mxu0 %v5147
    %v5215 = vpop.f32.mrf.mxu0
    %v5216 = vadd.f32 0.0, %v5215
    %v5217 = vpop.f32.mrf.mxu0
    %5218 = vdwg.mxu0
    %v5219 = vadd.f32 %v5145, %v5216
    %v5221 = vsel %vm2779, %v2763, 0
    %5223 = vmatprep.subr.mxu0 0.0
    %5224 = vmatpush1.msra.mxu0 0.0
    %5225 = vmatprep.subr.mxu0 0.0
    %5226 = vmatpush1.msra.mxu0 0.0
    %5227 = vmatprep.subr.mxu0 0.0
    %5228 = vmatpush1.msra.mxu0 0.0
    %5229 = vmatprep.subr.mxu0 0.0
    %5230 = vmatpush1.msra.mxu0 0.0
    %5231 = vmatprep.subr.mxu0 0.0
    %5232 = vmatpush1.msra.mxu0 0.0
    %5233 = vmatprep.subr.mxu0 0.0
    %5234 = vmatpush1.msra.mxu0 0.0
    %5235 = vmatprep.subr.mxu0 0.0
    %5236 = vmatpush1.msra.mxu0 0.0
    %5237 = vmatprep.subr.mxu0 0.0
    %5238 = vmatpush1.msra.mxu0 0.0
    %5239 = vmatprep.subr.mxu0 0.0
    %5240 = vmatpush1.msra.mxu0 %v434
    %5241 = vmatprep.subr.mxu0 0.0
    %5242 = vmatpush1.msra.mxu0 %v433
    %5243 = vmatprep.subr.mxu0 0.0
    %5244 = vmatpush1.msra.mxu0 %v432
    %5245 = vmatprep.subr.mxu0 0.0
    %5246 = vmatpush1.msra.mxu0 %v431
    %5247 = vmatprep.subr.mxu0 0.0
    %5248 = vmatpush1.msra.mxu0 %v430
    %5249 = vmatprep.subr.mxu0 0.0
    %5250 = vmatpush1.msra.mxu0 %v429
    %5251 = vmatprep.subr.mxu0 0.0
    %5252 = vmatpush1.msra.mxu0 %v428
    %5253 = vmatprep.subr.mxu0 0.0
    %5254 = vmatpush1.msra.mxu0 %v427
    %5255 = vmatprep.subr.mxu0 0.0
    %5256 = vmatpush2.msra.mxu0 0.0
    %5257 = vmatprep.subr.mxu0 0.0
    %5258 = vmatpush2.msra.mxu0 0.0
    %5259 = vmatprep.subr.mxu0 0.0
    %5260 = vmatpush2.msra.mxu0 0.0
    %5261 = vmatprep.subr.mxu0 0.0
    %5262 = vmatpush2.msra.mxu0 0.0
    %5263 = vmatprep.subr.mxu0 0.0
    %5264 = vmatpush2.msra.mxu0 0.0
    %5265 = vmatprep.subr.mxu0 0.0
    %5266 = vmatpush2.msra.mxu0 0.0
    %5267 = vmatprep.subr.mxu0 0.0
    %5268 = vmatpush2.msra.mxu0 0.0
    %5269 = vmatprep.subr.mxu0 0.0
    %5270 = vmatpush2.msra.mxu0 0.0
    %5271 = vmatprep.subr.mxu0 0.0
    %5272 = vmatpush2.msra.mxu0 0.0
    %5273 = vmatprep.subr.mxu0 0.0
    %5274 = vmatpush2.msra.mxu0 0.0
    %5275 = vmatprep.subr.mxu0 0.0
    %5276 = vmatpush2.msra.mxu0 0.0
    %5277 = vmatprep.subr.mxu0 0.0
    %5278 = vmatpush2.msra.mxu0 0.0
    %5279 = vmatprep.subr.mxu0 0.0
    %5280 = vmatpush2.msra.mxu0 0.0
    %5281 = vmatprep.subr.mxu0 0.0
    %5282 = vmatpush2.msra.mxu0 0.0
    %5283 = vmatprep.subr.mxu0 0.0
    %5284 = vmatpush2.msra.mxu0 0.0
    %5285 = vmatprep.subr.mxu0 0.0
    %5286 = vmatpush2.msra.mxu0 0.0
    %5287 = vmatprep.mubr.f32.mxu0 0.0
    %5288 = vmatmul.mubr.f32.gmra.mxu0 %v5221
    %v5289 = vpop.f32.mrf.mxu0
    %v5290 = vadd.f32 0.0, %v5289
    %v5291 = vpop.f32.mrf.mxu0
    %5292 = vdwg.mxu0
    %v5293 = vadd.f32 %v5219, %v5290
    %v5295 = vsel %vm2779, %v2764, 0
    %5297 = vmatprep.subr.mxu0 0.0
    %5298 = vmatpush1.msra.mxu0 0.0
    %5299 = vmatprep.subr.mxu0 0.0
    %5300 = vmatpush1.msra.mxu0 0.0
    %5301 = vmatprep.subr.mxu0 0.0
    %5302 = vmatpush1.msra.mxu0 0.0
    %5303 = vmatprep.subr.mxu0 0.0
    %5304 = vmatpush1.msra.mxu0 0.0
    %5305 = vmatprep.subr.mxu0 0.0
    %5306 = vmatpush1.msra.mxu0 0.0
    %5307 = vmatprep.subr.mxu0 0.0
    %5308 = vmatpush1.msra.mxu0 0.0
    %5309 = vmatprep.subr.mxu0 0.0
    %5310 = vmatpush1.msra.mxu0 0.0
    %5311 = vmatprep.subr.mxu0 0.0
    %5312 = vmatpush1.msra.mxu0 0.0
    %5313 = vmatprep.subr.mxu0 0.0
    %5314 = vmatpush1.msra.mxu0 %v442
    %5315 = vmatprep.subr.mxu0 0.0
    %5316 = vmatpush1.msra.mxu0 %v441
    %5317 = vmatprep.subr.mxu0 0.0
    %5318 = vmatpush1.msra.mxu0 %v440
    %5319 = vmatprep.subr.mxu0 0.0
    %5320 = vmatpush1.msra.mxu0 %v439
    %5321 = vmatprep.subr.mxu0 0.0
    %5322 = vmatpush1.msra.mxu0 %v438
    %5323 = vmatprep.subr.mxu0 0.0
    %5324 = vmatpush1.msra.mxu0 %v437
    %5325 = vmatprep.subr.mxu0 0.0
    %5326 = vmatpush1.msra.mxu0 %v436
    %5327 = vmatprep.subr.mxu0 0.0
    %5328 = vmatpush1.msra.mxu0 %v435
    %5329 = vmatprep.subr.mxu0 0.0
    %5330 = vmatpush2.msra.mxu0 0.0
    %5331 = vmatprep.subr.mxu0 0.0
    %5332 = vmatpush2.msra.mxu0 0.0
    %5333 = vmatprep.subr.mxu0 0.0
    %5334 = vmatpush2.msra.mxu0 0.0
    %5335 = vmatprep.subr.mxu0 0.0
    %5336 = vmatpush2.msra.mxu0 0.0
    %5337 = vmatprep.subr.mxu0 0.0
    %5338 = vmatpush2.msra.mxu0 0.0
    %5339 = vmatprep.subr.mxu0 0.0
    %5340 = vmatpush2.msra.mxu0 0.0
    %5341 = vmatprep.subr.mxu0 0.0
    %5342 = vmatpush2.msra.mxu0 0.0
    %5343 = vmatprep.subr.mxu0 0.0
    %5344 = vmatpush2.msra.mxu0 0.0
    %5345 = vmatprep.subr.mxu0 0.0
    %5346 = vmatpush2.msra.mxu0 0.0
    %5347 = vmatprep.subr.mxu0 0.0
    %5348 = vmatpush2.msra.mxu0 0.0
    %5349 = vmatprep.subr.mxu0 0.0
    %5350 = vmatpush2.msra.mxu0 0.0
    %5351 = vmatprep.subr.mxu0 0.0
    %5352 = vmatpush2.msra.mxu0 0.0
    %5353 = vmatprep.subr.mxu0 0.0
    %5354 = vmatpush2.msra.mxu0 0.0
    %5355 = vmatprep.subr.mxu0 0.0
    %5356 = vmatpush2.msra.mxu0 0.0
    %5357 = vmatprep.subr.mxu0 0.0
    %5358 = vmatpush2.msra.mxu0 0.0
    %5359 = vmatprep.subr.mxu0 0.0
    %5360 = vmatpush2.msra.mxu0 0.0
    %5361 = vmatprep.mubr.f32.mxu0 0.0
    %5362 = vmatmul.mubr.f32.gmra.mxu0 %v5295
    %v5363 = vpop.f32.mrf.mxu0
    %v5364 = vadd.f32 0.0, %v5363
    %v5365 = vpop.f32.mrf.mxu0
    %5366 = vdwg.mxu0
    %v5367 = vadd.f32 %v5293, %v5364
    %v5369 = vsel %vm2779, %v2765, 0
    %5371 = vmatprep.subr.mxu0 0.0
    %5372 = vmatpush1.msra.mxu0 0.0
    %5373 = vmatprep.subr.mxu0 0.0
    %5374 = vmatpush1.msra.mxu0 0.0
    %5375 = vmatprep.subr.mxu0 0.0
    %5376 = vmatpush1.msra.mxu0 0.0
    %5377 = vmatprep.subr.mxu0 0.0
    %5378 = vmatpush1.msra.mxu0 0.0
    %5379 = vmatprep.subr.mxu0 0.0
    %5380 = vmatpush1.msra.mxu0 0.0
    %5381 = vmatprep.subr.mxu0 0.0
    %5382 = vmatpush1.msra.mxu0 0.0
    %5383 = vmatprep.subr.mxu0 0.0
    %5384 = vmatpush1.msra.mxu0 0.0
    %5385 = vmatprep.subr.mxu0 0.0
    %5386 = vmatpush1.msra.mxu0 0.0
    %5387 = vmatprep.subr.mxu0 0.0
    %5388 = vmatpush1.msra.mxu0 %v450
    %5389 = vmatprep.subr.mxu0 0.0
    %5390 = vmatpush1.msra.mxu0 %v449
    %5391 = vmatprep.subr.mxu0 0.0
    %5392 = vmatpush1.msra.mxu0 %v448
    %5393 = vmatprep.subr.mxu0 0.0
    %5394 = vmatpush1.msra.mxu0 %v447
    %5395 = vmatprep.subr.mxu0 0.0
    %5396 = vmatpush1.msra.mxu0 %v446
    %5397 = vmatprep.subr.mxu0 0.0
    %5398 = vmatpush1.msra.mxu0 %v445
    %5399 = vmatprep.subr.mxu0 0.0
    %5400 = vmatpush1.msra.mxu0 %v444
    %5401 = vmatprep.subr.mxu0 0.0
    %5402 = vmatpush1.msra.mxu0 %v443
    %5403 = vmatprep.subr.mxu0 0.0
    %5404 = vmatpush2.msra.mxu0 0.0
    %5405 = vmatprep.subr.mxu0 0.0
    %5406 = vmatpush2.msra.mxu0 0.0
    %5407 = vmatprep.subr.mxu0 0.0
    %5408 = vmatpush2.msra.mxu0 0.0
    %5409 = vmatprep.subr.mxu0 0.0
    %5410 = vmatpush2.msra.mxu0 0.0
    %5411 = vmatprep.subr.mxu0 0.0
    %5412 = vmatpush2.msra.mxu0 0.0
    %5413 = vmatprep.subr.mxu0 0.0
    %5414 = vmatpush2.msra.mxu0 0.0
    %5415 = vmatprep.subr.mxu0 0.0
    %5416 = vmatpush2.msra.mxu0 0.0
    %5417 = vmatprep.subr.mxu0 0.0
    %5418 = vmatpush2.msra.mxu0 0.0
    %5419 = vmatprep.subr.mxu0 0.0
    %5420 = vmatpush2.msra.mxu0 0.0
    %5421 = vmatprep.subr.mxu0 0.0
    %5422 = vmatpush2.msra.mxu0 0.0
    %5423 = vmatprep.subr.mxu0 0.0
    %5424 = vmatpush2.msra.mxu0 0.0
    %5425 = vmatprep.subr.mxu0 0.0
    %5426 = vmatpush2.msra.mxu0 0.0
    %5427 = vmatprep.subr.mxu0 0.0
    %5428 = vmatpush2.msra.mxu0 0.0
    %5429 = vmatprep.subr.mxu0 0.0
    %5430 = vmatpush2.msra.mxu0 0.0
    %5431 = vmatprep.subr.mxu0 0.0
    %5432 = vmatpush2.msra.mxu0 0.0
    %5433 = vmatprep.subr.mxu0 0.0
    %5434 = vmatpush2.msra.mxu0 0.0
    %5435 = vmatprep.mubr.f32.mxu0 0.0
    %5436 = vmatmul.mubr.f32.gmra.mxu0 %v5369
    %v5437 = vpop.f32.mrf.mxu0
    %v5438 = vadd.f32 0.0, %v5437
    %v5439 = vpop.f32.mrf.mxu0
    %5440 = vdwg.mxu0
    %v5441 = vadd.f32 %v5367, %v5438
    %v5443 = vsel %vm2779, %v2766, 0
    %5445 = vmatprep.subr.mxu0 0.0
    %5446 = vmatpush1.msra.mxu0 0.0
    %5447 = vmatprep.subr.mxu0 0.0
    %5448 = vmatpush1.msra.mxu0 0.0
    %5449 = vmatprep.subr.mxu0 0.0
    %5450 = vmatpush1.msra.mxu0 0.0
    %5451 = vmatprep.subr.mxu0 0.0
    %5452 = vmatpush1.msra.mxu0 0.0
    %5453 = vmatprep.subr.mxu0 0.0
    %5454 = vmatpush1.msra.mxu0 0.0
    %5455 = vmatprep.subr.mxu0 0.0
    %5456 = vmatpush1.msra.mxu0 0.0
    %5457 = vmatprep.subr.mxu0 0.0
    %5458 = vmatpush1.msra.mxu0 0.0
    %5459 = vmatprep.subr.mxu0 0.0
    %5460 = vmatpush1.msra.mxu0 0.0
    %5461 = vmatprep.subr.mxu0 0.0
    %5462 = vmatpush1.msra.mxu0 %v458
    %5463 = vmatprep.subr.mxu0 0.0
    %5464 = vmatpush1.msra.mxu0 %v457
    %5465 = vmatprep.subr.mxu0 0.0
    %5466 = vmatpush1.msra.mxu0 %v456
    %5467 = vmatprep.subr.mxu0 0.0
    %5468 = vmatpush1.msra.mxu0 %v455
    %5469 = vmatprep.subr.mxu0 0.0
    %5470 = vmatpush1.msra.mxu0 %v454
    %5471 = vmatprep.subr.mxu0 0.0
    %5472 = vmatpush1.msra.mxu0 %v453
    %5473 = vmatprep.subr.mxu0 0.0
    %5474 = vmatpush1.msra.mxu0 %v452
    %5475 = vmatprep.subr.mxu0 0.0
    %5476 = vmatpush1.msra.mxu0 %v451
    %5477 = vmatprep.subr.mxu0 0.0
    %5478 = vmatpush2.msra.mxu0 0.0
    %5479 = vmatprep.subr.mxu0 0.0
    %5480 = vmatpush2.msra.mxu0 0.0
    %5481 = vmatprep.subr.mxu0 0.0
    %5482 = vmatpush2.msra.mxu0 0.0
    %5483 = vmatprep.subr.mxu0 0.0
    %5484 = vmatpush2.msra.mxu0 0.0
    %5485 = vmatprep.subr.mxu0 0.0
    %5486 = vmatpush2.msra.mxu0 0.0
    %5487 = vmatprep.subr.mxu0 0.0
    %5488 = vmatpush2.msra.mxu0 0.0
    %5489 = vmatprep.subr.mxu0 0.0
    %5490 = vmatpush2.msra.mxu0 0.0
    %5491 = vmatprep.subr.mxu0 0.0
    %5492 = vmatpush2.msra.mxu0 0.0
    %5493 = vmatprep.subr.mxu0 0.0
    %5494 = vmatpush2.msra.mxu0 0.0
    %5495 = vmatprep.subr.mxu0 0.0
    %5496 = vmatpush2.msra.mxu0 0.0
    %5497 = vmatprep.subr.mxu0 0.0
    %5498 = vmatpush2.msra.mxu0 0.0
    %5499 = vmatprep.subr.mxu0 0.0
    %5500 = vmatpush2.msra.mxu0 0.0
    %5501 = vmatprep.subr.mxu0 0.0
    %5502 = vmatpush2.msra.mxu0 0.0
    %5503 = vmatprep.subr.mxu0 0.0
    %5504 = vmatpush2.msra.mxu0 0.0
    %5505 = vmatprep.subr.mxu0 0.0
    %5506 = vmatpush2.msra.mxu0 0.0
    %5507 = vmatprep.subr.mxu0 0.0
    %5508 = vmatpush2.msra.mxu0 0.0
    %5509 = vmatprep.mubr.f32.mxu0 0.0
    %5510 = vmatmul.mubr.f32.gmra.mxu0 %v5443
    %v5511 = vpop.f32.mrf.mxu0
    %v5512 = vadd.f32 0.0, %v5511
    %v5513 = vpop.f32.mrf.mxu0
    %5514 = vdwg.mxu0
    %v5515 = vadd.f32 %v5441, %v5512
    %v5517 = vsel %vm2779, %v2767, 0
    %5519 = vmatprep.subr.mxu0 0.0
    %5520 = vmatpush1.msra.mxu0 0.0
    %5521 = vmatprep.subr.mxu0 0.0
    %5522 = vmatpush1.msra.mxu0 0.0
    %5523 = vmatprep.subr.mxu0 0.0
    %5524 = vmatpush1.msra.mxu0 0.0
    %5525 = vmatprep.subr.mxu0 0.0
    %5526 = vmatpush1.msra.mxu0 0.0
    %5527 = vmatprep.subr.mxu0 0.0
    %5528 = vmatpush1.msra.mxu0 0.0
    %5529 = vmatprep.subr.mxu0 0.0
    %5530 = vmatpush1.msra.mxu0 0.0
    %5531 = vmatprep.subr.mxu0 0.0
    %5532 = vmatpush1.msra.mxu0 0.0
    %5533 = vmatprep.subr.mxu0 0.0
    %5534 = vmatpush1.msra.mxu0 0.0
    %5535 = vmatprep.subr.mxu0 0.0
    %5536 = vmatpush1.msra.mxu0 %v466
    %5537 = vmatprep.subr.mxu0 0.0
    %5538 = vmatpush1.msra.mxu0 %v465
    %5539 = vmatprep.subr.mxu0 0.0
    %5540 = vmatpush1.msra.mxu0 %v464
    %5541 = vmatprep.subr.mxu0 0.0
    %5542 = vmatpush1.msra.mxu0 %v463
    %5543 = vmatprep.subr.mxu0 0.0
    %5544 = vmatpush1.msra.mxu0 %v462
    %5545 = vmatprep.subr.mxu0 0.0
    %5546 = vmatpush1.msra.mxu0 %v461
    %5547 = vmatprep.subr.mxu0 0.0
    %5548 = vmatpush1.msra.mxu0 %v460
    %5549 = vmatprep.subr.mxu0 0.0
    %5550 = vmatpush1.msra.mxu0 %v459
    %5551 = vmatprep.subr.mxu0 0.0
    %5552 = vmatpush2.msra.mxu0 0.0
    %5553 = vmatprep.subr.mxu0 0.0
    %5554 = vmatpush2.msra.mxu0 0.0
    %5555 = vmatprep.subr.mxu0 0.0
    %5556 = vmatpush2.msra.mxu0 0.0
    %5557 = vmatprep.subr.mxu0 0.0
    %5558 = vmatpush2.msra.mxu0 0.0
    %5559 = vmatprep.subr.mxu0 0.0
    %5560 = vmatpush2.msra.mxu0 0.0
    %5561 = vmatprep.subr.mxu0 0.0
    %5562 = vmatpush2.msra.mxu0 0.0
    %5563 = vmatprep.subr.mxu0 0.0
    %5564 = vmatpush2.msra.mxu0 0.0
    %5565 = vmatprep.subr.mxu0 0.0
    %5566 = vmatpush2.msra.mxu0 0.0
    %5567 = vmatprep.subr.mxu0 0.0
    %5568 = vmatpush2.msra.mxu0 0.0
    %5569 = vmatprep.subr.mxu0 0.0
    %5570 = vmatpush2.msra.mxu0 0.0
    %5571 = vmatprep.subr.mxu0 0.0
    %5572 = vmatpush2.msra.mxu0 0.0
    %5573 = vmatprep.subr.mxu0 0.0
    %5574 = vmatpush2.msra.mxu0 0.0
    %5575 = vmatprep.subr.mxu0 0.0
    %5576 = vmatpush2.msra.mxu0 0.0
    %5577 = vmatprep.subr.mxu0 0.0
    %5578 = vmatpush2.msra.mxu0 0.0
    %5579 = vmatprep.subr.mxu0 0.0
    %5580 = vmatpush2.msra.mxu0 0.0
    %5581 = vmatprep.subr.mxu0 0.0
    %5582 = vmatpush2.msra.mxu0 0.0
    %5583 = vmatprep.mubr.f32.mxu0 0.0
    %5584 = vmatmul.mubr.f32.gmra.mxu0 %v5517
    %v5585 = vpop.f32.mrf.mxu0
    %v5586 = vadd.f32 0.0, %v5585
    %v5587 = vpop.f32.mrf.mxu0
    %5588 = vdwg.mxu0
    %v5589 = vadd.f32 %v5515, %v5586
    %v5591 = vsel %vm2779, %v2768, 0
    %5593 = vmatprep.subr.mxu0 0.0
    %5594 = vmatpush1.msra.mxu0 0.0
    %5595 = vmatprep.subr.mxu0 0.0
    %5596 = vmatpush1.msra.mxu0 0.0
    %5597 = vmatprep.subr.mxu0 0.0
    %5598 = vmatpush1.msra.mxu0 0.0
    %5599 = vmatprep.subr.mxu0 0.0
    %5600 = vmatpush1.msra.mxu0 0.0
    %5601 = vmatprep.subr.mxu0 0.0
    %5602 = vmatpush1.msra.mxu0 0.0
    %5603 = vmatprep.subr.mxu0 0.0
    %5604 = vmatpush1.msra.mxu0 0.0
    %5605 = vmatprep.subr.mxu0 0.0
    %5606 = vmatpush1.msra.mxu0 0.0
    %5607 = vmatprep.subr.mxu0 0.0
    %5608 = vmatpush1.msra.mxu0 0.0
    %5609 = vmatprep.subr.mxu0 0.0
    %5610 = vmatpush1.msra.mxu0 %v474
    %5611 = vmatprep.subr.mxu0 0.0
    %5612 = vmatpush1.msra.mxu0 %v473
    %5613 = vmatprep.subr.mxu0 0.0
    %5614 = vmatpush1.msra.mxu0 %v472
    %5615 = vmatprep.subr.mxu0 0.0
    %5616 = vmatpush1.msra.mxu0 %v471
    %5617 = vmatprep.subr.mxu0 0.0
    %5618 = vmatpush1.msra.mxu0 %v470
    %5619 = vmatprep.subr.mxu0 0.0
    %5620 = vmatpush1.msra.mxu0 %v469
    %5621 = vmatprep.subr.mxu0 0.0
    %5622 = vmatpush1.msra.mxu0 %v468
    %5623 = vmatprep.subr.mxu0 0.0
    %5624 = vmatpush1.msra.mxu0 %v467
    %5625 = vmatprep.subr.mxu0 0.0
    %5626 = vmatpush2.msra.mxu0 0.0
    %5627 = vmatprep.subr.mxu0 0.0
    %5628 = vmatpush2.msra.mxu0 0.0
    %5629 = vmatprep.subr.mxu0 0.0
    %5630 = vmatpush2.msra.mxu0 0.0
    %5631 = vmatprep.subr.mxu0 0.0
    %5632 = vmatpush2.msra.mxu0 0.0
    %5633 = vmatprep.subr.mxu0 0.0
    %5634 = vmatpush2.msra.mxu0 0.0
    %5635 = vmatprep.subr.mxu0 0.0
    %5636 = vmatpush2.msra.mxu0 0.0
    %5637 = vmatprep.subr.mxu0 0.0
    %5638 = vmatpush2.msra.mxu0 0.0
    %5639 = vmatprep.subr.mxu0 0.0
    %5640 = vmatpush2.msra.mxu0 0.0
    %5641 = vmatprep.subr.mxu0 0.0
    %5642 = vmatpush2.msra.mxu0 0.0
    %5643 = vmatprep.subr.mxu0 0.0
    %5644 = vmatpush2.msra.mxu0 0.0
    %5645 = vmatprep.subr.mxu0 0.0
    %5646 = vmatpush2.msra.mxu0 0.0
    %5647 = vmatprep.subr.mxu0 0.0
    %5648 = vmatpush2.msra.mxu0 0.0
    %5649 = vmatprep.subr.mxu0 0.0
    %5650 = vmatpush2.msra.mxu0 0.0
    %5651 = vmatprep.subr.mxu0 0.0
    %5652 = vmatpush2.msra.mxu0 0.0
    %5653 = vmatprep.subr.mxu0 0.0
    %5654 = vmatpush2.msra.mxu0 0.0
    %5655 = vmatprep.subr.mxu0 0.0
    %5656 = vmatpush2.msra.mxu0 0.0
    %5657 = vmatprep.mubr.f32.mxu0 0.0
    %5658 = vmatmul.mubr.f32.gmra.mxu0 %v5591
    %v5659 = vpop.f32.mrf.mxu0
    %v5660 = vadd.f32 0.0, %v5659
    %v5661 = vpop.f32.mrf.mxu0
    %5662 = vdwg.mxu0
    %v5663 = vadd.f32 %v5589, %v5660
    %v5665 = vsel %vm2779, %v2769, 0
    %5667 = vmatprep.subr.mxu0 0.0
    %5668 = vmatpush1.msra.mxu0 0.0
    %5669 = vmatprep.subr.mxu0 0.0
    %5670 = vmatpush1.msra.mxu0 0.0
    %5671 = vmatprep.subr.mxu0 0.0
    %5672 = vmatpush1.msra.mxu0 0.0
    %5673 = vmatprep.subr.mxu0 0.0
    %5674 = vmatpush1.msra.mxu0 0.0
    %5675 = vmatprep.subr.mxu0 0.0
    %5676 = vmatpush1.msra.mxu0 0.0
    %5677 = vmatprep.subr.mxu0 0.0
    %5678 = vmatpush1.msra.mxu0 0.0
    %5679 = vmatprep.subr.mxu0 0.0
    %5680 = vmatpush1.msra.mxu0 0.0
    %5681 = vmatprep.subr.mxu0 0.0
    %5682 = vmatpush1.msra.mxu0 0.0
    %5683 = vmatprep.subr.mxu0 0.0
    %5684 = vmatpush1.msra.mxu0 %v482
    %5685 = vmatprep.subr.mxu0 0.0
    %5686 = vmatpush1.msra.mxu0 %v481
    %5687 = vmatprep.subr.mxu0 0.0
    %5688 = vmatpush1.msra.mxu0 %v480
    %5689 = vmatprep.subr.mxu0 0.0
    %5690 = vmatpush1.msra.mxu0 %v479
    %5691 = vmatprep.subr.mxu0 0.0
    %5692 = vmatpush1.msra.mxu0 %v478
    %5693 = vmatprep.subr.mxu0 0.0
    %5694 = vmatpush1.msra.mxu0 %v477
    %5695 = vmatprep.subr.mxu0 0.0
    %5696 = vmatpush1.msra.mxu0 %v476
    %5697 = vmatprep.subr.mxu0 0.0
    %5698 = vmatpush1.msra.mxu0 %v475
    %5699 = vmatprep.subr.mxu0 0.0
    %5700 = vmatpush2.msra.mxu0 0.0
    %5701 = vmatprep.subr.mxu0 0.0
    %5702 = vmatpush2.msra.mxu0 0.0
    %5703 = vmatprep.subr.mxu0 0.0
    %5704 = vmatpush2.msra.mxu0 0.0
    %5705 = vmatprep.subr.mxu0 0.0
    %5706 = vmatpush2.msra.mxu0 0.0
    %5707 = vmatprep.subr.mxu0 0.0
    %5708 = vmatpush2.msra.mxu0 0.0
    %5709 = vmatprep.subr.mxu0 0.0
    %5710 = vmatpush2.msra.mxu0 0.0
    %5711 = vmatprep.subr.mxu0 0.0
    %5712 = vmatpush2.msra.mxu0 0.0
    %5713 = vmatprep.subr.mxu0 0.0
    %5714 = vmatpush2.msra.mxu0 0.0
    %5715 = vmatprep.subr.mxu0 0.0
    %5716 = vmatpush2.msra.mxu0 0.0
    %5717 = vmatprep.subr.mxu0 0.0
    %5718 = vmatpush2.msra.mxu0 0.0
    %5719 = vmatprep.subr.mxu0 0.0
    %5720 = vmatpush2.msra.mxu0 0.0
    %5721 = vmatprep.subr.mxu0 0.0
    %5722 = vmatpush2.msra.mxu0 0.0
    %5723 = vmatprep.subr.mxu0 0.0
    %5724 = vmatpush2.msra.mxu0 0.0
    %5725 = vmatprep.subr.mxu0 0.0
    %5726 = vmatpush2.msra.mxu0 0.0
    %5727 = vmatprep.subr.mxu0 0.0
    %5728 = vmatpush2.msra.mxu0 0.0
    %5729 = vmatprep.subr.mxu0 0.0
    %5730 = vmatpush2.msra.mxu0 0.0
    %5731 = vmatprep.mubr.f32.mxu0 0.0
    %5732 = vmatmul.mubr.f32.gmra.mxu0 %v5665
    %v5733 = vpop.f32.mrf.mxu0
    %v5734 = vadd.f32 0.0, %v5733
    %v5735 = vpop.f32.mrf.mxu0
    %5736 = vdwg.mxu0
    %v5737 = vadd.f32 %v5663, %v5734
    %v5739 = vsel %vm2779, %v2770, 0
    %5741 = vmatprep.subr.mxu0 0.0
    %5742 = vmatpush1.msra.mxu0 0.0
    %5743 = vmatprep.subr.mxu0 0.0
    %5744 = vmatpush1.msra.mxu0 0.0
    %5745 = vmatprep.subr.mxu0 0.0
    %5746 = vmatpush1.msra.mxu0 0.0
    %5747 = vmatprep.subr.mxu0 0.0
    %5748 = vmatpush1.msra.mxu0 0.0
    %5749 = vmatprep.subr.mxu0 0.0
    %5750 = vmatpush1.msra.mxu0 0.0
    %5751 = vmatprep.subr.mxu0 0.0
    %5752 = vmatpush1.msra.mxu0 0.0
    %5753 = vmatprep.subr.mxu0 0.0
    %5754 = vmatpush1.msra.mxu0 0.0
    %5755 = vmatprep.subr.mxu0 0.0
    %5756 = vmatpush1.msra.mxu0 0.0
    %5757 = vmatprep.subr.mxu0 0.0
    %5758 = vmatpush1.msra.mxu0 %v490
    %5759 = vmatprep.subr.mxu0 0.0
    %5760 = vmatpush1.msra.mxu0 %v489
    %5761 = vmatprep.subr.mxu0 0.0
    %5762 = vmatpush1.msra.mxu0 %v488
    %5763 = vmatprep.subr.mxu0 0.0
    %5764 = vmatpush1.msra.mxu0 %v487
    %5765 = vmatprep.subr.mxu0 0.0
    %5766 = vmatpush1.msra.mxu0 %v486
    %5767 = vmatprep.subr.mxu0 0.0
    %5768 = vmatpush1.msra.mxu0 %v485
    %5769 = vmatprep.subr.mxu0 0.0
    %5770 = vmatpush1.msra.mxu0 %v484
    %5771 = vmatprep.subr.mxu0 0.0
    %5772 = vmatpush1.msra.mxu0 %v483
    %5773 = vmatprep.subr.mxu0 0.0
    %5774 = vmatpush2.msra.mxu0 0.0
    %5775 = vmatprep.subr.mxu0 0.0
    %5776 = vmatpush2.msra.mxu0 0.0
    %5777 = vmatprep.subr.mxu0 0.0
    %5778 = vmatpush2.msra.mxu0 0.0
    %5779 = vmatprep.subr.mxu0 0.0
    %5780 = vmatpush2.msra.mxu0 0.0
    %5781 = vmatprep.subr.mxu0 0.0
    %5782 = vmatpush2.msra.mxu0 0.0
    %5783 = vmatprep.subr.mxu0 0.0
    %5784 = vmatpush2.msra.mxu0 0.0
    %5785 = vmatprep.subr.mxu0 0.0
    %5786 = vmatpush2.msra.mxu0 0.0
    %5787 = vmatprep.subr.mxu0 0.0
    %5788 = vmatpush2.msra.mxu0 0.0
    %5789 = vmatprep.subr.mxu0 0.0
    %5790 = vmatpush2.msra.mxu0 0.0
    %5791 = vmatprep.subr.mxu0 0.0
    %5792 = vmatpush2.msra.mxu0 0.0
    %5793 = vmatprep.subr.mxu0 0.0
    %5794 = vmatpush2.msra.mxu0 0.0
    %5795 = vmatprep.subr.mxu0 0.0
    %5796 = vmatpush2.msra.mxu0 0.0
    %5797 = vmatprep.subr.mxu0 0.0
    %5798 = vmatpush2.msra.mxu0 0.0
    %5799 = vmatprep.subr.mxu0 0.0
    %5800 = vmatpush2.msra.mxu0 0.0
    %5801 = vmatprep.subr.mxu0 0.0
    %5802 = vmatpush2.msra.mxu0 0.0
    %5803 = vmatprep.subr.mxu0 0.0
    %5804 = vmatpush2.msra.mxu0 0.0
    %5805 = vmatprep.mubr.f32.mxu0 0.0
    %5806 = vmatmul.mubr.f32.gmra.mxu0 %v5739
    %v5807 = vpop.f32.mrf.mxu0
    %v5808 = vadd.f32 0.0, %v5807
    %v5809 = vpop.f32.mrf.mxu0
    %5810 = vdwg.mxu0
    %v5811 = vadd.f32 %v5737, %v5808
    %v5813 = vsel %vm2779, %v2771, 0
    %5815 = vmatprep.subr.mxu0 0.0
    %5816 = vmatpush1.msra.mxu0 0.0
    %5817 = vmatprep.subr.mxu0 0.0
    %5818 = vmatpush1.msra.mxu0 0.0
    %5819 = vmatprep.subr.mxu0 0.0
    %5820 = vmatpush1.msra.mxu0 0.0
    %5821 = vmatprep.subr.mxu0 0.0
    %5822 = vmatpush1.msra.mxu0 0.0
    %5823 = vmatprep.subr.mxu0 0.0
    %5824 = vmatpush1.msra.mxu0 0.0
    %5825 = vmatprep.subr.mxu0 0.0
    %5826 = vmatpush1.msra.mxu0 0.0
    %5827 = vmatprep.subr.mxu0 0.0
    %5828 = vmatpush1.msra.mxu0 0.0
    %5829 = vmatprep.subr.mxu0 0.0
    %5830 = vmatpush1.msra.mxu0 0.0
    %5831 = vmatprep.subr.mxu0 0.0
    %5832 = vmatpush1.msra.mxu0 %v498
    %5833 = vmatprep.subr.mxu0 0.0
    %5834 = vmatpush1.msra.mxu0 %v497
    %5835 = vmatprep.subr.mxu0 0.0
    %5836 = vmatpush1.msra.mxu0 %v496
    %5837 = vmatprep.subr.mxu0 0.0
    %5838 = vmatpush1.msra.mxu0 %v495
    %5839 = vmatprep.subr.mxu0 0.0
    %5840 = vmatpush1.msra.mxu0 %v494
    %5841 = vmatprep.subr.mxu0 0.0
    %5842 = vmatpush1.msra.mxu0 %v493
    %5843 = vmatprep.subr.mxu0 0.0
    %5844 = vmatpush1.msra.mxu0 %v492
    %5845 = vmatprep.subr.mxu0 0.0
    %5846 = vmatpush1.msra.mxu0 %v491
    %5847 = vmatprep.subr.mxu0 0.0
    %5848 = vmatpush2.msra.mxu0 0.0
    %5849 = vmatprep.subr.mxu0 0.0
    %5850 = vmatpush2.msra.mxu0 0.0
    %5851 = vmatprep.subr.mxu0 0.0
    %5852 = vmatpush2.msra.mxu0 0.0
    %5853 = vmatprep.subr.mxu0 0.0
    %5854 = vmatpush2.msra.mxu0 0.0
    %5855 = vmatprep.subr.mxu0 0.0
    %5856 = vmatpush2.msra.mxu0 0.0
    %5857 = vmatprep.subr.mxu0 0.0
    %5858 = vmatpush2.msra.mxu0 0.0
    %5859 = vmatprep.subr.mxu0 0.0
    %5860 = vmatpush2.msra.mxu0 0.0
    %5861 = vmatprep.subr.mxu0 0.0
    %5862 = vmatpush2.msra.mxu0 0.0
    %5863 = vmatprep.subr.mxu0 0.0
    %5864 = vmatpush2.msra.mxu0 0.0
    %5865 = vmatprep.subr.mxu0 0.0
    %5866 = vmatpush2.msra.mxu0 0.0
    %5867 = vmatprep.subr.mxu0 0.0
    %5868 = vmatpush2.msra.mxu0 0.0
    %5869 = vmatprep.subr.mxu0 0.0
    %5870 = vmatpush2.msra.mxu0 0.0
    %5871 = vmatprep.subr.mxu0 0.0
    %5872 = vmatpush2.msra.mxu0 0.0
    %5873 = vmatprep.subr.mxu0 0.0
    %5874 = vmatpush2.msra.mxu0 0.0
    %5875 = vmatprep.subr.mxu0 0.0
    %5876 = vmatpush2.msra.mxu0 0.0
    %5877 = vmatprep.subr.mxu0 0.0
    %5878 = vmatpush2.msra.mxu0 0.0
    %5879 = vmatprep.mubr.f32.mxu0 0.0
    %5880 = vmatmul.mubr.f32.gmra.mxu0 %v5813
    %v5881 = vpop.f32.mrf.mxu0
    %v5882 = vadd.f32 0.0, %v5881
    %v5883 = vpop.f32.mrf.mxu0
    %5884 = vdwg.mxu0
    %v5885 = vadd.f32 %v5811, %v5882
    %v5887 = vsel %vm2779, %v2772, 0
    %5889 = vmatprep.subr.mxu0 0.0
    %5890 = vmatpush1.msra.mxu0 0.0
    %5891 = vmatprep.subr.mxu0 0.0
    %5892 = vmatpush1.msra.mxu0 0.0
    %5893 = vmatprep.subr.mxu0 0.0
    %5894 = vmatpush1.msra.mxu0 0.0
    %5895 = vmatprep.subr.mxu0 0.0
    %5896 = vmatpush1.msra.mxu0 0.0
    %5897 = vmatprep.subr.mxu0 0.0
    %5898 = vmatpush1.msra.mxu0 0.0
    %5899 = vmatprep.subr.mxu0 0.0
    %5900 = vmatpush1.msra.mxu0 0.0
    %5901 = vmatprep.subr.mxu0 0.0
    %5902 = vmatpush1.msra.mxu0 0.0
    %5903 = vmatprep.subr.mxu0 0.0
    %5904 = vmatpush1.msra.mxu0 0.0
    %5905 = vmatprep.subr.mxu0 0.0
    %5906 = vmatpush1.msra.mxu0 %v506
    %5907 = vmatprep.subr.mxu0 0.0
    %5908 = vmatpush1.msra.mxu0 %v505
    %5909 = vmatprep.subr.mxu0 0.0
    %5910 = vmatpush1.msra.mxu0 %v504
    %5911 = vmatprep.subr.mxu0 0.0
    %5912 = vmatpush1.msra.mxu0 %v503
    %5913 = vmatprep.subr.mxu0 0.0
    %5914 = vmatpush1.msra.mxu0 %v502
    %5915 = vmatprep.subr.mxu0 0.0
    %5916 = vmatpush1.msra.mxu0 %v501
    %5917 = vmatprep.subr.mxu0 0.0
    %5918 = vmatpush1.msra.mxu0 %v500
    %5919 = vmatprep.subr.mxu0 0.0
    %5920 = vmatpush1.msra.mxu0 %v499
    %5921 = vmatprep.subr.mxu0 0.0
    %5922 = vmatpush2.msra.mxu0 0.0
    %5923 = vmatprep.subr.mxu0 0.0
    %5924 = vmatpush2.msra.mxu0 0.0
    %5925 = vmatprep.subr.mxu0 0.0
    %5926 = vmatpush2.msra.mxu0 0.0
    %5927 = vmatprep.subr.mxu0 0.0
    %5928 = vmatpush2.msra.mxu0 0.0
    %5929 = vmatprep.subr.mxu0 0.0
    %5930 = vmatpush2.msra.mxu0 0.0
    %5931 = vmatprep.subr.mxu0 0.0
    %5932 = vmatpush2.msra.mxu0 0.0
    %5933 = vmatprep.subr.mxu0 0.0
    %5934 = vmatpush2.msra.mxu0 0.0
    %5935 = vmatprep.subr.mxu0 0.0
    %5936 = vmatpush2.msra.mxu0 0.0
    %5937 = vmatprep.subr.mxu0 0.0
    %5938 = vmatpush2.msra.mxu0 0.0
    %5939 = vmatprep.subr.mxu0 0.0
    %5940 = vmatpush2.msra.mxu0 0.0
    %5941 = vmatprep.subr.mxu0 0.0
    %5942 = vmatpush2.msra.mxu0 0.0
    %5943 = vmatprep.subr.mxu0 0.0
    %5944 = vmatpush2.msra.mxu0 0.0
    %5945 = vmatprep.subr.mxu0 0.0
    %5946 = vmatpush2.msra.mxu0 0.0
    %5947 = vmatprep.subr.mxu0 0.0
    %5948 = vmatpush2.msra.mxu0 0.0
    %5949 = vmatprep.subr.mxu0 0.0
    %5950 = vmatpush2.msra.mxu0 0.0
    %5951 = vmatprep.subr.mxu0 0.0
    %5952 = vmatpush2.msra.mxu0 0.0
    %5953 = vmatprep.mubr.f32.mxu0 0.0
    %5954 = vmatmul.mubr.f32.gmra.mxu0 %v5887
    %v5955 = vpop.f32.mrf.mxu0
    %v5956 = vadd.f32 0.0, %v5955
    %v5957 = vpop.f32.mrf.mxu0
    %5958 = vdwg.mxu0
    %v5959 = vadd.f32 %v5885, %v5956
    %v5961 = vsel %vm2779, %v2773, 0
    %5963 = vmatprep.subr.mxu0 0.0
    %5964 = vmatpush1.msra.mxu0 0.0
    %5965 = vmatprep.subr.mxu0 0.0
    %5966 = vmatpush1.msra.mxu0 0.0
    %5967 = vmatprep.subr.mxu0 0.0
    %5968 = vmatpush1.msra.mxu0 0.0
    %5969 = vmatprep.subr.mxu0 0.0
    %5970 = vmatpush1.msra.mxu0 0.0
    %5971 = vmatprep.subr.mxu0 0.0
    %5972 = vmatpush1.msra.mxu0 0.0
    %5973 = vmatprep.subr.mxu0 0.0
    %5974 = vmatpush1.msra.mxu0 0.0
    %5975 = vmatprep.subr.mxu0 0.0
    %5976 = vmatpush1.msra.mxu0 0.0
    %5977 = vmatprep.subr.mxu0 0.0
    %5978 = vmatpush1.msra.mxu0 0.0
    %5979 = vmatprep.subr.mxu0 0.0
    %5980 = vmatpush1.msra.mxu0 %v514
    %5981 = vmatprep.subr.mxu0 0.0
    %5982 = vmatpush1.msra.mxu0 %v513
    %5983 = vmatprep.subr.mxu0 0.0
    %5984 = vmatpush1.msra.mxu0 %v512
    %5985 = vmatprep.subr.mxu0 0.0
    %5986 = vmatpush1.msra.mxu0 %v511
    %5987 = vmatprep.subr.mxu0 0.0
    %5988 = vmatpush1.msra.mxu0 %v510
    %5989 = vmatprep.subr.mxu0 0.0
    %5990 = vmatpush1.msra.mxu0 %v509
    %5991 = vmatprep.subr.mxu0 0.0
    %5992 = vmatpush1.msra.mxu0 %v508
    %5993 = vmatprep.subr.mxu0 0.0
    %5994 = vmatpush1.msra.mxu0 %v507
    %5995 = vmatprep.subr.mxu0 0.0
    %5996 = vmatpush2.msra.mxu0 0.0
    %5997 = vmatprep.subr.mxu0 0.0
    %5998 = vmatpush2.msra.mxu0 0.0
    %5999 = vmatprep.subr.mxu0 0.0
    %6000 = vmatpush2.msra.mxu0 0.0
    %6001 = vmatprep.subr.mxu0 0.0
    %6002 = vmatpush2.msra.mxu0 0.0
    %6003 = vmatprep.subr.mxu0 0.0
    %6004 = vmatpush2.msra.mxu0 0.0
    %6005 = vmatprep.subr.mxu0 0.0
    %6006 = vmatpush2.msra.mxu0 0.0
    %6007 = vmatprep.subr.mxu0 0.0
    %6008 = vmatpush2.msra.mxu0 0.0
    %6009 = vmatprep.subr.mxu0 0.0
    %6010 = vmatpush2.msra.mxu0 0.0
    %6011 = vmatprep.subr.mxu0 0.0
    %6012 = vmatpush2.msra.mxu0 0.0
    %6013 = vmatprep.subr.mxu0 0.0
    %6014 = vmatpush2.msra.mxu0 0.0
    %6015 = vmatprep.subr.mxu0 0.0
    %6016 = vmatpush2.msra.mxu0 0.0
    %6017 = vmatprep.subr.mxu0 0.0
    %6018 = vmatpush2.msra.mxu0 0.0
    %6019 = vmatprep.subr.mxu0 0.0
    %6020 = vmatpush2.msra.mxu0 0.0
    %6021 = vmatprep.subr.mxu0 0.0
    %6022 = vmatpush2.msra.mxu0 0.0
    %6023 = vmatprep.subr.mxu0 0.0
    %6024 = vmatpush2.msra.mxu0 0.0
    %6025 = vmatprep.subr.mxu0 0.0
    %6026 = vmatpush2.msra.mxu0 0.0
    %6027 = vmatprep.mubr.f32.mxu0 0.0
    %6028 = vmatmul.mubr.f32.gmra.mxu0 %v5961
    %v6029 = vpop.f32.mrf.mxu0
    %v6030 = vadd.f32 0.0, %v6029
    %v6031 = vpop.f32.mrf.mxu0
    %6032 = vdwg.mxu0
    %v6033 = vadd.f32 %v5959, %v6030
    %v6035 = vsel %vm2779, %v2774, 0
    %6037 = vmatprep.subr.mxu0 0.0
    %6038 = vmatpush1.msra.mxu0 0.0
    %6039 = vmatprep.subr.mxu0 0.0
    %6040 = vmatpush1.msra.mxu0 0.0
    %6041 = vmatprep.subr.mxu0 0.0
    %6042 = vmatpush1.msra.mxu0 0.0
    %6043 = vmatprep.subr.mxu0 0.0
    %6044 = vmatpush1.msra.mxu0 0.0
    %6045 = vmatprep.subr.mxu0 0.0
    %6046 = vmatpush1.msra.mxu0 0.0
    %6047 = vmatprep.subr.mxu0 0.0
    %6048 = vmatpush1.msra.mxu0 0.0
    %6049 = vmatprep.subr.mxu0 0.0
    %6050 = vmatpush1.msra.mxu0 0.0
    %6051 = vmatprep.subr.mxu0 0.0
    %6052 = vmatpush1.msra.mxu0 0.0
    %6053 = vmatprep.subr.mxu0 0.0
    %6054 = vmatpush1.msra.mxu0 %v522
    %6055 = vmatprep.subr.mxu0 0.0
    %6056 = vmatpush1.msra.mxu0 %v521
    %6057 = vmatprep.subr.mxu0 0.0
    %6058 = vmatpush1.msra.mxu0 %v520
    %6059 = vmatprep.subr.mxu0 0.0
    %6060 = vmatpush1.msra.mxu0 %v519
    %6061 = vmatprep.subr.mxu0 0.0
    %6062 = vmatpush1.msra.mxu0 %v518
    %6063 = vmatprep.subr.mxu0 0.0
    %6064 = vmatpush1.msra.mxu0 %v517
    %6065 = vmatprep.subr.mxu0 0.0
    %6066 = vmatpush1.msra.mxu0 %v516
    %6067 = vmatprep.subr.mxu0 0.0
    %6068 = vmatpush1.msra.mxu0 %v515
    %6069 = vmatprep.subr.mxu0 0.0
    %6070 = vmatpush2.msra.mxu0 0.0
    %6071 = vmatprep.subr.mxu0 0.0
    %6072 = vmatpush2.msra.mxu0 0.0
    %6073 = vmatprep.subr.mxu0 0.0
    %6074 = vmatpush2.msra.mxu0 0.0
    %6075 = vmatprep.subr.mxu0 0.0
    %6076 = vmatpush2.msra.mxu0 0.0
    %6077 = vmatprep.subr.mxu0 0.0
    %6078 = vmatpush2.msra.mxu0 0.0
    %6079 = vmatprep.subr.mxu0 0.0
    %6080 = vmatpush2.msra.mxu0 0.0
    %6081 = vmatprep.subr.mxu0 0.0
    %6082 = vmatpush2.msra.mxu0 0.0
    %6083 = vmatprep.subr.mxu0 0.0
    %6084 = vmatpush2.msra.mxu0 0.0
    %6085 = vmatprep.subr.mxu0 0.0
    %6086 = vmatpush2.msra.mxu0 0.0
    %6087 = vmatprep.subr.mxu0 0.0
    %6088 = vmatpush2.msra.mxu0 0.0
    %6089 = vmatprep.subr.mxu0 0.0
    %6090 = vmatpush2.msra.mxu0 0.0
    %6091 = vmatprep.subr.mxu0 0.0
    %6092 = vmatpush2.msra.mxu0 0.0
    %6093 = vmatprep.subr.mxu0 0.0
    %6094 = vmatpush2.msra.mxu0 0.0
    %6095 = vmatprep.subr.mxu0 0.0
    %6096 = vmatpush2.msra.mxu0 0.0
    %6097 = vmatprep.subr.mxu0 0.0
    %6098 = vmatpush2.msra.mxu0 0.0
    %6099 = vmatprep.subr.mxu0 0.0
    %6100 = vmatpush2.msra.mxu0 0.0
    %6101 = vmatprep.mubr.f32.mxu0 0.0
    %6102 = vmatmul.mubr.f32.gmra.mxu0 %v6035
    %v6103 = vpop.f32.mrf.mxu0
    %v6104 = vadd.f32 0.0, %v6103
    %v6105 = vpop.f32.mrf.mxu0
    %6106 = vdwg.mxu0
    %v6107 = vadd.f32 %v6033, %v6104
    %v6109 = vsel %vm2779, %v2775, 0
    %6111 = vmatprep.subr.mxu0 0.0
    %6112 = vmatpush1.msra.mxu0 0.0
    %6113 = vmatprep.subr.mxu0 0.0
    %6114 = vmatpush1.msra.mxu0 0.0
    %6115 = vmatprep.subr.mxu0 0.0
    %6116 = vmatpush1.msra.mxu0 0.0
    %6117 = vmatprep.subr.mxu0 0.0
    %6118 = vmatpush1.msra.mxu0 0.0
    %6119 = vmatprep.subr.mxu0 0.0
    %6120 = vmatpush1.msra.mxu0 0.0
    %6121 = vmatprep.subr.mxu0 0.0
    %6122 = vmatpush1.msra.mxu0 0.0
    %6123 = vmatprep.subr.mxu0 0.0
    %6124 = vmatpush1.msra.mxu0 0.0
    %6125 = vmatprep.subr.mxu0 0.0
    %6126 = vmatpush1.msra.mxu0 0.0
    %6127 = vmatprep.subr.mxu0 0.0
    %6128 = vmatpush1.msra.mxu0 %v530
    %6129 = vmatprep.subr.mxu0 0.0
    %6130 = vmatpush1.msra.mxu0 %v529
    %6131 = vmatprep.subr.mxu0 0.0
    %6132 = vmatpush1.msra.mxu0 %v528
    %6133 = vmatprep.subr.mxu0 0.0
    %6134 = vmatpush1.msra.mxu0 %v527
    %6135 = vmatprep.subr.mxu0 0.0
    %6136 = vmatpush1.msra.mxu0 %v526
    %6137 = vmatprep.subr.mxu0 0.0
    %6138 = vmatpush1.msra.mxu0 %v525
    %6139 = vmatprep.subr.mxu0 0.0
    %6140 = vmatpush1.msra.mxu0 %v524
    %6141 = vmatprep.subr.mxu0 0.0
    %6142 = vmatpush1.msra.mxu0 %v523
    %6143 = vmatprep.subr.mxu0 0.0
    %6144 = vmatpush2.msra.mxu0 0.0
    %6145 = vmatprep.subr.mxu0 0.0
    %6146 = vmatpush2.msra.mxu0 0.0
    %6147 = vmatprep.subr.mxu0 0.0
    %6148 = vmatpush2.msra.mxu0 0.0
    %6149 = vmatprep.subr.mxu0 0.0
    %6150 = vmatpush2.msra.mxu0 0.0
    %6151 = vmatprep.subr.mxu0 0.0
    %6152 = vmatpush2.msra.mxu0 0.0
    %6153 = vmatprep.subr.mxu0 0.0
    %6154 = vmatpush2.msra.mxu0 0.0
    %6155 = vmatprep.subr.mxu0 0.0
    %6156 = vmatpush2.msra.mxu0 0.0
    %6157 = vmatprep.subr.mxu0 0.0
    %6158 = vmatpush2.msra.mxu0 0.0
    %6159 = vmatprep.subr.mxu0 0.0
    %6160 = vmatpush2.msra.mxu0 0.0
    %6161 = vmatprep.subr.mxu0 0.0
    %6162 = vmatpush2.msra.mxu0 0.0
    %6163 = vmatprep.subr.mxu0 0.0
    %6164 = vmatpush2.msra.mxu0 0.0
    %6165 = vmatprep.subr.mxu0 0.0
    %6166 = vmatpush2.msra.mxu0 0.0
    %6167 = vmatprep.subr.mxu0 0.0
    %6168 = vmatpush2.msra.mxu0 0.0
    %6169 = vmatprep.subr.mxu0 0.0
    %6170 = vmatpush2.msra.mxu0 0.0
    %6171 = vmatprep.subr.mxu0 0.0
    %6172 = vmatpush2.msra.mxu0 0.0
    %6173 = vmatprep.subr.mxu0 0.0
    %6174 = vmatpush2.msra.mxu0 0.0
    %6175 = vmatprep.mubr.f32.mxu0 0.0
    %6176 = vmatmul.mubr.f32.gmra.mxu0 %v6109
    %v6177 = vpop.f32.mrf.mxu0
    %v6178 = vadd.f32 0.0, %v6177
    %v6179 = vpop.f32.mrf.mxu0
    %6180 = vdwg.mxu0
    %v6181 = vadd.f32 %v6107, %v6178
    %v6183 = vsel %vm2779, %v2776, 0
    %6185 = vmatprep.subr.mxu0 0.0
    %6186 = vmatpush1.msra.mxu0 0.0
    %6187 = vmatprep.subr.mxu0 0.0
    %6188 = vmatpush1.msra.mxu0 0.0
    %6189 = vmatprep.subr.mxu0 0.0
    %6190 = vmatpush1.msra.mxu0 0.0
    %6191 = vmatprep.subr.mxu0 0.0
    %6192 = vmatpush1.msra.mxu0 0.0
    %6193 = vmatprep.subr.mxu0 0.0
    %6194 = vmatpush1.msra.mxu0 0.0
    %6195 = vmatprep.subr.mxu0 0.0
    %6196 = vmatpush1.msra.mxu0 0.0
    %6197 = vmatprep.subr.mxu0 0.0
    %6198 = vmatpush1.msra.mxu0 0.0
    %6199 = vmatprep.subr.mxu0 0.0
    %6200 = vmatpush1.msra.mxu0 0.0
    %6201 = vmatprep.subr.mxu0 0.0
    %6202 = vmatpush1.msra.mxu0 %v538
    %6203 = vmatprep.subr.mxu0 0.0
    %6204 = vmatpush1.msra.mxu0 %v537
    %6205 = vmatprep.subr.mxu0 0.0
    %6206 = vmatpush1.msra.mxu0 %v536
    %6207 = vmatprep.subr.mxu0 0.0
    %6208 = vmatpush1.msra.mxu0 %v535
    %6209 = vmatprep.subr.mxu0 0.0
    %6210 = vmatpush1.msra.mxu0 %v534
    %6211 = vmatprep.subr.mxu0 0.0
    %6212 = vmatpush1.msra.mxu0 %v533
    %6213 = vmatprep.subr.mxu0 0.0
    %6214 = vmatpush1.msra.mxu0 %v532
    %6215 = vmatprep.subr.mxu0 0.0
    %6216 = vmatpush1.msra.mxu0 %v531
    %6217 = vmatprep.subr.mxu0 0.0
    %6218 = vmatpush2.msra.mxu0 0.0
    %6219 = vmatprep.subr.mxu0 0.0
    %6220 = vmatpush2.msra.mxu0 0.0
    %6221 = vmatprep.subr.mxu0 0.0
    %6222 = vmatpush2.msra.mxu0 0.0
    %6223 = vmatprep.subr.mxu0 0.0
    %6224 = vmatpush2.msra.mxu0 0.0
    %6225 = vmatprep.subr.mxu0 0.0
    %6226 = vmatpush2.msra.mxu0 0.0
    %6227 = vmatprep.subr.mxu0 0.0
    %6228 = vmatpush2.msra.mxu0 0.0
    %6229 = vmatprep.subr.mxu0 0.0
    %6230 = vmatpush2.msra.mxu0 0.0
    %6231 = vmatprep.subr.mxu0 0.0
    %6232 = vmatpush2.msra.mxu0 0.0
    %6233 = vmatprep.subr.mxu0 0.0
    %6234 = vmatpush2.msra.mxu0 0.0
    %6235 = vmatprep.subr.mxu0 0.0
    %6236 = vmatpush2.msra.mxu0 0.0
    %6237 = vmatprep.subr.mxu0 0.0
    %6238 = vmatpush2.msra.mxu0 0.0
    %6239 = vmatprep.subr.mxu0 0.0
    %6240 = vmatpush2.msra.mxu0 0.0
    %6241 = vmatprep.subr.mxu0 0.0
    %6242 = vmatpush2.msra.mxu0 0.0
    %6243 = vmatprep.subr.mxu0 0.0
    %6244 = vmatpush2.msra.mxu0 0.0
    %6245 = vmatprep.subr.mxu0 0.0
    %6246 = vmatpush2.msra.mxu0 0.0
    %6247 = vmatprep.subr.mxu0 0.0
    %6248 = vmatpush2.msra.mxu0 0.0
    %6249 = vmatprep.mubr.f32.mxu0 0.0
    %6250 = vmatmul.mubr.f32.gmra.mxu0 %v6183
    %v6251 = vpop.f32.mrf.mxu0
    %v6252 = vadd.f32 0.0, %v6251
    %v6253 = vpop.f32.mrf.mxu0
    %6254 = vdwg.mxu0
    %v6255 = vadd.f32 %v6181, %v6252
    %v6257 = vsel %vm2779, %v2777, 0
    %6259 = vmatprep.subr.mxu0 0.0
    %6260 = vmatpush1.msra.mxu0 0.0
    %6261 = vmatprep.subr.mxu0 0.0
    %6262 = vmatpush1.msra.mxu0 0.0
    %6263 = vmatprep.subr.mxu0 0.0
    %6264 = vmatpush1.msra.mxu0 0.0
    %6265 = vmatprep.subr.mxu0 0.0
    %6266 = vmatpush1.msra.mxu0 0.0
    %6267 = vmatprep.subr.mxu0 0.0
    %6268 = vmatpush1.msra.mxu0 0.0
    %6269 = vmatprep.subr.mxu0 0.0
    %6270 = vmatpush1.msra.mxu0 0.0
    %6271 = vmatprep.subr.mxu0 0.0
    %6272 = vmatpush1.msra.mxu0 0.0
    %6273 = vmatprep.subr.mxu0 0.0
    %6274 = vmatpush1.msra.mxu0 0.0
    %6275 = vmatprep.subr.mxu0 0.0
    %6276 = vmatpush1.msra.mxu0 %v546
    %6277 = vmatprep.subr.mxu0 0.0
    %6278 = vmatpush1.msra.mxu0 %v545
    %6279 = vmatprep.subr.mxu0 0.0
    %6280 = vmatpush1.msra.mxu0 %v544
    %6281 = vmatprep.subr.mxu0 0.0
    %6282 = vmatpush1.msra.mxu0 %v543
    %6283 = vmatprep.subr.mxu0 0.0
    %6284 = vmatpush1.msra.mxu0 %v542
    %6285 = vmatprep.subr.mxu0 0.0
    %6286 = vmatpush1.msra.mxu0 %v541
    %6287 = vmatprep.subr.mxu0 0.0
    %6288 = vmatpush1.msra.mxu0 %v540
    %6289 = vmatprep.subr.mxu0 0.0
    %6290 = vmatpush1.msra.mxu0 %v539
    %6291 = vmatprep.subr.mxu0 0.0
    %6292 = vmatpush2.msra.mxu0 0.0
    %6293 = vmatprep.subr.mxu0 0.0
    %6294 = vmatpush2.msra.mxu0 0.0
    %6295 = vmatprep.subr.mxu0 0.0
    %6296 = vmatpush2.msra.mxu0 0.0
    %6297 = vmatprep.subr.mxu0 0.0
    %6298 = vmatpush2.msra.mxu0 0.0
    %6299 = vmatprep.subr.mxu0 0.0
    %6300 = vmatpush2.msra.mxu0 0.0
    %6301 = vmatprep.subr.mxu0 0.0
    %6302 = vmatpush2.msra.mxu0 0.0
    %6303 = vmatprep.subr.mxu0 0.0
    %6304 = vmatpush2.msra.mxu0 0.0
    %6305 = vmatprep.subr.mxu0 0.0
    %6306 = vmatpush2.msra.mxu0 0.0
    %6307 = vmatprep.subr.mxu0 0.0
    %6308 = vmatpush2.msra.mxu0 0.0
    %6309 = vmatprep.subr.mxu0 0.0
    %6310 = vmatpush2.msra.mxu0 0.0
    %6311 = vmatprep.subr.mxu0 0.0
    %6312 = vmatpush2.msra.mxu0 0.0
    %6313 = vmatprep.subr.mxu0 0.0
    %6314 = vmatpush2.msra.mxu0 0.0
    %6315 = vmatprep.subr.mxu0 0.0
    %6316 = vmatpush2.msra.mxu0 0.0
    %6317 = vmatprep.subr.mxu0 0.0
    %6318 = vmatpush2.msra.mxu0 0.0
    %6319 = vmatprep.subr.mxu0 0.0
    %6320 = vmatpush2.msra.mxu0 0.0
    %6321 = vmatprep.subr.mxu0 0.0
    %6322 = vmatpush2.msra.mxu0 0.0
    %6323 = vmatprep.mubr.f32.mxu0 0.0
    %6324 = vmatmul.mubr.f32.gmra.mxu0 %v6257
    %v6325 = vpop.f32.mrf.mxu0
    %v6326 = vadd.f32 0.0, %v6325
    %v6327 = vpop.f32.mrf.mxu0
    %6328 = vdwg.mxu0
    %v6329 = vadd.f32 %v6255, %v6326
    %v6331 = vsel %vm2779, %v2778, 0
    %6333 = vmatprep.subr.mxu0 0.0
    %6334 = vmatpush1.msra.mxu0 0.0
    %6335 = vmatprep.subr.mxu0 0.0
    %6336 = vmatpush1.msra.mxu0 0.0
    %6337 = vmatprep.subr.mxu0 0.0
    %6338 = vmatpush1.msra.mxu0 0.0
    %6339 = vmatprep.subr.mxu0 0.0
    %6340 = vmatpush1.msra.mxu0 0.0
    %6341 = vmatprep.subr.mxu0 0.0
    %6342 = vmatpush1.msra.mxu0 0.0
    %6343 = vmatprep.subr.mxu0 0.0
    %6344 = vmatpush1.msra.mxu0 0.0
    %6345 = vmatprep.subr.mxu0 0.0
    %6346 = vmatpush1.msra.mxu0 0.0
    %6347 = vmatprep.subr.mxu0 0.0
    %6348 = vmatpush1.msra.mxu0 0.0
    %6349 = vmatprep.subr.mxu0 0.0
    %6350 = vmatpush1.msra.mxu0 %v554
    %6351 = vmatprep.subr.mxu0 0.0
    %6352 = vmatpush1.msra.mxu0 %v553
    %6353 = vmatprep.subr.mxu0 0.0
    %6354 = vmatpush1.msra.mxu0 %v552
    %6355 = vmatprep.subr.mxu0 0.0
    %6356 = vmatpush1.msra.mxu0 %v551
    %6357 = vmatprep.subr.mxu0 0.0
    %6358 = vmatpush1.msra.mxu0 %v550
    %6359 = vmatprep.subr.mxu0 0.0
    %6360 = vmatpush1.msra.mxu0 %v549
    %6361 = vmatprep.subr.mxu0 0.0
    %6362 = vmatpush1.msra.mxu0 %v548
    %6363 = vmatprep.subr.mxu0 0.0
    %6364 = vmatpush1.msra.mxu0 %v547
    %6365 = vmatprep.subr.mxu0 0.0
    %6366 = vmatpush2.msra.mxu0 0.0
    %6367 = vmatprep.subr.mxu0 0.0
    %6368 = vmatpush2.msra.mxu0 0.0
    %6369 = vmatprep.subr.mxu0 0.0
    %6370 = vmatpush2.msra.mxu0 0.0
    %6371 = vmatprep.subr.mxu0 0.0
    %6372 = vmatpush2.msra.mxu0 0.0
    %6373 = vmatprep.subr.mxu0 0.0
    %6374 = vmatpush2.msra.mxu0 0.0
    %6375 = vmatprep.subr.mxu0 0.0
    %6376 = vmatpush2.msra.mxu0 0.0
    %6377 = vmatprep.subr.mxu0 0.0
    %6378 = vmatpush2.msra.mxu0 0.0
    %6379 = vmatprep.subr.mxu0 0.0
    %6380 = vmatpush2.msra.mxu0 0.0
    %6381 = vmatprep.subr.mxu0 0.0
    %6382 = vmatpush2.msra.mxu0 0.0
    %6383 = vmatprep.subr.mxu0 0.0
    %6384 = vmatpush2.msra.mxu0 0.0
    %6385 = vmatprep.subr.mxu0 0.0
    %6386 = vmatpush2.msra.mxu0 0.0
    %6387 = vmatprep.subr.mxu0 0.0
    %6388 = vmatpush2.msra.mxu0 0.0
    %6389 = vmatprep.subr.mxu0 0.0
    %6390 = vmatpush2.msra.mxu0 0.0
    %6391 = vmatprep.subr.mxu0 0.0
    %6392 = vmatpush2.msra.mxu0 0.0
    %6393 = vmatprep.subr.mxu0 0.0
    %6394 = vmatpush2.msra.mxu0 0.0
    %6395 = vmatprep.subr.mxu0 0.0
    %6396 = vmatpush2.msra.mxu0 0.0
    %6397 = vmatprep.mubr.f32.mxu0 0.0
    %6398 = vmatmul.mubr.f32.gmra.mxu0 %v6331
    %v6399 = vpop.f32.mrf.mxu0
    %v6400 = vadd.f32 0.0, %v6399
    %v6401 = vpop.f32.mrf.mxu0
    %6402 = vdwg.mxu0
    %v6403 = vadd.f32 %v6329, %v6400
    %v6404 = vld [vmem:[%s19] sm:$0x1]
    %v6406 = vlaneseq
    %v6407 = vshrl.u32 %v6406, 7
    %v6408 = vsub.s32 0, %v6407
    %v6409 = vrot.slane %v6404, %v6408
    %v6411 = vadd.f32 %v6403, %v6409
    %v6412 = vmax.f32 %v6411, 0.0
    %v6413 = vld [vmem:[%s21] sm:$0x1]
    %v6415 = vlaneseq
    %v6416 = vshrl.u32 %v6415, 7
    %v6417 = vsub.s32 0, %v6416
    %v6418 = vrot.slane %v6413, %v6417
    %v6420 = vadd.f32 %v6412, %v6418
    %v6421 = vld [vmem:[%s5] sm:$0xff]
    %v6422 = vld [vmem:[%s23] sm:$0xff]
    %v6423 = vld [vmem:[%s23 + $0x8] sm:$0xff]
    %v6424 = vld [vmem:[%s23 + $0x10] sm:$0xff]
    %v6425 = vld [vmem:[%s23 + $0x18] sm:$0xff]
    %v6426 = vld [vmem:[%s25] sm:$0x1]
    %v6427 = vld [vmem:[%s27] sm:$0xff]
    %v6428 = vld [vmem:[%s27 + $0x8] sm:$0xff]
    %v6429 = vld [vmem:[%s27 + $0x10] sm:$0xff]
    %v6430 = vld [vmem:[%s27 + $0x18] sm:$0xff]
    %v6431 = vld [vmem:[%s29] sm:$0x1]
    %v6432 = vld [vmem:[%s31] sm:$0x1]
    %v6433 = vld [vmem:[%s33] sm:$0x1]
    %v6434 = vld [vmem:[%s35] sm:$0xff]
    %v6435 = vld [vmem:[%s35 + $0x8] sm:$0xff]
    %v6436 = vld [vmem:[%s35 + $0x10] sm:$0xff]
    %v6437 = vld [vmem:[%s35 + $0x18] sm:$0xff]
    %v6438 = vld [vmem:[%s37] sm:$0x1]
    %v6439 = vld [vmem:[%s39] sm:$0xff]
    %v6440 = vld [vmem:[%s39 + $0x8] sm:$0xff]
    %v6441 = vld [vmem:[%s39 + $0x10] sm:$0xff]
    %v6442 = vld [vmem:[%s39 + $0x18] sm:$0xff]
    %v6443 = vld [vmem:[%s39 + $0x20] sm:$0xff]
    %v6444 = vld [vmem:[%s39 + $0x28] sm:$0xff]
    %v6445 = vld [vmem:[%s39 + $0x30] sm:$0xff]
    %v6446 = vld [vmem:[%s39 + $0x38] sm:$0xff]
    %v6447 = vld [vmem:[%s39 + $0x40] sm:$0xff]
    %v6448 = vld [vmem:[%s39 + $0x48] sm:$0xff]
    %v6449 = vld [vmem:[%s39 + $0x50] sm:$0xff]
    %v6450 = vld [vmem:[%s39 + $0x58] sm:$0xff]
    %v6451 = vld [vmem:[%s39 + $0x60] sm:$0xff]
    %v6452 = vld [vmem:[%s39 + $0x68] sm:$0xff]
    %v6453 = vld [vmem:[%s39 + $0x70] sm:$0xff]
    %v6454 = vld [vmem:[%s39 + $0x78] sm:$0xff]
    %v6455 = vld [vmem:[%s41] sm:$0x1]
    %v6456 = vld [vmem:[%s43] sm:$0x1]
    %v6457 = vld [vmem:[%s45] sm:$0x1]
    %v6459 = vlaneseq
    %v6460 = vshrl.u32 %v6459, 7
    %v6461 = vsub.s32 0, %v6460
    %v6462 = vrot.slane %v6426, %v6461
    %v6465 = vsel %vm1962, %v6420, 0
    %6467 = vmatprep.subr.mxu0 0.0
    %6468 = vmatpush1.msra.mxu0 0.0
    %6469 = vmatprep.subr.mxu0 0.0
    %6470 = vmatpush1.msra.mxu0 0.0
    %6471 = vmatprep.subr.mxu0 0.0
    %6472 = vmatpush1.msra.mxu0 0.0
    %6473 = vmatprep.subr.mxu0 0.0
    %6474 = vmatpush1.msra.mxu0 0.0
    %6475 = vmatprep.subr.mxu0 0.0
    %6476 = vmatpush1.msra.mxu0 0.0
    %6477 = vmatprep.subr.mxu0 0.0
    %6478 = vmatpush1.msra.mxu0 0.0
    %6479 = vmatprep.subr.mxu0 0.0
    %6480 = vmatpush1.msra.mxu0 0.0
    %6481 = vmatprep.subr.mxu0 0.0
    %6482 = vmatpush1.msra.mxu0 0.0
    %6483 = vmatprep.subr.mxu0 0.0
    %6484 = vmatpush1.msra.mxu0 0.0
    %6485 = vmatprep.subr.mxu0 0.0
    %6486 = vmatpush1.msra.mxu0 0.0
    %6487 = vmatprep.subr.mxu0 0.0
    %6488 = vmatpush1.msra.mxu0 0.0
    %6489 = vmatprep.subr.mxu0 0.0
    %6490 = vmatpush1.msra.mxu0 0.0
    %6491 = vmatprep.subr.mxu0 0.0
    %6492 = vmatpush1.msra.mxu0 %v6425
    %6493 = vmatprep.subr.mxu0 0.0
    %6494 = vmatpush1.msra.mxu0 %v6424
    %6495 = vmatprep.subr.mxu0 0.0
    %6496 = vmatpush1.msra.mxu0 %v6423
    %6497 = vmatprep.subr.mxu0 0.0
    %6498 = vmatpush1.msra.mxu0 %v6422
    %6499 = vmatprep.subr.mxu0 0.0
    %6500 = vmatpush2.msra.mxu0 0.0
    %6501 = vmatprep.subr.mxu0 0.0
    %6502 = vmatpush2.msra.mxu0 0.0
    %6503 = vmatprep.subr.mxu0 0.0
    %6504 = vmatpush2.msra.mxu0 0.0
    %6505 = vmatprep.subr.mxu0 0.0
    %6506 = vmatpush2.msra.mxu0 0.0
    %6507 = vmatprep.subr.mxu0 0.0
    %6508 = vmatpush2.msra.mxu0 0.0
    %6509 = vmatprep.subr.mxu0 0.0
    %6510 = vmatpush2.msra.mxu0 0.0
    %6511 = vmatprep.subr.mxu0 0.0
    %6512 = vmatpush2.msra.mxu0 0.0
    %6513 = vmatprep.subr.mxu0 0.0
    %6514 = vmatpush2.msra.mxu0 0.0
    %6515 = vmatprep.subr.mxu0 0.0
    %6516 = vmatpush2.msra.mxu0 0.0
    %6517 = vmatprep.subr.mxu0 0.0
    %6518 = vmatpush2.msra.mxu0 0.0
    %6519 = vmatprep.subr.mxu0 0.0
    %6520 = vmatpush2.msra.mxu0 0.0
    %6521 = vmatprep.subr.mxu0 0.0
    %6522 = vmatpush2.msra.mxu0 0.0
    %6523 = vmatprep.subr.mxu0 0.0
    %6524 = vmatpush2.msra.mxu0 0.0
    %6525 = vmatprep.subr.mxu0 0.0
    %6526 = vmatpush2.msra.mxu0 0.0
    %6527 = vmatprep.subr.mxu0 0.0
    %6528 = vmatpush2.msra.mxu0 0.0
    %6529 = vmatprep.subr.mxu0 0.0
    %6530 = vmatpush2.msra.mxu0 0.0
    %6531 = vmatprep.mubr.f32.mxu0 0.0
    %6532 = vmatmul.mubr.f32.gmra.mxu0 %v6465
    %v6533 = vpop.f32.mrf.mxu0
    %v6534 = vadd.f32 %v6462, %v6533
    %v6535 = vpop.f32.mrf.mxu0
    %6536 = vdwg.mxu0
    %v6537 = vmul.f32 %v6534, 0.35355338
    %6539 = vrot.lane.b32.xlu0 %v6534, 96
    %v6540 = vpop.permute.xlu0 %6539
    %vm6541 = vcmask 64512
    %v6543 = vsel %vm6541, %v6537, 0
    %v6545 = vsel %vm6541, %v6540, 0
    %6547 = vmatprep.subr.mxu0 0.0
    %6548 = vmatpush1.xpose.msra.mxu0 0.0
    %6549 = vmatprep.subr.mxu0 0.0
    %6550 = vmatpush1.xpose.msra.mxu0 0.0
    %6551 = vmatprep.subr.mxu0 0.0
    %6552 = vmatpush1.xpose.msra.mxu0 0.0
    %6553 = vmatprep.subr.mxu0 0.0
    %6554 = vmatpush1.xpose.msra.mxu0 0.0
    %6555 = vmatprep.subr.mxu0 0.0
    %6556 = vmatpush1.xpose.msra.mxu0 0.0
    %6557 = vmatprep.subr.mxu0 0.0
    %6558 = vmatpush1.xpose.msra.mxu0 0.0
    %6559 = vmatprep.subr.mxu0 0.0
    %6560 = vmatpush1.xpose.msra.mxu0 0.0
    %6561 = vmatprep.subr.mxu0 0.0
    %6562 = vmatpush1.xpose.msra.mxu0 0.0
    %6563 = vmatprep.subr.mxu0 0.0
    %6564 = vmatpush1.xpose.msra.mxu0 0.0
    %6565 = vmatprep.subr.mxu0 0.0
    %6566 = vmatpush1.xpose.msra.mxu0 0.0
    %6567 = vmatprep.subr.mxu0 0.0
    %6568 = vmatpush1.xpose.msra.mxu0 0.0
    %6569 = vmatprep.subr.mxu0 0.0
    %6570 = vmatpush1.xpose.msra.mxu0 0.0
    %6571 = vmatprep.subr.mxu0 0.0
    %6572 = vmatpush1.xpose.msra.mxu0 0.0
    %6573 = vmatprep.subr.mxu0 0.0
    %6574 = vmatpush1.xpose.msra.mxu0 0.0
    %6575 = vmatprep.subr.mxu0 0.0
    %6576 = vmatpush1.xpose.msra.mxu0 0.0
    %6577 = vmatprep.subr.mxu0 0.0
    %6578 = vmatpush1.xpose.msra.mxu0 %v6545
    %6579 = vmatprep.subr.mxu0 0.0
    %6580 = vmatpush2.xpose.msra.mxu0 0.0
    %6581 = vmatprep.subr.mxu0 0.0
    %6582 = vmatpush2.xpose.msra.mxu0 0.0
    %6583 = vmatprep.subr.mxu0 0.0
    %6584 = vmatpush2.xpose.msra.mxu0 0.0
    %6585 = vmatprep.subr.mxu0 0.0
    %6586 = vmatpush2.xpose.msra.mxu0 0.0
    %6587 = vmatprep.subr.mxu0 0.0
    %6588 = vmatpush2.xpose.msra.mxu0 0.0
    %6589 = vmatprep.subr.mxu0 0.0
    %6590 = vmatpush2.xpose.msra.mxu0 0.0
    %6591 = vmatprep.subr.mxu0 0.0
    %6592 = vmatpush2.xpose.msra.mxu0 0.0
    %6593 = vmatprep.subr.mxu0 0.0
    %6594 = vmatpush2.xpose.msra.mxu0 0.0
    %6595 = vmatprep.subr.mxu0 0.0
    %6596 = vmatpush2.xpose.msra.mxu0 0.0
    %6597 = vmatprep.subr.mxu0 0.0
    %6598 = vmatpush2.xpose.msra.mxu0 0.0
    %6599 = vmatprep.subr.mxu0 0.0
    %6600 = vmatpush2.xpose.msra.mxu0 0.0
    %6601 = vmatprep.subr.mxu0 0.0
    %6602 = vmatpush2.xpose.msra.mxu0 0.0
    %6603 = vmatprep.subr.mxu0 0.0
    %6604 = vmatpush2.xpose.msra.mxu0 0.0
    %6605 = vmatprep.subr.mxu0 0.0
    %6606 = vmatpush2.xpose.msra.mxu0 0.0
    %6607 = vmatprep.subr.mxu0 0.0
    %6608 = vmatpush2.xpose.msra.mxu0 0.0
    %6609 = vmatprep.subr.mxu0 0.0
    %6610 = vmatpush2.xpose.msra.mxu0 0.0
    %6611 = vmatprep.mubr.f32.mxu0 0.0
    %6612 = vmatmul.mubr.f32.gmra.mxu0 %v6543
    %v6613 = vpop.f32.mrf.mxu0
    %v6614 = vadd.f32 %v6421, %v6613
    %v6615 = vpop.f32.mrf.mxu0
    %6616 = vdwg.mxu0
    %v6617 = vsel %vm6541, %v6614, -inf
    %6618 = vmax.xlane.f32.xlu0 %v6617
    %v6619 = vpop.xlane.xlu0 %6618
    %v6620 = vsub.f32 %v6614, %v6619
    %v6621 = vmul.f32 %v6620, 1.442695
    %v6622 = vpow.pop %v6621
    %v6623 = vsel %vm6541, %v6622, 0.0
    %6624 = vadd.xlane.f32.xlu0 %v6623
    %v6625 = vpop.xlane.xlu0 %6624
    %v6626 = vrcp.pop %v6625
    %v6627 = vmul.f32 %v6622, %v6626
    %6628 = vrot.lane.b32.xlu0 %v6534, 64
    %v6629 = vpop.permute.xlu0 %6628
    %v6632 = vsel %vm6541, %v6627, 0
    %6634 = vmatprep.subr.mxu0 0.0
    %6635 = vmatpush1.msra.mxu0 0.0
    %6636 = vmatprep.subr.mxu0 0.0
    %6637 = vmatpush1.msra.mxu0 0.0
    %6638 = vmatprep.subr.mxu0 0.0
    %6639 = vmatpush1.msra.mxu0 0.0
    %6640 = vmatprep.subr.mxu0 0.0
    %6641 = vmatpush1.msra.mxu0 0.0
    %6642 = vmatprep.subr.mxu0 0.0
    %6643 = vmatpush1.msra.mxu0 0.0
    %6644 = vmatprep.subr.mxu0 0.0
    %6645 = vmatpush1.msra.mxu0 0.0
    %6646 = vmatprep.subr.mxu0 0.0
    %6647 = vmatpush1.msra.mxu0 0.0
    %6648 = vmatprep.subr.mxu0 0.0
    %6649 = vmatpush1.msra.mxu0 0.0
    %6650 = vmatprep.subr.mxu0 0.0
    %6651 = vmatpush1.msra.mxu0 0.0
    %6652 = vmatprep.subr.mxu0 0.0
    %6653 = vmatpush1.msra.mxu0 0.0
    %6654 = vmatprep.subr.mxu0 0.0
    %6655 = vmatpush1.msra.mxu0 0.0
    %6656 = vmatprep.subr.mxu0 0.0
    %6657 = vmatpush1.msra.mxu0 0.0
    %6658 = vmatprep.subr.mxu0 0.0
    %6659 = vmatpush1.msra.mxu0 0.0
    %6660 = vmatprep.subr.mxu0 0.0
    %6661 = vmatpush1.msra.mxu0 0.0
    %6662 = vmatprep.subr.mxu0 0.0
    %6663 = vmatpush1.msra.mxu0 0.0
    %6664 = vmatprep.subr.mxu0 0.0
    %6665 = vmatpush1.msra.mxu0 %v6629
    %6666 = vmatprep.subr.mxu0 0.0
    %6667 = vmatpush2.msra.mxu0 0.0
    %6668 = vmatprep.subr.mxu0 0.0
    %6669 = vmatpush2.msra.mxu0 0.0
    %6670 = vmatprep.subr.mxu0 0.0
    %6671 = vmatpush2.msra.mxu0 0.0
    %6672 = vmatprep.subr.mxu0 0.0
    %6673 = vmatpush2.msra.mxu0 0.0
    %6674 = vmatprep.subr.mxu0 0.0
    %6675 = vmatpush2.msra.mxu0 0.0
    %6676 = vmatprep.subr.mxu0 0.0
    %6677 = vmatpush2.msra.mxu0 0.0
    %6678 = vmatprep.subr.mxu0 0.0
    %6679 = vmatpush2.msra.mxu0 0.0
    %6680 = vmatprep.subr.mxu0 0.0
    %6681 = vmatpush2.msra.mxu0 0.0
    %6682 = vmatprep.subr.mxu0 0.0
    %6683 = vmatpush2.msra.mxu0 0.0
    %6684 = vmatprep.subr.mxu0 0.0
    %6685 = vmatpush2.msra.mxu0 0.0
    %6686 = vmatprep.subr.mxu0 0.0
    %6687 = vmatpush2.msra.mxu0 0.0
    %6688 = vmatprep.subr.mxu0 0.0
    %6689 = vmatpush2.msra.mxu0 0.0
    %6690 = vmatprep.subr.mxu0 0.0
    %6691 = vmatpush2.msra.mxu0 0.0
    %6692 = vmatprep.subr.mxu0 0.0
    %6693 = vmatpush2.msra.mxu0 0.0
    %6694 = vmatprep.subr.mxu0 0.0
    %6695 = vmatpush2.msra.mxu0 0.0
    %6696 = vmatprep.subr.mxu0 0.0
    %6697 = vmatpush2.msra.mxu0 0.0
    %6698 = vmatprep.mubr.f32.mxu0 0.0
    %6699 = vmatmul.mubr.f32.gmra.mxu0 %v6632
    %v6700 = vpop.f32.mrf.mxu0
    %v6701 = vadd.f32 0.0, %v6700
    %v6702 = vpop.f32.mrf.mxu0
    %6703 = vdwg.mxu0
    %6704 = vrot.lane.b32.xlu0 %v6537, 120
    %v6705 = vpop.permute.xlu0 %6704
    %6706 = vrot.lane.b32.xlu0 %v6534, 88
    %v6707 = vpop.permute.xlu0 %6706
    %v6708 = vsel %vm6541, %v6705, 0
    %v6710 = vsel %vm6541, %v6707, 0
    %6712 = vmatprep.subr.mxu0 0.0
    %6713 = vmatpush1.xpose.msra.mxu0 0.0
    %6714 = vmatprep.subr.mxu0 0.0
    %6715 = vmatpush1.xpose.msra.mxu0 0.0
    %6716 = vmatprep.subr.mxu0 0.0
    %6717 = vmatpush1.xpose.msra.mxu0 0.0
    %6718 = vmatprep.subr.mxu0 0.0
    %6719 = vmatpush1.xpose.msra.mxu0 0.0
    %6720 = vmatprep.subr.mxu0 0.0
    %6721 = vmatpush1.xpose.msra.mxu0 0.0
    %6722 = vmatprep.subr.mxu0 0.0
    %6723 = vmatpush1.xpose.msra.mxu0 0.0
    %6724 = vmatprep.subr.mxu0 0.0
    %6725 = vmatpush1.xpose.msra.mxu0 0.0
    %6726 = vmatprep.subr.mxu0 0.0
    %6727 = vmatpush1.xpose.msra.mxu0 0.0
    %6728 = vmatprep.subr.mxu0 0.0
    %6729 = vmatpush1.xpose.msra.mxu0 0.0
    %6730 = vmatprep.subr.mxu0 0.0
    %6731 = vmatpush1.xpose.msra.mxu0 0.0
    %6732 = vmatprep.subr.mxu0 0.0
    %6733 = vmatpush1.xpose.msra.mxu0 0.0
    %6734 = vmatprep.subr.mxu0 0.0
    %6735 = vmatpush1.xpose.msra.mxu0 0.0
    %6736 = vmatprep.subr.mxu0 0.0
    %6737 = vmatpush1.xpose.msra.mxu0 0.0
    %6738 = vmatprep.subr.mxu0 0.0
    %6739 = vmatpush1.xpose.msra.mxu0 0.0
    %6740 = vmatprep.subr.mxu0 0.0
    %6741 = vmatpush1.xpose.msra.mxu0 0.0
    %6742 = vmatprep.subr.mxu0 0.0
    %6743 = vmatpush1.xpose.msra.mxu0 %v6710
    %6744 = vmatprep.subr.mxu0 0.0
    %6745 = vmatpush2.xpose.msra.mxu0 0.0
    %6746 = vmatprep.subr.mxu0 0.0
    %6747 = vmatpush2.xpose.msra.mxu0 0.0
    %6748 = vmatprep.subr.mxu0 0.0
    %6749 = vmatpush2.xpose.msra.mxu0 0.0
    %6750 = vmatprep.subr.mxu0 0.0
    %6751 = vmatpush2.xpose.msra.mxu0 0.0
    %6752 = vmatprep.subr.mxu0 0.0
    %6753 = vmatpush2.xpose.msra.mxu0 0.0
    %6754 = vmatprep.subr.mxu0 0.0
    %6755 = vmatpush2.xpose.msra.mxu0 0.0
    %6756 = vmatprep.subr.mxu0 0.0
    %6757 = vmatpush2.xpose.msra.mxu0 0.0
    %6758 = vmatprep.subr.mxu0 0.0
    %6759 = vmatpush2.xpose.msra.mxu0 0.0
    %6760 = vmatprep.subr.mxu0 0.0
    %6761 = vmatpush2.xpose.msra.mxu0 0.0
    %6762 = vmatprep.subr.mxu0 0.0
    %6763 = vmatpush2.xpose.msra.mxu0 0.0
    %6764 = vmatprep.subr.mxu0 0.0
    %6765 = vmatpush2.xpose.msra.mxu0 0.0
    %6766 = vmatprep.subr.mxu0 0.0
    %6767 = vmatpush2.xpose.msra.mxu0 0.0
    %6768 = vmatprep.subr.mxu0 0.0
    %6769 = vmatpush2.xpose.msra.mxu0 0.0
    %6770 = vmatprep.subr.mxu0 0.0
    %6771 = vmatpush2.xpose.msra.mxu0 0.0
    %6772 = vmatprep.subr.mxu0 0.0
    %6773 = vmatpush2.xpose.msra.mxu0 0.0
    %6774 = vmatprep.subr.mxu0 0.0
    %6775 = vmatpush2.xpose.msra.mxu0 0.0
    %6776 = vmatprep.mubr.f32.mxu0 0.0
    %6777 = vmatmul.mubr.f32.gmra.mxu0 %v6708
    %v6778 = vpop.f32.mrf.mxu0
    %v6779 = vadd.f32 %v6421, %v6778
    %v6780 = vpop.f32.mrf.mxu0
    %6781 = vdwg.mxu0
    %v6782 = vsel %vm6541, %v6779, -inf
    %6783 = vmax.xlane.f32.xlu0 %v6782
    %v6784 = vpop.xlane.xlu0 %6783
    %v6785 = vsub.f32 %v6779, %v6784
    %v6786 = vmul.f32 %v6785, 1.442695
    %v6787 = vpow.pop %v6786
    %v6788 = vsel %vm6541, %v6787, 0.0
    %6789 = vadd.xlane.f32.xlu0 %v6788
    %v6790 = vpop.xlane.xlu0 %6789
    %v6791 = vrcp.pop %v6790
    %v6792 = vmul.f32 %v6787, %v6791
    %6793 = vrot.lane.b32.xlu0 %v6534, 56
    %v6794 = vpop.permute.xlu0 %6793
    %v6797 = vsel %vm6541, %v6792, 0
    %6799 = vmatprep.subr.mxu0 0.0
    %6800 = vmatpush1.msra.mxu0 0.0
    %6801 = vmatprep.subr.mxu0 0.0
    %6802 = vmatpush1.msra.mxu0 0.0
    %6803 = vmatprep.subr.mxu0 0.0
    %6804 = vmatpush1.msra.mxu0 0.0
    %6805 = vmatprep.subr.mxu0 0.0
    %6806 = vmatpush1.msra.mxu0 0.0
    %6807 = vmatprep.subr.mxu0 0.0
    %6808 = vmatpush1.msra.mxu0 0.0
    %6809 = vmatprep.subr.mxu0 0.0
    %6810 = vmatpush1.msra.mxu0 0.0
    %6811 = vmatprep.subr.mxu0 0.0
    %6812 = vmatpush1.msra.mxu0 0.0
    %6813 = vmatprep.subr.mxu0 0.0
    %6814 = vmatpush1.msra.mxu0 0.0
    %6815 = vmatprep.subr.mxu0 0.0
    %6816 = vmatpush1.msra.mxu0 0.0
    %6817 = vmatprep.subr.mxu0 0.0
    %6818 = vmatpush1.msra.mxu0 0.0
    %6819 = vmatprep.subr.mxu0 0.0
    %6820 = vmatpush1.msra.mxu0 0.0
    %6821 = vmatprep.subr.mxu0 0.0
    %6822 = vmatpush1.msra.mxu0 0.0
    %6823 = vmatprep.subr.mxu0 0.0
    %6824 = vmatpush1.msra.mxu0 0.0
    %6825 = vmatprep.subr.mxu0 0.0
    %6826 = vmatpush1.msra.mxu0 0.0
    %6827 = vmatprep.subr.mxu0 0.0
    %6828 = vmatpush1.msra.mxu0 0.0
    %6829 = vmatprep.subr.mxu0 0.0
    %6830 = vmatpush1.msra.mxu0 %v6794
    %6831 = vmatprep.subr.mxu0 0.0
    %6832 = vmatpush2.msra.mxu0 0.0
    %6833 = vmatprep.subr.mxu0 0.0
    %6834 = vmatpush2.msra.mxu0 0.0
    %6835 = vmatprep.subr.mxu0 0.0
    %6836 = vmatpush2.msra.mxu0 0.0
    %6837 = vmatprep.subr.mxu0 0.0
    %6838 = vmatpush2.msra.mxu0 0.0
    %6839 = vmatprep.subr.mxu0 0.0
    %6840 = vmatpush2.msra.mxu0 0.0
    %6841 = vmatprep.subr.mxu0 0.0
    %6842 = vmatpush2.msra.mxu0 0.0
    %6843 = vmatprep.subr.mxu0 0.0
    %6844 = vmatpush2.msra.mxu0 0.0
    %6845 = vmatprep.subr.mxu0 0.0
    %6846 = vmatpush2.msra.mxu0 0.0
    %6847 = vmatprep.subr.mxu0 0.0
    %6848 = vmatpush2.msra.mxu0 0.0
    %6849 = vmatprep.subr.mxu0 0.0
    %6850 = vmatpush2.msra.mxu0 0.0
    %6851 = vmatprep.subr.mxu0 0.0
    %6852 = vmatpush2.msra.mxu0 0.0
    %6853 = vmatprep.subr.mxu0 0.0
    %6854 = vmatpush2.msra.mxu0 0.0
    %6855 = vmatprep.subr.mxu0 0.0
    %6856 = vmatpush2.msra.mxu0 0.0
    %6857 = vmatprep.subr.mxu0 0.0
    %6858 = vmatpush2.msra.mxu0 0.0
    %6859 = vmatprep.subr.mxu0 0.0
    %6860 = vmatpush2.msra.mxu0 0.0
    %6861 = vmatprep.subr.mxu0 0.0
    %6862 = vmatpush2.msra.mxu0 0.0
    %6863 = vmatprep.mubr.f32.mxu0 0.0
    %6864 = vmatmul.mubr.f32.gmra.mxu0 %v6797
    %v6865 = vpop.f32.mrf.mxu0
    %v6866 = vadd.f32 0.0, %v6865
    %v6867 = vpop.f32.mrf.mxu0
    %6868 = vdwg.mxu0
    %6869 = vrot.lane.b32.xlu0 %v6537, 112
    %v6870 = vpop.permute.xlu0 %6869
    %6871 = vrot.lane.b32.xlu0 %v6534, 80
    %v6872 = vpop.permute.xlu0 %6871
    %v6873 = vsel %vm6541, %v6870, 0
    %v6875 = vsel %vm6541, %v6872, 0
    %6877 = vmatprep.subr.mxu0 0.0
    %6878 = vmatpush1.xpose.msra.mxu0 0.0
    %6879 = vmatprep.subr.mxu0 0.0
    %6880 = vmatpush1.xpose.msra.mxu0 0.0
    %6881 = vmatprep.subr.mxu0 0.0
    %6882 = vmatpush1.xpose.msra.mxu0 0.0
    %6883 = vmatprep.subr.mxu0 0.0
    %6884 = vmatpush1.xpose.msra.mxu0 0.0
    %6885 = vmatprep.subr.mxu0 0.0
    %6886 = vmatpush1.xpose.msra.mxu0 0.0
    %6887 = vmatprep.subr.mxu0 0.0
    %6888 = vmatpush1.xpose.msra.mxu0 0.0
    %6889 = vmatprep.subr.mxu0 0.0
    %6890 = vmatpush1.xpose.msra.mxu0 0.0
    %6891 = vmatprep.subr.mxu0 0.0
    %6892 = vmatpush1.xpose.msra.mxu0 0.0
    %6893 = vmatprep.subr.mxu0 0.0
    %6894 = vmatpush1.xpose.msra.mxu0 0.0
    %6895 = vmatprep.subr.mxu0 0.0
    %6896 = vmatpush1.xpose.msra.mxu0 0.0
    %6897 = vmatprep.subr.mxu0 0.0
    %6898 = vmatpush1.xpose.msra.mxu0 0.0
    %6899 = vmatprep.subr.mxu0 0.0
    %6900 = vmatpush1.xpose.msra.mxu0 0.0
    %6901 = vmatprep.subr.mxu0 0.0
    %6902 = vmatpush1.xpose.msra.mxu0 0.0
    %6903 = vmatprep.subr.mxu0 0.0
    %6904 = vmatpush1.xpose.msra.mxu0 0.0
    %6905 = vmatprep.subr.mxu0 0.0
    %6906 = vmatpush1.xpose.msra.mxu0 0.0
    %6907 = vmatprep.subr.mxu0 0.0
    %6908 = vmatpush1.xpose.msra.mxu0 %v6875
    %6909 = vmatprep.subr.mxu0 0.0
    %6910 = vmatpush2.xpose.msra.mxu0 0.0
    %6911 = vmatprep.subr.mxu0 0.0
    %6912 = vmatpush2.xpose.msra.mxu0 0.0
    %6913 = vmatprep.subr.mxu0 0.0
    %6914 = vmatpush2.xpose.msra.mxu0 0.0
    %6915 = vmatprep.subr.mxu0 0.0
    %6916 = vmatpush2.xpose.msra.mxu0 0.0
    %6917 = vmatprep.subr.mxu0 0.0
    %6918 = vmatpush2.xpose.msra.mxu0 0.0
    %6919 = vmatprep.subr.mxu0 0.0
    %6920 = vmatpush2.xpose.msra.mxu0 0.0
    %6921 = vmatprep.subr.mxu0 0.0
    %6922 = vmatpush2.xpose.msra.mxu0 0.0
    %6923 = vmatprep.subr.mxu0 0.0
    %6924 = vmatpush2.xpose.msra.mxu0 0.0
    %6925 = vmatprep.subr.mxu0 0.0
    %6926 = vmatpush2.xpose.msra.mxu0 0.0
    %6927 = vmatprep.subr.mxu0 0.0
    %6928 = vmatpush2.xpose.msra.mxu0 0.0
    %6929 = vmatprep.subr.mxu0 0.0
    %6930 = vmatpush2.xpose.msra.mxu0 0.0
    %6931 = vmatprep.subr.mxu0 0.0
    %6932 = vmatpush2.xpose.msra.mxu0 0.0
    %6933 = vmatprep.subr.mxu0 0.0
    %6934 = vmatpush2.xpose.msra.mxu0 0.0
    %6935 = vmatprep.subr.mxu0 0.0
    %6936 = vmatpush2.xpose.msra.mxu0 0.0
    %6937 = vmatprep.subr.mxu0 0.0
    %6938 = vmatpush2.xpose.msra.mxu0 0.0
    %6939 = vmatprep.subr.mxu0 0.0
    %6940 = vmatpush2.xpose.msra.mxu0 0.0
    %6941 = vmatprep.mubr.f32.mxu0 0.0
    %6942 = vmatmul.mubr.f32.gmra.mxu0 %v6873
    %v6943 = vpop.f32.mrf.mxu0
    %v6944 = vadd.f32 %v6421, %v6943
    %v6945 = vpop.f32.mrf.mxu0
    %6946 = vdwg.mxu0
    %v6947 = vsel %vm6541, %v6944, -inf
    %6948 = vmax.xlane.f32.xlu0 %v6947
    %v6949 = vpop.xlane.xlu0 %6948
    %v6950 = vsub.f32 %v6944, %v6949
    %v6951 = vmul.f32 %v6950, 1.442695
    %v6952 = vpow.pop %v6951
    %v6953 = vsel %vm6541, %v6952, 0.0
    %6954 = vadd.xlane.f32.xlu0 %v6953
    %v6955 = vpop.xlane.xlu0 %6954
    %v6956 = vrcp.pop %v6955
    %v6957 = vmul.f32 %v6952, %v6956
    %6958 = vrot.lane.b32.xlu0 %v6534, 48
    %v6959 = vpop.permute.xlu0 %6958
    %v6962 = vsel %vm6541, %v6957, 0
    %6964 = vmatprep.subr.mxu0 0.0
    %6965 = vmatpush1.msra.mxu0 0.0
    %6966 = vmatprep.subr.mxu0 0.0
    %6967 = vmatpush1.msra.mxu0 0.0
    %6968 = vmatprep.subr.mxu0 0.0
    %6969 = vmatpush1.msra.mxu0 0.0
    %6970 = vmatprep.subr.mxu0 0.0
    %6971 = vmatpush1.msra.mxu0 0.0
    %6972 = vmatprep.subr.mxu0 0.0
    %6973 = vmatpush1.msra.mxu0 0.0
    %6974 = vmatprep.subr.mxu0 0.0
    %6975 = vmatpush1.msra.mxu0 0.0
    %6976 = vmatprep.subr.mxu0 0.0
    %6977 = vmatpush1.msra.mxu0 0.0
    %6978 = vmatprep.subr.mxu0 0.0
    %6979 = vmatpush1.msra.mxu0 0.0
    %6980 = vmatprep.subr.mxu0 0.0
    %6981 = vmatpush1.msra.mxu0 0.0
    %6982 = vmatprep.subr.mxu0 0.0
    %6983 = vmatpush1.msra.mxu0 0.0
    %6984 = vmatprep.subr.mxu0 0.0
    %6985 = vmatpush1.msra.mxu0 0.0
    %6986 = vmatprep.subr.mxu0 0.0
    %6987 = vmatpush1.msra.mxu0 0.0
    %6988 = vmatprep.subr.mxu0 0.0
    %6989 = vmatpush1.msra.mxu0 0.0
    %6990 = vmatprep.subr.mxu0 0.0
    %6991 = vmatpush1.msra.mxu0 0.0
    %6992 = vmatprep.subr.mxu0 0.0
    %6993 = vmatpush1.msra.mxu0 0.0
    %6994 = vmatprep.subr.mxu0 0.0
    %6995 = vmatpush1.msra.mxu0 %v6959
    %6996 = vmatprep.subr.mxu0 0.0
    %6997 = vmatpush2.msra.mxu0 0.0
    %6998 = vmatprep.subr.mxu0 0.0
    %6999 = vmatpush2.msra.mxu0 0.0
    %7000 = vmatprep.subr.mxu0 0.0
    %7001 = vmatpush2.msra.mxu0 0.0
    %7002 = vmatprep.subr.mxu0 0.0
    %7003 = vmatpush2.msra.mxu0 0.0
    %7004 = vmatprep.subr.mxu0 0.0
    %7005 = vmatpush2.msra.mxu0 0.0
    %7006 = vmatprep.subr.mxu0 0.0
    %7007 = vmatpush2.msra.mxu0 0.0
    %7008 = vmatprep.subr.mxu0 0.0
    %7009 = vmatpush2.msra.mxu0 0.0
    %7010 = vmatprep.subr.mxu0 0.0
    %7011 = vmatpush2.msra.mxu0 0.0
    %7012 = vmatprep.subr.mxu0 0.0
    %7013 = vmatpush2.msra.mxu0 0.0
    %7014 = vmatprep.subr.mxu0 0.0
    %7015 = vmatpush2.msra.mxu0 0.0
    %7016 = vmatprep.subr.mxu0 0.0
    %7017 = vmatpush2.msra.mxu0 0.0
    %7018 = vmatprep.subr.mxu0 0.0
    %7019 = vmatpush2.msra.mxu0 0.0
    %7020 = vmatprep.subr.mxu0 0.0
    %7021 = vmatpush2.msra.mxu0 0.0
    %7022 = vmatprep.subr.mxu0 0.0
    %7023 = vmatpush2.msra.mxu0 0.0
    %7024 = vmatprep.subr.mxu0 0.0
    %7025 = vmatpush2.msra.mxu0 0.0
    %7026 = vmatprep.subr.mxu0 0.0
    %7027 = vmatpush2.msra.mxu0 0.0
    %7028 = vmatprep.mubr.f32.mxu0 0.0
    %7029 = vmatmul.mubr.f32.gmra.mxu0 %v6962
    %v7030 = vpop.f32.mrf.mxu0
    %v7031 = vadd.f32 0.0, %v7030
    %v7032 = vpop.f32.mrf.mxu0
    %7033 = vdwg.mxu0
    %7034 = vrot.lane.b32.xlu0 %v6537, 104
    %v7035 = vpop.permute.xlu0 %7034
    %7036 = vrot.lane.b32.xlu0 %v6534, 72
    %v7037 = vpop.permute.xlu0 %7036
    %v7038 = vsel %vm6541, %v7035, 0
    %v7040 = vsel %vm6541, %v7037, 0
    %7042 = vmatprep.subr.mxu0 0.0
    %7043 = vmatpush1.xpose.msra.mxu0 0.0
    %7044 = vmatprep.subr.mxu0 0.0
    %7045 = vmatpush1.xpose.msra.mxu0 0.0
    %7046 = vmatprep.subr.mxu0 0.0
    %7047 = vmatpush1.xpose.msra.mxu0 0.0
    %7048 = vmatprep.subr.mxu0 0.0
    %7049 = vmatpush1.xpose.msra.mxu0 0.0
    %7050 = vmatprep.subr.mxu0 0.0
    %7051 = vmatpush1.xpose.msra.mxu0 0.0
    %7052 = vmatprep.subr.mxu0 0.0
    %7053 = vmatpush1.xpose.msra.mxu0 0.0
    %7054 = vmatprep.subr.mxu0 0.0
    %7055 = vmatpush1.xpose.msra.mxu0 0.0
    %7056 = vmatprep.subr.mxu0 0.0
    %7057 = vmatpush1.xpose.msra.mxu0 0.0
    %7058 = vmatprep.subr.mxu0 0.0
    %7059 = vmatpush1.xpose.msra.mxu0 0.0
    %7060 = vmatprep.subr.mxu0 0.0
    %7061 = vmatpush1.xpose.msra.mxu0 0.0
    %7062 = vmatprep.subr.mxu0 0.0
    %7063 = vmatpush1.xpose.msra.mxu0 0.0
    %7064 = vmatprep.subr.mxu0 0.0
    %7065 = vmatpush1.xpose.msra.mxu0 0.0
    %7066 = vmatprep.subr.mxu0 0.0
    %7067 = vmatpush1.xpose.msra.mxu0 0.0
    %7068 = vmatprep.subr.mxu0 0.0
    %7069 = vmatpush1.xpose.msra.mxu0 0.0
    %7070 = vmatprep.subr.mxu0 0.0
    %7071 = vmatpush1.xpose.msra.mxu0 0.0
    %7072 = vmatprep.subr.mxu0 0.0
    %7073 = vmatpush1.xpose.msra.mxu0 %v7040
    %7074 = vmatprep.subr.mxu0 0.0
    %7075 = vmatpush2.xpose.msra.mxu0 0.0
    %7076 = vmatprep.subr.mxu0 0.0
    %7077 = vmatpush2.xpose.msra.mxu0 0.0
    %7078 = vmatprep.subr.mxu0 0.0
    %7079 = vmatpush2.xpose.msra.mxu0 0.0
    %7080 = vmatprep.subr.mxu0 0.0
    %7081 = vmatpush2.xpose.msra.mxu0 0.0
    %7082 = vmatprep.subr.mxu0 0.0
    %7083 = vmatpush2.xpose.msra.mxu0 0.0
    %7084 = vmatprep.subr.mxu0 0.0
    %7085 = vmatpush2.xpose.msra.mxu0 0.0
    %7086 = vmatprep.subr.mxu0 0.0
    %7087 = vmatpush2.xpose.msra.mxu0 0.0
    %7088 = vmatprep.subr.mxu0 0.0
    %7089 = vmatpush2.xpose.msra.mxu0 0.0
    %7090 = vmatprep.subr.mxu0 0.0
    %7091 = vmatpush2.xpose.msra.mxu0 0.0
    %7092 = vmatprep.subr.mxu0 0.0
    %7093 = vmatpush2.xpose.msra.mxu0 0.0
    %7094 = vmatprep.subr.mxu0 0.0
    %7095 = vmatpush2.xpose.msra.mxu0 0.0
    %7096 = vmatprep.subr.mxu0 0.0
    %7097 = vmatpush2.xpose.msra.mxu0 0.0
    %7098 = vmatprep.subr.mxu0 0.0
    %7099 = vmatpush2.xpose.msra.mxu0 0.0
    %7100 = vmatprep.subr.mxu0 0.0
    %7101 = vmatpush2.xpose.msra.mxu0 0.0
    %7102 = vmatprep.subr.mxu0 0.0
    %7103 = vmatpush2.xpose.msra.mxu0 0.0
    %7104 = vmatprep.subr.mxu0 0.0
    %7105 = vmatpush2.xpose.msra.mxu0 0.0
    %7106 = vmatprep.mubr.f32.mxu0 0.0
    %7107 = vmatmul.mubr.f32.gmra.mxu0 %v7038
    %v7108 = vpop.f32.mrf.mxu0
    %v7109 = vadd.f32 %v6421, %v7108
    %v7110 = vpop.f32.mrf.mxu0
    %7111 = vdwg.mxu0
    %v7112 = vsel %vm6541, %v7109, -inf
    %7113 = vmax.xlane.f32.xlu0 %v7112
    %v7114 = vpop.xlane.xlu0 %7113
    %v7115 = vsub.f32 %v7109, %v7114
    %v7116 = vmul.f32 %v7115, 1.442695
    %v7117 = vpow.pop %v7116
    %v7118 = vsel %vm6541, %v7117, 0.0
    %7119 = vadd.xlane.f32.xlu0 %v7118
    %v7120 = vpop.xlane.xlu0 %7119
    %v7121 = vrcp.pop %v7120
    %v7122 = vmul.f32 %v7117, %v7121
    %7123 = vrot.lane.b32.xlu0 %v6534, 40
    %v7124 = vpop.permute.xlu0 %7123
    %v7127 = vsel %vm6541, %v7122, 0
    %7129 = vmatprep.subr.mxu0 0.0
    %7130 = vmatpush1.msra.mxu0 0.0
    %7131 = vmatprep.subr.mxu0 0.0
    %7132 = vmatpush1.msra.mxu0 0.0
    %7133 = vmatprep.subr.mxu0 0.0
    %7134 = vmatpush1.msra.mxu0 0.0
    %7135 = vmatprep.subr.mxu0 0.0
    %7136 = vmatpush1.msra.mxu0 0.0
    %7137 = vmatprep.subr.mxu0 0.0
    %7138 = vmatpush1.msra.mxu0 0.0
    %7139 = vmatprep.subr.mxu0 0.0
    %7140 = vmatpush1.msra.mxu0 0.0
    %7141 = vmatprep.subr.mxu0 0.0
    %7142 = vmatpush1.msra.mxu0 0.0
    %7143 = vmatprep.subr.mxu0 0.0
    %7144 = vmatpush1.msra.mxu0 0.0
    %7145 = vmatprep.subr.mxu0 0.0
    %7146 = vmatpush1.msra.mxu0 0.0
    %7147 = vmatprep.subr.mxu0 0.0
    %7148 = vmatpush1.msra.mxu0 0.0
    %7149 = vmatprep.subr.mxu0 0.0
    %7150 = vmatpush1.msra.mxu0 0.0
    %7151 = vmatprep.subr.mxu0 0.0
    %7152 = vmatpush1.msra.mxu0 0.0
    %7153 = vmatprep.subr.mxu0 0.0
    %7154 = vmatpush1.msra.mxu0 0.0
    %7155 = vmatprep.subr.mxu0 0.0
    %7156 = vmatpush1.msra.mxu0 0.0
    %7157 = vmatprep.subr.mxu0 0.0
    %7158 = vmatpush1.msra.mxu0 0.0
    %7159 = vmatprep.subr.mxu0 0.0
    %7160 = vmatpush1.msra.mxu0 %v7124
    %7161 = vmatprep.subr.mxu0 0.0
    %7162 = vmatpush2.msra.mxu0 0.0
    %7163 = vmatprep.subr.mxu0 0.0
    %7164 = vmatpush2.msra.mxu0 0.0
    %7165 = vmatprep.subr.mxu0 0.0
    %7166 = vmatpush2.msra.mxu0 0.0
    %7167 = vmatprep.subr.mxu0 0.0
    %7168 = vmatpush2.msra.mxu0 0.0
    %7169 = vmatprep.subr.mxu0 0.0
    %7170 = vmatpush2.msra.mxu0 0.0
    %7171 = vmatprep.subr.mxu0 0.0
    %7172 = vmatpush2.msra.mxu0 0.0
    %7173 = vmatprep.subr.mxu0 0.0
    %7174 = vmatpush2.msra.mxu0 0.0
    %7175 = vmatprep.subr.mxu0 0.0
    %7176 = vmatpush2.msra.mxu0 0.0
    %7177 = vmatprep.subr.mxu0 0.0
    %7178 = vmatpush2.msra.mxu0 0.0
    %7179 = vmatprep.subr.mxu0 0.0
    %7180 = vmatpush2.msra.mxu0 0.0
    %7181 = vmatprep.subr.mxu0 0.0
    %7182 = vmatpush2.msra.mxu0 0.0
    %7183 = vmatprep.subr.mxu0 0.0
    %7184 = vmatpush2.msra.mxu0 0.0
    %7185 = vmatprep.subr.mxu0 0.0
    %7186 = vmatpush2.msra.mxu0 0.0
    %7187 = vmatprep.subr.mxu0 0.0
    %7188 = vmatpush2.msra.mxu0 0.0
    %7189 = vmatprep.subr.mxu0 0.0
    %7190 = vmatpush2.msra.mxu0 0.0
    %7191 = vmatprep.subr.mxu0 0.0
    %7192 = vmatpush2.msra.mxu0 0.0
    %7193 = vmatprep.mubr.f32.mxu0 0.0
    %7194 = vmatmul.mubr.f32.gmra.mxu0 %v7127
    %v7195 = vpop.f32.mrf.mxu0
    %v7196 = vadd.f32 0.0, %v7195
    %v7197 = vpop.f32.mrf.mxu0
    %7198 = vdwg.mxu0
    %7200 = vrot.lane.b32.xlu0 %v6866, 8
    %v7201 = vpop.permute.xlu0 %7200
    %7204 = vrot.lane.b32.xlu0 %v7031, 16
    %v7205 = vpop.permute.xlu0 %7204
    %7208 = vrot.lane.b32.xlu0 %v7196, 24
    %v7209 = vpop.permute.xlu0 %7208
    %v7211 = vsel %vm6541, %v6701, %v7201
    %vm7212 = vcmask 130048
    %v7213 = vsel %vm7212, %v7211, %v7205
    %vm7214 = vcmask 195584
    %v7215 = vsel %vm7214, %v7213, %v7209
    %v7217 = vlaneseq
    %v7218 = vshrl.u32 %v7217, 7
    %v7219 = vsub.s32 0, %v7218
    %v7220 = vrot.slane %v6431, %v7219
    %v7223 = vsel %vm1962, %v7215, 0
    %7225 = vmatprep.subr.mxu0 0.0
    %7226 = vmatpush1.msra.mxu0 0.0
    %7227 = vmatprep.subr.mxu0 0.0
    %7228 = vmatpush1.msra.mxu0 0.0
    %7229 = vmatprep.subr.mxu0 0.0
    %7230 = vmatpush1.msra.mxu0 0.0
    %7231 = vmatprep.subr.mxu0 0.0
    %7232 = vmatpush1.msra.mxu0 0.0
    %7233 = vmatprep.subr.mxu0 0.0
    %7234 = vmatpush1.msra.mxu0 0.0
    %7235 = vmatprep.subr.mxu0 0.0
    %7236 = vmatpush1.msra.mxu0 0.0
    %7237 = vmatprep.subr.mxu0 0.0
    %7238 = vmatpush1.msra.mxu0 0.0
    %7239 = vmatprep.subr.mxu0 0.0
    %7240 = vmatpush1.msra.mxu0 0.0
    %7241 = vmatprep.subr.mxu0 0.0
    %7242 = vmatpush1.msra.mxu0 0.0
    %7243 = vmatprep.subr.mxu0 0.0
    %7244 = vmatpush1.msra.mxu0 0.0
    %7245 = vmatprep.subr.mxu0 0.0
    %7246 = vmatpush1.msra.mxu0 0.0
    %7247 = vmatprep.subr.mxu0 0.0
    %7248 = vmatpush1.msra.mxu0 0.0
    %7249 = vmatprep.subr.mxu0 0.0
    %7250 = vmatpush1.msra.mxu0 %v6430
    %7251 = vmatprep.subr.mxu0 0.0
    %7252 = vmatpush1.msra.mxu0 %v6429
    %7253 = vmatprep.subr.mxu0 0.0
    %7254 = vmatpush1.msra.mxu0 %v6428
    %7255 = vmatprep.subr.mxu0 0.0
    %7256 = vmatpush1.msra.mxu0 %v6427
    %7257 = vmatprep.subr.mxu0 0.0
    %7258 = vmatpush2.msra.mxu0 0.0
    %7259 = vmatprep.subr.mxu0 0.0
    %7260 = vmatpush2.msra.mxu0 0.0
    %7261 = vmatprep.subr.mxu0 0.0
    %7262 = vmatpush2.msra.mxu0 0.0
    %7263 = vmatprep.subr.mxu0 0.0
    %7264 = vmatpush2.msra.mxu0 0.0
    %7265 = vmatprep.subr.mxu0 0.0
    %7266 = vmatpush2.msra.mxu0 0.0
    %7267 = vmatprep.subr.mxu0 0.0
    %7268 = vmatpush2.msra.mxu0 0.0
    %7269 = vmatprep.subr.mxu0 0.0
    %7270 = vmatpush2.msra.mxu0 0.0
    %7271 = vmatprep.subr.mxu0 0.0
    %7272 = vmatpush2.msra.mxu0 0.0
    %7273 = vmatprep.subr.mxu0 0.0
    %7274 = vmatpush2.msra.mxu0 0.0
    %7275 = vmatprep.subr.mxu0 0.0
    %7276 = vmatpush2.msra.mxu0 0.0
    %7277 = vmatprep.subr.mxu0 0.0
    %7278 = vmatpush2.msra.mxu0 0.0
    %7279 = vmatprep.subr.mxu0 0.0
    %7280 = vmatpush2.msra.mxu0 0.0
    %7281 = vmatprep.subr.mxu0 0.0
    %7282 = vmatpush2.msra.mxu0 0.0
    %7283 = vmatprep.subr.mxu0 0.0
    %7284 = vmatpush2.msra.mxu0 0.0
    %7285 = vmatprep.subr.mxu0 0.0
    %7286 = vmatpush2.msra.mxu0 0.0
    %7287 = vmatprep.subr.mxu0 0.0
    %7288 = vmatpush2.msra.mxu0 0.0
    %7289 = vmatprep.mubr.f32.mxu0 0.0
    %7290 = vmatmul.mubr.f32.gmra.mxu0 %v7223
    %v7291 = vpop.f32.mrf.mxu0
    %v7292 = vadd.f32 %v7220, %v7291
    %v7293 = vpop.f32.mrf.mxu0
    %7294 = vdwg.mxu0
    %v7295 = vadd.f32 %v6420, %v7292
    %v7296 = vsel %vm1962, %v7295, 0.0
    %7297 = vadd.xlane.f32.xlu0 %v7296
    %v7298 = vpop.xlane.xlu0 %7297
    %v7299 = vrcp.pop 32.0
    %v7300 = vmul.f32 %v7298, %v7299
    %v7301 = vsub.f32 %v7295, %v7300
    %v7302 = vmul.f32 %v7301, %v7301
    %v7303 = vsel %vm1962, %v7302, 0.0
    %7304 = vadd.xlane.f32.xlu0 %v7303
    %v7305 = vpop.xlane.xlu0 %7304
    %v7306 = vmul.f32 %v7305, %v7299
    %v7307 = vadd.f32 %v7306, 1e-05
    %v7308 = vrsqrt.pop %v7307
    %v7309 = vmul.f32 %v7301, %v7308
    %v7311 = vlaneseq
    %v7312 = vshrl.u32 %v7311, 7
    %v7313 = vsub.s32 0, %v7312
    %v7314 = vrot.slane %v6432, %v7313
    %v7316 = vmul.f32 %v7309, %v7314
    %v7318 = vlaneseq
    %v7319 = vshrl.u32 %v7318, 7
    %v7320 = vsub.s32 0, %v7319
    %v7321 = vrot.slane %v6433, %v7320
    %v7323 = vadd.f32 %v7316, %v7321
    %v7325 = vlaneseq
    %v7326 = vshrl.u32 %v7325, 7
    %v7327 = vsub.s32 0, %v7326
    %v7328 = vrot.slane %v6438, %v7327
    %v7331 = vsel %vm1962, %v7323, 0
    %7333 = vmatprep.subr.mxu0 0.0
    %7334 = vmatpush1.msra.mxu0 0.0
    %7335 = vmatprep.subr.mxu0 0.0
    %7336 = vmatpush1.msra.mxu0 0.0
    %7337 = vmatprep.subr.mxu0 0.0
    %7338 = vmatpush1.msra.mxu0 0.0
    %7339 = vmatprep.subr.mxu0 0.0
    %7340 = vmatpush1.msra.mxu0 0.0
    %7341 = vmatprep.subr.mxu0 0.0
    %7342 = vmatpush1.msra.mxu0 0.0
    %7343 = vmatprep.subr.mxu0 0.0
    %7344 = vmatpush1.msra.mxu0 0.0
    %7345 = vmatprep.subr.mxu0 0.0
    %7346 = vmatpush1.msra.mxu0 0.0
    %7347 = vmatprep.subr.mxu0 0.0
    %7348 = vmatpush1.msra.mxu0 0.0
    %7349 = vmatprep.subr.mxu0 0.0
    %7350 = vmatpush1.msra.mxu0 0.0
    %7351 = vmatprep.subr.mxu0 0.0
    %7352 = vmatpush1.msra.mxu0 0.0
    %7353 = vmatprep.subr.mxu0 0.0
    %7354 = vmatpush1.msra.mxu0 0.0
    %7355 = vmatprep.subr.mxu0 0.0
    %7356 = vmatpush1.msra.mxu0 0.0
    %7357 = vmatprep.subr.mxu0 0.0
    %7358 = vmatpush1.msra.mxu0 %v6437
    %7359 = vmatprep.subr.mxu0 0.0
    %7360 = vmatpush1.msra.mxu0 %v6436
    %7361 = vmatprep.subr.mxu0 0.0
    %7362 = vmatpush1.msra.mxu0 %v6435
    %7363 = vmatprep.subr.mxu0 0.0
    %7364 = vmatpush1.msra.mxu0 %v6434
    %7365 = vmatprep.subr.mxu0 0.0
    %7366 = vmatpush2.msra.mxu0 0.0
    %7367 = vmatprep.subr.mxu0 0.0
    %7368 = vmatpush2.msra.mxu0 0.0
    %7369 = vmatprep.subr.mxu0 0.0
    %7370 = vmatpush2.msra.mxu0 0.0
    %7371 = vmatprep.subr.mxu0 0.0
    %7372 = vmatpush2.msra.mxu0 0.0
    %7373 = vmatprep.subr.mxu0 0.0
    %7374 = vmatpush2.msra.mxu0 0.0
    %7375 = vmatprep.subr.mxu0 0.0
    %7376 = vmatpush2.msra.mxu0 0.0
    %7377 = vmatprep.subr.mxu0 0.0
    %7378 = vmatpush2.msra.mxu0 0.0
    %7379 = vmatprep.subr.mxu0 0.0
    %7380 = vmatpush2.msra.mxu0 0.0
    %7381 = vmatprep.subr.mxu0 0.0
    %7382 = vmatpush2.msra.mxu0 0.0
    %7383 = vmatprep.subr.mxu0 0.0
    %7384 = vmatpush2.msra.mxu0 0.0
    %7385 = vmatprep.subr.mxu0 0.0
    %7386 = vmatpush2.msra.mxu0 0.0
    %7387 = vmatprep.subr.mxu0 0.0
    %7388 = vmatpush2.msra.mxu0 0.0
    %7389 = vmatprep.subr.mxu0 0.0
    %7390 = vmatpush2.msra.mxu0 0.0
    %7391 = vmatprep.subr.mxu0 0.0
    %7392 = vmatpush2.msra.mxu0 0.0
    %7393 = vmatprep.subr.mxu0 0.0
    %7394 = vmatpush2.msra.mxu0 0.0
    %7395 = vmatprep.subr.mxu0 0.0
    %7396 = vmatpush2.msra.mxu0 0.0
    %7397 = vmatprep.mubr.f32.mxu0 0.0
    %7398 = vmatmul.mubr.f32.gmra.mxu0 %v7331
    %v7399 = vpop.f32.mrf.mxu0
    %v7400 = vadd.f32 %v7328, %v7399
    %v7401 = vpop.f32.mrf.mxu0
    %7402 = vdwg.mxu0
    %v7403 = vmax.f32 %v7400, 0.0
    %v7405 = vlaneseq
    %v7406 = vshrl.u32 %v7405, 7
    %v7407 = vsub.s32 0, %v7406
    %v7408 = vrot.slane %v6455, %v7407
    %7410 = vmatprep.subr.mxu0 0.0
    %7411 = vmatpush1.msra.mxu0 %v6454
    %7412 = vmatprep.subr.mxu0 0.0
    %7413 = vmatpush1.msra.mxu0 %v6453
    %7414 = vmatprep.subr.mxu0 0.0
    %7415 = vmatpush1.msra.mxu0 %v6452
    %7416 = vmatprep.subr.mxu0 0.0
    %7417 = vmatpush1.msra.mxu0 %v6451
    %7418 = vmatprep.subr.mxu0 0.0
    %7419 = vmatpush1.msra.mxu0 %v6450
    %7420 = vmatprep.subr.mxu0 0.0
    %7421 = vmatpush1.msra.mxu0 %v6449
    %7422 = vmatprep.subr.mxu0 0.0
    %7423 = vmatpush1.msra.mxu0 %v6448
    %7424 = vmatprep.subr.mxu0 0.0
    %7425 = vmatpush1.msra.mxu0 %v6447
    %7426 = vmatprep.subr.mxu0 0.0
    %7427 = vmatpush1.msra.mxu0 %v6446
    %7428 = vmatprep.subr.mxu0 0.0
    %7429 = vmatpush1.msra.mxu0 %v6445
    %7430 = vmatprep.subr.mxu0 0.0
    %7431 = vmatpush1.msra.mxu0 %v6444
    %7432 = vmatprep.subr.mxu0 0.0
    %7433 = vmatpush1.msra.mxu0 %v6443
    %7434 = vmatprep.subr.mxu0 0.0
    %7435 = vmatpush1.msra.mxu0 %v6442
    %7436 = vmatprep.subr.mxu0 0.0
    %7437 = vmatpush1.msra.mxu0 %v6441
    %7438 = vmatprep.subr.mxu0 0.0
    %7439 = vmatpush1.msra.mxu0 %v6440
    %7440 = vmatprep.subr.mxu0 0.0
    %7441 = vmatpush1.msra.mxu0 %v6439
    %7442 = vmatprep.subr.mxu0 0.0
    %7443 = vmatpush2.msra.mxu0 0.0
    %7444 = vmatprep.subr.mxu0 0.0
    %7445 = vmatpush2.msra.mxu0 0.0
    %7446 = vmatprep.subr.mxu0 0.0
    %7447 = vmatpush2.msra.mxu0 0.0
    %7448 = vmatprep.subr.mxu0 0.0
    %7449 = vmatpush2.msra.mxu0 0.0
    %7450 = vmatprep.subr.mxu0 0.0
    %7451 = vmatpush2.msra.mxu0 0.0
    %7452 = vmatprep.subr.mxu0 0.0
    %7453 = vmatpush2.msra.mxu0 0.0
    %7454 = vmatprep.subr.mxu0 0.0
    %7455 = vmatpush2.msra.mxu0 0.0
    %7456 = vmatprep.subr.mxu0 0.0
    %7457 = vmatpush2.msra.mxu0 0.0
    %7458 = vmatprep.subr.mxu0 0.0
    %7459 = vmatpush2.msra.mxu0 0.0
    %7460 = vmatprep.subr.mxu0 0.0
    %7461 = vmatpush2.msra.mxu0 0.0
    %7462 = vmatprep.subr.mxu0 0.0
    %7463 = vmatpush2.msra.mxu0 0.0
    %7464 = vmatprep.subr.mxu0 0.0
    %7465 = vmatpush2.msra.mxu0 0.0
    %7466 = vmatprep.subr.mxu0 0.0
    %7467 = vmatpush2.msra.mxu0 0.0
    %7468 = vmatprep.subr.mxu0 0.0
    %7469 = vmatpush2.msra.mxu0 0.0
    %7470 = vmatprep.subr.mxu0 0.0
    %7471 = vmatpush2.msra.mxu0 0.0
    %7472 = vmatprep.subr.mxu0 0.0
    %7473 = vmatpush2.msra.mxu0 0.0
    %7474 = vmatprep.mubr.f32.mxu0 0.0
    %7475 = vmatmul.mubr.f32.gmra.mxu0 %v7403
    %v7476 = vpop.f32.mrf.mxu0
    %v7477 = vadd.f32 %v7408, %v7476
    %v7478 = vpop.f32.mrf.mxu0
    %7479 = vdwg.mxu0
    %v7480 = vadd.f32 %v7323, %v7477
    %v7481 = vsel %vm1962, %v7480, 0.0
    %7482 = vadd.xlane.f32.xlu0 %v7481
    %v7483 = vpop.xlane.xlu0 %7482
    %v7484 = vmul.f32 %v7483, %v7299
    %v7485 = vsub.f32 %v7480, %v7484
    %v7486 = vmul.f32 %v7485, %v7485
    %v7487 = vsel %vm1962, %v7486, 0.0
    %7488 = vadd.xlane.f32.xlu0 %v7487
    %v7489 = vpop.xlane.xlu0 %7488
    %v7490 = vmul.f32 %v7489, %v7299
    %v7491 = vadd.f32 %v7490, 1e-05
    %v7492 = vrsqrt.pop %v7491
    %v7493 = vmul.f32 %v7485, %v7492
    %v7495 = vlaneseq
    %v7496 = vshrl.u32 %v7495, 7
    %v7497 = vsub.s32 0, %v7496
    %v7498 = vrot.slane %v6456, %v7497
    %v7500 = vmul.f32 %v7493, %v7498
    %v7502 = vlaneseq
    %v7503 = vshrl.u32 %v7502, 7
    %v7504 = vsub.s32 0, %v7503
    %v7505 = vrot.slane %v6457, %v7504
    %v7507 = vadd.f32 %v7500, %v7505
    %v7508 = vld [vmem:[%s47] sm:$0xff]
    %v7509 = vld [vmem:[%s47 + $0x8] sm:$0xff]
    %v7510 = vld [vmem:[%s47 + $0x10] sm:$0xff]
    %v7511 = vld [vmem:[%s47 + $0x18] sm:$0xff]
    %v7512 = vld [vmem:[%s49] sm:$0x1]
    %v7513 = vld [vmem:[%s51] sm:$0xff]
    %v7514 = vld [vmem:[%s51 + $0x8] sm:$0xff]
    %v7515 = vld [vmem:[%s51 + $0x10] sm:$0xff]
    %v7516 = vld [vmem:[%s51 + $0x18] sm:$0xff]
    %v7517 = vld [vmem:[%s53] sm:$0x1]
    %v7518 = vld [vmem:[%s55] sm:$0x1]
    %v7519 = vld [vmem:[%s57] sm:$0x1]
    %v7520 = vld [vmem:[%s59] sm:$0xff]
    %v7521 = vld [vmem:[%s59 + $0x8] sm:$0xff]
    %v7522 = vld [vmem:[%s59 + $0x10] sm:$0xff]
    %v7523 = vld [vmem:[%s59 + $0x18] sm:$0xff]
    %v7524 = vld [vmem:[%s61] sm:$0x1]
    %v7525 = vld [vmem:[%s63] sm:$0xff]
    %v7526 = vld [vmem:[%s63 + $0x8] sm:$0xff]
    %v7527 = vld [vmem:[%s63 + $0x10] sm:$0xff]
    %v7528 = vld [vmem:[%s63 + $0x18] sm:$0xff]
    %v7529 = vld [vmem:[%s63 + $0x20] sm:$0xff]
    %v7530 = vld [vmem:[%s63 + $0x28] sm:$0xff]
    %v7531 = vld [vmem:[%s63 + $0x30] sm:$0xff]
    %v7532 = vld [vmem:[%s63 + $0x38] sm:$0xff]
    %v7533 = vld [vmem:[%s63 + $0x40] sm:$0xff]
    %v7534 = vld [vmem:[%s63 + $0x48] sm:$0xff]
    %v7535 = vld [vmem:[%s63 + $0x50] sm:$0xff]
    %v7536 = vld [vmem:[%s63 + $0x58] sm:$0xff]
    %v7537 = vld [vmem:[%s63 + $0x60] sm:$0xff]
    %v7538 = vld [vmem:[%s63 + $0x68] sm:$0xff]
    %v7539 = vld [vmem:[%s63 + $0x70] sm:$0xff]
    %v7540 = vld [vmem:[%s63 + $0x78] sm:$0xff]
    %v7541 = vld [vmem:[%s65] sm:$0x1]
    %v7542 = vld [vmem:[%s67] sm:$0x1]
    %v7543 = vld [vmem:[%s69] sm:$0x1]
    %v7545 = vlaneseq
    %v7546 = vshrl.u32 %v7545, 7
    %v7547 = vsub.s32 0, %v7546
    %v7548 = vrot.slane %v7512, %v7547
    %v7551 = vsel %vm1962, %v7507, 0
    %7553 = vmatprep.subr.mxu0 0.0
    %7554 = vmatpush1.msra.mxu0 0.0
    %7555 = vmatprep.subr.mxu0 0.0
    %7556 = vmatpush1.msra.mxu0 0.0
    %7557 = vmatprep.subr.mxu0 0.0
    %7558 = vmatpush1.msra.mxu0 0.0
    %7559 = vmatprep.subr.mxu0 0.0
    %7560 = vmatpush1.msra.mxu0 0.0
    %7561 = vmatprep.subr.mxu0 0.0
    %7562 = vmatpush1.msra.mxu0 0.0
    %7563 = vmatprep.subr.mxu0 0.0
    %7564 = vmatpush1.msra.mxu0 0.0
    %7565 = vmatprep.subr.mxu0 0.0
    %7566 = vmatpush1.msra.mxu0 0.0
    %7567 = vmatprep.subr.mxu0 0.0
    %7568 = vmatpush1.msra.mxu0 0.0
    %7569 = vmatprep.subr.mxu0 0.0
    %7570 = vmatpush1.msra.mxu0 0.0
    %7571 = vmatprep.subr.mxu0 0.0
    %7572 = vmatpush1.msra.mxu0 0.0
    %7573 = vmatprep.subr.mxu0 0.0
    %7574 = vmatpush1.msra.mxu0 0.0
    %7575 = vmatprep.subr.mxu0 0.0
    %7576 = vmatpush1.msra.mxu0 0.0
    %7577 = vmatprep.subr.mxu0 0.0
    %7578 = vmatpush1.msra.mxu0 %v7511
    %7579 = vmatprep.subr.mxu0 0.0
    %7580 = vmatpush1.msra.mxu0 %v7510
    %7581 = vmatprep.subr.mxu0 0.0
    %7582 = vmatpush1.msra.mxu0 %v7509
    %7583 = vmatprep.subr.mxu0 0.0
    %7584 = vmatpush1.msra.mxu0 %v7508
    %7585 = vmatprep.subr.mxu0 0.0
    %7586 = vmatpush2.msra.mxu0 0.0
    %7587 = vmatprep.subr.mxu0 0.0
    %7588 = vmatpush2.msra.mxu0 0.0
    %7589 = vmatprep.subr.mxu0 0.0
    %7590 = vmatpush2.msra.mxu0 0.0
    %7591 = vmatprep.subr.mxu0 0.0
    %7592 = vmatpush2.msra.mxu0 0.0
    %7593 = vmatprep.subr.mxu0 0.0
    %7594 = vmatpush2.msra.mxu0 0.0
    %7595 = vmatprep.subr.mxu0 0.0
    %7596 = vmatpush2.msra.mxu0 0.0
    %7597 = vmatprep.subr.mxu0 0.0
    %7598 = vmatpush2.msra.mxu0 0.0
    %7599 = vmatprep.subr.mxu0 0.0
    %7600 = vmatpush2.msra.mxu0 0.0
    %7601 = vmatprep.subr.mxu0 0.0
    %7602 = vmatpush2.msra.mxu0 0.0
    %7603 = vmatprep.subr.mxu0 0.0
    %7604 = vmatpush2.msra.mxu0 0.0
    %7605 = vmatprep.subr.mxu0 0.0
    %7606 = vmatpush2.msra.mxu0 0.0
    %7607 = vmatprep.subr.mxu0 0.0
    %7608 = vmatpush2.msra.mxu0 0.0
    %7609 = vmatprep.subr.mxu0 0.0
    %7610 = vmatpush2.msra.mxu0 0.0
    %7611 = vmatprep.subr.mxu0 0.0
    %7612 = vmatpush2.msra.mxu0 0.0
    %7613 = vmatprep.subr.mxu0 0.0
    %7614 = vmatpush2.msra.mxu0 0.0
    %7615 = vmatprep.subr.mxu0 0.0
    %7616 = vmatpush2.msra.mxu0 0.0
    %7617 = vmatprep.mubr.f32.mxu0 0.0
    %7618 = vmatmul.mubr.f32.gmra.mxu0 %v7551
    %v7619 = vpop.f32.mrf.mxu0
    %v7620 = vadd.f32 %v7548, %v7619
    %v7621 = vpop.f32.mrf.mxu0
    %7622 = vdwg.mxu0
    %v7623 = vmul.f32 %v7620, 0.35355338
    %7625 = vrot.lane.b32.xlu0 %v7620, 96
    %v7626 = vpop.permute.xlu0 %7625
    %v7628 = vsel %vm6541, %v7623, 0
    %v7630 = vsel %vm6541, %v7626, 0
    %7632 = vmatprep.subr.mxu0 0.0
    %7633 = vmatpush1.xpose.msra.mxu0 0.0
    %7634 = vmatprep.subr.mxu0 0.0
    %7635 = vmatpush1.xpose.msra.mxu0 0.0
    %7636 = vmatprep.subr.mxu0 0.0
    %7637 = vmatpush1.xpose.msra.mxu0 0.0
    %7638 = vmatprep.subr.mxu0 0.0
    %7639 = vmatpush1.xpose.msra.mxu0 0.0
    %7640 = vmatprep.subr.mxu0 0.0
    %7641 = vmatpush1.xpose.msra.mxu0 0.0
    %7642 = vmatprep.subr.mxu0 0.0
    %7643 = vmatpush1.xpose.msra.mxu0 0.0
    %7644 = vmatprep.subr.mxu0 0.0
    %7645 = vmatpush1.xpose.msra.mxu0 0.0
    %7646 = vmatprep.subr.mxu0 0.0
    %7647 = vmatpush1.xpose.msra.mxu0 0.0
    %7648 = vmatprep.subr.mxu0 0.0
    %7649 = vmatpush1.xpose.msra.mxu0 0.0
    %7650 = vmatprep.subr.mxu0 0.0
    %7651 = vmatpush1.xpose.msra.mxu0 0.0
    %7652 = vmatprep.subr.mxu0 0.0
    %7653 = vmatpush1.xpose.msra.mxu0 0.0
    %7654 = vmatprep.subr.mxu0 0.0
    %7655 = vmatpush1.xpose.msra.mxu0 0.0
    %7656 = vmatprep.subr.mxu0 0.0
    %7657 = vmatpush1.xpose.msra.mxu0 0.0
    %7658 = vmatprep.subr.mxu0 0.0
    %7659 = vmatpush1.xpose.msra.mxu0 0.0
    %7660 = vmatprep.subr.mxu0 0.0
    %7661 = vmatpush1.xpose.msra.mxu0 0.0
    %7662 = vmatprep.subr.mxu0 0.0
    %7663 = vmatpush1.xpose.msra.mxu0 %v7630
    %7664 = vmatprep.subr.mxu0 0.0
    %7665 = vmatpush2.xpose.msra.mxu0 0.0
    %7666 = vmatprep.subr.mxu0 0.0
    %7667 = vmatpush2.xpose.msra.mxu0 0.0
    %7668 = vmatprep.subr.mxu0 0.0
    %7669 = vmatpush2.xpose.msra.mxu0 0.0
    %7670 = vmatprep.subr.mxu0 0.0
    %7671 = vmatpush2.xpose.msra.mxu0 0.0
    %7672 = vmatprep.subr.mxu0 0.0
    %7673 = vmatpush2.xpose.msra.mxu0 0.0
    %7674 = vmatprep.subr.mxu0 0.0
    %7675 = vmatpush2.xpose.msra.mxu0 0.0
    %7676 = vmatprep.subr.mxu0 0.0
    %7677 = vmatpush2.xpose.msra.mxu0 0.0
    %7678 = vmatprep.subr.mxu0 0.0
    %7679 = vmatpush2.xpose.msra.mxu0 0.0
    %7680 = vmatprep.subr.mxu0 0.0
    %7681 = vmatpush2.xpose.msra.mxu0 0.0
    %7682 = vmatprep.subr.mxu0 0.0
    %7683 = vmatpush2.xpose.msra.mxu0 0.0
    %7684 = vmatprep.subr.mxu0 0.0
    %7685 = vmatpush2.xpose.msra.mxu0 0.0
    %7686 = vmatprep.subr.mxu0 0.0
    %7687 = vmatpush2.xpose.msra.mxu0 0.0
    %7688 = vmatprep.subr.mxu0 0.0
    %7689 = vmatpush2.xpose.msra.mxu0 0.0
    %7690 = vmatprep.subr.mxu0 0.0
    %7691 = vmatpush2.xpose.msra.mxu0 0.0
    %7692 = vmatprep.subr.mxu0 0.0
    %7693 = vmatpush2.xpose.msra.mxu0 0.0
    %7694 = vmatprep.subr.mxu0 0.0
    %7695 = vmatpush2.xpose.msra.mxu0 0.0
    %7696 = vmatprep.mubr.f32.mxu0 0.0
    %7697 = vmatmul.mubr.f32.gmra.mxu0 %v7628
    %v7698 = vpop.f32.mrf.mxu0
    %v7699 = vadd.f32 %v6421, %v7698
    %v7700 = vpop.f32.mrf.mxu0
    %7701 = vdwg.mxu0
    %v7702 = vsel %vm6541, %v7699, -inf
    %7703 = vmax.xlane.f32.xlu0 %v7702
    %v7704 = vpop.xlane.xlu0 %7703
    %v7705 = vsub.f32 %v7699, %v7704
    %v7706 = vmul.f32 %v7705, 1.442695
    %v7707 = vpow.pop %v7706
    %v7708 = vsel %vm6541, %v7707, 0.0
    %7709 = vadd.xlane.f32.xlu0 %v7708
    %v7710 = vpop.xlane.xlu0 %7709
    %v7711 = vrcp.pop %v7710
    %v7712 = vmul.f32 %v7707, %v7711
    %7713 = vrot.lane.b32.xlu0 %v7620, 64
    %v7714 = vpop.permute.xlu0 %7713
    %v7717 = vsel %vm6541, %v7712, 0
    %7719 = vmatprep.subr.mxu0 0.0
    %7720 = vmatpush1.msra.mxu0 0.0
    %7721 = vmatprep.subr.mxu0 0.0
    %7722 = vmatpush1.msra.mxu0 0.0
    %7723 = vmatprep.subr.mxu0 0.0
    %7724 = vmatpush1.msra.mxu0 0.0
    %7725 = vmatprep.subr.mxu0 0.0
    %7726 = vmatpush1.msra.mxu0 0.0
    %7727 = vmatprep.subr.mxu0 0.0
    %7728 = vmatpush1.msra.mxu0 0.0
    %7729 = vmatprep.subr.mxu0 0.0
    %7730 = vmatpush1.msra.mxu0 0.0
    %7731 = vmatprep.subr.mxu0 0.0
    %7732 = vmatpush1.msra.mxu0 0.0
    %7733 = vmatprep.subr.mxu0 0.0
    %7734 = vmatpush1.msra.mxu0 0.0
    %7735 = vmatprep.subr.mxu0 0.0
    %7736 = vmatpush1.msra.mxu0 0.0
    %7737 = vmatprep.subr.mxu0 0.0
    %7738 = vmatpush1.msra.mxu0 0.0
    %7739 = vmatprep.subr.mxu0 0.0
    %7740 = vmatpush1.msra.mxu0 0.0
    %7741 = vmatprep.subr.mxu0 0.0
    %7742 = vmatpush1.msra.mxu0 0.0
    %7743 = vmatprep.subr.mxu0 0.0
    %7744 = vmatpush1.msra.mxu0 0.0
    %7745 = vmatprep.subr.mxu0 0.0
    %7746 = vmatpush1.msra.mxu0 0.0
    %7747 = vmatprep.subr.mxu0 0.0
    %7748 = vmatpush1.msra.mxu0 0.0
    %7749 = vmatprep.subr.mxu0 0.0
    %7750 = vmatpush1.msra.mxu0 %v7714
    %7751 = vmatprep.subr.mxu0 0.0
    %7752 = vmatpush2.msra.mxu0 0.0
    %7753 = vmatprep.subr.mxu0 0.0
    %7754 = vmatpush2.msra.mxu0 0.0
    %7755 = vmatprep.subr.mxu0 0.0
    %7756 = vmatpush2.msra.mxu0 0.0
    %7757 = vmatprep.subr.mxu0 0.0
    %7758 = vmatpush2.msra.mxu0 0.0
    %7759 = vmatprep.subr.mxu0 0.0
    %7760 = vmatpush2.msra.mxu0 0.0
    %7761 = vmatprep.subr.mxu0 0.0
    %7762 = vmatpush2.msra.mxu0 0.0
    %7763 = vmatprep.subr.mxu0 0.0
    %7764 = vmatpush2.msra.mxu0 0.0
    %7765 = vmatprep.subr.mxu0 0.0
    %7766 = vmatpush2.msra.mxu0 0.0
    %7767 = vmatprep.subr.mxu0 0.0
    %7768 = vmatpush2.msra.mxu0 0.0
    %7769 = vmatprep.subr.mxu0 0.0
    %7770 = vmatpush2.msra.mxu0 0.0
    %7771 = vmatprep.subr.mxu0 0.0
    %7772 = vmatpush2.msra.mxu0 0.0
    %7773 = vmatprep.subr.mxu0 0.0
    %7774 = vmatpush2.msra.mxu0 0.0
    %7775 = vmatprep.subr.mxu0 0.0
    %7776 = vmatpush2.msra.mxu0 0.0
    %7777 = vmatprep.subr.mxu0 0.0
    %7778 = vmatpush2.msra.mxu0 0.0
    %7779 = vmatprep.subr.mxu0 0.0
    %7780 = vmatpush2.msra.mxu0 0.0
    %7781 = vmatprep.subr.mxu0 0.0
    %7782 = vmatpush2.msra.mxu0 0.0
    %7783 = vmatprep.mubr.f32.mxu0 0.0
    %7784 = vmatmul.mubr.f32.gmra.mxu0 %v7717
    %v7785 = vpop.f32.mrf.mxu0
    %v7786 = vadd.f32 0.0, %v7785
    %v7787 = vpop.f32.mrf.mxu0
    %7788 = vdwg.mxu0
    %7789 = vrot.lane.b32.xlu0 %v7623, 120
    %v7790 = vpop.permute.xlu0 %7789
    %7791 = vrot.lane.b32.xlu0 %v7620, 88
    %v7792 = vpop.permute.xlu0 %7791
    %v7793 = vsel %vm6541, %v7790, 0
    %v7795 = vsel %vm6541, %v7792, 0
    %7797 = vmatprep.subr.mxu0 0.0
    %7798 = vmatpush1.xpose.msra.mxu0 0.0
    %7799 = vmatprep.subr.mxu0 0.0
    %7800 = vmatpush1.xpose.msra.mxu0 0.0
    %7801 = vmatprep.subr.mxu0 0.0
    %7802 = vmatpush1.xpose.msra.mxu0 0.0
    %7803 = vmatprep.subr.mxu0 0.0
    %7804 = vmatpush1.xpose.msra.mxu0 0.0
    %7805 = vmatprep.subr.mxu0 0.0
    %7806 = vmatpush1.xpose.msra.mxu0 0.0
    %7807 = vmatprep.subr.mxu0 0.0
    %7808 = vmatpush1.xpose.msra.mxu0 0.0
    %7809 = vmatprep.subr.mxu0 0.0
    %7810 = vmatpush1.xpose.msra.mxu0 0.0
    %7811 = vmatprep.subr.mxu0 0.0
    %7812 = vmatpush1.xpose.msra.mxu0 0.0
    %7813 = vmatprep.subr.mxu0 0.0
    %7814 = vmatpush1.xpose.msra.mxu0 0.0
    %7815 = vmatprep.subr.mxu0 0.0
    %7816 = vmatpush1.xpose.msra.mxu0 0.0
    %7817 = vmatprep.subr.mxu0 0.0
    %7818 = vmatpush1.xpose.msra.mxu0 0.0
    %7819 = vmatprep.subr.mxu0 0.0
    %7820 = vmatpush1.xpose.msra.mxu0 0.0
    %7821 = vmatprep.subr.mxu0 0.0
    %7822 = vmatpush1.xpose.msra.mxu0 0.0
    %7823 = vmatprep.subr.mxu0 0.0
    %7824 = vmatpush1.xpose.msra.mxu0 0.0
    %7825 = vmatprep.subr.mxu0 0.0
    %7826 = vmatpush1.xpose.msra.mxu0 0.0
    %7827 = vmatprep.subr.mxu0 0.0
    %7828 = vmatpush1.xpose.msra.mxu0 %v7795
    %7829 = vmatprep.subr.mxu0 0.0
    %7830 = vmatpush2.xpose.msra.mxu0 0.0
    %7831 = vmatprep.subr.mxu0 0.0
    %7832 = vmatpush2.xpose.msra.mxu0 0.0
    %7833 = vmatprep.subr.mxu0 0.0
    %7834 = vmatpush2.xpose.msra.mxu0 0.0
    %7835 = vmatprep.subr.mxu0 0.0
    %7836 = vmatpush2.xpose.msra.mxu0 0.0
    %7837 = vmatprep.subr.mxu0 0.0
    %7838 = vmatpush2.xpose.msra.mxu0 0.0
    %7839 = vmatprep.subr.mxu0 0.0
    %7840 = vmatpush2.xpose.msra.mxu0 0.0
    %7841 = vmatprep.subr.mxu0 0.0
    %7842 = vmatpush2.xpose.msra.mxu0 0.0
    %7843 = vmatprep.subr.mxu0 0.0
    %7844 = vmatpush2.xpose.msra.mxu0 0.0
    %7845 = vmatprep.subr.mxu0 0.0
    %7846 = vmatpush2.xpose.msra.mxu0 0.0
    %7847 = vmatprep.subr.mxu0 0.0
    %7848 = vmatpush2.xpose.msra.mxu0 0.0
    %7849 = vmatprep.subr.mxu0 0.0
    %7850 = vmatpush2.xpose.msra.mxu0 0.0
    %7851 = vmatprep.subr.mxu0 0.0
    %7852 = vmatpush2.xpose.msra.mxu0 0.0
    %7853 = vmatprep.subr.mxu0 0.0
    %7854 = vmatpush2.xpose.msra.mxu0 0.0
    %7855 = vmatprep.subr.mxu0 0.0
    %7856 = vmatpush2.xpose.msra.mxu0 0.0
    %7857 = vmatprep.subr.mxu0 0.0
    %7858 = vmatpush2.xpose.msra.mxu0 0.0
    %7859 = vmatprep.subr.mxu0 0.0
    %7860 = vmatpush2.xpose.msra.mxu0 0.0
    %7861 = vmatprep.mubr.f32.mxu0 0.0
    %7862 = vmatmul.mubr.f32.gmra.mxu0 %v7793
    %v7863 = vpop.f32.mrf.mxu0
    %v7864 = vadd.f32 %v6421, %v7863
    %v7865 = vpop.f32.mrf.mxu0
    %7866 = vdwg.mxu0
    %v7867 = vsel %vm6541, %v7864, -inf
    %7868 = vmax.xlane.f32.xlu0 %v7867
    %v7869 = vpop.xlane.xlu0 %7868
    %v7870 = vsub.f32 %v7864, %v7869
    %v7871 = vmul.f32 %v7870, 1.442695
    %v7872 = vpow.pop %v7871
    %v7873 = vsel %vm6541, %v7872, 0.0
    %7874 = vadd.xlane.f32.xlu0 %v7873
    %v7875 = vpop.xlane.xlu0 %7874
    %v7876 = vrcp.pop %v7875
    %v7877 = vmul.f32 %v7872, %v7876
    %7878 = vrot.lane.b32.xlu0 %v7620, 56
    %v7879 = vpop.permute.xlu0 %7878
    %v7882 = vsel %vm6541, %v7877, 0
    %7884 = vmatprep.subr.mxu0 0.0
    %7885 = vmatpush1.msra.mxu0 0.0
    %7886 = vmatprep.subr.mxu0 0.0
    %7887 = vmatpush1.msra.mxu0 0.0
    %7888 = vmatprep.subr.mxu0 0.0
    %7889 = vmatpush1.msra.mxu0 0.0
    %7890 = vmatprep.subr.mxu0 0.0
    %7891 = vmatpush1.msra.mxu0 0.0
    %7892 = vmatprep.subr.mxu0 0.0
    %7893 = vmatpush1.msra.mxu0 0.0
    %7894 = vmatprep.subr.mxu0 0.0
    %7895 = vmatpush1.msra.mxu0 0.0
    %7896 = vmatprep.subr.mxu0 0.0
    %7897 = vmatpush1.msra.mxu0 0.0
    %7898 = vmatprep.subr.mxu0 0.0
    %7899 = vmatpush1.msra.mxu0 0.0
    %7900 = vmatprep.subr.mxu0 0.0
    %7901 = vmatpush1.msra.mxu0 0.0
    %7902 = vmatprep.subr.mxu0 0.0
    %7903 = vmatpush1.msra.mxu0 0.0
    %7904 = vmatprep.subr.mxu0 0.0
    %7905 = vmatpush1.msra.mxu0 0.0
    %7906 = vmatprep.subr.mxu0 0.0
    %7907 = vmatpush1.msra.mxu0 0.0
    %7908 = vmatprep.subr.mxu0 0.0
    %7909 = vmatpush1.msra.mxu0 0.0
    %7910 = vmatprep.subr.mxu0 0.0
    %7911 = vmatpush1.msra.mxu0 0.0
    %7912 = vmatprep.subr.mxu0 0.0
    %7913 = vmatpush1.msra.mxu0 0.0
    %7914 = vmatprep.subr.mxu0 0.0
    %7915 = vmatpush1.msra.mxu0 %v7879
    %7916 = vmatprep.subr.mxu0 0.0
    %7917 = vmatpush2.msra.mxu0 0.0
    %7918 = vmatprep.subr.mxu0 0.0
    %7919 = vmatpush2.msra.mxu0 0.0
    %7920 = vmatprep.subr.mxu0 0.0
    %7921 = vmatpush2.msra.mxu0 0.0
    %7922 = vmatprep.subr.mxu0 0.0
    %7923 = vmatpush2.msra.mxu0 0.0
    %7924 = vmatprep.subr.mxu0 0.0
    %7925 = vmatpush2.msra.mxu0 0.0
    %7926 = vmatprep.subr.mxu0 0.0
    %7927 = vmatpush2.msra.mxu0 0.0
    %7928 = vmatprep.subr.mxu0 0.0
    %7929 = vmatpush2.msra.mxu0 0.0
    %7930 = vmatprep.subr.mxu0 0.0
    %7931 = vmatpush2.msra.mxu0 0.0
    %7932 = vmatprep.subr.mxu0 0.0
    %7933 = vmatpush2.msra.mxu0 0.0
    %7934 = vmatprep.subr.mxu0 0.0
    %7935 = vmatpush2.msra.mxu0 0.0
    %7936 = vmatprep.subr.mxu0 0.0
    %7937 = vmatpush2.msra.mxu0 0.0
    %7938 = vmatprep.subr.mxu0 0.0
    %7939 = vmatpush2.msra.mxu0 0.0
    %7940 = vmatprep.subr.mxu0 0.0
    %7941 = vmatpush2.msra.mxu0 0.0
    %7942 = vmatprep.subr.mxu0 0.0
    %7943 = vmatpush2.msra.mxu0 0.0
    %7944 = vmatprep.subr.mxu0 0.0
    %7945 = vmatpush2.msra.mxu0 0.0
    %7946 = vmatprep.subr.mxu0 0.0
    %7947 = vmatpush2.msra.mxu0 0.0
    %7948 = vmatprep.mubr.f32.mxu0 0.0
    %7949 = vmatmul.mubr.f32.gmra.mxu0 %v7882
    %v7950 = vpop.f32.mrf.mxu0
    %v7951 = vadd.f32 0.0, %v7950
    %v7952 = vpop.f32.mrf.mxu0
    %7953 = vdwg.mxu0
    %7954 = vrot.lane.b32.xlu0 %v7623, 112
    %v7955 = vpop.permute.xlu0 %7954
    %7956 = vrot.lane.b32.xlu0 %v7620, 80
    %v7957 = vpop.permute.xlu0 %7956
    %v7958 = vsel %vm6541, %v7955, 0
    %v7960 = vsel %vm6541, %v7957, 0
    %7962 = vmatprep.subr.mxu0 0.0
    %7963 = vmatpush1.xpose.msra.mxu0 0.0
    %7964 = vmatprep.subr.mxu0 0.0
    %7965 = vmatpush1.xpose.msra.mxu0 0.0
    %7966 = vmatprep.subr.mxu0 0.0
    %7967 = vmatpush1.xpose.msra.mxu0 0.0
    %7968 = vmatprep.subr.mxu0 0.0
    %7969 = vmatpush1.xpose.msra.mxu0 0.0
    %7970 = vmatprep.subr.mxu0 0.0
    %7971 = vmatpush1.xpose.msra.mxu0 0.0
    %7972 = vmatprep.subr.mxu0 0.0
    %7973 = vmatpush1.xpose.msra.mxu0 0.0
    %7974 = vmatprep.subr.mxu0 0.0
    %7975 = vmatpush1.xpose.msra.mxu0 0.0
    %7976 = vmatprep.subr.mxu0 0.0
    %7977 = vmatpush1.xpose.msra.mxu0 0.0
    %7978 = vmatprep.subr.mxu0 0.0
    %7979 = vmatpush1.xpose.msra.mxu0 0.0
    %7980 = vmatprep.subr.mxu0 0.0
    %7981 = vmatpush1.xpose.msra.mxu0 0.0
    %7982 = vmatprep.subr.mxu0 0.0
    %7983 = vmatpush1.xpose.msra.mxu0 0.0
    %7984 = vmatprep.subr.mxu0 0.0
    %7985 = vmatpush1.xpose.msra.mxu0 0.0
    %7986 = vmatprep.subr.mxu0 0.0
    %7987 = vmatpush1.xpose.msra.mxu0 0.0
    %7988 = vmatprep.subr.mxu0 0.0
    %7989 = vmatpush1.xpose.msra.mxu0 0.0
    %7990 = vmatprep.subr.mxu0 0.0
    %7991 = vmatpush1.xpose.msra.mxu0 0.0
    %7992 = vmatprep.subr.mxu0 0.0
    %7993 = vmatpush1.xpose.msra.mxu0 %v7960
    %7994 = vmatprep.subr.mxu0 0.0
    %7995 = vmatpush2.xpose.msra.mxu0 0.0
    %7996 = vmatprep.subr.mxu0 0.0
    %7997 = vmatpush2.xpose.msra.mxu0 0.0
    %7998 = vmatprep.subr.mxu0 0.0
    %7999 = vmatpush2.xpose.msra.mxu0 0.0
    %8000 = vmatprep.subr.mxu0 0.0
    %8001 = vmatpush2.xpose.msra.mxu0 0.0
    %8002 = vmatprep.subr.mxu0 0.0
    %8003 = vmatpush2.xpose.msra.mxu0 0.0
    %8004 = vmatprep.subr.mxu0 0.0
    %8005 = vmatpush2.xpose.msra.mxu0 0.0
    %8006 = vmatprep.subr.mxu0 0.0
    %8007 = vmatpush2.xpose.msra.mxu0 0.0
    %8008 = vmatprep.subr.mxu0 0.0
    %8009 = vmatpush2.xpose.msra.mxu0 0.0
    %8010 = vmatprep.subr.mxu0 0.0
    %8011 = vmatpush2.xpose.msra.mxu0 0.0
    %8012 = vmatprep.subr.mxu0 0.0
    %8013 = vmatpush2.xpose.msra.mxu0 0.0
    %8014 = vmatprep.subr.mxu0 0.0
    %8015 = vmatpush2.xpose.msra.mxu0 0.0
    %8016 = vmatprep.subr.mxu0 0.0
    %8017 = vmatpush2.xpose.msra.mxu0 0.0
    %8018 = vmatprep.subr.mxu0 0.0
    %8019 = vmatpush2.xpose.msra.mxu0 0.0
    %8020 = vmatprep.subr.mxu0 0.0
    %8021 = vmatpush2.xpose.msra.mxu0 0.0
    %8022 = vmatprep.subr.mxu0 0.0
    %8023 = vmatpush2.xpose.msra.mxu0 0.0
    %8024 = vmatprep.subr.mxu0 0.0
    %8025 = vmatpush2.xpose.msra.mxu0 0.0
    %8026 = vmatprep.mubr.f32.mxu0 0.0
    %8027 = vmatmul.mubr.f32.gmra.mxu0 %v7958
    %v8028 = vpop.f32.mrf.mxu0
    %v8029 = vadd.f32 %v6421, %v8028
    %v8030 = vpop.f32.mrf.mxu0
    %8031 = vdwg.mxu0
    %v8032 = vsel %vm6541, %v8029, -inf
    %8033 = vmax.xlane.f32.xlu0 %v8032
    %v8034 = vpop.xlane.xlu0 %8033
    %v8035 = vsub.f32 %v8029, %v8034
    %v8036 = vmul.f32 %v8035, 1.442695
    %v8037 = vpow.pop %v8036
    %v8038 = vsel %vm6541, %v8037, 0.0
    %8039 = vadd.xlane.f32.xlu0 %v8038
    %v8040 = vpop.xlane.xlu0 %8039
    %v8041 = vrcp.pop %v8040
    %v8042 = vmul.f32 %v8037, %v8041
    %8043 = vrot.lane.b32.xlu0 %v7620, 48
    %v8044 = vpop.permute.xlu0 %8043
    %v8047 = vsel %vm6541, %v8042, 0
    %8049 = vmatprep.subr.mxu0 0.0
    %8050 = vmatpush1.msra.mxu0 0.0
    %8051 = vmatprep.subr.mxu0 0.0
    %8052 = vmatpush1.msra.mxu0 0.0
    %8053 = vmatprep.subr.mxu0 0.0
    %8054 = vmatpush1.msra.mxu0 0.0
    %8055 = vmatprep.subr.mxu0 0.0
    %8056 = vmatpush1.msra.mxu0 0.0
    %8057 = vmatprep.subr.mxu0 0.0
    %8058 = vmatpush1.msra.mxu0 0.0
    %8059 = vmatprep.subr.mxu0 0.0
    %8060 = vmatpush1.msra.mxu0 0.0
    %8061 = vmatprep.subr.mxu0 0.0
    %8062 = vmatpush1.msra.mxu0 0.0
    %8063 = vmatprep.subr.mxu0 0.0
    %8064 = vmatpush1.msra.mxu0 0.0
    %8065 = vmatprep.subr.mxu0 0.0
    %8066 = vmatpush1.msra.mxu0 0.0
    %8067 = vmatprep.subr.mxu0 0.0
    %8068 = vmatpush1.msra.mxu0 0.0
    %8069 = vmatprep.subr.mxu0 0.0
    %8070 = vmatpush1.msra.mxu0 0.0
    %8071 = vmatprep.subr.mxu0 0.0
    %8072 = vmatpush1.msra.mxu0 0.0
    %8073 = vmatprep.subr.mxu0 0.0
    %8074 = vmatpush1.msra.mxu0 0.0
    %8075 = vmatprep.subr.mxu0 0.0
    %8076 = vmatpush1.msra.mxu0 0.0
    %8077 = vmatprep.subr.mxu0 0.0
    %8078 = vmatpush1.msra.mxu0 0.0
    %8079 = vmatprep.subr.mxu0 0.0
    %8080 = vmatpush1.msra.mxu0 %v8044
    %8081 = vmatprep.subr.mxu0 0.0
    %8082 = vmatpush2.msra.mxu0 0.0
    %8083 = vmatprep.subr.mxu0 0.0
    %8084 = vmatpush2.msra.mxu0 0.0
    %8085 = vmatprep.subr.mxu0 0.0
    %8086 = vmatpush2.msra.mxu0 0.0
    %8087 = vmatprep.subr.mxu0 0.0
    %8088 = vmatpush2.msra.mxu0 0.0
    %8089 = vmatprep.subr.mxu0 0.0
    %8090 = vmatpush2.msra.mxu0 0.0
    %8091 = vmatprep.subr.mxu0 0.0
    %8092 = vmatpush2.msra.mxu0 0.0
    %8093 = vmatprep.subr.mxu0 0.0
    %8094 = vmatpush2.msra.mxu0 0.0
    %8095 = vmatprep.subr.mxu0 0.0
    %8096 = vmatpush2.msra.mxu0 0.0
    %8097 = vmatprep.subr.mxu0 0.0
    %8098 = vmatpush2.msra.mxu0 0.0
    %8099 = vmatprep.subr.mxu0 0.0
    %8100 = vmatpush2.msra.mxu0 0.0
    %8101 = vmatprep.subr.mxu0 0.0
    %8102 = vmatpush2.msra.mxu0 0.0
    %8103 = vmatprep.subr.mxu0 0.0
    %8104 = vmatpush2.msra.mxu0 0.0
    %8105 = vmatprep.subr.mxu0 0.0
    %8106 = vmatpush2.msra.mxu0 0.0
    %8107 = vmatprep.subr.mxu0 0.0
    %8108 = vmatpush2.msra.mxu0 0.0
    %8109 = vmatprep.subr.mxu0 0.0
    %8110 = vmatpush2.msra.mxu0 0.0
    %8111 = vmatprep.subr.mxu0 0.0
    %8112 = vmatpush2.msra.mxu0 0.0
    %8113 = vmatprep.mubr.f32.mxu0 0.0
    %8114 = vmatmul.mubr.f32.gmra.mxu0 %v8047
    %v8115 = vpop.f32.mrf.mxu0
    %v8116 = vadd.f32 0.0, %v8115
    %v8117 = vpop.f32.mrf.mxu0
    %8118 = vdwg.mxu0
    %8119 = vrot.lane.b32.xlu0 %v7623, 104
    %v8120 = vpop.permute.xlu0 %8119
    %8121 = vrot.lane.b32.xlu0 %v7620, 72
    %v8122 = vpop.permute.xlu0 %8121
    %v8123 = vsel %vm6541, %v8120, 0
    %v8125 = vsel %vm6541, %v8122, 0
    %8127 = vmatprep.subr.mxu0 0.0
    %8128 = vmatpush1.xpose.msra.mxu0 0.0
    %8129 = vmatprep.subr.mxu0 0.0
    %8130 = vmatpush1.xpose.msra.mxu0 0.0
    %8131 = vmatprep.subr.mxu0 0.0
    %8132 = vmatpush1.xpose.msra.mxu0 0.0
    %8133 = vmatprep.subr.mxu0 0.0
    %8134 = vmatpush1.xpose.msra.mxu0 0.0
    %8135 = vmatprep.subr.mxu0 0.0
    %8136 = vmatpush1.xpose.msra.mxu0 0.0
    %8137 = vmatprep.subr.mxu0 0.0
    %8138 = vmatpush1.xpose.msra.mxu0 0.0
    %8139 = vmatprep.subr.mxu0 0.0
    %8140 = vmatpush1.xpose.msra.mxu0 0.0
    %8141 = vmatprep.subr.mxu0 0.0
    %8142 = vmatpush1.xpose.msra.mxu0 0.0
    %8143 = vmatprep.subr.mxu0 0.0
    %8144 = vmatpush1.xpose.msra.mxu0 0.0
    %8145 = vmatprep.subr.mxu0 0.0
    %8146 = vmatpush1.xpose.msra.mxu0 0.0
    %8147 = vmatprep.subr.mxu0 0.0
    %8148 = vmatpush1.xpose.msra.mxu0 0.0
    %8149 = vmatprep.subr.mxu0 0.0
    %8150 = vmatpush1.xpose.msra.mxu0 0.0
    %8151 = vmatprep.subr.mxu0 0.0
    %8152 = vmatpush1.xpose.msra.mxu0 0.0
    %8153 = vmatprep.subr.mxu0 0.0
    %8154 = vmatpush1.xpose.msra.mxu0 0.0
    %8155 = vmatprep.subr.mxu0 0.0
    %8156 = vmatpush1.xpose.msra.mxu0 0.0
    %8157 = vmatprep.subr.mxu0 0.0
    %8158 = vmatpush1.xpose.msra.mxu0 %v8125
    %8159 = vmatprep.subr.mxu0 0.0
    %8160 = vmatpush2.xpose.msra.mxu0 0.0
    %8161 = vmatprep.subr.mxu0 0.0
    %8162 = vmatpush2.xpose.msra.mxu0 0.0
    %8163 = vmatprep.subr.mxu0 0.0
    %8164 = vmatpush2.xpose.msra.mxu0 0.0
    %8165 = vmatprep.subr.mxu0 0.0
    %8166 = vmatpush2.xpose.msra.mxu0 0.0
    %8167 = vmatprep.subr.mxu0 0.0
    %8168 = vmatpush2.xpose.msra.mxu0 0.0
    %8169 = vmatprep.subr.mxu0 0.0
    %8170 = vmatpush2.xpose.msra.mxu0 0.0
    %8171 = vmatprep.subr.mxu0 0.0
    %8172 = vmatpush2.xpose.msra.mxu0 0.0
    %8173 = vmatprep.subr.mxu0 0.0
    %8174 = vmatpush2.xpose.msra.mxu0 0.0
    %8175 = vmatprep.subr.mxu0 0.0
    %8176 = vmatpush2.xpose.msra.mxu0 0.0
    %8177 = vmatprep.subr.mxu0 0.0
    %8178 = vmatpush2.xpose.msra.mxu0 0.0
    %8179 = vmatprep.subr.mxu0 0.0
    %8180 = vmatpush2.xpose.msra.mxu0 0.0
    %8181 = vmatprep.subr.mxu0 0.0
    %8182 = vmatpush2.xpose.msra.mxu0 0.0
    %8183 = vmatprep.subr.mxu0 0.0
    %8184 = vmatpush2.xpose.msra.mxu0 0.0
    %8185 = vmatprep.subr.mxu0 0.0
    %8186 = vmatpush2.xpose.msra.mxu0 0.0
    %8187 = vmatprep.subr.mxu0 0.0
    %8188 = vmatpush2.xpose.msra.mxu0 0.0
    %8189 = vmatprep.subr.mxu0 0.0
    %8190 = vmatpush2.xpose.msra.mxu0 0.0
    %8191 = vmatprep.mubr.f32.mxu0 0.0
    %8192 = vmatmul.mubr.f32.gmra.mxu0 %v8123
    %v8193 = vpop.f32.mrf.mxu0
    %v8194 = vadd.f32 %v6421, %v8193
    %v8195 = vpop.f32.mrf.mxu0
    %8196 = vdwg.mxu0
    %v8197 = vsel %vm6541, %v8194, -inf
    %8198 = vmax.xlane.f32.xlu0 %v8197
    %v8199 = vpop.xlane.xlu0 %8198
    %v8200 = vsub.f32 %v8194, %v8199
    %v8201 = vmul.f32 %v8200, 1.442695
    %v8202 = vpow.pop %v8201
    %v8203 = vsel %vm6541, %v8202, 0.0
    %8204 = vadd.xlane.f32.xlu0 %v8203
    %v8205 = vpop.xlane.xlu0 %8204
    %v8206 = vrcp.pop %v8205
    %v8207 = vmul.f32 %v8202, %v8206
    %8208 = vrot.lane.b32.xlu0 %v7620, 40
    %v8209 = vpop.permute.xlu0 %8208
    %v8212 = vsel %vm6541, %v8207, 0
    %8214 = vmatprep.subr.mxu0 0.0
    %8215 = vmatpush1.msra.mxu0 0.0
    %8216 = vmatprep.subr.mxu0 0.0
    %8217 = vmatpush1.msra.mxu0 0.0
    %8218 = vmatprep.subr.mxu0 0.0
    %8219 = vmatpush1.msra.mxu0 0.0
    %8220 = vmatprep.subr.mxu0 0.0
    %8221 = vmatpush1.msra.mxu0 0.0
    %8222 = vmatprep.subr.mxu0 0.0
    %8223 = vmatpush1.msra.mxu0 0.0
    %8224 = vmatprep.subr.mxu0 0.0
    %8225 = vmatpush1.msra.mxu0 0.0
    %8226 = vmatprep.subr.mxu0 0.0
    %8227 = vmatpush1.msra.mxu0 0.0
    %8228 = vmatprep.subr.mxu0 0.0
    %8229 = vmatpush1.msra.mxu0 0.0
    %8230 = vmatprep.subr.mxu0 0.0
    %8231 = vmatpush1.msra.mxu0 0.0
    %8232 = vmatprep.subr.mxu0 0.0
    %8233 = vmatpush1.msra.mxu0 0.0
    %8234 = vmatprep.subr.mxu0 0.0
    %8235 = vmatpush1.msra.mxu0 0.0
    %8236 = vmatprep.subr.mxu0 0.0
    %8237 = vmatpush1.msra.mxu0 0.0
    %8238 = vmatprep.subr.mxu0 0.0
    %8239 = vmatpush1.msra.mxu0 0.0
    %8240 = vmatprep.subr.mxu0 0.0
    %8241 = vmatpush1.msra.mxu0 0.0
    %8242 = vmatprep.subr.mxu0 0.0
    %8243 = vmatpush1.msra.mxu0 0.0
    %8244 = vmatprep.subr.mxu0 0.0
    %8245 = vmatpush1.msra.mxu0 %v8209
    %8246 = vmatprep.subr.mxu0 0.0
    %8247 = vmatpush2.msra.mxu0 0.0
    %8248 = vmatprep.subr.mxu0 0.0
    %8249 = vmatpush2.msra.mxu0 0.0
    %8250 = vmatprep.subr.mxu0 0.0
    %8251 = vmatpush2.msra.mxu0 0.0
    %8252 = vmatprep.subr.mxu0 0.0
    %8253 = vmatpush2.msra.mxu0 0.0
    %8254 = vmatprep.subr.mxu0 0.0
    %8255 = vmatpush2.msra.mxu0 0.0
    %8256 = vmatprep.subr.mxu0 0.0
    %8257 = vmatpush2.msra.mxu0 0.0
    %8258 = vmatprep.subr.mxu0 0.0
    %8259 = vmatpush2.msra.mxu0 0.0
    %8260 = vmatprep.subr.mxu0 0.0
    %8261 = vmatpush2.msra.mxu0 0.0
    %8262 = vmatprep.subr.mxu0 0.0
    %8263 = vmatpush2.msra.mxu0 0.0
    %8264 = vmatprep.subr.mxu0 0.0
    %8265 = vmatpush2.msra.mxu0 0.0
    %8266 = vmatprep.subr.mxu0 0.0
    %8267 = vmatpush2.msra.mxu0 0.0
    %8268 = vmatprep.subr.mxu0 0.0
    %8269 = vmatpush2.msra.mxu0 0.0
    %8270 = vmatprep.subr.mxu0 0.0
    %8271 = vmatpush2.msra.mxu0 0.0
    %8272 = vmatprep.subr.mxu0 0.0
    %8273 = vmatpush2.msra.mxu0 0.0
    %8274 = vmatprep.subr.mxu0 0.0
    %8275 = vmatpush2.msra.mxu0 0.0
    %8276 = vmatprep.subr.mxu0 0.0
    %8277 = vmatpush2.msra.mxu0 0.0
    %8278 = vmatprep.mubr.f32.mxu0 0.0
    %8279 = vmatmul.mubr.f32.gmra.mxu0 %v8212
    %v8280 = vpop.f32.mrf.mxu0
    %v8281 = vadd.f32 0.0, %v8280
    %v8282 = vpop.f32.mrf.mxu0
    %8283 = vdwg.mxu0
    %8285 = vrot.lane.b32.xlu0 %v7951, 8
    %v8286 = vpop.permute.xlu0 %8285
    %8289 = vrot.lane.b32.xlu0 %v8116, 16
    %v8290 = vpop.permute.xlu0 %8289
    %8293 = vrot.lane.b32.xlu0 %v8281, 24
    %v8294 = vpop.permute.xlu0 %8293
    %v8296 = vsel %vm6541, %v7786, %v8286
    %v8297 = vsel %vm7212, %v8296, %v8290
    %v8298 = vsel %vm7214, %v8297, %v8294
    %v8300 = vlaneseq
    %v8301 = vshrl.u32 %v8300, 7
    %v8302 = vsub.s32 0, %v8301
    %v8303 = vrot.slane %v7517, %v8302
    %v8306 = vsel %vm1962, %v8298, 0
    %8308 = vmatprep.subr.mxu0 0.0
    %8309 = vmatpush1.msra.mxu0 0.0
    %8310 = vmatprep.subr.mxu0 0.0
    %8311 = vmatpush1.msra.mxu0 0.0
    %8312 = vmatprep.subr.mxu0 0.0
    %8313 = vmatpush1.msra.mxu0 0.0
    %8314 = vmatprep.subr.mxu0 0.0
    %8315 = vmatpush1.msra.mxu0 0.0
    %8316 = vmatprep.subr.mxu0 0.0
    %8317 = vmatpush1.msra.mxu0 0.0
    %8318 = vmatprep.subr.mxu0 0.0
    %8319 = vmatpush1.msra.mxu0 0.0
    %8320 = vmatprep.subr.mxu0 0.0
    %8321 = vmatpush1.msra.mxu0 0.0
    %8322 = vmatprep.subr.mxu0 0.0
    %8323 = vmatpush1.msra.mxu0 0.0
    %8324 = vmatprep.subr.mxu0 0.0
    %8325 = vmatpush1.msra.mxu0 0.0
    %8326 = vmatprep.subr.mxu0 0.0
    %8327 = vmatpush1.msra.mxu0 0.0
    %8328 = vmatprep.subr.mxu0 0.0
    %8329 = vmatpush1.msra.mxu0 0.0
    %8330 = vmatprep.subr.mxu0 0.0
    %8331 = vmatpush1.msra.mxu0 0.0
    %8332 = vmatprep.subr.mxu0 0.0
    %8333 = vmatpush1.msra.mxu0 %v7516
    %8334 = vmatprep.subr.mxu0 0.0
    %8335 = vmatpush1.msra.mxu0 %v7515
    %8336 = vmatprep.subr.mxu0 0.0
    %8337 = vmatpush1.msra.mxu0 %v7514
    %8338 = vmatprep.subr.mxu0 0.0
    %8339 = vmatpush1.msra.mxu0 %v7513
    %8340 = vmatprep.subr.mxu0 0.0
    %8341 = vmatpush2.msra.mxu0 0.0
    %8342 = vmatprep.subr.mxu0 0.0
    %8343 = vmatpush2.msra.mxu0 0.0
    %8344 = vmatprep.subr.mxu0 0.0
    %8345 = vmatpush2.msra.mxu0 0.0
    %8346 = vmatprep.subr.mxu0 0.0
    %8347 = vmatpush2.msra.mxu0 0.0
    %8348 = vmatprep.subr.mxu0 0.0
    %8349 = vmatpush2.msra.mxu0 0.0
    %8350 = vmatprep.subr.mxu0 0.0
    %8351 = vmatpush2.msra.mxu0 0.0
    %8352 = vmatprep.subr.mxu0 0.0
    %8353 = vmatpush2.msra.mxu0 0.0
    %8354 = vmatprep.subr.mxu0 0.0
    %8355 = vmatpush2.msra.mxu0 0.0
    %8356 = vmatprep.subr.mxu0 0.0
    %8357 = vmatpush2.msra.mxu0 0.0
    %8358 = vmatprep.subr.mxu0 0.0
    %8359 = vmatpush2.msra.mxu0 0.0
    %8360 = vmatprep.subr.mxu0 0.0
    %8361 = vmatpush2.msra.mxu0 0.0
    %8362 = vmatprep.subr.mxu0 0.0
    %8363 = vmatpush2.msra.mxu0 0.0
    %8364 = vmatprep.subr.mxu0 0.0
    %8365 = vmatpush2.msra.mxu0 0.0
    %8366 = vmatprep.subr.mxu0 0.0
    %8367 = vmatpush2.msra.mxu0 0.0
    %8368 = vmatprep.subr.mxu0 0.0
    %8369 = vmatpush2.msra.mxu0 0.0
    %8370 = vmatprep.subr.mxu0 0.0
    %8371 = vmatpush2.msra.mxu0 0.0
    %8372 = vmatprep.mubr.f32.mxu0 0.0
    %8373 = vmatmul.mubr.f32.gmra.mxu0 %v8306
    %v8374 = vpop.f32.mrf.mxu0
    %v8375 = vadd.f32 %v8303, %v8374
    %v8376 = vpop.f32.mrf.mxu0
    %8377 = vdwg.mxu0
    %v8378 = vadd.f32 %v7507, %v8375
    %v8379 = vsel %vm1962, %v8378, 0.0
    %8380 = vadd.xlane.f32.xlu0 %v8379
    %v8381 = vpop.xlane.xlu0 %8380
    %v8382 = vmul.f32 %v8381, %v7299
    %v8383 = vsub.f32 %v8378, %v8382
    %v8384 = vmul.f32 %v8383, %v8383
    %v8385 = vsel %vm1962, %v8384, 0.0
    %8386 = vadd.xlane.f32.xlu0 %v8385
    %v8387 = vpop.xlane.xlu0 %8386
    %v8388 = vmul.f32 %v8387, %v7299
    %v8389 = vadd.f32 %v8388, 1e-05
    %v8390 = vrsqrt.pop %v8389
    %v8391 = vmul.f32 %v8383, %v8390
    %v8393 = vlaneseq
    %v8394 = vshrl.u32 %v8393, 7
    %v8395 = vsub.s32 0, %v8394
    %v8396 = vrot.slane %v7518, %v8395
    %v8398 = vmul.f32 %v8391, %v8396
    %v8400 = vlaneseq
    %v8401 = vshrl.u32 %v8400, 7
    %v8402 = vsub.s32 0, %v8401
    %v8403 = vrot.slane %v7519, %v8402
    %v8405 = vadd.f32 %v8398, %v8403
    %v8407 = vlaneseq
    %v8408 = vshrl.u32 %v8407, 7
    %v8409 = vsub.s32 0, %v8408
    %v8410 = vrot.slane %v7524, %v8409
    %v8413 = vsel %vm1962, %v8405, 0
    %8415 = vmatprep.subr.mxu0 0.0
    %8416 = vmatpush1.msra.mxu0 0.0
    %8417 = vmatprep.subr.mxu0 0.0
    %8418 = vmatpush1.msra.mxu0 0.0
    %8419 = vmatprep.subr.mxu0 0.0
    %8420 = vmatpush1.msra.mxu0 0.0
    %8421 = vmatprep.subr.mxu0 0.0
    %8422 = vmatpush1.msra.mxu0 0.0
    %8423 = vmatprep.subr.mxu0 0.0
    %8424 = vmatpush1.msra.mxu0 0.0
    %8425 = vmatprep.subr.mxu0 0.0
    %8426 = vmatpush1.msra.mxu0 0.0
    %8427 = vmatprep.subr.mxu0 0.0
    %8428 = vmatpush1.msra.mxu0 0.0
    %8429 = vmatprep.subr.mxu0 0.0
    %8430 = vmatpush1.msra.mxu0 0.0
    %8431 = vmatprep.subr.mxu0 0.0
    %8432 = vmatpush1.msra.mxu0 0.0
    %8433 = vmatprep.subr.mxu0 0.0
    %8434 = vmatpush1.msra.mxu0 0.0
    %8435 = vmatprep.subr.mxu0 0.0
    %8436 = vmatpush1.msra.mxu0 0.0
    %8437 = vmatprep.subr.mxu0 0.0
    %8438 = vmatpush1.msra.mxu0 0.0
    %8439 = vmatprep.subr.mxu0 0.0
    %8440 = vmatpush1.msra.mxu0 %v7523
    %8441 = vmatprep.subr.mxu0 0.0
    %8442 = vmatpush1.msra.mxu0 %v7522
    %8443 = vmatprep.subr.mxu0 0.0
    %8444 = vmatpush1.msra.mxu0 %v7521
    %8445 = vmatprep.subr.mxu0 0.0
    %8446 = vmatpush1.msra.mxu0 %v7520
    %8447 = vmatprep.subr.mxu0 0.0
    %8448 = vmatpush2.msra.mxu0 0.0
    %8449 = vmatprep.subr.mxu0 0.0
    %8450 = vmatpush2.msra.mxu0 0.0
    %8451 = vmatprep.subr.mxu0 0.0
    %8452 = vmatpush2.msra.mxu0 0.0
    %8453 = vmatprep.subr.mxu0 0.0
    %8454 = vmatpush2.msra.mxu0 0.0
    %8455 = vmatprep.subr.mxu0 0.0
    %8456 = vmatpush2.msra.mxu0 0.0
    %8457 = vmatprep.subr.mxu0 0.0
    %8458 = vmatpush2.msra.mxu0 0.0
    %8459 = vmatprep.subr.mxu0 0.0
    %8460 = vmatpush2.msra.mxu0 0.0
    %8461 = vmatprep.subr.mxu0 0.0
    %8462 = vmatpush2.msra.mxu0 0.0
    %8463 = vmatprep.subr.mxu0 0.0
    %8464 = vmatpush2.msra.mxu0 0.0
    %8465 = vmatprep.subr.mxu0 0.0
    %8466 = vmatpush2.msra.mxu0 0.0
    %8467 = vmatprep.subr.mxu0 0.0
    %8468 = vmatpush2.msra.mxu0 0.0
    %8469 = vmatprep.subr.mxu0 0.0
    %8470 = vmatpush2.msra.mxu0 0.0
    %8471 = vmatprep.subr.mxu0 0.0
    %8472 = vmatpush2.msra.mxu0 0.0
    %8473 = vmatprep.subr.mxu0 0.0
    %8474 = vmatpush2.msra.mxu0 0.0
    %8475 = vmatprep.subr.mxu0 0.0
    %8476 = vmatpush2.msra.mxu0 0.0
    %8477 = vmatprep.subr.mxu0 0.0
    %8478 = vmatpush2.msra.mxu0 0.0
    %8479 = vmatprep.mubr.f32.mxu0 0.0
    %8480 = vmatmul.mubr.f32.gmra.mxu0 %v8413
    %v8481 = vpop.f32.mrf.mxu0
    %v8482 = vadd.f32 %v8410, %v8481
    %v8483 = vpop.f32.mrf.mxu0
    %8484 = vdwg.mxu0
    %v8485 = vmax.f32 %v8482, 0.0
    %v8487 = vlaneseq
    %v8488 = vshrl.u32 %v8487, 7
    %v8489 = vsub.s32 0, %v8488
    %v8490 = vrot.slane %v7541, %v8489
    %8492 = vmatprep.subr.mxu0 0.0
    %8493 = vmatpush1.msra.mxu0 %v7540
    %8494 = vmatprep.subr.mxu0 0.0
    %8495 = vmatpush1.msra.mxu0 %v7539
    %8496 = vmatprep.subr.mxu0 0.0
    %8497 = vmatpush1.msra.mxu0 %v7538
    %8498 = vmatprep.subr.mxu0 0.0
    %8499 = vmatpush1.msra.mxu0 %v7537
    %8500 = vmatprep.subr.mxu0 0.0
    %8501 = vmatpush1.msra.mxu0 %v7536
    %8502 = vmatprep.subr.mxu0 0.0
    %8503 = vmatpush1.msra.mxu0 %v7535
    %8504 = vmatprep.subr.mxu0 0.0
    %8505 = vmatpush1.msra.mxu0 %v7534
    %8506 = vmatprep.subr.mxu0 0.0
    %8507 = vmatpush1.msra.mxu0 %v7533
    %8508 = vmatprep.subr.mxu0 0.0
    %8509 = vmatpush1.msra.mxu0 %v7532
    %8510 = vmatprep.subr.mxu0 0.0
    %8511 = vmatpush1.msra.mxu0 %v7531
    %8512 = vmatprep.subr.mxu0 0.0
    %8513 = vmatpush1.msra.mxu0 %v7530
    %8514 = vmatprep.subr.mxu0 0.0
    %8515 = vmatpush1.msra.mxu0 %v7529
    %8516 = vmatprep.subr.mxu0 0.0
    %8517 = vmatpush1.msra.mxu0 %v7528
    %8518 = vmatprep.subr.mxu0 0.0
    %8519 = vmatpush1.msra.mxu0 %v7527
    %8520 = vmatprep.subr.mxu0 0.0
    %8521 = vmatpush1.msra.mxu0 %v7526
    %8522 = vmatprep.subr.mxu0 0.0
    %8523 = vmatpush1.msra.mxu0 %v7525
    %8524 = vmatprep.subr.mxu0 0.0
    %8525 = vmatpush2.msra.mxu0 0.0
    %8526 = vmatprep.subr.mxu0 0.0
    %8527 = vmatpush2.msra.mxu0 0.0
    %8528 = vmatprep.subr.mxu0 0.0
    %8529 = vmatpush2.msra.mxu0 0.0
    %8530 = vmatprep.subr.mxu0 0.0
    %8531 = vmatpush2.msra.mxu0 0.0
    %8532 = vmatprep.subr.mxu0 0.0
    %8533 = vmatpush2.msra.mxu0 0.0
    %8534 = vmatprep.subr.mxu0 0.0
    %8535 = vmatpush2.msra.mxu0 0.0
    %8536 = vmatprep.subr.mxu0 0.0
    %8537 = vmatpush2.msra.mxu0 0.0
    %8538 = vmatprep.subr.mxu0 0.0
    %8539 = vmatpush2.msra.mxu0 0.0
    %8540 = vmatprep.subr.mxu0 0.0
    %8541 = vmatpush2.msra.mxu0 0.0
    %8542 = vmatprep.subr.mxu0 0.0
    %8543 = vmatpush2.msra.mxu0 0.0
    %8544 = vmatprep.subr.mxu0 0.0
    %8545 = vmatpush2.msra.mxu0 0.0
    %8546 = vmatprep.subr.mxu0 0.0
    %8547 = vmatpush2.msra.mxu0 0.0
    %8548 = vmatprep.subr.mxu0 0.0
    %8549 = vmatpush2.msra.mxu0 0.0
    %8550 = vmatprep.subr.mxu0 0.0
    %8551 = vmatpush2.msra.mxu0 0.0
    %8552 = vmatprep.subr.mxu0 0.0
    %8553 = vmatpush2.msra.mxu0 0.0
    %8554 = vmatprep.subr.mxu0 0.0
    %8555 = vmatpush2.msra.mxu0 0.0
    %8556 = vmatprep.mubr.f32.mxu0 0.0
    %8557 = vmatmul.mubr.f32.gmra.mxu0 %v8485
    %v8558 = vpop.f32.mrf.mxu0
    %v8559 = vadd.f32 %v8490, %v8558
    %v8560 = vpop.f32.mrf.mxu0
    %8561 = vdwg.mxu0
    %v8562 = vadd.f32 %v8405, %v8559
    %v8563 = vsel %vm1962, %v8562, 0.0
    %8564 = vadd.xlane.f32.xlu0 %v8563
    %v8565 = vpop.xlane.xlu0 %8564
    %v8566 = vmul.f32 %v8565, %v7299
    %v8567 = vsub.f32 %v8562, %v8566
    %v8568 = vmul.f32 %v8567, %v8567
    %v8569 = vsel %vm1962, %v8568, 0.0
    %8570 = vadd.xlane.f32.xlu0 %v8569
    %v8571 = vpop.xlane.xlu0 %8570
    %v8572 = vmul.f32 %v8571, %v7299
    %v8573 = vadd.f32 %v8572, 1e-05
    %v8574 = vrsqrt.pop %v8573
    %v8575 = vmul.f32 %v8567, %v8574
    %v8577 = vlaneseq
    %v8578 = vshrl.u32 %v8577, 7
    %v8579 = vsub.s32 0, %v8578
    %v8580 = vrot.slane %v7542, %v8579
    %v8582 = vmul.f32 %v8575, %v8580
    %v8584 = vlaneseq
    %v8585 = vshrl.u32 %v8584, 7
    %v8586 = vsub.s32 0, %v8585
    %v8587 = vrot.slane %v7543, %v8586
    %v8589 = vadd.f32 %v8582, %v8587
    %v8590 = vld [vmem:[%s7] sm:$0x3]
    %v8592 = vsel %vm6541, %v8590, 0
    %8594 = vmatprep.subr.mxu0 0.0
    %8595 = vmatpush1.msra.mxu0 0.0
    %8596 = vmatprep.subr.mxu0 0.0
    %8597 = vmatpush1.msra.mxu0 0.0
    %8598 = vmatprep.subr.mxu0 0.0
    %8599 = vmatpush1.msra.mxu0 0.0
    %8600 = vmatprep.subr.mxu0 0.0
    %8601 = vmatpush1.msra.mxu0 0.0
    %8602 = vmatprep.subr.mxu0 0.0
    %8603 = vmatpush1.msra.mxu0 0.0
    %8604 = vmatprep.subr.mxu0 0.0
    %8605 = vmatpush1.msra.mxu0 0.0
    %8606 = vmatprep.subr.mxu0 0.0
    %8607 = vmatpush1.msra.mxu0 0.0
    %8608 = vmatprep.subr.mxu0 0.0
    %8609 = vmatpush1.msra.mxu0 0.0
    %8610 = vmatprep.subr.mxu0 0.0
    %8611 = vmatpush1.msra.mxu0 0.0
    %8612 = vmatprep.subr.mxu0 0.0
    %8613 = vmatpush1.msra.mxu0 0.0
    %8614 = vmatprep.subr.mxu0 0.0
    %8615 = vmatpush1.msra.mxu0 0.0
    %8616 = vmatprep.subr.mxu0 0.0
    %8617 = vmatpush1.msra.mxu0 0.0
    %8618 = vmatprep.subr.mxu0 0.0
    %8619 = vmatpush1.msra.mxu0 0.0
    %8620 = vmatprep.subr.mxu0 0.0
    %8621 = vmatpush1.msra.mxu0 0.0
    %8622 = vmatprep.subr.mxu0 0.0
    %8623 = vmatpush1.msra.mxu0 0.0
    %8624 = vmatprep.subr.mxu0 0.0
    %8625 = vmatpush1.msra.mxu0 %v8589
    %8626 = vmatprep.subr.mxu0 0.0
    %8627 = vmatpush2.msra.mxu0 0.0
    %8628 = vmatprep.subr.mxu0 0.0
    %8629 = vmatpush2.msra.mxu0 0.0
    %8630 = vmatprep.subr.mxu0 0.0
    %8631 = vmatpush2.msra.mxu0 0.0
    %8632 = vmatprep.subr.mxu0 0.0
    %8633 = vmatpush2.msra.mxu0 0.0
    %8634 = vmatprep.subr.mxu0 0.0
    %8635 = vmatpush2.msra.mxu0 0.0
    %8636 = vmatprep.subr.mxu0 0.0
    %8637 = vmatpush2.msra.mxu0 0.0
    %8638 = vmatprep.subr.mxu0 0.0
    %8639 = vmatpush2.msra.mxu0 0.0
    %8640 = vmatprep.subr.mxu0 0.0
    %8641 = vmatpush2.msra.mxu0 0.0
    %8642 = vmatprep.subr.mxu0 0.0
    %8643 = vmatpush2.msra.mxu0 0.0
    %8644 = vmatprep.subr.mxu0 0.0
    %8645 = vmatpush2.msra.mxu0 0.0
    %8646 = vmatprep.subr.mxu0 0.0
    %8647 = vmatpush2.msra.mxu0 0.0
    %8648 = vmatprep.subr.mxu0 0.0
    %8649 = vmatpush2.msra.mxu0 0.0
    %8650 = vmatprep.subr.mxu0 0.0
    %8651 = vmatpush2.msra.mxu0 0.0
    %8652 = vmatprep.subr.mxu0 0.0
    %8653 = vmatpush2.msra.mxu0 0.0
    %8654 = vmatprep.subr.mxu0 0.0
    %8655 = vmatpush2.msra.mxu0 0.0
    %8656 = vmatprep.subr.mxu0 0.0
    %8657 = vmatpush2.msra.mxu0 0.0
    %8658 = vmatprep.mubr.f32.mxu0 0.0
    %8659 = vmatmul.mubr.f32.gmra.mxu0 %v8592
    %v8660 = vpop.f32.mrf.mxu0
    %v8661 = vadd.f32 0.0, %v8660
    %v8662 = vpop.f32.mrf.mxu0
    %8663 = vdwg.mxu0
    %v8664 = vld [vmem:[%s71] sm:$0xff]
    %v8665 = vld [vmem:[%s71 + $0x8] sm:$0xff]
    %v8666 = vld [vmem:[%s71 + $0x10] sm:$0xff]
    %v8667 = vld [vmem:[%s71 + $0x18] sm:$0xff]
    %v8668 = vld [vmem:[%s73] sm:$0x1]
    %v8670 = vlaneseq
    %v8671 = vshrl.u32 %v8670, 7
    %v8672 = vsub.s32 0, %v8671
    %v8673 = vrot.slane %v8668, %v8672
    %v8676 = vsel %vm1962, %v8661, 0
    %8678 = vmatprep.subr.mxu0 0.0
    %8679 = vmatpush1.msra.mxu0 0.0
    %8680 = vmatprep.subr.mxu0 0.0
    %8681 = vmatpush1.msra.mxu0 0.0
    %8682 = vmatprep.subr.mxu0 0.0
    %8683 = vmatpush1.msra.mxu0 0.0
    %8684 = vmatprep.subr.mxu0 0.0
    %8685 = vmatpush1.msra.mxu0 0.0
    %8686 = vmatprep.subr.mxu0 0.0
    %8687 = vmatpush1.msra.mxu0 0.0
    %8688 = vmatprep.subr.mxu0 0.0
    %8689 = vmatpush1.msra.mxu0 0.0
    %8690 = vmatprep.subr.mxu0 0.0
    %8691 = vmatpush1.msra.mxu0 0.0
    %8692 = vmatprep.subr.mxu0 0.0
    %8693 = vmatpush1.msra.mxu0 0.0
    %8694 = vmatprep.subr.mxu0 0.0
    %8695 = vmatpush1.msra.mxu0 0.0
    %8696 = vmatprep.subr.mxu0 0.0
    %8697 = vmatpush1.msra.mxu0 0.0
    %8698 = vmatprep.subr.mxu0 0.0
    %8699 = vmatpush1.msra.mxu0 0.0
    %8700 = vmatprep.subr.mxu0 0.0
    %8701 = vmatpush1.msra.mxu0 0.0
    %8702 = vmatprep.subr.mxu0 0.0
    %8703 = vmatpush1.msra.mxu0 %v8667
    %8704 = vmatprep.subr.mxu0 0.0
    %8705 = vmatpush1.msra.mxu0 %v8666
    %8706 = vmatprep.subr.mxu0 0.0
    %8707 = vmatpush1.msra.mxu0 %v8665
    %8708 = vmatprep.subr.mxu0 0.0
    %8709 = vmatpush1.msra.mxu0 %v8664
    %8710 = vmatprep.subr.mxu0 0.0
    %8711 = vmatpush2.msra.mxu0 0.0
    %8712 = vmatprep.subr.mxu0 0.0
    %8713 = vmatpush2.msra.mxu0 0.0
    %8714 = vmatprep.subr.mxu0 0.0
    %8715 = vmatpush2.msra.mxu0 0.0
    %8716 = vmatprep.subr.mxu0 0.0
    %8717 = vmatpush2.msra.mxu0 0.0
    %8718 = vmatprep.subr.mxu0 0.0
    %8719 = vmatpush2.msra.mxu0 0.0
    %8720 = vmatprep.subr.mxu0 0.0
    %8721 = vmatpush2.msra.mxu0 0.0
    %8722 = vmatprep.subr.mxu0 0.0
    %8723 = vmatpush2.msra.mxu0 0.0
    %8724 = vmatprep.subr.mxu0 0.0
    %8725 = vmatpush2.msra.mxu0 0.0
    %8726 = vmatprep.subr.mxu0 0.0
    %8727 = vmatpush2.msra.mxu0 0.0
    %8728 = vmatprep.subr.mxu0 0.0
    %8729 = vmatpush2.msra.mxu0 0.0
    %8730 = vmatprep.subr.mxu0 0.0
    %8731 = vmatpush2.msra.mxu0 0.0
    %8732 = vmatprep.subr.mxu0 0.0
    %8733 = vmatpush2.msra.mxu0 0.0
    %8734 = vmatprep.subr.mxu0 0.0
    %8735 = vmatpush2.msra.mxu0 0.0
    %8736 = vmatprep.subr.mxu0 0.0
    %8737 = vmatpush2.msra.mxu0 0.0
    %8738 = vmatprep.subr.mxu0 0.0
    %8739 = vmatpush2.msra.mxu0 0.0
    %8740 = vmatprep.subr.mxu0 0.0
    %8741 = vmatpush2.msra.mxu0 0.0
    %8742 = vmatprep.mubr.f32.mxu0 0.0
    %8743 = vmatmul.mubr.f32.gmra.mxu0 %v8676
    %v8744 = vpop.f32.mrf.mxu0
    %v8745 = vadd.f32 %v8673, %v8744
    %v8746 = vpop.f32.mrf.mxu0
    %8747 = vdwg.mxu0
    %v8748 = vmax.f32 %v8745, 0.0
    %v8749 = vld [vmem:[%s75] sm:$0xff]
    %v8750 = vld [vmem:[%s75 + $0x8] sm:$0xff]
    %v8751 = vld [vmem:[%s75 + $0x10] sm:$0xff]
    %v8752 = vld [vmem:[%s75 + $0x18] sm:$0xff]
    %v8753 = vld [vmem:[%s77] sm:$0x1]
    %v8755 = vlaneseq
    %v8756 = vshrl.u32 %v8755, 7
    %v8757 = vsub.s32 0, %v8756
    %v8758 = vrot.slane %v8753, %v8757
    %v8761 = vsel %vm1962, %v8748, 0
    %8763 = vmatprep.subr.mxu0 0.0
    %8764 = vmatpush1.msra.mxu0 0.0
    %8765 = vmatprep.subr.mxu0 0.0
    %8766 = vmatpush1.msra.mxu0 0.0
    %8767 = vmatprep.subr.mxu0 0.0
    %8768 = vmatpush1.msra.mxu0 0.0
    %8769 = vmatprep.subr.mxu0 0.0
    %8770 = vmatpush1.msra.mxu0 0.0
    %8771 = vmatprep.subr.mxu0 0.0
    %8772 = vmatpush1.msra.mxu0 0.0
    %8773 = vmatprep.subr.mxu0 0.0
    %8774 = vmatpush1.msra.mxu0 0.0
    %8775 = vmatprep.subr.mxu0 0.0
    %8776 = vmatpush1.msra.mxu0 0.0
    %8777 = vmatprep.subr.mxu0 0.0
    %8778 = vmatpush1.msra.mxu0 0.0
    %8779 = vmatprep.subr.mxu0 0.0
    %8780 = vmatpush1.msra.mxu0 0.0
    %8781 = vmatprep.subr.mxu0 0.0
    %8782 = vmatpush1.msra.mxu0 0.0
    %8783 = vmatprep.subr.mxu0 0.0
    %8784 = vmatpush1.msra.mxu0 0.0
    %8785 = vmatprep.subr.mxu0 0.0
    %8786 = vmatpush1.msra.mxu0 0.0
    %8787 = vmatprep.subr.mxu0 0.0
    %8788 = vmatpush1.msra.mxu0 %v8752
    %8789 = vmatprep.subr.mxu0 0.0
    %8790 = vmatpush1.msra.mxu0 %v8751
    %8791 = vmatprep.subr.mxu0 0.0
    %8792 = vmatpush1.msra.mxu0 %v8750
    %8793 = vmatprep.subr.mxu0 0.0
    %8794 = vmatpush1.msra.mxu0 %v8749
    %8795 = vmatprep.subr.mxu0 0.0
    %8796 = vmatpush2.msra.mxu0 0.0
    %8797 = vmatprep.subr.mxu0 0.0
    %8798 = vmatpush2.msra.mxu0 0.0
    %8799 = vmatprep.subr.mxu0 0.0
    %8800 = vmatpush2.msra.mxu0 0.0
    %8801 = vmatprep.subr.mxu0 0.0
    %8802 = vmatpush2.msra.mxu0 0.0
    %8803 = vmatprep.subr.mxu0 0.0
    %8804 = vmatpush2.msra.mxu0 0.0
    %8805 = vmatprep.subr.mxu0 0.0
    %8806 = vmatpush2.msra.mxu0 0.0
    %8807 = vmatprep.subr.mxu0 0.0
    %8808 = vmatpush2.msra.mxu0 0.0
    %8809 = vmatprep.subr.mxu0 0.0
    %8810 = vmatpush2.msra.mxu0 0.0
    %8811 = vmatprep.subr.mxu0 0.0
    %8812 = vmatpush2.msra.mxu0 0.0
    %8813 = vmatprep.subr.mxu0 0.0
    %8814 = vmatpush2.msra.mxu0 0.0
    %8815 = vmatprep.subr.mxu0 0.0
    %8816 = vmatpush2.msra.mxu0 0.0
    %8817 = vmatprep.subr.mxu0 0.0
    %8818 = vmatpush2.msra.mxu0 0.0
    %8819 = vmatprep.subr.mxu0 0.0
    %8820 = vmatpush2.msra.mxu0 0.0
    %8821 = vmatprep.subr.mxu0 0.0
    %8822 = vmatpush2.msra.mxu0 0.0
    %8823 = vmatprep.subr.mxu0 0.0
    %8824 = vmatpush2.msra.mxu0 0.0
    %8825 = vmatprep.subr.mxu0 0.0
    %8826 = vmatpush2.msra.mxu0 0.0
    %8827 = vmatprep.mubr.f32.mxu0 0.0
    %8828 = vmatmul.mubr.f32.gmra.mxu0 %v8761
    %v8829 = vpop.f32.mrf.mxu0
    %v8830 = vadd.f32 %v8758, %v8829
    %v8831 = vpop.f32.mrf.mxu0
    %8832 = vdwg.mxu0
    %vm8833 = vcmask 41984
    %8834 = vst.msk [vmem:[#allocation2] sm:$0x3] %vm8833, %v8830
    // Predicated region
    $region158: #{transformer_policy_forward.1} parent=1 // pred_check
      _
    $region159: #{transformer_policy_forward.1} parent=1 // pred_check_branch
      %8836 = sbr.rel (0) target = $region161
    $region160: #{transformer_policy_forward.1} parent=1 // pred_region
      %s8838 = ssub.s32 32, 32
      %8839 = vsyncadd [#allocation3], %s8838
      %s8841 = sshll.u32 [#allocation2], 4
      %s8842 = int_to_ptr.vmem [resolvable:$true] %s8841
      %8844 = dma.vmem_to_hbm [thread:$0]  %s8842, 32, %s79, [#allocation3]
    $region161: #{transformer_policy_forward.1} parent=1 // pred_fallthru
      _
    // Predicated region
    $region162: #{transformer_policy_forward.1} parent=1 // pred_check
      _
    $region163: #{transformer_policy_forward.1} parent=1 // pred_check_branch
      %8846 = sbr.rel (0) target = $region165
    $region164: #{transformer_policy_forward.1} parent=1 // pred_region
      %8847 = dma.done [#allocation3], 32
    $region165: #{transformer_policy_forward.1} parent=1 // pred_fallthru
      _
    %8848 = vsyncpa [#allocation3], 1

</llo_original>
